<compile_context>
chip_gen: v7x
topology: tpu7x:2x2x1
jax: 0.10.0
libtpu: 0.0.40
codegen_flags: <defaults>
</compile_context>

<pallas_src>
import functools

import jax
import jax.numpy as jnp
from jax import lax
from jax.experimental import pallas as pl
from jax.experimental.pallas import tpu as pltpu

_EPS = 1e-5  # GroupNorm default eps

# ----------------------------------------------------------------------------
# pltpu.roll convention probe (np.roll: out[i] = x[(i - shift) % n]).  Cached
# Python bool; cheap one-off micro-kernel so the shift direction is guaranteed.
# ----------------------------------------------------------------------------
_ROLL_NP_CONVENTION = None


def _probe_roll_convention():
    global _ROLL_NP_CONVENTION
    if _ROLL_NP_CONVENTION is None:
        try:
            def k(x_ref, o_ref):
                o_ref[...] = pltpu.roll(x_ref[...], 1, axis=1)

            with jax.ensure_compile_time_eval():
                x = jnp.arange(8 * 128, dtype=jnp.float32).reshape(8, 128)
                y = pl.pallas_call(
                    k, out_shape=jax.ShapeDtypeStruct((8, 128), jnp.float32))(x)
                _ROLL_NP_CONVENTION = bool(jnp.all(y == jnp.roll(x, 1, axis=1)))
        except Exception:
            _ROLL_NP_CONVENTION = True  # np.roll semantics (the documented behavior)
    return _ROLL_NP_CONVENTION


# ----------------------------------------------------------------------------
# Fused kernel: one batch sample per grid step; activations as (C, HW).
# ----------------------------------------------------------------------------
def _axial_block_kernel(x_ref, pvec_ref, bf1_ref,
                        w1_ref, w21_ref, w22_ref, w3_ref, wf1_ref, wf2_ref,
                        lr_mask_ref, td_mask_ref, o_ref,
                        *, shift_size, pad, W, hw, roll_np_convention):
    f32 = jnp.float32
    bf16 = jnp.bfloat16

    x = x_ref[0].astype(f32)                        # (C, HW), f32 for stats/residuals
    pv = pvec_ref[...]                              # (C, 16) packed per-channel params
    col = lambda j: pv[:, j:j + 1]                  # (C, 1), broadcasts over lanes

    def group_norm(z, gamma, beta):
        # GroupNorm(1, C): stats over the whole (C, HW) sample.  mean((z-mu)^2) form:
        # z - mu is needed for the output anyway, so this costs no extra traversal and
        # avoids the E[z^2]-mu^2 cancellation.
        inv_n = 1.0 / (z.shape[0] * z.shape[1])
        mu = jnp.sum(jnp.sum(z, axis=1, keepdims=True), axis=0, keepdims=True) * inv_n
        d = z - mu
        var = jnp.sum(jnp.sum(d * d, axis=1, keepdims=True), axis=0, keepdims=True) * inv_n
        return d * lax.rsqrt(var + _EPS) * gamma + beta

    def gelu(z):
        # tanh formulation -> EUP slot.
        c0 = 0.7978845608028654                     # sqrt(2/pi)
        return 0.5 * z * (1.0 + jnp.tanh(c0 * (z + 0.044715 * (z * z * z))))

    def conv1x1(z, w_ref, bias):
        # 1x1 conv == channel matmul; bf16 operands on the MXU, f32 accumulation.
        return jnp.dot(w_ref[...], z.astype(bf16), preferred_element_type=f32) + bias

    def shifted(z, k):
        # out[:, i] = z[:, (i + k) mod HW]; out-of-range / wrapped lanes are killed by the
        # precomputed masks.  Roll executes on the XLU (free slot here).
        kk = k % hw
        if kk == 0:
            return z
        amt = (hw - kk) if roll_np_convention else kk
        return pltpu.roll(z, amt, axis=1)

    # ---- block norm1 -------------------------------------------------------
    y = group_norm(x, col(0), col(1))

    # ---- AxialShift --------------------------------------------------------
    a = gelu(group_norm(conv1x1(y, w1_ref, col(2)), col(3), col(4)))

    # Shift assembly: channel group g gets spatial shift s = pad - g.  lr_mask fuses
    # (channel-group selector x W-row-boundary validity); td_mask fuses
    # (channel-group selector x H-boundary validity, needed because roll wraps rows).
    x_lr = None
    x_td = None
    for g in range(shift_size):                     # static unroll
        s = pad - g
        lr_t = shifted(a, s) * lr_mask_ref[g]
        td_t = shifted(a, s * W) * td_mask_ref[g]
        x_lr = lr_t if x_lr is None else x_lr + lr_t
        x_td = td_t if x_td is None else x_td + td_t

    y_lr = gelu(conv1x1(x_lr, w21_ref, col(5)))
    y_td = gelu(conv1x1(x_td, w22_ref, col(6)))
    axial = conv1x1(group_norm(y_lr + y_td, col(7), col(8)), w3_ref, col(9))

    x1 = x + axial                                  # residual 1 (drop_path = identity)

    # ---- MLP ---------------------------------------------------------------
    z = group_norm(x1, col(10), col(11))
    h = gelu(conv1x1(z, wf1_ref, bf1_ref[...]))
    m = conv1x1(h, wf2_ref, col(12))

    o_ref[0] = (x1 + m).astype(o_ref.dtype)         # residual 2, emit in input dtype


# ----------------------------------------------------------------------------
# Wrapper (NCHW in / NCHW out, matching the PyTorch module)
# ----------------------------------------------------------------------------
def _rep_spec(shape, single_buffer):
    idx = lambda b, _n=len(shape): (0,) * _n
    if single_buffer:
        try:
            # Constant index_map -> one buffer is enough; halves replicated-param VMEM.
            return pl.BlockSpec(shape, idx, pipeline_mode=pl.Buffered(1))
        except Exception:
            pass
    return pl.BlockSpec(shape, idx)


def _vmem_limit(C, HW, hidden, shift_size, io_itemsize):
    act = C * HW * 4                                   # one f32 activation tile
    hid = hidden * HW * 4
    weights = 2 * (4 * C * C + 2 * C * hidden)         # bf16 weights, single-buffered
    masks = 2 * shift_size * C * HW * 4                # two f32 mask stacks
    io = 2 * 2 * C * HW * io_itemsize                  # double-buffered in + out blocks
    est = io + weights + masks + 10 * act + 3 * hid + (4 << 20)
    cap = 56 << 20                                     # conservative fallback (v7x-safe)
    try:
        cap = int(pltpu.get_tpu_info().vmem_capacity_bytes) - (8 << 20)
    except Exception:
        pass
    return int(min(max(est, 32 << 20), max(cap, 32 << 20)))


def axial_shifted_block_pallas(x_nchw, p, *, shift_size=7, single_buffer_params=True):
    B, C, H, W = x_nchw.shape
    HW = H * W
    pad = shift_size // 2
    group = -(-C // shift_size)                        # ceil(C / shift_size)
    f32 = jnp.float32
    bf16 = jnp.bfloat16
    out_dtype = x_nchw.dtype

    x = x_nchw.reshape(B, C, HW)                       # lane-dense flattened spatial

    # Fused shift masks (precomputed, f32 so no per-use in-kernel converts):
    #   lr_mask[g,c,i] = [c in group g] * [0 <= i%W + (pad-g) < W]
    #   td_mask[g,c,i] = [c in group g] * [0 <= i//W + (pad-g) < H]
    gid = jnp.arange(C, dtype=jnp.int32) // group
    cmask = gid[None, :] == jnp.arange(shift_size, dtype=jnp.int32)[:, None]        # (S,C)
    w_idx = jnp.arange(HW, dtype=jnp.int32) % W
    h_idx = jnp.arange(HW, dtype=jnp.int32) // W
    s_vec = (pad - jnp.arange(shift_size, dtype=jnp.int32))[:, None]                # (S,1)
    wvalid = ((w_idx[None, :] + s_vec) >= 0) & ((w_idx[None, :] + s_vec) < W)       # (S,HW)
    hvalid = ((h_idx[None, :] + s_vec) >= 0) & ((h_idx[None, :] + s_vec) < H)       # (S,HW)
    lr_mask = (cmask[:, :, None] & wvalid[:, None, :]).astype(f32)                  # (S,C,HW)
    td_mask = (cmask[:, :, None] & hvalid[:, None, :]).astype(f32)                  # (S,C,HW)

    # Pack the 13 per-channel vectors into one (C, 16) tensor (one DMA, one VMEM alloc).
    names = ["g_n1", "b_n1", "b1", "g_a1", "b_a1", "b21", "b22",
             "g_a2", "b_a2", "b3", "g_n2", "b_n2", "bf2"]
    cols = [p[n].astype(f32) for n in names]
    cols += [jnp.zeros((C,), f32)] * (16 - len(cols))
    pvec = jnp.stack(cols, axis=1)                                                  # (C,16)

    hidden = p["wf1"].shape[0]
    bf1 = p["bf1"].reshape(-1, 1).astype(f32)                                       # (hid,1)

    wcast = lambda n: p[n].astype(bf16)                # bf16 MXU operands
    args = (x, pvec, bf1,
            wcast("w1"), wcast("w21"), wcast("w22"), wcast("w3"),
            wcast("wf1"), wcast("wf2"),
            lr_mask, td_mask)

    x_spec = pl.BlockSpec((1, C, HW), lambda b: (b, 0, 0))
    in_specs = [x_spec] + [_rep_spec(a.shape, single_buffer_params) for a in args[1:]]
    out_spec = pl.BlockSpec((1, C, HW), lambda b: (b, 0, 0))

    kernel = functools.partial(
        _axial_block_kernel, shift_size=shift_size, pad=pad, W=W, hw=HW,
        roll_np_convention=_probe_roll_convention())

    out = pl.pallas_call(
        kernel,
        grid=(B,),
        in_specs=in_specs,
        out_specs=out_spec,
        out_shape=jax.ShapeDtypeStruct((B, C, HW), out_dtype),
        compiler_params=pltpu.CompilerParams(
            dimension_semantics=("parallel",),         # megacore: samples split across TCs
            vmem_limit_bytes=_vmem_limit(C, HW, hidden, shift_size,
                                         jnp.dtype(out_dtype).itemsize)),
    )(*args)
    return out.reshape(B, C, H, W)


# ----------------------------------------------------------------------------
# Plain-JAX (XLA) reference mirroring the PyTorch forward in NCHW
# ----------------------------------------------------------------------------
def _gn_ref(z, gamma, beta):
    mu = z.mean(axis=(1, 2, 3), keepdims=True)
    var = z.var(axis=(1, 2, 3), keepdims=True)
    return ((z - mu) / jnp.sqrt(var + _EPS)) * gamma[None, :, None, None] \
        + beta[None, :, None, None]


def _conv1x1_ref(z, w, b):
    return (jnp.einsum("oc,bchw->bohw", w, z, precision=lax.Precision.HIGHEST)
            + b[None, :, None, None])


def _shift_ref(z, axis, shift_size):
    # CUDA shift kernel semantics: out[n,c,..,i,..] = z[n,c,..,i+s,..] (zero-padded),
    # s = shift//2 - (c // ceil(C/shift)).
    C = z.shape[1]
    pad = shift_size // 2
    group = -(-C // shift_size)
    padcfg = [(0, 0)] * 4
    padcfg[axis] = (pad, pad)
    zp = jnp.pad(z, padcfg)
    size = z.shape[axis]
    chunks = []
    for c in range(C):
        s = pad - (c // group)
        chunks.append(lax.slice_in_dim(zp[:, c:c + 1], pad + s, pad + s + size, axis=axis))
    return jnp.concatenate(chunks, axis=1)


def axial_shifted_block_reference(x, p, *, shift_size=7):
    act = lambda z: jax.nn.gelu(z, approximate=False)   # nn.GELU() default (exact erf)
    shortcut = x
    y = _gn_ref(x, p["g_n1"], p["b_n1"])
    # AxialShift
    y = act(_gn_ref(_conv1x1_ref(y, p["w1"], p["b1"]), p["g_a1"], p["b_a1"]))
    y_lr = act(_conv1x1_ref(_shift_ref(y, 3, shift_size), p["w21"], p["b21"]))
    y_td = act(_conv1x1_ref(_shift_ref(y, 2, shift_size), p["w22"], p["b22"]))
    y = _conv1x1_ref(_gn_ref(y_lr + y_td, p["g_a2"], p["b_a2"]), p["w3"], p["b3"])
    x1 = shortcut + y
    z = _gn_ref(x1, p["g_n2"], p["b_n2"])
    z = _conv1x1_ref(act(_conv1x1_ref(z, p["wf1"], p["bf1"])), p["wf2"], p["bf2"])
    return x1 + z


# ----------------------------------------------------------------------------
if __name__ == "__main__":
    B, C, H, W = 2, 32, 16, 16
    shift_size = 7
    mlp_ratio = 4.0
    hidden = int(C * mlp_ratio)

    key = jax.random.PRNGKey(0)
    ks = jax.random.split(key, 22)
    f32 = jnp.float32
    nrm = lambda k, shape, s: s * jax.random.normal(k, shape, dtype=f32)

    x = nrm(ks[0], (B, C, H, W), 1.0)

    p = {
        "g_n1": 1.0 + nrm(ks[1], (C,), 0.1),  "b_n1": nrm(ks[2], (C,), 0.1),
        "w1":   nrm(ks[3], (C, C), 0.2),      "b1":   nrm(ks[4], (C,), 0.1),
        "g_a1": 1.0 + nrm(ks[5], (C,), 0.1),  "b_a1": nrm(ks[6], (C,), 0.1),
        "w21":  nrm(ks[7], (C, C), 0.2),      "b21":  nrm(ks[8], (C,), 0.1),
        "w22":  nrm(ks[9], (C, C), 0.2),      "b22":  nrm(ks[10], (C,), 0.1),
        "g_a2": 1.0 + nrm(ks[11], (C,), 0.1), "b_a2": nrm(ks[12], (C,), 0.1),
        "w3":   nrm(ks[13], (C, C), 0.2),     "b3":   nrm(ks[14], (C,), 0.1),
        "g_n2": 1.0 + nrm(ks[15], (C,), 0.1), "b_n2": nrm(ks[16], (C,), 0.1),
        "wf1":  nrm(ks[17], (hidden, C), 0.2), "bf1": nrm(ks[18], (hidden,), 0.1),
        "wf2":  nrm(ks[19], (C, hidden), 0.1), "bf2": nrm(ks[20], (C,), 0.1),
    }

    _probe_roll_convention()                            # eager one-off probe, outside jit

    run = jax.jit(functools.partial(axial_shifted_block_pallas, shift_size=shift_size))
    try:
        out = jax.block_until_ready(run(x, p))
    except Exception:
        # Fallback: identical kernel but without single-buffered (Buffered(1)) params.
        run = jax.jit(functools.partial(axial_shifted_block_pallas,
                                        shift_size=shift_size,
                                        single_buffer_params=False))
        out = jax.block_until_ready(run(x, p))

    ref = axial_shifted_block_reference(x, p, shift_size=shift_size)
    assert out.shape == (B, C, H, W), out.shape

    diff = jnp.abs(out.astype(f32) - ref)
    max_diff = float(jnp.max(diff))
    mean_diff = float(jnp.mean(diff))
    # Tolerances sized for bf16 MXU operands + tanh-GELU in the kernel vs the
    # exact-erf / Precision.HIGHEST f32 reference.
    assert max_diff < 2e-1 and mean_diff < 3e-2, (max_diff, mean_diff)
    print("KERNEL_OK")
</pallas_src>

<mosaic_0001>
module attributes {stable_mosaic.version = 11 : i64} {
  func.func @k(%arg0: memref<8x128xf32, #tpu.memory_space<vmem>>, %arg1: memref<8x128xf32, #tpu.memory_space<vmem>>) attributes {dimension_semantics = [], scalar_prefetch = 0 : i64, scratch_operands = 0 : i64, tpu.core_type = #tpu.core_type<tc>} {
    %c0 = arith.constant 0 : index
    %c0_0 = arith.constant 0 : index
    %0 = vector.load %arg0[%c0, %c0_0] : memref<8x128xf32, #tpu.memory_space<vmem>>, vector<8x128xf32>
    %c1_i32 = arith.constant 1 : i32
    %1 = tpu.dynamic_rotate %0 by %c1_i32 dim 1 : vector<8x128xf32>, i32 -> vector<8x128xf32>
    %c0_1 = arith.constant 0 : index
    %c0_2 = arith.constant 0 : index
    %2 = vector.load %arg1[%c0_1, %c0_2] : memref<8x128xf32, #tpu.memory_space<vmem>>, vector<8x128xf32>
    tpu.vector_store %arg1[%c0_1, %c0_2], %1 {strides = array<i32>} : memref<8x128xf32, #tpu.memory_space<vmem>>, vector<8x128xf32>,
    return
  }
}

module attributes {stable_mosaic.version = 11 : i64} {
  func.func @_axial_block_kernel(%arg0: i32, %arg1: memref<1x32x256xf32, #tpu.memory_space<vmem>>, %arg2: memref<32x16xf32, #tpu.memory_space<vmem>>, %arg3: memref<128x1xf32, #tpu.memory_space<vmem>>, %arg4: memref<32x32xbf16, #tpu.memory_space<vmem>>, %arg5: memref<32x32xbf16, #tpu.memory_space<vmem>>, %arg6: memref<32x32xbf16, #tpu.memory_space<vmem>>, %arg7: memref<32x32xbf16, #tpu.memory_space<vmem>>, %arg8: memref<128x32xbf16, #tpu.memory_space<vmem>>, %arg9: memref<32x128xbf16, #tpu.memory_space<vmem>>, %arg10: memref<7x32x256xf32, #tpu.memory_space<vmem>>, %arg11: memref<7x32x256xf32, #tpu.memory_space<vmem>>, %arg12: memref<1x32x256xf32, #tpu.memory_space<vmem>>) attributes {dimension_semantics = [#tpu.dimension_semantics<parallel>], iteration_bounds = array<i64: 2>, scalar_prefetch = 0 : i64, scratch_operands = 0 : i64, tpu.core_type = #tpu.core_type<tc>, window_params = [{transform_indices = @transform_0, window_bounds = array<i64: 1, 32, 256>}, {pipeline_mode = #tpu.pipeline_mode<synchronous>, transform_indices = @transform_1, window_bounds = array<i64: 32, 16>}, {pipeline_mode = #tpu.pipeline_mode<synchronous>, transform_indices = @transform_2, window_bounds = array<i64: 128, 1>}, {pipeline_mode = #tpu.pipeline_mode<synchronous>, transform_indices = @transform_3, window_bounds = array<i64: 32, 32>}, {pipeline_mode = #tpu.pipeline_mode<synchronous>, transform_indices = @transform_4, window_bounds = array<i64: 32, 32>}, {pipeline_mode = #tpu.pipeline_mode<synchronous>, transform_indices = @transform_5, window_bounds = array<i64: 32, 32>}, {pipeline_mode = #tpu.pipeline_mode<synchronous>, transform_indices = @transform_6, window_bounds = array<i64: 32, 32>}, {pipeline_mode = #tpu.pipeline_mode<synchronous>, transform_indices = @transform_7, window_bounds = array<i64: 128, 32>}, {pipeline_mode = #tpu.pipeline_mode<synchronous>, transform_indices = @transform_8, window_bounds = array<i64: 32, 128>}, {pipeline_mode = #tpu.pipeline_mode<synchronous>, transform_indices = @transform_9, window_bounds = array<i64: 7, 32, 256>}, {pipeline_mode = #tpu.pipeline_mode<synchronous>, transform_indices = @transform_10, window_bounds = array<i64: 7, 32, 256>}, {transform_indices = @transform_11, window_bounds = array<i64: 1, 32, 256>}]} {
    %c0 = arith.constant 0 : index
    %c0_0 = arith.constant 0 : index
    %c0_1 = arith.constant 0 : index
    %0 = vector.load %arg1[%c0, %c0_0, %c0_1] : memref<1x32x256xf32, #tpu.memory_space<vmem>>, vector<1x32x256xf32>
    %1 = vector.shape_cast %0 : vector<1x32x256xf32> to vector<32x256xf32>
    %c0_2 = arith.constant 0 : index
    %c0_3 = arith.constant 0 : index
    %2 = vector.load %arg2[%c0_2, %c0_3] : memref<32x16xf32, #tpu.memory_space<vmem>>, vector<32x16xf32>
    %3 = vector.extract_strided_slice %2 {offsets = [0, 0], sizes = [32, 1], strides = [1, 1]} : vector<32x16xf32> to vector<32x1xf32>
    %4 = vector.extract_strided_slice %2 {offsets = [0, 1], sizes = [32, 1], strides = [1, 1]} : vector<32x16xf32> to vector<32x1xf32>
    %cst = arith.constant dense<0.000000e+00> : vector<32xf32>
    %5 = vector.multi_reduction <add>, %1, %cst [1] : vector<32x256xf32> to vector<32xf32>
    %6 = vector.shape_cast %5 : vector<32xf32> to vector<32x1xf32>
    %cst_4 = arith.constant dense<0.000000e+00> : vector<1xf32>
    %7 = vector.multi_reduction <add>, %6, %cst_4 [0] : vector<32x1xf32> to vector<1xf32>
    %8 = vector.shape_cast %7 : vector<1xf32> to vector<1x1xf32>
    %cst_5 = arith.constant 1.22070313E-4 : f32
    %9 = vector.broadcast %cst_5 : f32 to vector<1x1xf32>
    %10 = arith.mulf %8, %9 : vector<1x1xf32>
    %11 = vector.broadcast %10 : vector<1x1xf32> to vector<32x256xf32>
    %12 = arith.subf %1, %11 : vector<32x256xf32>
    %13 = arith.mulf %12, %12 : vector<32x256xf32>
    %cst_6 = arith.constant dense<0.000000e+00> : vector<32xf32>
    %14 = vector.multi_reduction <add>, %13, %cst_6 [1] : vector<32x256xf32> to vector<32xf32>
    %15 = vector.shape_cast %14 : vector<32xf32> to vector<32x1xf32>
    %cst_7 = arith.constant dense<0.000000e+00> : vector<1xf32>
    %16 = vector.multi_reduction <add>, %15, %cst_7 [0] : vector<32x1xf32> to vector<1xf32>
    %17 = vector.shape_cast %16 : vector<1xf32> to vector<1x1xf32>
    %cst_8 = arith.constant 1.22070313E-4 : f32
    %18 = vector.broadcast %cst_8 : f32 to vector<1x1xf32>
    %19 = arith.mulf %17, %18 : vector<1x1xf32>
    %cst_9 = arith.constant 9.99999974E-6 : f32
    %20 = vector.broadcast %cst_9 : f32 to vector<1x1xf32>
    %21 = arith.addf %19, %20 : vector<1x1xf32>
    %22 = math.rsqrt %21 : vector<1x1xf32>
    %23 = vector.broadcast %22 : vector<1x1xf32> to vector<32x256xf32>
    %24 = arith.mulf %12, %23 : vector<32x256xf32>
    %25 = vector.broadcast %3 : vector<32x1xf32> to vector<32x256xf32>
    %26 = arith.mulf %24, %25 : vector<32x256xf32>
    %27 = vector.broadcast %4 : vector<32x1xf32> to vector<32x256xf32>
    %28 = arith.addf %26, %27 : vector<32x256xf32>
    %29 = vector.extract_strided_slice %2 {offsets = [0, 2], sizes = [32, 1], strides = [1, 1]} : vector<32x16xf32> to vector<32x1xf32>
    %c0_10 = arith.constant 0 : index
    %c0_11 = arith.constant 0 : index
    %30 = vector.load %arg4[%c0_10, %c0_11] : memref<32x32xbf16, #tpu.memory_space<vmem>>, vector<32x32xbf16>
    %31 = arith.truncf %28 : vector<32x256xf32> to vector<32x256xbf16>
    %cst_12 = arith.constant dense<0.000000e+00> : vector<32x256xf32>
    %32 = tpu.matmul %30, %31, %cst_12 {dimension_numbers = #tpu.dot_dimension_numbers<[1], [0], [0], [1], [0, 0, 1, 1], [], []>} : vector<32x32xbf16>, vector<32x256xbf16>, vector<32x256xf32> -> vector<32x256xf32>
    %33 = vector.broadcast %29 : vector<32x1xf32> to vector<32x256xf32>
    %34 = arith.addf %32, %33 : vector<32x256xf32>
    %35 = vector.extract_strided_slice %2 {offsets = [0, 3], sizes = [32, 1], strides = [1, 1]} : vector<32x16xf32> to vector<32x1xf32>
    %36 = vector.extract_strided_slice %2 {offsets = [0, 4], sizes = [32, 1], strides = [1, 1]} : vector<32x16xf32> to vector<32x1xf32>
    %cst_13 = arith.constant dense<0.000000e+00> : vector<32xf32>
    %37 = vector.multi_reduction <add>, %34, %cst_13 [1] : vector<32x256xf32> to vector<32xf32>
    %38 = vector.shape_cast %37 : vector<32xf32> to vector<32x1xf32>
    %cst_14 = arith.constant dense<0.000000e+00> : vector<1xf32>
    %39 = vector.multi_reduction <add>, %38, %cst_14 [0] : vector<32x1xf32> to vector<1xf32>
    %40 = vector.shape_cast %39 : vector<1xf32> to vector<1x1xf32>
    %cst_15 = arith.constant 1.22070313E-4 : f32
    %41 = vector.broadcast %cst_15 : f32 to vector<1x1xf32>
    %42 = arith.mulf %40, %41 : vector<1x1xf32>
    %43 = vector.broadcast %42 : vector<1x1xf32> to vector<32x256xf32>
    %44 = arith.subf %34, %43 : vector<32x256xf32>
    %45 = arith.mulf %44, %44 : vector<32x256xf32>
    %cst_16 = arith.constant dense<0.000000e+00> : vector<32xf32>
    %46 = vector.multi_reduction <add>, %45, %cst_16 [1] : vector<32x256xf32> to vector<32xf32>
    %47 = vector.shape_cast %46 : vector<32xf32> to vector<32x1xf32>
    %cst_17 = arith.constant dense<0.000000e+00> : vector<1xf32>
    %48 = vector.multi_reduction <add>, %47, %cst_17 [0] : vector<32x1xf32> to vector<1xf32>
    %49 = vector.shape_cast %48 : vector<1xf32> to vector<1x1xf32>
    %cst_18 = arith.constant 1.22070313E-4 : f32
    %50 = vector.broadcast %cst_18 : f32 to vector<1x1xf32>
    %51 = arith.mulf %49, %50 : vector<1x1xf32>
    %cst_19 = arith.constant 9.99999974E-6 : f32
    %52 = vector.broadcast %cst_19 : f32 to vector<1x1xf32>
    %53 = arith.addf %51, %52 : vector<1x1xf32>
    %54 = math.rsqrt %53 : vector<1x1xf32>
    %55 = vector.broadcast %54 : vector<1x1xf32> to vector<32x256xf32>
    %56 = arith.mulf %44, %55 : vector<32x256xf32>
    %57 = vector.broadcast %35 : vector<32x1xf32> to vector<32x256xf32>
    %58 = arith.mulf %56, %57 : vector<32x256xf32>
    %59 = vector.broadcast %36 : vector<32x1xf32> to vector<32x256xf32>
    %60 = arith.addf %58, %59 : vector<32x256xf32>
    %cst_20 = arith.constant 5.000000e-01 : f32
    %61 = vector.broadcast %cst_20 : f32 to vector<32x256xf32>
    %62 = arith.mulf %61, %60 : vector<32x256xf32>
    %63 = arith.mulf %60, %60 : vector<32x256xf32>
    %64 = arith.mulf %63, %60 : vector<32x256xf32>
    %cst_21 = arith.constant 4.471500e-02 : f32
    %65 = vector.broadcast %cst_21 : f32 to vector<32x256xf32>
    %66 = arith.mulf %65, %64 : vector<32x256xf32>
    %67 = arith.addf %60, %66 : vector<32x256xf32>
    %cst_22 = arith.constant 0.797884583 : f32
    %68 = vector.broadcast %cst_22 : f32 to vector<32x256xf32>
    %69 = arith.mulf %68, %67 : vector<32x256xf32>
    %70 = math.tanh %69 : vector<32x256xf32>
    %cst_23 = arith.constant 1.000000e+00 : f32
    %71 = vector.broadcast %cst_23 : f32 to vector<32x256xf32>
    %72 = arith.addf %71, %70 : vector<32x256xf32>
    %73 = arith.mulf %62, %72 : vector<32x256xf32>
    %c253_i32 = arith.constant 253 : i32
    %74 = tpu.dynamic_rotate %73 by %c253_i32 dim 1 : vector<32x256xf32>, i32 -> vector<32x256xf32>
    %c0_24 = arith.constant 0 : index
    %c0_25 = arith.constant 0 : index
    %c0_26 = arith.constant 0 : index
    %75 = vector.load %arg10[%c0_24, %c0_25, %c0_26] : memref<7x32x256xf32, #tpu.memory_space<vmem>>, vector<1x32x256xf32>
    %76 = vector.shape_cast %75 : vector<1x32x256xf32> to vector<32x256xf32>
    %77 = arith.mulf %74, %76 : vector<32x256xf32>
    %c208_i32 = arith.constant 208 : i32
    %78 = tpu.dynamic_rotate %73 by %c208_i32 dim 1 : vector<32x256xf32>, i32 -> vector<32x256xf32>
    %c0_27 = arith.constant 0 : index
    %c0_28 = arith.constant 0 : index
    %c0_29 = arith.constant 0 : index
    %79 = vector.load %arg11[%c0_27, %c0_28, %c0_29] : memref<7x32x256xf32, #tpu.memory_space<vmem>>, vector<1x32x256xf32>
    %80 = vector.shape_cast %79 : vector<1x32x256xf32> to vector<32x256xf32>
    %81 = arith.mulf %78, %80 : vector<32x256xf32>
    %c254_i32 = arith.constant 254 : i32
    %82 = tpu.dynamic_rotate %73 by %c254_i32 dim 1 : vector<32x256xf32>, i32 -> vector<32x256xf32>
    %c1 = arith.constant 1 : index
    %c0_30 = arith.constant 0 : index
    %c0_31 = arith.constant 0 : index
    %83 = vector.load %arg10[%c1, %c0_30, %c0_31] : memref<7x32x256xf32, #tpu.memory_space<vmem>>, vector<1x32x256xf32>
    %84 = vector.shape_cast %83 : vector<1x32x256xf32> to vector<32x256xf32>
    %85 = arith.mulf %82, %84 : vector<32x256xf32>
    %c224_i32 = arith.constant 224 : i32
    %86 = tpu.dynamic_rotate %73 by %c224_i32 dim 1 : vector<32x256xf32>, i32 -> vector<32x256xf32>
    %c1_32 = arith.constant 1 : index
    %c0_33 = arith.constant 0 : index
    %c0_34 = arith.constant 0 : index
    %87 = vector.load %arg11[%c1_32, %c0_33, %c0_34] : memref<7x32x256xf32, #tpu.memory_space<vmem>>, vector<1x32x256xf32>
    %88 = vector.shape_cast %87 : vector<1x32x256xf32> to vector<32x256xf32>
    %89 = arith.mulf %86, %88 : vector<32x256xf32>
    %90 = arith.addf %77, %85 : vector<32x256xf32>
    %91 = arith.addf %81, %89 : vector<32x256xf32>
    %c255_i32 = arith.constant 255 : i32
    %92 = tpu.dynamic_rotate %73 by %c255_i32 dim 1 : vector<32x256xf32>, i32 -> vector<32x256xf32>
    %c2 = arith.constant 2 : index
    %c0_35 = arith.constant 0 : index
    %c0_36 = arith.constant 0 : index
    %93 = vector.load %arg10[%c2, %c0_35, %c0_36] : memref<7x32x256xf32, #tpu.memory_space<vmem>>, vector<1x32x256xf32>
    %94 = vector.shape_cast %93 : vector<1x32x256xf32> to vector<32x256xf32>
    %95 = arith.mulf %92, %94 : vector<32x256xf32>
    %c240_i32 = arith.constant 240 : i32
    %96 = tpu.dynamic_rotate %73 by %c240_i32 dim 1 : vector<32x256xf32>, i32 -> vector<32x256xf32>
    %c2_37 = arith.constant 2 : index
    %c0_38 = arith.constant 0 : index
    %c0_39 = arith.constant 0 : index
    %97 = vector.load %arg11[%c2_37, %c0_38, %c0_39] : memref<7x32x256xf32, #tpu.memory_space<vmem>>, vector<1x32x256xf32>
    %98 = vector.shape_cast %97 : vector<1x32x256xf32> to vector<32x256xf32>
    %99 = arith.mulf %96, %98 : vector<32x256xf32>
    %100 = arith.addf %90, %95 : vector<32x256xf32>
    %101 = arith.addf %91, %99 : vector<32x256xf32>
    %c3 = arith.constant 3 : index
    %c0_40 = arith.constant 0 : index
    %c0_41 = arith.constant 0 : index
    %102 = vector.load %arg10[%c3, %c0_40, %c0_41] : memref<7x32x256xf32, #tpu.memory_space<vmem>>, vector<1x32x256xf32>
    %103 = vector.shape_cast %102 : vector<1x32x256xf32> to vector<32x256xf32>
    %104 = arith.mulf %73, %103 : vector<32x256xf32>
    %c3_42 = arith.constant 3 : index
    %c0_43 = arith.constant 0 : index
    %c0_44 = arith.constant 0 : index
    %105 = vector.load %arg11[%c3_42, %c0_43, %c0_44] : memref<7x32x256xf32, #tpu.memory_space<vmem>>, vector<1x32x256xf32>
    %106 = vector.shape_cast %105 : vector<1x32x256xf32> to vector<32x256xf32>
    %107 = arith.mulf %73, %106 : vector<32x256xf32>
    %108 = arith.addf %100, %104 : vector<32x256xf32>
    %109 = arith.addf %101, %107 : vector<32x256xf32>
    %c1_i32 = arith.constant 1 : i32
    %110 = tpu.dynamic_rotate %73 by %c1_i32 dim 1 : vector<32x256xf32>, i32 -> vector<32x256xf32>
    %c4 = arith.constant 4 : index
    %c0_45 = arith.constant 0 : index
    %c0_46 = arith.constant 0 : index
    %111 = vector.load %arg10[%c4, %c0_45, %c0_46] : memref<7x32x256xf32, #tpu.memory_space<vmem>>, vector<1x32x256xf32>
    %112 = vector.shape_cast %111 : vector<1x32x256xf32> to vector<32x256xf32>
    %113 = arith.mulf %110, %112 : vector<32x256xf32>
    %c16_i32 = arith.constant 16 : i32
    %114 = tpu.dynamic_rotate %73 by %c16_i32 dim 1 : vector<32x256xf32>, i32 -> vector<32x256xf32>
    %c4_47 = arith.constant 4 : index
    %c0_48 = arith.constant 0 : index
    %c0_49 = arith.constant 0 : index
    %115 = vector.load %arg11[%c4_47, %c0_48, %c0_49] : memref<7x32x256xf32, #tpu.memory_space<vmem>>, vector<1x32x256xf32>
    %116 = vector.shape_cast %115 : vector<1x32x256xf32> to vector<32x256xf32>
    %117 = arith.mulf %114, %116 : vector<32x256xf32>
    %118 = arith.addf %108, %113 : vector<32x256xf32>
    %119 = arith.addf %109, %117 : vector<32x256xf32>
    %c2_i32 = arith.constant 2 : i32
    %120 = tpu.dynamic_rotate %73 by %c2_i32 dim 1 : vector<32x256xf32>, i32 -> vector<32x256xf32>
    %c5 = arith.constant 5 : index
    %c0_50 = arith.constant 0 : index
    %c0_51 = arith.constant 0 : index
    %121 = vector.load %arg10[%c5, %c0_50, %c0_51] : memref<7x32x256xf32, #tpu.memory_space<vmem>>, vector<1x32x256xf32>
    %122 = vector.shape_cast %121 : vector<1x32x256xf32> to vector<32x256xf32>
    %123 = arith.mulf %120, %122 : vector<32x256xf32>
    %c32_i32 = arith.constant 32 : i32
    %124 = tpu.dynamic_rotate %73 by %c32_i32 dim 1 : vector<32x256xf32>, i32 -> vector<32x256xf32>
    %c5_52 = arith.constant 5 : index
    %c0_53 = arith.constant 0 : index
    %c0_54 = arith.constant 0 : index
    %125 = vector.load %arg11[%c5_52, %c0_53, %c0_54] : memref<7x32x256xf32, #tpu.memory_space<vmem>>, vector<1x32x256xf32>
    %126 = vector.shape_cast %125 : vector<1x32x256xf32> to vector<32x256xf32>
    %127 = arith.mulf %124, %126 : vector<32x256xf32>
    %128 = arith.addf %118, %123 : vector<32x256xf32>
    %129 = arith.addf %119, %127 : vector<32x256xf32>
    %c3_i32 = arith.constant 3 : i32
    %130 = tpu.dynamic_rotate %73 by %c3_i32 dim 1 : vector<32x256xf32>, i32 -> vector<32x256xf32>
    %c6 = arith.constant 6 : index
    %c0_55 = arith.constant 0 : index
    %c0_56 = arith.constant 0 : index
    %131 = vector.load %arg10[%c6, %c0_55, %c0_56] : memref<7x32x256xf32, #tpu.memory_space<vmem>>, vector<1x32x256xf32>
    %132 = vector.shape_cast %131 : vector<1x32x256xf32> to vector<32x256xf32>
    %133 = arith.mulf %130, %132 : vector<32x256xf32>
    %c48_i32 = arith.constant 48 : i32
    %134 = tpu.dynamic_rotate %73 by %c48_i32 dim 1 : vector<32x256xf32>, i32 -> vector<32x256xf32>
    %c6_57 = arith.constant 6 : index
    %c0_58 = arith.constant 0 : index
    %c0_59 = arith.constant 0 : index
    %135 = vector.load %arg11[%c6_57, %c0_58, %c0_59] : memref<7x32x256xf32, #tpu.memory_space<vmem>>, vector<1x32x256xf32>
    %136 = vector.shape_cast %135 : vector<1x32x256xf32> to vector<32x256xf32>
    %137 = arith.mulf %134, %136 : vector<32x256xf32>
    %138 = arith.addf %128, %133 : vector<32x256xf32>
    %139 = arith.addf %129, %137 : vector<32x256xf32>
    %140 = vector.extract_strided_slice %2 {offsets = [0, 5], sizes = [32, 1], strides = [1, 1]} : vector<32x16xf32> to vector<32x1xf32>
    %c0_60 = arith.constant 0 : index
    %c0_61 = arith.constant 0 : index
    %141 = vector.load %arg5[%c0_60, %c0_61] : memref<32x32xbf16, #tpu.memory_space<vmem>>, vector<32x32xbf16>
    %142 = arith.truncf %138 : vector<32x256xf32> to vector<32x256xbf16>
    %cst_62 = arith.constant dense<0.000000e+00> : vector<32x256xf32>
    %143 = tpu.matmul %141, %142, %cst_62 {dimension_numbers = #tpu.dot_dimension_numbers<[1], [0], [0], [1], [0, 0, 1, 1], [], []>} : vector<32x32xbf16>, vector<32x256xbf16>, vector<32x256xf32> -> vector<32x256xf32>
    %144 = vector.broadcast %140 : vector<32x1xf32> to vector<32x256xf32>
    %145 = arith.addf %143, %144 : vector<32x256xf32>
    %cst_63 = arith.constant 5.000000e-01 : f32
    %146 = vector.broadcast %cst_63 : f32 to vector<32x256xf32>
    %147 = arith.mulf %146, %145 : vector<32x256xf32>
    %148 = arith.mulf %145, %145 : vector<32x256xf32>
    %149 = arith.mulf %148, %145 : vector<32x256xf32>
    %cst_64 = arith.constant 4.471500e-02 : f32
    %150 = vector.broadcast %cst_64 : f32 to vector<32x256xf32>
    %151 = arith.mulf %150, %149 : vector<32x256xf32>
    %152 = arith.addf %145, %151 : vector<32x256xf32>
    %cst_65 = arith.constant 0.797884583 : f32
    %153 = vector.broadcast %cst_65 : f32 to vector<32x256xf32>
    %154 = arith.mulf %153, %152 : vector<32x256xf32>
    %155 = math.tanh %154 : vector<32x256xf32>
    %cst_66 = arith.constant 1.000000e+00 : f32
    %156 = vector.broadcast %cst_66 : f32 to vector<32x256xf32>
    %157 = arith.addf %156, %155 : vector<32x256xf32>
    %158 = arith.mulf %147, %157 : vector<32x256xf32>
    %159 = vector.extract_strided_slice %2 {offsets = [0, 6], sizes = [32, 1], strides = [1, 1]} : vector<32x16xf32> to vector<32x1xf32>
    %c0_67 = arith.constant 0 : index
    %c0_68 = arith.constant 0 : index
    %160 = vector.load %arg6[%c0_67, %c0_68] : memref<32x32xbf16, #tpu.memory_space<vmem>>, vector<32x32xbf16>
    %161 = arith.truncf %139 : vector<32x256xf32> to vector<32x256xbf16>
    %cst_69 = arith.constant dense<0.000000e+00> : vector<32x256xf32>
    %162 = tpu.matmul %160, %161, %cst_69 {dimension_numbers = #tpu.dot_dimension_numbers<[1], [0], [0], [1], [0, 0, 1, 1], [], []>} : vector<32x32xbf16>, vector<32x256xbf16>, vector<32x256xf32> -> vector<32x256xf32>
    %163 = vector.broadcast %159 : vector<32x1xf32> to vector<32x256xf32>
    %164 = arith.addf %162, %163 : vector<32x256xf32>
    %cst_70 = arith.constant 5.000000e-01 : f32
    %165 = vector.broadcast %cst_70 : f32 to vector<32x256xf32>
    %166 = arith.mulf %165, %164 : vector<32x256xf32>
    %167 = arith.mulf %164, %164 : vector<32x256xf32>
    %168 = arith.mulf %167, %164 : vector<32x256xf32>
    %cst_71 = arith.constant 4.471500e-02 : f32
    %169 = vector.broadcast %cst_71 : f32 to vector<32x256xf32>
    %170 = arith.mulf %169, %168 : vector<32x256xf32>
    %171 = arith.addf %164, %170 : vector<32x256xf32>
    %cst_72 = arith.constant 0.797884583 : f32
    %172 = vector.broadcast %cst_72 : f32 to vector<32x256xf32>
    %173 = arith.mulf %172, %171 : vector<32x256xf32>
    %174 = math.tanh %173 : vector<32x256xf32>
    %cst_73 = arith.constant 1.000000e+00 : f32
    %175 = vector.broadcast %cst_73 : f32 to vector<32x256xf32>
    %176 = arith.addf %175, %174 : vector<32x256xf32>
    %177 = arith.mulf %166, %176 : vector<32x256xf32>
    %178 = arith.addf %158, %177 : vector<32x256xf32>
    %179 = vector.extract_strided_slice %2 {offsets = [0, 7], sizes = [32, 1], strides = [1, 1]} : vector<32x16xf32> to vector<32x1xf32>
    %180 = vector.extract_strided_slice %2 {offsets = [0, 8], sizes = [32, 1], strides = [1, 1]} : vector<32x16xf32> to vector<32x1xf32>
    %cst_74 = arith.constant dense<0.000000e+00> : vector<32xf32>
    %181 = vector.multi_reduction <add>, %178, %cst_74 [1] : vector<32x256xf32> to vector<32xf32>
    %182 = vector.shape_cast %181 : vector<32xf32> to vector<32x1xf32>
    %cst_75 = arith.constant dense<0.000000e+00> : vector<1xf32>
    %183 = vector.multi_reduction <add>, %182, %cst_75 [0] : vector<32x1xf32> to vector<1xf32>
    %184 = vector.shape_cast %183 : vector<1xf32> to vector<1x1xf32>
    %cst_76 = arith.constant 1.22070313E-4 : f32
    %185 = vector.broadcast %cst_76 : f32 to vector<1x1xf32>
    %186 = arith.mulf %184, %185 : vector<1x1xf32>
    %187 = vector.broadcast %186 : vector<1x1xf32> to vector<32x256xf32>
    %188 = arith.subf %178, %187 : vector<32x256xf32>
    %189 = arith.mulf %188, %188 : vector<32x256xf32>
    %cst_77 = arith.constant dense<0.000000e+00> : vector<32xf32>
    %190 = vector.multi_reduction <add>, %189, %cst_77 [1] : vector<32x256xf32> to vector<32xf32>
    %191 = vector.shape_cast %190 : vector<32xf32> to vector<32x1xf32>
    %cst_78 = arith.constant dense<0.000000e+00> : vector<1xf32>
    %192 = vector.multi_reduction <add>, %191, %cst_78 [0] : vector<32x1xf32> to vector<1xf32>
    %193 = vector.shape_cast %192 : vector<1xf32> to vector<1x1xf32>
    %cst_79 = arith.constant 1.22070313E-4 : f32
    %194 = vector.broadcast %cst_79 : f32 to vector<1x1xf32>
    %195 = arith.mulf %193, %194 : vector<1x1xf32>
    %cst_80 = arith.constant 9.99999974E-6 : f32
    %196 = vector.broadcast %cst_80 : f32 to vector<1x1xf32>
    %197 = arith.addf %195, %196 : vector<1x1xf32>
    %198 = math.rsqrt %197 : vector<1x1xf32>
    %199 = vector.broadcast %198 : vector<1x1xf32> to vector<32x256xf32>
    %200 = arith.mulf %188, %199 : vector<32x256xf32>
    %201 = vector.broadcast %179 : vector<32x1xf32> to vector<32x256xf32>
    %202 = arith.mulf %200, %201 : vector<32x256xf32>
    %203 = vector.broadcast %180 : vector<32x1xf32> to vector<32x256xf32>
    %204 = arith.addf %202, %203 : vector<32x256xf32>
    %205 = vector.extract_strided_slice %2 {offsets = [0, 9], sizes = [32, 1], strides = [1, 1]} : vector<32x16xf32> to vector<32x1xf32>
    %c0_81 = arith.constant 0 : index
    %c0_82 = arith.constant 0 : index
    %206 = vector.load %arg7[%c0_81, %c0_82] : memref<32x32xbf16, #tpu.memory_space<vmem>>, vector<32x32xbf16>
    %207 = arith.truncf %204 : vector<32x256xf32> to vector<32x256xbf16>
    %cst_83 = arith.constant dense<0.000000e+00> : vector<32x256xf32>
    %208 = tpu.matmul %206, %207, %cst_83 {dimension_numbers = #tpu.dot_dimension_numbers<[1], [0], [0], [1], [0, 0, 1, 1], [], []>} : vector<32x32xbf16>, vector<32x256xbf16>, vector<32x256xf32> -> vector<32x256xf32>
    %209 = vector.broadcast %205 : vector<32x1xf32> to vector<32x256xf32>
    %210 = arith.addf %208, %209 : vector<32x256xf32>
    %211 = arith.addf %1, %210 : vector<32x256xf32>
    %212 = vector.extract_strided_slice %2 {offsets = [0, 10], sizes = [32, 1], strides = [1, 1]} : vector<32x16xf32> to vector<32x1xf32>
    %213 = vector.extract_strided_slice %2 {offsets = [0, 11], sizes = [32, 1], strides = [1, 1]} : vector<32x16xf32> to vector<32x1xf32>
    %cst_84 = arith.constant dense<0.000000e+00> : vector<32xf32>
    %214 = vector.multi_reduction <add>, %211, %cst_84 [1] : vector<32x256xf32> to vector<32xf32>
    %215 = vector.shape_cast %214 : vector<32xf32> to vector<32x1xf32>
    %cst_85 = arith.constant dense<0.000000e+00> : vector<1xf32>
    %216 = vector.multi_reduction <add>, %215, %cst_85 [0] : vector<32x1xf32> to vector<1xf32>
    %217 = vector.shape_cast %216 : vector<1xf32> to vector<1x1xf32>
    %cst_86 = arith.constant 1.22070313E-4 : f32
    %218 = vector.broadcast %cst_86 : f32 to vector<1x1xf32>
    %219 = arith.mulf %217, %218 : vector<1x1xf32>
    %220 = vector.broadcast %219 : vector<1x1xf32> to vector<32x256xf32>
    %221 = arith.subf %211, %220 : vector<32x256xf32>
    %222 = arith.mulf %221, %221 : vector<32x256xf32>
    %cst_87 = arith.constant dense<0.000000e+00> : vector<32xf32>
    %223 = vector.multi_reduction <add>, %222, %cst_87 [1] : vector<32x256xf32> to vector<32xf32>
    %224 = vector.shape_cast %223 : vector<32xf32> to vector<32x1xf32>
    %cst_88 = arith.constant dense<0.000000e+00> : vector<1xf32>
    %225 = vector.multi_reduction <add>, %224, %cst_88 [0] : vector<32x1xf32> to vector<1xf32>
    %226 = vector.shape_cast %225 : vector<1xf32> to vector<1x1xf32>
    %cst_89 = arith.constant 1.22070313E-4 : f32
    %227 = vector.broadcast %cst_89 : f32 to vector<1x1xf32>
    %228 = arith.mulf %226, %227 : vector<1x1xf32>
    %cst_90 = arith.constant 9.99999974E-6 : f32
    %229 = vector.broadcast %cst_90 : f32 to vector<1x1xf32>
    %230 = arith.addf %228, %229 : vector<1x1xf32>
    %231 = math.rsqrt %230 : vector<1x1xf32>
    %232 = vector.broadcast %231 : vector<1x1xf32> to vector<32x256xf32>
    %233 = arith.mulf %221, %232 : vector<32x256xf32>
    %234 = vector.broadcast %212 : vector<32x1xf32> to vector<32x256xf32>
    %235 = arith.mulf %233, %234 : vector<32x256xf32>
    %236 = vector.broadcast %213 : vector<32x1xf32> to vector<32x256xf32>
    %237 = arith.addf %235, %236 : vector<32x256xf32>
    %c0_91 = arith.constant 0 : index
    %c0_92 = arith.constant 0 : index
    %238 = vector.load %arg3[%c0_91, %c0_92] : memref<128x1xf32, #tpu.memory_space<vmem>>, vector<128x1xf32>
    %c0_93 = arith.constant 0 : index
    %c0_94 = arith.constant 0 : index
    %239 = vector.load %arg8[%c0_93, %c0_94] : memref<128x32xbf16, #tpu.memory_space<vmem>>, vector<128x32xbf16>
    %240 = arith.truncf %237 : vector<32x256xf32> to vector<32x256xbf16>
    %cst_95 = arith.constant dense<0.000000e+00> : vector<128x256xf32>
    %241 = tpu.matmul %239, %240, %cst_95 {dimension_numbers = #tpu.dot_dimension_numbers<[1], [0], [0], [1], [0, 0, 1, 1], [], []>} : vector<128x32xbf16>, vector<32x256xbf16>, vector<128x256xf32> -> vector<128x256xf32>
    %242 = vector.broadcast %238 : vector<128x1xf32> to vector<128x256xf32>
    %243 = arith.addf %241, %242 : vector<128x256xf32>
    %cst_96 = arith.constant 5.000000e-01 : f32
    %244 = vector.broadcast %cst_96 : f32 to vector<128x256xf32>
    %245 = arith.mulf %244, %243 : vector<128x256xf32>
    %246 = arith.mulf %243, %243 : vector<128x256xf32>
    %247 = arith.mulf %246, %243 : vector<128x256xf32>
    %cst_97 = arith.constant 4.471500e-02 : f32
    %248 = vector.broadcast %cst_97 : f32 to vector<128x256xf32>
    %249 = arith.mulf %248, %247 : vector<128x256xf32>
    %250 = arith.addf %243, %249 : vector<128x256xf32>
    %cst_98 = arith.constant 0.797884583 : f32
    %251 = vector.broadcast %cst_98 : f32 to vector<128x256xf32>
    %252 = arith.mulf %251, %250 : vector<128x256xf32>
    %253 = math.tanh %252 : vector<128x256xf32>
    %cst_99 = arith.constant 1.000000e+00 : f32
    %254 = vector.broadcast %cst_99 : f32 to vector<128x256xf32>
    %255 = arith.addf %254, %253 : vector<128x256xf32>
    %256 = arith.mulf %245, %255 : vector<128x256xf32>
    %257 = vector.extract_strided_slice %2 {offsets = [0, 12], sizes = [32, 1], strides = [1, 1]} : vector<32x16xf32> to vector<32x1xf32>
    %c0_100 = arith.constant 0 : index
    %c0_101 = arith.constant 0 : index
    %258 = vector.load %arg9[%c0_100, %c0_101] : memref<32x128xbf16, #tpu.memory_space<vmem>>, vector<32x128xbf16>
    %259 = arith.truncf %256 : vector<128x256xf32> to vector<128x256xbf16>
    %cst_102 = arith.constant dense<0.000000e+00> : vector<32x256xf32>
    %260 = tpu.matmul %258, %259, %cst_102 {dimension_numbers = #tpu.dot_dimension_numbers<[1], [0], [0], [1], [0, 0, 1, 1], [], []>} : vector<32x128xbf16>, vector<128x256xbf16>, vector<32x256xf32> -> vector<32x256xf32>
    %261 = vector.broadcast %257 : vector<32x1xf32> to vector<32x256xf32>
    %262 = arith.addf %260, %261 : vector<32x256xf32>
    %263 = arith.addf %211, %262 : vector<32x256xf32>
    %c0_103 = arith.constant 0 : index
    %c0_104 = arith.constant 0 : index
    %c0_105 = arith.constant 0 : index
    %264 = vector.load %arg12[%c0_103, %c0_104, %c0_105] : memref<1x32x256xf32, #tpu.memory_space<vmem>>, vector<1x32x256xf32>
    %265 = vector.shape_cast %264 : vector<1x32x256xf32> to vector<32x256xf32>
    %266 = vector.shape_cast %263 : vector<32x256xf32> to vector<1x32x256xf32>
    tpu.vector_store %arg12[%c0_103, %c0_104, %c0_105], %266 {strides = array<i32>} : memref<1x32x256xf32, #tpu.memory_space<vmem>>, vector<1x32x256xf32>,
    return
  }
  func.func @transform_0(%arg0: i32) -> (i32, i32, i32) {
    %c0_i32 = arith.constant 0 : i32
    %c0_i32_0 = arith.constant 0 : i32
    %c0_i32_1 = arith.constant 0 : i32
    return %arg0, %c0_i32, %c0_i32_0 : i32, i32, i32
  }
  func.func @transform_1(%arg0: i32) -> (i32, i32) {
    %c0_i32 = arith.constant 0 : i32
    %c0_i32_0 = arith.constant 0 : i32
    %c0_i32_1 = arith.constant 0 : i32
    return %c0_i32, %c0_i32_0 : i32, i32
  }
  func.func @transform_2(%arg0: i32) -> (i32, i32) {
    %c0_i32 = arith.constant 0 : i32
    %c0_i32_0 = arith.constant 0 : i32
    %c0_i32_1 = arith.constant 0 : i32
    return %c0_i32, %c0_i32_0 : i32, i32
  }
  func.func @transform_3(%arg0: i32) -> (i32, i32) {
    %c0_i32 = arith.constant 0 : i32
    %c0_i32_0 = arith.constant 0 : i32
    %c0_i32_1 = arith.constant 0 : i32
    return %c0_i32, %c0_i32_0 : i32, i32
  }
  func.func @transform_4(%arg0: i32) -> (i32, i32) {
    %c0_i32 = arith.constant 0 : i32
    %c0_i32_0 = arith.constant 0 : i32
    %c0_i32_1 = arith.constant 0 : i32
    return %c0_i32, %c0_i32_0 : i32, i32
  }
  func.func @transform_5(%arg0: i32) -> (i32, i32) {
    %c0_i32 = arith.constant 0 : i32
    %c0_i32_0 = arith.constant 0 : i32
    %c0_i32_1 = arith.constant 0 : i32
    return %c0_i32, %c0_i32_0 : i32, i32
  }
  func.func @transform_6(%arg0: i32) -> (i32, i32) {
    %c0_i32 = arith.constant 0 : i32
    %c0_i32_0 = arith.constant 0 : i32
    %c0_i32_1 = arith.constant 0 : i32
    return %c0_i32, %c0_i32_0 : i32, i32
  }
  func.func @transform_7(%arg0: i32) -> (i32, i32) {
    %c0_i32 = arith.constant 0 : i32
    %c0_i32_0 = arith.constant 0 : i32
    %c0_i32_1 = arith.constant 0 : i32
    return %c0_i32, %c0_i32_0 : i32, i32
  }
  func.func @transform_8(%arg0: i32) -> (i32, i32) {
    %c0_i32 = arith.constant 0 : i32
    %c0_i32_0 = arith.constant 0 : i32
    %c0_i32_1 = arith.constant 0 : i32
    return %c0_i32, %c0_i32_0 : i32, i32
  }
  func.func @transform_9(%arg0: i32) -> (i32, i32, i32) {
    %c0_i32 = arith.constant 0 : i32
    %c0_i32_0 = arith.constant 0 : i32
    %c0_i32_1 = arith.constant 0 : i32
    %c0_i32_2 = arith.constant 0 : i32
    return %c0_i32, %c0_i32_0, %c0_i32_1 : i32, i32, i32
  }
  func.func @transform_10(%arg0: i32) -> (i32, i32, i32) {
    %c0_i32 = arith.constant 0 : i32
    %c0_i32_0 = arith.constant 0 : i32
    %c0_i32_1 = arith.constant 0 : i32
    %c0_i32_2 = arith.constant 0 : i32
    return %c0_i32, %c0_i32_0, %c0_i32_1 : i32, i32, i32
  }
  func.func @transform_11(%arg0: i32) -> (i32, i32, i32) {
    %c0_i32 = arith.constant 0 : i32
    %c0_i32_0 = arith.constant 0 : i32
    %c0_i32_1 = arith.constant 0 : i32
    return %arg0, %c0_i32, %c0_i32_0 : i32, i32, i32
  }
}

module attributes {stable_mosaic.version = 11 : i64} {
  func.func @_axial_block_kernel(%arg0: i32, %arg1: memref<1x32x256xf32, #tpu.memory_space<vmem>>, %arg2: memref<32x16xf32, #tpu.memory_space<vmem>>, %arg3: memref<128x1xf32, #tpu.memory_space<vmem>>, %arg4: memref<32x32xbf16, #tpu.memory_space<vmem>>, %arg5: memref<32x32xbf16, #tpu.memory_space<vmem>>, %arg6: memref<32x32xbf16, #tpu.memory_space<vmem>>, %arg7: memref<32x32xbf16, #tpu.memory_space<vmem>>, %arg8: memref<128x32xbf16, #tpu.memory_space<vmem>>, %arg9: memref<32x128xbf16, #tpu.memory_space<vmem>>, %arg10: memref<7x32x256xf32, #tpu.memory_space<vmem>>, %arg11: memref<7x32x256xf32, #tpu.memory_space<vmem>>, %arg12: memref<1x32x256xf32, #tpu.memory_space<vmem>>) attributes {dimension_semantics = [#tpu.dimension_semantics<parallel>], iteration_bounds = array<i64: 2>, scalar_prefetch = 0 : i64, scratch_operands = 0 : i64, tpu.core_type = #tpu.core_type<tc>, window_params = [{transform_indices = @transform_0, window_bounds = array<i64: 1, 32, 256>}, {pipeline_mode = #tpu.pipeline_mode<synchronous>, transform_indices = @transform_1, window_bounds = array<i64: 32, 16>}, {pipeline_mode = #tpu.pipeline_mode<synchronous>, transform_indices = @transform_2, window_bounds = array<i64: 128, 1>}, {pipeline_mode = #tpu.pipeline_mode<synchronous>, transform_indices = @transform_3, window_bounds = array<i64: 32, 32>}, {pipeline_mode = #tpu.pipeline_mode<synchronous>, transform_indices = @transform_4, window_bounds = array<i64: 32, 32>}, {pipeline_mode = #tpu.pipeline_mode<synchronous>, transform_indices = @transform_5, window_bounds = array<i64: 32, 32>}, {pipeline_mode = #tpu.pipeline_mode<synchronous>, transform_indices = @transform_6, window_bounds = array<i64: 32, 32>}, {pipeline_mode = #tpu.pipeline_mode<synchronous>, transform_indices = @transform_7, window_bounds = array<i64: 128, 32>}, {pipeline_mode = #tpu.pipeline_mode<synchronous>, transform_indices = @transform_8, window_bounds = array<i64: 32, 128>}, {pipeline_mode = #tpu.pipeline_mode<synchronous>, transform_indices = @transform_9, window_bounds = array<i64: 7, 32, 256>}, {pipeline_mode = #tpu.pipeline_mode<synchronous>, transform_indices = @transform_10, window_bounds = array<i64: 7, 32, 256>}, {transform_indices = @transform_11, window_bounds = array<i64: 1, 32, 256>}]} {
    %c0 = arith.constant 0 : index
    %c0_0 = arith.constant 0 : index
    %c0_1 = arith.constant 0 : index
    %0 = vector.load %arg1[%c0, %c0_0, %c0_1] : memref<1x32x256xf32, #tpu.memory_space<vmem>>, vector<1x32x256xf32>
    %1 = vector.shape_cast %0 : vector<1x32x256xf32> to vector<32x256xf32>
    %c0_2 = arith.constant 0 : index
    %c0_3 = arith.constant 0 : index
    %2 = vector.load %arg2[%c0_2, %c0_3] : memref<32x16xf32, #tpu.memory_space<vmem>>, vector<32x16xf32>
    %3 = vector.extract_strided_slice %2 {offsets = [0, 0], sizes = [32, 1], strides = [1, 1]} : vector<32x16xf32> to vector<32x1xf32>
    %4 = vector.extract_strided_slice %2 {offsets = [0, 1], sizes = [32, 1], strides = [1, 1]} : vector<32x16xf32> to vector<32x1xf32>
    %cst = arith.constant dense<0.000000e+00> : vector<32xf32>
    %5 = vector.multi_reduction <add>, %1, %cst [1] : vector<32x256xf32> to vector<32xf32>
    %6 = vector.shape_cast %5 : vector<32xf32> to vector<32x1xf32>
    %cst_4 = arith.constant dense<0.000000e+00> : vector<1xf32>
    %7 = vector.multi_reduction <add>, %6, %cst_4 [0] : vector<32x1xf32> to vector<1xf32>
    %8 = vector.shape_cast %7 : vector<1xf32> to vector<1x1xf32>
    %cst_5 = arith.constant 1.22070313E-4 : f32
    %9 = vector.broadcast %cst_5 : f32 to vector<1x1xf32>
    %10 = arith.mulf %8, %9 : vector<1x1xf32>
    %11 = vector.broadcast %10 : vector<1x1xf32> to vector<32x256xf32>
    %12 = arith.subf %1, %11 : vector<32x256xf32>
    %13 = arith.mulf %12, %12 : vector<32x256xf32>
    %cst_6 = arith.constant dense<0.000000e+00> : vector<32xf32>
    %14 = vector.multi_reduction <add>, %13, %cst_6 [1] : vector<32x256xf32> to vector<32xf32>
    %15 = vector.shape_cast %14 : vector<32xf32> to vector<32x1xf32>
    %cst_7 = arith.constant dense<0.000000e+00> : vector<1xf32>
    %16 = vector.multi_reduction <add>, %15, %cst_7 [0] : vector<32x1xf32> to vector<1xf32>
    %17 = vector.shape_cast %16 : vector<1xf32> to vector<1x1xf32>
    %cst_8 = arith.constant 1.22070313E-4 : f32
    %18 = vector.broadcast %cst_8 : f32 to vector<1x1xf32>
    %19 = arith.mulf %17, %18 : vector<1x1xf32>
    %cst_9 = arith.constant 9.99999974E-6 : f32
    %20 = vector.broadcast %cst_9 : f32 to vector<1x1xf32>
    %21 = arith.addf %19, %20 : vector<1x1xf32>
    %22 = math.rsqrt %21 : vector<1x1xf32>
    %23 = vector.broadcast %22 : vector<1x1xf32> to vector<32x256xf32>
    %24 = arith.mulf %12, %23 : vector<32x256xf32>
    %25 = vector.broadcast %3 : vector<32x1xf32> to vector<32x256xf32>
    %26 = arith.mulf %24, %25 : vector<32x256xf32>
    %27 = vector.broadcast %4 : vector<32x1xf32> to vector<32x256xf32>
    %28 = arith.addf %26, %27 : vector<32x256xf32>
    %29 = vector.extract_strided_slice %2 {offsets = [0, 2], sizes = [32, 1], strides = [1, 1]} : vector<32x16xf32> to vector<32x1xf32>
    %c0_10 = arith.constant 0 : index
    %c0_11 = arith.constant 0 : index
    %30 = vector.load %arg4[%c0_10, %c0_11] : memref<32x32xbf16, #tpu.memory_space<vmem>>, vector<32x32xbf16>
    %31 = arith.truncf %28 : vector<32x256xf32> to vector<32x256xbf16>
    %cst_12 = arith.constant dense<0.000000e+00> : vector<32x256xf32>
    %32 = tpu.matmul %30, %31, %cst_12 {dimension_numbers = #tpu.dot_dimension_numbers<[1], [0], [0], [1], [0, 0, 1, 1], [], []>} : vector<32x32xbf16>, vector<32x256xbf16>, vector<32x256xf32> -> vector<32x256xf32>
    %33 = vector.broadcast %29 : vector<32x1xf32> to vector<32x256xf32>
    %34 = arith.addf %32, %33 : vector<32x256xf32>
    %35 = vector.extract_strided_slice %2 {offsets = [0, 3], sizes = [32, 1], strides = [1, 1]} : vector<32x16xf32> to vector<32x1xf32>
    %36 = vector.extract_strided_slice %2 {offsets = [0, 4], sizes = [32, 1], strides = [1, 1]} : vector<32x16xf32> to vector<32x1xf32>
    %cst_13 = arith.constant dense<0.000000e+00> : vector<32xf32>
    %37 = vector.multi_reduction <add>, %34, %cst_13 [1] : vector<32x256xf32> to vector<32xf32>
    %38 = vector.shape_cast %37 : vector<32xf32> to vector<32x1xf32>
    %cst_14 = arith.constant dense<0.000000e+00> : vector<1xf32>
    %39 = vector.multi_reduction <add>, %38, %cst_14 [0] : vector<32x1xf32> to vector<1xf32>
    %40 = vector.shape_cast %39 : vector<1xf32> to vector<1x1xf32>
    %cst_15 = arith.constant 1.22070313E-4 : f32
    %41 = vector.broadcast %cst_15 : f32 to vector<1x1xf32>
    %42 = arith.mulf %40, %41 : vector<1x1xf32>
    %43 = vector.broadcast %42 : vector<1x1xf32> to vector<32x256xf32>
    %44 = arith.subf %34, %43 : vector<32x256xf32>
    %45 = arith.mulf %44, %44 : vector<32x256xf32>
    %cst_16 = arith.constant dense<0.000000e+00> : vector<32xf32>
    %46 = vector.multi_reduction <add>, %45, %cst_16 [1] : vector<32x256xf32> to vector<32xf32>
    %47 = vector.shape_cast %46 : vector<32xf32> to vector<32x1xf32>
    %cst_17 = arith.constant dense<0.000000e+00> : vector<1xf32>
    %48 = vector.multi_reduction <add>, %47, %cst_17 [0] : vector<32x1xf32> to vector<1xf32>
    %49 = vector.shape_cast %48 : vector<1xf32> to vector<1x1xf32>
    %cst_18 = arith.constant 1.22070313E-4 : f32
    %50 = vector.broadcast %cst_18 : f32 to vector<1x1xf32>
    %51 = arith.mulf %49, %50 : vector<1x1xf32>
    %cst_19 = arith.constant 9.99999974E-6 : f32
    %52 = vector.broadcast %cst_19 : f32 to vector<1x1xf32>
    %53 = arith.addf %51, %52 : vector<1x1xf32>
    %54 = math.rsqrt %53 : vector<1x1xf32>
    %55 = vector.broadcast %54 : vector<1x1xf32> to vector<32x256xf32>
    %56 = arith.mulf %44, %55 : vector<32x256xf32>
    %57 = vector.broadcast %35 : vector<32x1xf32> to vector<32x256xf32>
    %58 = arith.mulf %56, %57 : vector<32x256xf32>
    %59 = vector.broadcast %36 : vector<32x1xf32> to vector<32x256xf32>
    %60 = arith.addf %58, %59 : vector<32x256xf32>
    %cst_20 = arith.constant 5.000000e-01 : f32
    %61 = vector.broadcast %cst_20 : f32 to vector<32x256xf32>
    %62 = arith.mulf %61, %60 : vector<32x256xf32>
    %63 = arith.mulf %60, %60 : vector<32x256xf32>
    %64 = arith.mulf %63, %60 : vector<32x256xf32>
    %cst_21 = arith.constant 4.471500e-02 : f32
    %65 = vector.broadcast %cst_21 : f32 to vector<32x256xf32>
    %66 = arith.mulf %65, %64 : vector<32x256xf32>
    %67 = arith.addf %60, %66 : vector<32x256xf32>
    %cst_22 = arith.constant 0.797884583 : f32
    %68 = vector.broadcast %cst_22 : f32 to vector<32x256xf32>
    %69 = arith.mulf %68, %67 : vector<32x256xf32>
    %70 = math.tanh %69 : vector<32x256xf32>
    %cst_23 = arith.constant 1.000000e+00 : f32
    %71 = vector.broadcast %cst_23 : f32 to vector<32x256xf32>
    %72 = arith.addf %71, %70 : vector<32x256xf32>
    %73 = arith.mulf %62, %72 : vector<32x256xf32>
    %c253_i32 = arith.constant 253 : i32
    %74 = tpu.dynamic_rotate %73 by %c253_i32 dim 1 : vector<32x256xf32>, i32 -> vector<32x256xf32>
    %c0_24 = arith.constant 0 : index
    %c0_25 = arith.constant 0 : index
    %c0_26 = arith.constant 0 : index
    %75 = vector.load %arg10[%c0_24, %c0_25, %c0_26] : memref<7x32x256xf32, #tpu.memory_space<vmem>>, vector<1x32x256xf32>
    %76 = vector.shape_cast %75 : vector<1x32x256xf32> to vector<32x256xf32>
    %77 = arith.mulf %74, %76 : vector<32x256xf32>
    %c208_i32 = arith.constant 208 : i32
    %78 = tpu.dynamic_rotate %73 by %c208_i32 dim 1 : vector<32x256xf32>, i32 -> vector<32x256xf32>
    %c0_27 = arith.constant 0 : index
    %c0_28 = arith.constant 0 : index
    %c0_29 = arith.constant 0 : index
    %79 = vector.load %arg11[%c0_27, %c0_28, %c0_29] : memref<7x32x256xf32, #tpu.memory_space<vmem>>, vector<1x32x256xf32>
    %80 = vector.shape_cast %79 : vector<1x32x256xf32> to vector<32x256xf32>
    %81 = arith.mulf %78, %80 : vector<32x256xf32>
    %c254_i32 = arith.constant 254 : i32
    %82 = tpu.dynamic_rotate %73 by %c254_i32 dim 1 : vector<32x256xf32>, i32 -> vector<32x256xf32>
    %c1 = arith.constant 1 : index
    %c0_30 = arith.constant 0 : index
    %c0_31 = arith.constant 0 : index
    %83 = vector.load %arg10[%c1, %c0_30, %c0_31] : memref<7x32x256xf32, #tpu.memory_space<vmem>>, vector<1x32x256xf32>
    %84 = vector.shape_cast %83 : vector<1x32x256xf32> to vector<32x256xf32>
    %85 = arith.mulf %82, %84 : vector<32x256xf32>
    %c224_i32 = arith.constant 224 : i32
    %86 = tpu.dynamic_rotate %73 by %c224_i32 dim 1 : vector<32x256xf32>, i32 -> vector<32x256xf32>
    %c1_32 = arith.constant 1 : index
    %c0_33 = arith.constant 0 : index
    %c0_34 = arith.constant 0 : index
    %87 = vector.load %arg11[%c1_32, %c0_33, %c0_34] : memref<7x32x256xf32, #tpu.memory_space<vmem>>, vector<1x32x256xf32>
    %88 = vector.shape_cast %87 : vector<1x32x256xf32> to vector<32x256xf32>
    %89 = arith.mulf %86, %88 : vector<32x256xf32>
    %90 = arith.addf %77, %85 : vector<32x256xf32>
    %91 = arith.addf %81, %89 : vector<32x256xf32>
    %c255_i32 = arith.constant 255 : i32
    %92 = tpu.dynamic_rotate %73 by %c255_i32 dim 1 : vector<32x256xf32>, i32 -> vector<32x256xf32>
    %c2 = arith.constant 2 : index
    %c0_35 = arith.constant 0 : index
    %c0_36 = arith.constant 0 : index
    %93 = vector.load %arg10[%c2, %c0_35, %c0_36] : memref<7x32x256xf32, #tpu.memory_space<vmem>>, vector<1x32x256xf32>
    %94 = vector.shape_cast %93 : vector<1x32x256xf32> to vector<32x256xf32>
    %95 = arith.mulf %92, %94 : vector<32x256xf32>
    %c240_i32 = arith.constant 240 : i32
    %96 = tpu.dynamic_rotate %73 by %c240_i32 dim 1 : vector<32x256xf32>, i32 -> vector<32x256xf32>
    %c2_37 = arith.constant 2 : index
    %c0_38 = arith.constant 0 : index
    %c0_39 = arith.constant 0 : index
    %97 = vector.load %arg11[%c2_37, %c0_38, %c0_39] : memref<7x32x256xf32, #tpu.memory_space<vmem>>, vector<1x32x256xf32>
    %98 = vector.shape_cast %97 : vector<1x32x256xf32> to vector<32x256xf32>
    %99 = arith.mulf %96, %98 : vector<32x256xf32>
    %100 = arith.addf %90, %95 : vector<32x256xf32>
    %101 = arith.addf %91, %99 : vector<32x256xf32>
    %c3 = arith.constant 3 : index
    %c0_40 = arith.constant 0 : index
    %c0_41 = arith.constant 0 : index
    %102 = vector.load %arg10[%c3, %c0_40, %c0_41] : memref<7x32x256xf32, #tpu.memory_space<vmem>>, vector<1x32x256xf32>
    %103 = vector.shape_cast %102 : vector<1x32x256xf32> to vector<32x256xf32>
    %104 = arith.mulf %73, %103 : vector<32x256xf32>
    %c3_42 = arith.constant 3 : index
    %c0_43 = arith.constant 0 : index
    %c0_44 = arith.constant 0 : index
    %105 = vector.load %arg11[%c3_42, %c0_43, %c0_44] : memref<7x32x256xf32, #tpu.memory_space<vmem>>, vector<1x32x256xf32>
    %106 = vector.shape_cast %105 : vector<1x32x256xf32> to vector<32x256xf32>
    %107 = arith.mulf %73, %106 : vector<32x256xf32>
    %108 = arith.addf %100, %104 : vector<32x256xf32>
    %109 = arith.addf %101, %107 : vector<32x256xf32>
    %c1_i32 = arith.constant 1 : i32
    %110 = tpu.dynamic_rotate %73 by %c1_i32 dim 1 : vector<32x256xf32>, i32 -> vector<32x256xf32>
    %c4 = arith.constant 4 : index
    %c0_45 = arith.constant 0 : index
    %c0_46 = arith.constant 0 : index
    %111 = vector.load %arg10[%c4, %c0_45, %c0_46] : memref<7x32x256xf32, #tpu.memory_space<vmem>>, vector<1x32x256xf32>
    %112 = vector.shape_cast %111 : vector<1x32x256xf32> to vector<32x256xf32>
    %113 = arith.mulf %110, %112 : vector<32x256xf32>
    %c16_i32 = arith.constant 16 : i32
    %114 = tpu.dynamic_rotate %73 by %c16_i32 dim 1 : vector<32x256xf32>, i32 -> vector<32x256xf32>
    %c4_47 = arith.constant 4 : index
    %c0_48 = arith.constant 0 : index
    %c0_49 = arith.constant 0 : index
    %115 = vector.load %arg11[%c4_47, %c0_48, %c0_49] : memref<7x32x256xf32, #tpu.memory_space<vmem>>, vector<1x32x256xf32>
    %116 = vector.shape_cast %115 : vector<1x32x256xf32> to vector<32x256xf32>
    %117 = arith.mulf %114, %116 : vector<32x256xf32>
    %118 = arith.addf %108, %113 : vector<32x256xf32>
    %119 = arith.addf %109, %117 : vector<32x256xf32>
    %c2_i32 = arith.constant 2 : i32
    %120 = tpu.dynamic_rotate %73 by %c2_i32 dim 1 : vector<32x256xf32>, i32 -> vector<32x256xf32>
    %c5 = arith.constant 5 : index
    %c0_50 = arith.constant 0 : index
    %c0_51 = arith.constant 0 : index
    %121 = vector.load %arg10[%c5, %c0_50, %c0_51] : memref<7x32x256xf32, #tpu.memory_space<vmem>>, vector<1x32x256xf32>
    %122 = vector.shape_cast %121 : vector<1x32x256xf32> to vector<32x256xf32>
    %123 = arith.mulf %120, %122 : vector<32x256xf32>
    %c32_i32 = arith.constant 32 : i32
    %124 = tpu.dynamic_rotate %73 by %c32_i32 dim 1 : vector<32x256xf32>, i32 -> vector<32x256xf32>
    %c5_52 = arith.constant 5 : index
    %c0_53 = arith.constant 0 : index
    %c0_54 = arith.constant 0 : index
    %125 = vector.load %arg11[%c5_52, %c0_53, %c0_54] : memref<7x32x256xf32, #tpu.memory_space<vmem>>, vector<1x32x256xf32>
    %126 = vector.shape_cast %125 : vector<1x32x256xf32> to vector<32x256xf32>
    %127 = arith.mulf %124, %126 : vector<32x256xf32>
    %128 = arith.addf %118, %123 : vector<32x256xf32>
    %129 = arith.addf %119, %127 : vector<32x256xf32>
    %c3_i32 = arith.constant 3 : i32
    %130 = tpu.dynamic_rotate %73 by %c3_i32 dim 1 : vector<32x256xf32>, i32 -> vector<32x256xf32>
    %c6 = arith.constant 6 : index
    %c0_55 = arith.constant 0 : index
    %c0_56 = arith.constant 0 : index
    %131 = vector.load %arg10[%c6, %c0_55, %c0_56] : memref<7x32x256xf32, #tpu.memory_space<vmem>>, vector<1x32x256xf32>
    %132 = vector.shape_cast %131 : vector<1x32x256xf32> to vector<32x256xf32>
    %133 = arith.mulf %130, %132 : vector<32x256xf32>
    %c48_i32 = arith.constant 48 : i32
    %134 = tpu.dynamic_rotate %73 by %c48_i32 dim 1 : vector<32x256xf32>, i32 -> vector<32x256xf32>
    %c6_57 = arith.constant 6 : index
    %c0_58 = arith.constant 0 : index
    %c0_59 = arith.constant 0 : index
    %135 = vector.load %arg11[%c6_57, %c0_58, %c0_59] : memref<7x32x256xf32, #tpu.memory_space<vmem>>, vector<1x32x256xf32>
    %136 = vector.shape_cast %135 : vector<1x32x256xf32> to vector<32x256xf32>
    %137 = arith.mulf %134, %136 : vector<32x256xf32>
    %138 = arith.addf %128, %133 : vector<32x256xf32>
    %139 = arith.addf %129, %137 : vector<32x256xf32>
    %140 = vector.extract_strided_slice %2 {offsets = [0, 5], sizes = [32, 1], strides = [1, 1]} : vector<32x16xf32> to vector<32x1xf32>
    %c0_60 = arith.constant 0 : index
    %c0_61 = arith.constant 0 : index
    %141 = vector.load %arg5[%c0_60, %c0_61] : memref<32x32xbf16, #tpu.memory_space<vmem>>, vector<32x32xbf16>
    %142 = arith.truncf %138 : vector<32x256xf32> to vector<32x256xbf16>
    %cst_62 = arith.constant dense<0.000000e+00> : vector<32x256xf32>
    %143 = tpu.matmul %141, %142, %cst_62 {dimension_numbers = #tpu.dot_dimension_numbers<[1], [0], [0], [1], [0, 0, 1, 1], [], []>} : vector<32x32xbf16>, vector<32x256xbf16>, vector<32x256xf32> -> vector<32x256xf32>
    %144 = vector.broadcast %140 : vector<32x1xf32> to vector<32x256xf32>
    %145 = arith.addf %143, %144 : vector<32x256xf32>
    %cst_63 = arith.constant 5.000000e-01 : f32
    %146 = vector.broadcast %cst_63 : f32 to vector<32x256xf32>
    %147 = arith.mulf %146, %145 : vector<32x256xf32>
    %148 = arith.mulf %145, %145 : vector<32x256xf32>
    %149 = arith.mulf %148, %145 : vector<32x256xf32>
    %cst_64 = arith.constant 4.471500e-02 : f32
    %150 = vector.broadcast %cst_64 : f32 to vector<32x256xf32>
    %151 = arith.mulf %150, %149 : vector<32x256xf32>
    %152 = arith.addf %145, %151 : vector<32x256xf32>
    %cst_65 = arith.constant 0.797884583 : f32
    %153 = vector.broadcast %cst_65 : f32 to vector<32x256xf32>
    %154 = arith.mulf %153, %152 : vector<32x256xf32>
    %155 = math.tanh %154 : vector<32x256xf32>
    %cst_66 = arith.constant 1.000000e+00 : f32
    %156 = vector.broadcast %cst_66 : f32 to vector<32x256xf32>
    %157 = arith.addf %156, %155 : vector<32x256xf32>
    %158 = arith.mulf %147, %157 : vector<32x256xf32>
    %159 = vector.extract_strided_slice %2 {offsets = [0, 6], sizes = [32, 1], strides = [1, 1]} : vector<32x16xf32> to vector<32x1xf32>
    %c0_67 = arith.constant 0 : index
    %c0_68 = arith.constant 0 : index
    %160 = vector.load %arg6[%c0_67, %c0_68] : memref<32x32xbf16, #tpu.memory_space<vmem>>, vector<32x32xbf16>
    %161 = arith.truncf %139 : vector<32x256xf32> to vector<32x256xbf16>
    %cst_69 = arith.constant dense<0.000000e+00> : vector<32x256xf32>
    %162 = tpu.matmul %160, %161, %cst_69 {dimension_numbers = #tpu.dot_dimension_numbers<[1], [0], [0], [1], [0, 0, 1, 1], [], []>} : vector<32x32xbf16>, vector<32x256xbf16>, vector<32x256xf32> -> vector<32x256xf32>
    %163 = vector.broadcast %159 : vector<32x1xf32> to vector<32x256xf32>
    %164 = arith.addf %162, %163 : vector<32x256xf32>
    %cst_70 = arith.constant 5.000000e-01 : f32
    %165 = vector.broadcast %cst_70 : f32 to vector<32x256xf32>
    %166 = arith.mulf %165, %164 : vector<32x256xf32>
    %167 = arith.mulf %164, %164 : vector<32x256xf32>
    %168 = arith.mulf %167, %164 : vector<32x256xf32>
    %cst_71 = arith.constant 4.471500e-02 : f32
    %169 = vector.broadcast %cst_71 : f32 to vector<32x256xf32>
    %170 = arith.mulf %169, %168 : vector<32x256xf32>
    %171 = arith.addf %164, %170 : vector<32x256xf32>
    %cst_72 = arith.constant 0.797884583 : f32
    %172 = vector.broadcast %cst_72 : f32 to vector<32x256xf32>
    %173 = arith.mulf %172, %171 : vector<32x256xf32>
    %174 = math.tanh %173 : vector<32x256xf32>
    %cst_73 = arith.constant 1.000000e+00 : f32
    %175 = vector.broadcast %cst_73 : f32 to vector<32x256xf32>
    %176 = arith.addf %175, %174 : vector<32x256xf32>
    %177 = arith.mulf %166, %176 : vector<32x256xf32>
    %178 = arith.addf %158, %177 : vector<32x256xf32>
    %179 = vector.extract_strided_slice %2 {offsets = [0, 7], sizes = [32, 1], strides = [1, 1]} : vector<32x16xf32> to vector<32x1xf32>
    %180 = vector.extract_strided_slice %2 {offsets = [0, 8], sizes = [32, 1], strides = [1, 1]} : vector<32x16xf32> to vector<32x1xf32>
    %cst_74 = arith.constant dense<0.000000e+00> : vector<32xf32>
    %181 = vector.multi_reduction <add>, %178, %cst_74 [1] : vector<32x256xf32> to vector<32xf32>
    %182 = vector.shape_cast %181 : vector<32xf32> to vector<32x1xf32>
    %cst_75 = arith.constant dense<0.000000e+00> : vector<1xf32>
    %183 = vector.multi_reduction <add>, %182, %cst_75 [0] : vector<32x1xf32> to vector<1xf32>
    %184 = vector.shape_cast %183 : vector<1xf32> to vector<1x1xf32>
    %cst_76 = arith.constant 1.22070313E-4 : f32
    %185 = vector.broadcast %cst_76 : f32 to vector<1x1xf32>
    %186 = arith.mulf %184, %185 : vector<1x1xf32>
    %187 = vector.broadcast %186 : vector<1x1xf32> to vector<32x256xf32>
    %188 = arith.subf %178, %187 : vector<32x256xf32>
    %189 = arith.mulf %188, %188 : vector<32x256xf32>
    %cst_77 = arith.constant dense<0.000000e+00> : vector<32xf32>
    %190 = vector.multi_reduction <add>, %189, %cst_77 [1] : vector<32x256xf32> to vector<32xf32>
    %191 = vector.shape_cast %190 : vector<32xf32> to vector<32x1xf32>
    %cst_78 = arith.constant dense<0.000000e+00> : vector<1xf32>
    %192 = vector.multi_reduction <add>, %191, %cst_78 [0] : vector<32x1xf32> to vector<1xf32>
    %193 = vector.shape_cast %192 : vector<1xf32> to vector<1x1xf32>
    %cst_79 = arith.constant 1.22070313E-4 : f32
    %194 = vector.broadcast %cst_79 : f32 to vector<1x1xf32>
    %195 = arith.mulf %193, %194 : vector<1x1xf32>
    %cst_80 = arith.constant 9.99999974E-6 : f32
    %196 = vector.broadcast %cst_80 : f32 to vector<1x1xf32>
    %197 = arith.addf %195, %196 : vector<1x1xf32>
    %198 = math.rsqrt %197 : vector<1x1xf32>
    %199 = vector.broadcast %198 : vector<1x1xf32> to vector<32x256xf32>
    %200 = arith.mulf %188, %199 : vector<32x256xf32>
    %201 = vector.broadcast %179 : vector<32x1xf32> to vector<32x256xf32>
    %202 = arith.mulf %200, %201 : vector<32x256xf32>
    %203 = vector.broadcast %180 : vector<32x1xf32> to vector<32x256xf32>
    %204 = arith.addf %202, %203 : vector<32x256xf32>
    %205 = vector.extract_strided_slice %2 {offsets = [0, 9], sizes = [32, 1], strides = [1, 1]} : vector<32x16xf32> to vector<32x1xf32>
    %c0_81 = arith.constant 0 : index
    %c0_82 = arith.constant 0 : index
    %206 = vector.load %arg7[%c0_81, %c0_82] : memref<32x32xbf16, #tpu.memory_space<vmem>>, vector<32x32xbf16>
    %207 = arith.truncf %204 : vector<32x256xf32> to vector<32x256xbf16>
    %cst_83 = arith.constant dense<0.000000e+00> : vector<32x256xf32>
    %208 = tpu.matmul %206, %207, %cst_83 {dimension_numbers = #tpu.dot_dimension_numbers<[1], [0], [0], [1], [0, 0, 1, 1], [], []>} : vector<32x32xbf16>, vector<32x256xbf16>, vector<32x256xf32> -> vector<32x256xf32>
    %209 = vector.broadcast %205 : vector<32x1xf32> to vector<32x256xf32>
    %210 = arith.addf %208, %209 : vector<32x256xf32>
    %211 = arith.addf %1, %210 : vector<32x256xf32>
    %212 = vector.extract_strided_slice %2 {offsets = [0, 10], sizes = [32, 1], strides = [1, 1]} : vector<32x16xf32> to vector<32x1xf32>
    %213 = vector.extract_strided_slice %2 {offsets = [0, 11], sizes = [32, 1], strides = [1, 1]} : vector<32x16xf32> to vector<32x1xf32>
    %cst_84 = arith.constant dense<0.000000e+00> : vector<32xf32>
    %214 = vector.multi_reduction <add>, %211, %cst_84 [1] : vector<32x256xf32> to vector<32xf32>
    %215 = vector.shape_cast %214 : vector<32xf32> to vector<32x1xf32>
    %cst_85 = arith.constant dense<0.000000e+00> : vector<1xf32>
    %216 = vector.multi_reduction <add>, %215, %cst_85 [0] : vector<32x1xf32> to vector<1xf32>
    %217 = vector.shape_cast %216 : vector<1xf32> to vector<1x1xf32>
    %cst_86 = arith.constant 1.22070313E-4 : f32
    %218 = vector.broadcast %cst_86 : f32 to vector<1x1xf32>
    %219 = arith.mulf %217, %218 : vector<1x1xf32>
    %220 = vector.broadcast %219 : vector<1x1xf32> to vector<32x256xf32>
    %221 = arith.subf %211, %220 : vector<32x256xf32>
    %222 = arith.mulf %221, %221 : vector<32x256xf32>
    %cst_87 = arith.constant dense<0.000000e+00> : vector<32xf32>
    %223 = vector.multi_reduction <add>, %222, %cst_87 [1] : vector<32x256xf32> to vector<32xf32>
    %224 = vector.shape_cast %223 : vector<32xf32> to vector<32x1xf32>
    %cst_88 = arith.constant dense<0.000000e+00> : vector<1xf32>
    %225 = vector.multi_reduction <add>, %224, %cst_88 [0] : vector<32x1xf32> to vector<1xf32>
    %226 = vector.shape_cast %225 : vector<1xf32> to vector<1x1xf32>
    %cst_89 = arith.constant 1.22070313E-4 : f32
    %227 = vector.broadcast %cst_89 : f32 to vector<1x1xf32>
    %228 = arith.mulf %226, %227 : vector<1x1xf32>
    %cst_90 = arith.constant 9.99999974E-6 : f32
    %229 = vector.broadcast %cst_90 : f32 to vector<1x1xf32>
    %230 = arith.addf %228, %229 : vector<1x1xf32>
    %231 = math.rsqrt %230 : vector<1x1xf32>
    %232 = vector.broadcast %231 : vector<1x1xf32> to vector<32x256xf32>
    %233 = arith.mulf %221, %232 : vector<32x256xf32>
    %234 = vector.broadcast %212 : vector<32x1xf32> to vector<32x256xf32>
    %235 = arith.mulf %233, %234 : vector<32x256xf32>
    %236 = vector.broadcast %213 : vector<32x1xf32> to vector<32x256xf32>
    %237 = arith.addf %235, %236 : vector<32x256xf32>
    %c0_91 = arith.constant 0 : index
    %c0_92 = arith.constant 0 : index
    %238 = vector.load %arg3[%c0_91, %c0_92] : memref<128x1xf32, #tpu.memory_space<vmem>>, vector<128x1xf32>
    %c0_93 = arith.constant 0 : index
    %c0_94 = arith.constant 0 : index
    %239 = vector.load %arg8[%c0_93, %c0_94] : memref<128x32xbf16, #tpu.memory_space<vmem>>, vector<128x32xbf16>
    %240 = arith.truncf %237 : vector<32x256xf32> to vector<32x256xbf16>
    %cst_95 = arith.constant dense<0.000000e+00> : vector<128x256xf32>
    %241 = tpu.matmul %239, %240, %cst_95 {dimension_numbers = #tpu.dot_dimension_numbers<[1], [0], [0], [1], [0, 0, 1, 1], [], []>} : vector<128x32xbf16>, vector<32x256xbf16>, vector<128x256xf32> -> vector<128x256xf32>
    %242 = vector.broadcast %238 : vector<128x1xf32> to vector<128x256xf32>
    %243 = arith.addf %241, %242 : vector<128x256xf32>
    %cst_96 = arith.constant 5.000000e-01 : f32
    %244 = vector.broadcast %cst_96 : f32 to vector<128x256xf32>
    %245 = arith.mulf %244, %243 : vector<128x256xf32>
    %246 = arith.mulf %243, %243 : vector<128x256xf32>
    %247 = arith.mulf %246, %243 : vector<128x256xf32>
    %cst_97 = arith.constant 4.471500e-02 : f32
    %248 = vector.broadcast %cst_97 : f32 to vector<128x256xf32>
    %249 = arith.mulf %248, %247 : vector<128x256xf32>
    %250 = arith.addf %243, %249 : vector<128x256xf32>
    %cst_98 = arith.constant 0.797884583 : f32
    %251 = vector.broadcast %cst_98 : f32 to vector<128x256xf32>
    %252 = arith.mulf %251, %250 : vector<128x256xf32>
    %253 = math.tanh %252 : vector<128x256xf32>
    %cst_99 = arith.constant 1.000000e+00 : f32
    %254 = vector.broadcast %cst_99 : f32 to vector<128x256xf32>
    %255 = arith.addf %254, %253 : vector<128x256xf32>
    %256 = arith.mulf %245, %255 : vector<128x256xf32>
    %257 = vector.extract_strided_slice %2 {offsets = [0, 12], sizes = [32, 1], strides = [1, 1]} : vector<32x16xf32> to vector<32x1xf32>
    %c0_100 = arith.constant 0 : index
    %c0_101 = arith.constant 0 : index
    %258 = vector.load %arg9[%c0_100, %c0_101] : memref<32x128xbf16, #tpu.memory_space<vmem>>, vector<32x128xbf16>
    %259 = arith.truncf %256 : vector<128x256xf32> to vector<128x256xbf16>
    %cst_102 = arith.constant dense<0.000000e+00> : vector<32x256xf32>
    %260 = tpu.matmul %258, %259, %cst_102 {dimension_numbers = #tpu.dot_dimension_numbers<[1], [0], [0], [1], [0, 0, 1, 1], [], []>} : vector<32x128xbf16>, vector<128x256xbf16>, vector<32x256xf32> -> vector<32x256xf32>
    %261 = vector.broadcast %257 : vector<32x1xf32> to vector<32x256xf32>
    %262 = arith.addf %260, %261 : vector<32x256xf32>
    %263 = arith.addf %211, %262 : vector<32x256xf32>
    %c0_103 = arith.constant 0 : index
    %c0_104 = arith.constant 0 : index
    %c0_105 = arith.constant 0 : index
    %264 = vector.load %arg12[%c0_103, %c0_104, %c0_105] : memref<1x32x256xf32, #tpu.memory_space<vmem>>, vector<1x32x256xf32>
    %265 = vector.shape_cast %264 : vector<1x32x256xf32> to vector<32x256xf32>
    %266 = vector.shape_cast %263 : vector<32x256xf32> to vector<1x32x256xf32>
    tpu.vector_store %arg12[%c0_103, %c0_104, %c0_105], %266 {strides = array<i32>} : memref<1x32x256xf32, #tpu.memory_space<vmem>>, vector<1x32x256xf32>,
    return
  }
  func.func @transform_0(%arg0: i32) -> (i32, i32, i32) {
    %c0_i32 = arith.constant 0 : i32
    %c0_i32_0 = arith.constant 0 : i32
    %c0_i32_1 = arith.constant 0 : i32
    return %arg0, %c0_i32, %c0_i32_0 : i32, i32, i32
  }
  func.func @transform_1(%arg0: i32) -> (i32, i32) {
    %c0_i32 = arith.constant 0 : i32
    %c0_i32_0 = arith.constant 0 : i32
    %c0_i32_1 = arith.constant 0 : i32
    return %c0_i32, %c0_i32_0 : i32, i32
  }
  func.func @transform_2(%arg0: i32) -> (i32, i32) {
    %c0_i32 = arith.constant 0 : i32
    %c0_i32_0 = arith.constant 0 : i32
    %c0_i32_1 = arith.constant 0 : i32
    return %c0_i32, %c0_i32_0 : i32, i32
  }
  func.func @transform_3(%arg0: i32) -> (i32, i32) {
    %c0_i32 = arith.constant 0 : i32
    %c0_i32_0 = arith.constant 0 : i32
    %c0_i32_1 = arith.constant 0 : i32
    return %c0_i32, %c0_i32_0 : i32, i32
  }
  func.func @transform_4(%arg0: i32) -> (i32, i32) {
    %c0_i32 = arith.constant 0 : i32
    %c0_i32_0 = arith.constant 0 : i32
    %c0_i32_1 = arith.constant 0 : i32
    return %c0_i32, %c0_i32_0 : i32, i32
  }
  func.func @transform_5(%arg0: i32) -> (i32, i32) {
    %c0_i32 = arith.constant 0 : i32
    %c0_i32_0 = arith.constant 0 : i32
    %c0_i32_1 = arith.constant 0 : i32
    return %c0_i32, %c0_i32_0 : i32, i32
  }
  func.func @transform_6(%arg0: i32) -> (i32, i32) {
    %c0_i32 = arith.constant 0 : i32
    %c0_i32_0 = arith.constant 0 : i32
    %c0_i32_1 = arith.constant 0 : i32
    return %c0_i32, %c0_i32_0 : i32, i32
  }
  func.func @transform_7(%arg0: i32) -> (i32, i32) {
    %c0_i32 = arith.constant 0 : i32
    %c0_i32_0 = arith.constant 0 : i32
    %c0_i32_1 = arith.constant 0 : i32
    return %c0_i32, %c0_i32_0 : i32, i32
  }
  func.func @transform_8(%arg0: i32) -> (i32, i32) {
    %c0_i32 = arith.constant 0 : i32
    %c0_i32_0 = arith.constant 0 : i32
    %c0_i32_1 = arith.constant 0 : i32
    return %c0_i32, %c0_i32_0 : i32, i32
  }
  func.func @transform_9(%arg0: i32) -> (i32, i32, i32) {
    %c0_i32 = arith.constant 0 : i32
    %c0_i32_0 = arith.constant 0 : i32
    %c0_i32_1 = arith.constant 0 : i32
    %c0_i32_2 = arith.constant 0 : i32
    return %c0_i32, %c0_i32_0, %c0_i32_1 : i32, i32, i32
  }
  func.func @transform_10(%arg0: i32) -> (i32, i32, i32) {
    %c0_i32 = arith.constant 0 : i32
    %c0_i32_0 = arith.constant 0 : i32
    %c0_i32_1 = arith.constant 0 : i32
    %c0_i32_2 = arith.constant 0 : i32
    return %c0_i32, %c0_i32_0, %c0_i32_1 : i32, i32, i32
  }
  func.func @transform_11(%arg0: i32) -> (i32, i32, i32) {
    %c0_i32 = arith.constant 0 : i32
    %c0_i32_0 = arith.constant 0 : i32
    %c0_i32_1 = arith.constant 0 : i32
    return %arg0, %c0_i32, %c0_i32_0 : i32, i32, i32
  }
}

</mosaic_0001>

<llo_original>
// kernel: tpu_custom_call.1
$region0: #{tpu_custom_call.1}
  #allocation0 [shape = 'u32[]', space=smem, size = 0x4, offset = 0x4, fixed_abs, tag = 'smem constant byte address 0x4 - core index']
  #allocation1 [shape = 'u32[144,128]{1,0:T(1,128)}', space=vmem, size = 0x12000, scoped, tag = 'internal scratch']
  %s0 = inlined_call_operand.hbm [shape: f32[8,128], index: 0, kind: input, shape index: {}]
  %s1 = inlined_call_operand.hbm [shape: f32[8,128], index: 1, kind: output, shape index: {}]
  %s2 = sld [smem:[#allocation0]]
  $region18: #{tpu_custom_call.1} parent=0
    _
  %s4 = ssub.s32 1, %s2
  %s5 = scalar_select 0, %s4, %s2
  $region1: #{tpu_custom_call.1} parent=0
    #allocation2 [shape = 'u8[4096]{0}', space=vmem, size = 0x1000, scoped, tag = 'input window, operand 0, single buffered']
    #allocation3 [shape = 's32[1]{0}', space=sflag, size = 0x4, scoped, tag = 'scoped memory for tpu_custom_call.1']
    #allocation4 [shape = 's32[1]{0}', space=sflag, size = 0x4, scoped, tag = 'scoped memory for tpu_custom_call.1']
    #allocation5 [shape = 'u8[4096]{0}', space=vmem, size = 0x1000, scoped, tag = 'output window, operand 0, single buffered']
    %6 = vsyncpa [#allocation3], 0
    %7 = vsyncpa [#allocation4], 0
    // Predicated region
    $region2: #{tpu_custom_call.1} parent=1 // pred_check
      _
    $region3: #{tpu_custom_call.1} parent=1 // pred_check_branch
      %9 = sbr.rel (0) target = $region5
    $region4: #{tpu_custom_call.1} parent=1 // pred_region
      %s11 = ssub.s32 128, 128
      %12 = vsyncadd [#allocation3], %s11
      %s14 = sshll.u32 [#allocation2], 4
      %s15 = int_to_ptr.vmem [resolvable:$true] %s14
      %17 = dma.hbm_to_vmem [thread:$0]  %s0, 128, %s15, [#allocation3]
    $region5: #{tpu_custom_call.1} parent=1 // pred_fallthru
      _
    // Predicated region
    $region6: #{tpu_custom_call.1} parent=1 // pred_check
      _
    $region7: #{tpu_custom_call.1} parent=1 // pred_check_branch
      %19 = sbr.rel (0) target = $region9
    $region8: #{tpu_custom_call.1} parent=1 // pred_region
      %20 = dma.done [#allocation3], 128
    $region9: #{tpu_custom_call.1} parent=1 // pred_fallthru
      _
    %v21 = vld [vmem:[#allocation2] sm:$0xff]
    %22 = vrot.lane.b32.xlu0 %v21, 1
    %v23 = vpop.permute.xlu0 %22
    %24 = vst [vmem:[#allocation5] sm:$0xff] %v23
    // Predicated region
    $region10: #{tpu_custom_call.1} parent=1 // pred_check
      _
    $region11: #{tpu_custom_call.1} parent=1 // pred_check_branch
      %26 = sbr.rel (0) target = $region13
    $region12: #{tpu_custom_call.1} parent=1 // pred_region
      %s28 = ssub.s32 128, 128
      %29 = vsyncadd [#allocation4], %s28
      %s31 = sshll.u32 [#allocation5], 4
      %s32 = int_to_ptr.vmem [resolvable:$true] %s31
      %34 = dma.vmem_to_hbm [thread:$0]  %s32, 128, %s1, [#allocation4]
    $region13: #{tpu_custom_call.1} parent=1 // pred_fallthru
      _
    // Predicated region
    $region14: #{tpu_custom_call.1} parent=1 // pred_check
      _
    $region15: #{tpu_custom_call.1} parent=1 // pred_check_branch
      %36 = sbr.rel (0) target = $region17
    $region16: #{tpu_custom_call.1} parent=1 // pred_region
      %37 = dma.done [#allocation4], 128
    $region17: #{tpu_custom_call.1} parent=1 // pred_fallthru
      _
    %38 = vsyncpa [#allocation3], 1
    %39 = vsyncpa [#allocation4], 1

// kernel: axial_shifted_block_pallas.1
$region0: #{axial_shifted_block_pallas.1}
  #allocation0 [shape = 'u32[]', space=smem, size = 0x4, offset = 0x4, fixed_abs, tag = 'smem constant byte address 0x4 - core index']
  #allocation1 [shape = 'u32[144,128]{1,0:T(1,128)}', space=vmem, size = 0x12000, scoped, tag = 'internal scratch']
  %s0 = inlined_call_operand.vmem [shape: f32[2,32,256], index: 0, kind: input, shape index: {}]
  %s1 = inlined_call_operand.vmem [shape: f32[32,16], index: 1, kind: input, shape index: {}]
  %s2 = inlined_call_operand.vmem [shape: f32[128,1], index: 2, kind: input, shape index: {}]
  %s3 = inlined_call_operand.vmem [shape: bf16[32,32], index: 3, kind: input, shape index: {}]
  %s4 = inlined_call_operand.vmem [shape: bf16[32,32], index: 4, kind: input, shape index: {}]
  %s5 = inlined_call_operand.vmem [shape: bf16[32,32], index: 5, kind: input, shape index: {}]
  %s6 = inlined_call_operand.vmem [shape: bf16[32,32], index: 6, kind: input, shape index: {}]
  %s7 = inlined_call_operand.vmem [shape: bf16[128,32], index: 7, kind: input, shape index: {}]
  %s8 = inlined_call_operand.vmem [shape: bf16[32,128], index: 8, kind: input, shape index: {}]
  %s9 = inlined_call_operand.vmem [shape: f32[7,32,256], index: 9, kind: input, shape index: {}]
  %s10 = inlined_call_operand.vmem [shape: f32[7,32,256], index: 10, kind: input, shape index: {}]
  %s11 = inlined_call_operand.vmem [shape: f32[2,32,256], index: 11, kind: output, shape index: {}]
  %s12 = sld [smem:[#allocation0]]
  $region77: #{axial_shifted_block_pallas.1} parent=0
    _
  %s14 = ssub.s32 1, %s12
  %s15 = scalar_select 0, %s14, %s12
  loop: start=0, step=1, limit=4
  $region2: #{axial_shifted_block_pallas.1} parent=0 // loop_pre_header
    _
  $region3: #{axial_shifted_block_pallas.1} parent=0 // loop_header
    %s17 = sphi 0, %s21
    %p18 = scmp.ge.s32.totalorder %s17, 4
    %s27 = sphi 0, %s29
    %s30 = sphi 0, %s27
    %s31 = sphi 0, %s30
    %s47 = sphi 0, %s31
    %s51 = sphi 0, %s51
    %s53 = sphi 0, %s51
    %s54 = sphi 0, %s53
    %s68 = sphi 0, %s54
    %s72 = sphi 0, %s72
    %s74 = sphi 0, %s72
    %s75 = sphi 0, %s74
    %s89 = sphi 0, %s75
    %s93 = sphi 0, %s93
    %s95 = sphi 0, %s93
    %s96 = sphi 0, %s95
    %s110 = sphi 0, %s96
    %s114 = sphi 0, %s114
    %s116 = sphi 0, %s114
    %s117 = sphi 0, %s116
    %s131 = sphi 0, %s117
    %s135 = sphi 0, %s135
    %s137 = sphi 0, %s135
    %s138 = sphi 0, %s137
    %s152 = sphi 0, %s138
    %s156 = sphi 0, %s156
    %s158 = sphi 0, %s156
    %s159 = sphi 0, %s158
    %s173 = sphi 0, %s159
    %s177 = sphi 0, %s177
    %s179 = sphi 0, %s177
    %s180 = sphi 0, %s179
    %s194 = sphi 0, %s180
    %s198 = sphi 0, %s198
    %s200 = sphi 0, %s198
    %s201 = sphi 0, %s200
    %s215 = sphi 0, %s201
    %s219 = sphi 0, %s219
    %s221 = sphi 0, %s219
    %s222 = sphi 0, %s221
    %s236 = sphi 0, %s222
    %s240 = sphi 0, %s240
    %s242 = sphi 0, %s240
    %s243 = sphi 0, %s242
    %s257 = sphi 0, %s243
    %s263 = sphi 0, %s265
    %s266 = sphi 0, %s263
    %s267 = sphi 0, %s266
    %s283 = sphi 0, %s267
  $region4: #{axial_shifted_block_pallas.1} parent=0 // loop_header_branch
    %20 = sbr.rel (%p18) target = $region8
  $region5: #{axial_shifted_block_pallas.1} parent=0 // loop_body
    %s22 = ssub.s32 %s17, 1
    %s23 = ssub.s32 %s17, 2
    %s24 = sadd.s32 %s17, 1
    %s25 = ssub.s32 %s17, %s24
    %p26 = scmp.eq.s32.totalorder %s25, 0
    %s28 = sadd.s32 %s27, 1
    %s29 = scalar_select %p26, %s27, %s28
    %p32 = pneg %p26
    %p33 = scmp.eq.s32.totalorder %s17, 1
    %p34 = por %p32, %p33
    %p35 = scmp.ne.s32.totalorder %s27, %s30
    %p36 = scmp.eq.s32.totalorder %s17, 0
    %p37 = por %p35, %p36
    %p38 = scmp.ne.s32.totalorder %s27, %s30
    %p39 = scmp.eq.s32.totalorder %s22, 1
    %p40 = por %p38, %p39
    %p41 = scmp.ne.s32.totalorder %s30, %s31
    %p42 = scmp.eq.s32.totalorder %s22, 0
    %p43 = por %p41, %p42
    %p44 = scmp.ne.s32.totalorder %s30, %s31
    %p45 = scmp.eq.s32.totalorder %s23, 1
    %p46 = por %p44, %p45
    %p48 = scmp.ne.s32.totalorder %s31, %s47
    %p49 = scmp.eq.s32.totalorder %s23, 0
    %p50 = por %p48, %p49
    %s52 = sadd.s32 %s51, 1
    %p55 = scmp.eq.s32.totalorder %s17, 1
    %p56 = scmp.ne.s32.totalorder %s51, %s53
    %p57 = scmp.eq.s32.totalorder %s17, 0
    %p58 = por %p56, %p57
    %p59 = scmp.ne.s32.totalorder %s51, %s53
    %p60 = scmp.eq.s32.totalorder %s22, 1
    %p61 = por %p59, %p60
    %p62 = scmp.ne.s32.totalorder %s53, %s54
    %p63 = scmp.eq.s32.totalorder %s22, 0
    %p64 = por %p62, %p63
    %p65 = scmp.ne.s32.totalorder %s53, %s54
    %p66 = scmp.eq.s32.totalorder %s23, 1
    %p67 = por %p65, %p66
    %p69 = scmp.ne.s32.totalorder %s54, %s68
    %p70 = scmp.eq.s32.totalorder %s23, 0
    %p71 = por %p69, %p70
    %s73 = sadd.s32 %s72, 1
    %p76 = scmp.eq.s32.totalorder %s17, 1
    %p77 = scmp.ne.s32.totalorder %s72, %s74
    %p78 = scmp.eq.s32.totalorder %s17, 0
    %p79 = por %p77, %p78
    %p80 = scmp.ne.s32.totalorder %s72, %s74
    %p81 = scmp.eq.s32.totalorder %s22, 1
    %p82 = por %p80, %p81
    %p83 = scmp.ne.s32.totalorder %s74, %s75
    %p84 = scmp.eq.s32.totalorder %s22, 0
    %p85 = por %p83, %p84
    %p86 = scmp.ne.s32.totalorder %s74, %s75
    %p87 = scmp.eq.s32.totalorder %s23, 1
    %p88 = por %p86, %p87
    %p90 = scmp.ne.s32.totalorder %s75, %s89
    %p91 = scmp.eq.s32.totalorder %s23, 0
    %p92 = por %p90, %p91
    %s94 = sadd.s32 %s93, 1
    %p97 = scmp.eq.s32.totalorder %s17, 1
    %p98 = scmp.ne.s32.totalorder %s93, %s95
    %p99 = scmp.eq.s32.totalorder %s17, 0
    %p100 = por %p98, %p99
    %p101 = scmp.ne.s32.totalorder %s93, %s95
    %p102 = scmp.eq.s32.totalorder %s22, 1
    %p103 = por %p101, %p102
    %p104 = scmp.ne.s32.totalorder %s95, %s96
    %p105 = scmp.eq.s32.totalorder %s22, 0
    %p106 = por %p104, %p105
    %p107 = scmp.ne.s32.totalorder %s95, %s96
    %p108 = scmp.eq.s32.totalorder %s23, 1
    %p109 = por %p107, %p108
    %p111 = scmp.ne.s32.totalorder %s96, %s110
    %p112 = scmp.eq.s32.totalorder %s23, 0
    %p113 = por %p111, %p112
    %s115 = sadd.s32 %s114, 1
    %p118 = scmp.eq.s32.totalorder %s17, 1
    %p119 = scmp.ne.s32.totalorder %s114, %s116
    %p120 = scmp.eq.s32.totalorder %s17, 0
    %p121 = por %p119, %p120
    %p122 = scmp.ne.s32.totalorder %s114, %s116
    %p123 = scmp.eq.s32.totalorder %s22, 1
    %p124 = por %p122, %p123
    %p125 = scmp.ne.s32.totalorder %s116, %s117
    %p126 = scmp.eq.s32.totalorder %s22, 0
    %p127 = por %p125, %p126
    %p128 = scmp.ne.s32.totalorder %s116, %s117
    %p129 = scmp.eq.s32.totalorder %s23, 1
    %p130 = por %p128, %p129
    %p132 = scmp.ne.s32.totalorder %s117, %s131
    %p133 = scmp.eq.s32.totalorder %s23, 0
    %p134 = por %p132, %p133
    %s136 = sadd.s32 %s135, 1
    %p139 = scmp.eq.s32.totalorder %s17, 1
    %p140 = scmp.ne.s32.totalorder %s135, %s137
    %p141 = scmp.eq.s32.totalorder %s17, 0
    %p142 = por %p140, %p141
    %p143 = scmp.ne.s32.totalorder %s135, %s137
    %p144 = scmp.eq.s32.totalorder %s22, 1
    %p145 = por %p143, %p144
    %p146 = scmp.ne.s32.totalorder %s137, %s138
    %p147 = scmp.eq.s32.totalorder %s22, 0
    %p148 = por %p146, %p147
    %p149 = scmp.ne.s32.totalorder %s137, %s138
    %p150 = scmp.eq.s32.totalorder %s23, 1
    %p151 = por %p149, %p150
    %p153 = scmp.ne.s32.totalorder %s138, %s152
    %p154 = scmp.eq.s32.totalorder %s23, 0
    %p155 = por %p153, %p154
    %s157 = sadd.s32 %s156, 1
    %p160 = scmp.eq.s32.totalorder %s17, 1
    %p161 = scmp.ne.s32.totalorder %s156, %s158
    %p162 = scmp.eq.s32.totalorder %s17, 0
    %p163 = por %p161, %p162
    %p164 = scmp.ne.s32.totalorder %s156, %s158
    %p165 = scmp.eq.s32.totalorder %s22, 1
    %p166 = por %p164, %p165
    %p167 = scmp.ne.s32.totalorder %s158, %s159
    %p168 = scmp.eq.s32.totalorder %s22, 0
    %p169 = por %p167, %p168
    %p170 = scmp.ne.s32.totalorder %s158, %s159
    %p171 = scmp.eq.s32.totalorder %s23, 1
    %p172 = por %p170, %p171
    %p174 = scmp.ne.s32.totalorder %s159, %s173
    %p175 = scmp.eq.s32.totalorder %s23, 0
    %p176 = por %p174, %p175
    %s178 = sadd.s32 %s177, 1
    %p181 = scmp.eq.s32.totalorder %s17, 1
    %p182 = scmp.ne.s32.totalorder %s177, %s179
    %p183 = scmp.eq.s32.totalorder %s17, 0
    %p184 = por %p182, %p183
    %p185 = scmp.ne.s32.totalorder %s177, %s179
    %p186 = scmp.eq.s32.totalorder %s22, 1
    %p187 = por %p185, %p186
    %p188 = scmp.ne.s32.totalorder %s179, %s180
    %p189 = scmp.eq.s32.totalorder %s22, 0
    %p190 = por %p188, %p189
    %p191 = scmp.ne.s32.totalorder %s179, %s180
    %p192 = scmp.eq.s32.totalorder %s23, 1
    %p193 = por %p191, %p192
    %p195 = scmp.ne.s32.totalorder %s180, %s194
    %p196 = scmp.eq.s32.totalorder %s23, 0
    %p197 = por %p195, %p196
    %s199 = sadd.s32 %s198, 1
    %p202 = scmp.eq.s32.totalorder %s17, 1
    %p203 = scmp.ne.s32.totalorder %s198, %s200
    %p204 = scmp.eq.s32.totalorder %s17, 0
    %p205 = por %p203, %p204
    %p206 = scmp.ne.s32.totalorder %s198, %s200
    %p207 = scmp.eq.s32.totalorder %s22, 1
    %p208 = por %p206, %p207
    %p209 = scmp.ne.s32.totalorder %s200, %s201
    %p210 = scmp.eq.s32.totalorder %s22, 0
    %p211 = por %p209, %p210
    %p212 = scmp.ne.s32.totalorder %s200, %s201
    %p213 = scmp.eq.s32.totalorder %s23, 1
    %p214 = por %p212, %p213
    %p216 = scmp.ne.s32.totalorder %s201, %s215
    %p217 = scmp.eq.s32.totalorder %s23, 0
    %p218 = por %p216, %p217
    %s220 = sadd.s32 %s219, 1
    %p223 = scmp.eq.s32.totalorder %s17, 1
    %p224 = scmp.ne.s32.totalorder %s219, %s221
    %p225 = scmp.eq.s32.totalorder %s17, 0
    %p226 = por %p224, %p225
    %p227 = scmp.ne.s32.totalorder %s219, %s221
    %p228 = scmp.eq.s32.totalorder %s22, 1
    %p229 = por %p227, %p228
    %p230 = scmp.ne.s32.totalorder %s221, %s222
    %p231 = scmp.eq.s32.totalorder %s22, 0
    %p232 = por %p230, %p231
    %p233 = scmp.ne.s32.totalorder %s221, %s222
    %p234 = scmp.eq.s32.totalorder %s23, 1
    %p235 = por %p233, %p234
    %p237 = scmp.ne.s32.totalorder %s222, %s236
    %p238 = scmp.eq.s32.totalorder %s23, 0
    %p239 = por %p237, %p238
    %s241 = sadd.s32 %s240, 1
    %p244 = scmp.eq.s32.totalorder %s17, 1
    %p245 = scmp.ne.s32.totalorder %s240, %s242
    %p246 = scmp.eq.s32.totalorder %s17, 0
    %p247 = por %p245, %p246
    %p248 = scmp.ne.s32.totalorder %s240, %s242
    %p249 = scmp.eq.s32.totalorder %s22, 1
    %p250 = por %p248, %p249
    %p251 = scmp.ne.s32.totalorder %s242, %s243
    %p252 = scmp.eq.s32.totalorder %s22, 0
    %p253 = por %p251, %p252
    %p254 = scmp.ne.s32.totalorder %s242, %s243
    %p255 = scmp.eq.s32.totalorder %s23, 1
    %p256 = por %p254, %p255
    %p258 = scmp.ne.s32.totalorder %s243, %s257
    %p259 = scmp.eq.s32.totalorder %s23, 0
    %p260 = por %p258, %p259
    %s261 = ssub.s32 %s17, %s24
    %p262 = scmp.eq.s32.totalorder %s261, 0
    %s264 = sadd.s32 %s263, 1
    %s265 = scalar_select %p262, %s263, %s264
    %p268 = pneg %p262
    %p269 = scmp.eq.s32.totalorder %s17, 1
    %p270 = por %p268, %p269
    %p271 = scmp.ne.s32.totalorder %s263, %s266
    %p272 = scmp.eq.s32.totalorder %s17, 0
    %p273 = por %p271, %p272
    %p274 = scmp.ne.s32.totalorder %s263, %s266
    %p275 = scmp.eq.s32.totalorder %s22, 1
    %p276 = por %p274, %p275
    %p277 = scmp.ne.s32.totalorder %s266, %s267
    %p278 = scmp.eq.s32.totalorder %s22, 0
    %p279 = por %p277, %p278
    %p280 = scmp.ne.s32.totalorder %s266, %s267
    %p281 = scmp.eq.s32.totalorder %s23, 1
    %p282 = por %p280, %p281
    %p284 = scmp.ne.s32.totalorder %s267, %s283
    %p285 = scmp.eq.s32.totalorder %s23, 0
    %p286 = por %p284, %p285
    %p287 = scmp.le.s32.totalorder 1, %s17
    %p288 = scmp.lt.s32.totalorder %s17, 3
    %p289 = pnand %p287, %p288
    %p290 = pneg %p289
    // Predicated region
    $region9: #{axial_shifted_block_pallas.1} parent=5 // pred_check
      _
    $region10: #{axial_shifted_block_pallas.1} parent=5 // pred_check_branch
      %292 = sbr.rel (%p289) target = $region12
    $region11: #{axial_shifted_block_pallas.1} parent=5 // pred_region
      %s293 = ssub.s32 %s17, 1
      // Predicated region
      $region13: #{axial_shifted_block_pallas.1} parent=11 // pred_check
        %p294 = pneg %p64
      $region14: #{axial_shifted_block_pallas.1} parent=11 // pred_check_branch
        %296 = sbr.rel (%p294) target = $region16
      $region15: #{axial_shifted_block_pallas.1} parent=11 // pred_region
        _
      $region16: #{axial_shifted_block_pallas.1} parent=11 // pred_fallthru
        _
      // Predicated region
      $region17: #{axial_shifted_block_pallas.1} parent=11 // pred_check
        %p297 = pneg %p85
      $region18: #{axial_shifted_block_pallas.1} parent=11 // pred_check_branch
        %299 = sbr.rel (%p297) target = $region20
      $region19: #{axial_shifted_block_pallas.1} parent=11 // pred_region
        _
      $region20: #{axial_shifted_block_pallas.1} parent=11 // pred_fallthru
        _
      // Predicated region
      $region21: #{axial_shifted_block_pallas.1} parent=11 // pred_check
        %p300 = pneg %p106
      $region22: #{axial_shifted_block_pallas.1} parent=11 // pred_check_branch
        %302 = sbr.rel (%p300) target = $region24
      $region23: #{axial_shifted_block_pallas.1} parent=11 // pred_region
        _
      $region24: #{axial_shifted_block_pallas.1} parent=11 // pred_fallthru
        _
      // Predicated region
      $region25: #{axial_shifted_block_pallas.1} parent=11 // pred_check
        %p303 = pneg %p127
      $region26: #{axial_shifted_block_pallas.1} parent=11 // pred_check_branch
        %305 = sbr.rel (%p303) target = $region28
      $region27: #{axial_shifted_block_pallas.1} parent=11 // pred_region
        _
      $region28: #{axial_shifted_block_pallas.1} parent=11 // pred_fallthru
        _
      // Predicated region
      $region29: #{axial_shifted_block_pallas.1} parent=11 // pred_check
        %p306 = pneg %p148
      $region30: #{axial_shifted_block_pallas.1} parent=11 // pred_check_branch
        %308 = sbr.rel (%p306) target = $region32
      $region31: #{axial_shifted_block_pallas.1} parent=11 // pred_region
        _
      $region32: #{axial_shifted_block_pallas.1} parent=11 // pred_fallthru
        _
      // Predicated region
      $region33: #{axial_shifted_block_pallas.1} parent=11 // pred_check
        %p309 = pneg %p169
      $region34: #{axial_shifted_block_pallas.1} parent=11 // pred_check_branch
        %311 = sbr.rel (%p309) target = $region36
      $region35: #{axial_shifted_block_pallas.1} parent=11 // pred_region
        _
      $region36: #{axial_shifted_block_pallas.1} parent=11 // pred_fallthru
        _
      // Predicated region
      $region37: #{axial_shifted_block_pallas.1} parent=11 // pred_check
        %p312 = pneg %p190
      $region38: #{axial_shifted_block_pallas.1} parent=11 // pred_check_branch
        %314 = sbr.rel (%p312) target = $region40
      $region39: #{axial_shifted_block_pallas.1} parent=11 // pred_region
        _
      $region40: #{axial_shifted_block_pallas.1} parent=11 // pred_fallthru
        _
      // Predicated region
      $region41: #{axial_shifted_block_pallas.1} parent=11 // pred_check
        %p315 = pneg %p211
      $region42: #{axial_shifted_block_pallas.1} parent=11 // pred_check_branch
        %317 = sbr.rel (%p315) target = $region44
      $region43: #{axial_shifted_block_pallas.1} parent=11 // pred_region
        _
      $region44: #{axial_shifted_block_pallas.1} parent=11 // pred_fallthru
        _
      // Predicated region
      $region45: #{axial_shifted_block_pallas.1} parent=11 // pred_check
        %p318 = pneg %p232
      $region46: #{axial_shifted_block_pallas.1} parent=11 // pred_check_branch
        %320 = sbr.rel (%p318) target = $region48
      $region47: #{axial_shifted_block_pallas.1} parent=11 // pred_region
        _
      $region48: #{axial_shifted_block_pallas.1} parent=11 // pred_fallthru
        _
      // Predicated region
      $region49: #{axial_shifted_block_pallas.1} parent=11 // pred_check
        %p321 = pneg %p253
      $region50: #{axial_shifted_block_pallas.1} parent=11 // pred_check_branch
        %323 = sbr.rel (%p321) target = $region52
      $region51: #{axial_shifted_block_pallas.1} parent=11 // pred_region
        _
      $region52: #{axial_shifted_block_pallas.1} parent=11 // pred_fallthru
        _
    $region12: #{axial_shifted_block_pallas.1} parent=5 // pred_fallthru
      _
    %p324 = scmp.lt.s32.totalorder %s17, 2
    // Predicated region
    $region53: #{axial_shifted_block_pallas.1} parent=5 // pred_check
      %p325 = pneg %p324
    $region54: #{axial_shifted_block_pallas.1} parent=5 // pred_check_branch
      %327 = sbr.rel (%p325) target = $region56
    $region55: #{axial_shifted_block_pallas.1} parent=5 // pred_region
      // Predicated region
      $region57: #{axial_shifted_block_pallas.1} parent=55 // pred_check
        %p328 = pneg %p37
      $region58: #{axial_shifted_block_pallas.1} parent=55 // pred_check_branch
        %330 = sbr.rel (%p328) target = $region60
      $region59: #{axial_shifted_block_pallas.1} parent=55 // pred_region
        %p331 = scmp.lt.s32.totalorder %s17, 1
        %s332 = scalar_select %p331, %s17, 1
        %s333 = smul.addr %s332, 8
        %s334 = smul.addr %s333, 8
        %s335 = scalar_lea.vmem %s0, %s334
      $region60: #{axial_shifted_block_pallas.1} parent=55 // pred_fallthru
        _
    $region56: #{axial_shifted_block_pallas.1} parent=5 // pred_fallthru
      _
    %p336 = scmp.le.s32.totalorder 1, %s17
    %p337 = scmp.lt.s32.totalorder %s17, 3
    %p338 = pnand %p336, %p337
    %p339 = pneg %p338
    // Predicated region
    $region61: #{axial_shifted_block_pallas.1} parent=5 // pred_check
      _
    $region62: #{axial_shifted_block_pallas.1} parent=5 // pred_check_branch
      %341 = sbr.rel (%p338) target = $region64
    $region63: #{axial_shifted_block_pallas.1} parent=5 // pred_region
      %s342 = ssub.s32 %s17, 1
      %p343 = scmp.lt.s32.totalorder %s22, 1
      %s344 = scalar_select %p343, %s22, 1
      %s345 = smul.addr %s344, 8
      %s346 = smul.addr %s345, 8
      %s347 = scalar_lea.vmem %s0, %s346
      %p348 = pneg %p43
      %p349 = pneg %p40
      %p350 = pneg %p64
      %p351 = pneg %p61
      %p352 = pneg %p85
      %p353 = pneg %p82
      %p354 = pneg %p106
      %p355 = pneg %p103
      %p356 = pneg %p127
      %p357 = pneg %p124
      %p358 = pneg %p148
      %p359 = pneg %p145
      %p360 = pneg %p169
      %p361 = pneg %p166
      %p362 = pneg %p190
      %p363 = pneg %p187
      %p364 = pneg %p211
      %p365 = pneg %p208
      %p366 = pneg %p232
      %p367 = pneg %p229
      %p368 = pneg %p253
      %p369 = pneg %p250
      %p370 = pneg %p279
      %p371 = pneg %p276
      %p372 = scmp.lt.s32.totalorder %s22, 1
      %s373 = scalar_select %p372, %s22, 1
      %s374 = smul.addr %s373, 8
      %s375 = smul.addr %s374, 8
      %s376 = scalar_lea.vmem %s11, %s375
      %p377 = scmp.lt.s32.totalorder %s22, 1
      %s378 = scalar_select %p377, %s22, 1
      %s379 = smul.addr %s378, 8
      %s380 = smul.addr %s379, 8
      %s381 = scalar_lea.vmem %s0, %s380
      %p382 = scmp.lt.s32.totalorder %s22, 1
      %s383 = scalar_select %p382, %s22, 1
      %s384 = smul.addr %s383, 8
      %s385 = smul.addr %s384, 8
      %s386 = scalar_lea.vmem %s11, %s385
      %v388 = vld [vmem:[%s381] sm:$0xff]
      %v389 = vld [vmem:[%s381 + $0x8] sm:$0xff]
      %v390 = vld [vmem:[%s381 + $0x10] sm:$0xff]
      %v391 = vld [vmem:[%s381 + $0x18] sm:$0xff]
      %v392 = vld [vmem:[%s381 + $0x20] sm:$0xff]
      %v393 = vld [vmem:[%s381 + $0x28] sm:$0xff]
      %v394 = vld [vmem:[%s381 + $0x30] sm:$0xff]
      %v395 = vld [vmem:[%s381 + $0x38] sm:$0xff]
      %v396 = vld [vmem:[%s1] sm:$0xff]
      %v397 = vld [vmem:[%s1 + $0x8] sm:$0xff]
      %v398 = vld [vmem:[%s1 + $0x10] sm:$0xff]
      %v399 = vld [vmem:[%s1 + $0x18] sm:$0xff]
      %v400 = vadd.f32 %v388, %v389
      %401 = vadd.xlane.f32.xlu0 %v400
      %v402 = vpop.xlane.xlu0 %401
      %v403 = vadd.f32 %v390, %v391
      %404 = vadd.xlane.f32.xlu0 %v403
      %v405 = vpop.xlane.xlu0 %404
      %v406 = vadd.f32 %v392, %v393
      %407 = vadd.xlane.f32.xlu0 %v406
      %v408 = vpop.xlane.xlu0 %407
      %v409 = vadd.f32 %v394, %v395
      %410 = vadd.xlane.f32.xlu0 %v409
      %v411 = vpop.xlane.xlu0 %410
      %v412 = vadd.f32 %v402, %v405
      %v413 = vadd.f32 %v412, %v408
      %v414 = vadd.f32 %v413, %v411
      %v415 = vrot.slane %v414, 4
      %v416 = vadd.f32 %v414, %v415
      %v417 = vrot.slane %v416, 2
      %v418 = vadd.f32 %v416, %v417
      %v419 = vrot.slane %v418, 1
      %v420 = vadd.f32 %v418, %v419
      %v421 = vmul.f32 %v420, 0.00012207031
      %v422 = vsub.f32 %v388, %v421
      %v423 = vsub.f32 %v389, %v421
      %v424 = vsub.f32 %v390, %v421
      %v425 = vsub.f32 %v391, %v421
      %v426 = vsub.f32 %v392, %v421
      %v427 = vsub.f32 %v393, %v421
      %v428 = vsub.f32 %v394, %v421
      %v429 = vsub.f32 %v395, %v421
      %v430 = vmul.f32 %v422, %v422
      %v431 = vmul.f32 %v423, %v423
      %v432 = vmul.f32 %v424, %v424
      %v433 = vmul.f32 %v425, %v425
      %v434 = vmul.f32 %v426, %v426
      %v435 = vmul.f32 %v427, %v427
      %v436 = vmul.f32 %v428, %v428
      %v437 = vmul.f32 %v429, %v429
      %v438 = vadd.f32 %v430, %v431
      %439 = vadd.xlane.f32.xlu0 %v438
      %v440 = vpop.xlane.xlu0 %439
      %v441 = vadd.f32 %v432, %v433
      %442 = vadd.xlane.f32.xlu0 %v441
      %v443 = vpop.xlane.xlu0 %442
      %v444 = vadd.f32 %v434, %v435
      %445 = vadd.xlane.f32.xlu0 %v444
      %v446 = vpop.xlane.xlu0 %445
      %v447 = vadd.f32 %v436, %v437
      %448 = vadd.xlane.f32.xlu0 %v447
      %v449 = vpop.xlane.xlu0 %448
      %v450 = vadd.f32 %v440, %v443
      %v451 = vadd.f32 %v450, %v446
      %v452 = vadd.f32 %v451, %v449
      %v453 = vrot.slane %v452, 4
      %v454 = vadd.f32 %v452, %v453
      %v455 = vrot.slane %v454, 2
      %v456 = vadd.f32 %v454, %v455
      %v457 = vrot.slane %v456, 1
      %v458 = vadd.f32 %v456, %v457
      %v459 = vmul.f32 %v458, 0.00012207031
      %v460 = vadd.f32 %v459, 1e-05
      %v461 = vrsqrt.pop %v460
      %v462 = vmul.f32 %v422, %v461
      %v463 = vmul.f32 %v423, %v461
      %v464 = vmul.f32 %v424, %v461
      %v465 = vmul.f32 %v425, %v461
      %v466 = vmul.f32 %v426, %v461
      %v467 = vmul.f32 %v427, %v461
      %v468 = vmul.f32 %v428, %v461
      %v469 = vmul.f32 %v429, %v461
      %471 = vset.pattern.permute.xlu0 0
      %472 = vperm.xlu0 %471, %v396
      %v473 = vpop.permute.xlu0 %472
      %476 = vset.pattern.permute.xlu0 0
      %477 = vperm.xlu0 %476, %v397
      %v478 = vpop.permute.xlu0 %477
      %481 = vset.pattern.permute.xlu0 0
      %482 = vperm.xlu0 %481, %v398
      %v483 = vpop.permute.xlu0 %482
      %486 = vset.pattern.permute.xlu0 0
      %487 = vperm.xlu0 %486, %v399
      %v488 = vpop.permute.xlu0 %487
      %v490 = vmul.f32 %v462, %v473
      %v491 = vmul.f32 %v463, %v473
      %v492 = vmul.f32 %v464, %v478
      %v493 = vmul.f32 %v465, %v478
      %v494 = vmul.f32 %v466, %v483
      %v495 = vmul.f32 %v467, %v483
      %v496 = vmul.f32 %v468, %v488
      %v497 = vmul.f32 %v469, %v488
      %498 = vset.pattern.permute.xlu0 1
      %499 = vperm.xlu0 %498, %v396
      %v500 = vpop.permute.xlu0 %499
      %502 = vset.pattern.permute.xlu0 1
      %503 = vperm.xlu0 %502, %v397
      %v504 = vpop.permute.xlu0 %503
      %506 = vset.pattern.permute.xlu0 1
      %507 = vperm.xlu0 %506, %v398
      %v508 = vpop.permute.xlu0 %507
      %510 = vset.pattern.permute.xlu0 1
      %511 = vperm.xlu0 %510, %v399
      %v512 = vpop.permute.xlu0 %511
      %v514 = vadd.f32 %v490, %v500
      %v515 = vadd.f32 %v491, %v500
      %v516 = vadd.f32 %v492, %v504
      %v517 = vadd.f32 %v493, %v504
      %v518 = vadd.f32 %v494, %v508
      %v519 = vadd.f32 %v495, %v508
      %v520 = vadd.f32 %v496, %v512
      %v521 = vadd.f32 %v497, %v512
      %v522 = vld [vmem:[%s3] sm:$0xf]
      %v523 = vld [vmem:[%s3 + $0x4] sm:$0xf]
      %v524 = vld [vmem:[%s3 + $0x8] sm:$0xf]
      %v525 = vld [vmem:[%s3 + $0xc] sm:$0xf]
      %v526 = vpack.c.bf16 %v516, %v514
      %v527 = vpack.c.bf16 %v517, %v515
      %v528 = vpack.c.bf16 %v520, %v518
      %v529 = vpack.c.bf16 %v521, %v519
      %530 = vset.pattern.permute.xlu0 2
      %531 = vperm.xlu0 %530, %v396
      %v532 = vpop.permute.xlu0 %531
      %534 = vset.pattern.permute.xlu0 2
      %535 = vperm.xlu0 %534, %v397
      %v536 = vpop.permute.xlu0 %535
      %538 = vset.pattern.permute.xlu0 2
      %539 = vperm.xlu0 %538, %v398
      %v540 = vpop.permute.xlu0 %539
      %542 = vset.pattern.permute.xlu0 2
      %543 = vperm.xlu0 %542, %v399
      %v544 = vpop.permute.xlu0 %543
      %v550 = vunpack.c.l.b16 %v522
      %v551 = vunpack.c.l.b16 %v523
      %v552 = vunpack.c.l.b16 %v524
      %v553 = vunpack.c.l.b16 %v525
      %v554 = vpack.c.b16 %v551, %v550
      %v555 = vpack.c.b16 %v553, %v552
      %vm556 = vcmask 261120
      %v558 = vsel %vm556, %v554, 0
      %v561 = vsel %vm556, %v555, 0
      %563 = vmatprep.subr.bf16.mxu0 %v527
      %564 = vmatpush1.bf16.msra.mxu0 %v526
      %565 = vmatprep.subr.bf16.mxu0 %v529
      %566 = vmatpush1.bf16.msra.mxu0 %v528
      %567 = vmatprep.subr.bf16.mxu0 0
      %568 = vmatpush1.bf16.msra.mxu0 0
      %569 = vmatprep.subr.bf16.mxu0 0
      %570 = vmatpush1.bf16.msra.mxu0 0
      %571 = vmatprep.subr.bf16.mxu0 0
      %572 = vmatpush1.bf16.msra.mxu0 0
      %573 = vmatprep.subr.bf16.mxu0 0
      %574 = vmatpush1.bf16.msra.mxu0 0
      %575 = vmatprep.subr.bf16.mxu0 0
      %576 = vmatpush1.bf16.msra.mxu0 0
      %577 = vmatprep.subr.bf16.mxu0 0
      %578 = vmatpush1.bf16.msra.mxu0 0
      %579 = vmatprep.subr.bf16.mxu0 0
      %580 = vmatpush1.bf16.msra.mxu0 0
      %581 = vmatprep.subr.bf16.mxu0 0
      %582 = vmatpush1.bf16.msra.mxu0 0
      %583 = vmatprep.subr.bf16.mxu0 0
      %584 = vmatpush1.bf16.msra.mxu0 0
      %585 = vmatprep.subr.bf16.mxu0 0
      %586 = vmatpush1.bf16.msra.mxu0 0
      %587 = vmatprep.subr.bf16.mxu0 0
      %588 = vmatpush1.bf16.msra.mxu0 0
      %589 = vmatprep.subr.bf16.mxu0 0
      %590 = vmatpush1.bf16.msra.mxu0 0
      %591 = vmatprep.subr.bf16.mxu0 0
      %592 = vmatpush1.bf16.msra.mxu0 0
      %593 = vmatprep.subr.bf16.mxu0 0
      %594 = vmatpush1.bf16.msra.mxu0 0
      %595 = vmatprep.mubr.bf16.mxu0 0
      %596 = vmatmul.mubr.bf16.gmra.mrb[0].mxu0 %v558
      %v597 = vpop.f32.mrb[0].mxu0
      %v598 = vadd.f32 %v532, %v597
      %v599 = vpop.f32.mrb[0].mxu0
      %v600 = vadd.f32 %v532, %v599
      %v601 = vpop.f32.mrb[0].mxu0
      %v602 = vadd.f32 %v536, %v601
      %v603 = vpop.f32.mrb[0].mxu0
      %v604 = vadd.f32 %v536, %v603
      %605 = vmatprep.mubr.bf16.mxu0 0
      %606 = vmatmul.mubr.bf16.gmra.mrb[0].mxu0 %v561
      %v607 = vpop.f32.mrb[0].mxu0
      %v608 = vadd.f32 %v540, %v607
      %v609 = vpop.f32.mrb[0].mxu0
      %v610 = vadd.f32 %v540, %v609
      %v611 = vpop.f32.mrb[0].mxu0
      %v612 = vadd.f32 %v544, %v611
      %v613 = vpop.f32.mrb[0].mxu0
      %v614 = vadd.f32 %v544, %v613
      %615 = vdwg.mxu0
      %v616 = vadd.f32 %v598, %v600
      %617 = vadd.xlane.f32.xlu0 %v616
      %v618 = vpop.xlane.xlu0 %617
      %v619 = vadd.f32 %v602, %v604
      %620 = vadd.xlane.f32.xlu0 %v619
      %v621 = vpop.xlane.xlu0 %620
      %v622 = vadd.f32 %v608, %v610
      %623 = vadd.xlane.f32.xlu0 %v622
      %v624 = vpop.xlane.xlu0 %623
      %v625 = vadd.f32 %v612, %v614
      %626 = vadd.xlane.f32.xlu0 %v625
      %v627 = vpop.xlane.xlu0 %626
      %v628 = vadd.f32 %v618, %v621
      %v629 = vadd.f32 %v628, %v624
      %v630 = vadd.f32 %v629, %v627
      %v631 = vrot.slane %v630, 4
      %v632 = vadd.f32 %v630, %v631
      %v633 = vrot.slane %v632, 2
      %v634 = vadd.f32 %v632, %v633
      %v635 = vrot.slane %v634, 1
      %v636 = vadd.f32 %v634, %v635
      %v637 = vmul.f32 %v636, 0.00012207031
      %v638 = vsub.f32 %v598, %v637
      %v639 = vsub.f32 %v600, %v637
      %v640 = vsub.f32 %v602, %v637
      %v641 = vsub.f32 %v604, %v637
      %v642 = vsub.f32 %v608, %v637
      %v643 = vsub.f32 %v610, %v637
      %v644 = vsub.f32 %v612, %v637
      %v645 = vsub.f32 %v614, %v637
      %v646 = vmul.f32 %v638, %v638
      %v647 = vmul.f32 %v639, %v639
      %v648 = vmul.f32 %v640, %v640
      %v649 = vmul.f32 %v641, %v641
      %v650 = vmul.f32 %v642, %v642
      %v651 = vmul.f32 %v643, %v643
      %v652 = vmul.f32 %v644, %v644
      %v653 = vmul.f32 %v645, %v645
      %v654 = vadd.f32 %v646, %v647
      %655 = vadd.xlane.f32.xlu0 %v654
      %v656 = vpop.xlane.xlu0 %655
      %v657 = vadd.f32 %v648, %v649
      %658 = vadd.xlane.f32.xlu0 %v657
      %v659 = vpop.xlane.xlu0 %658
      %v660 = vadd.f32 %v650, %v651
      %661 = vadd.xlane.f32.xlu0 %v660
      %v662 = vpop.xlane.xlu0 %661
      %v663 = vadd.f32 %v652, %v653
      %664 = vadd.xlane.f32.xlu0 %v663
      %v665 = vpop.xlane.xlu0 %664
      %v666 = vadd.f32 %v656, %v659
      %v667 = vadd.f32 %v666, %v662
      %v668 = vadd.f32 %v667, %v665
      %v669 = vrot.slane %v668, 4
      %v670 = vadd.f32 %v668, %v669
      %v671 = vrot.slane %v670, 2
      %v672 = vadd.f32 %v670, %v671
      %v673 = vrot.slane %v672, 1
      %v674 = vadd.f32 %v672, %v673
      %v675 = vmul.f32 %v674, 0.00012207031
      %v676 = vadd.f32 %v675, 1e-05
      %v677 = vrsqrt.pop %v676
      %v678 = vmul.f32 %v638, %v677
      %v679 = vmul.f32 %v639, %v677
      %v680 = vmul.f32 %v640, %v677
      %v681 = vmul.f32 %v641, %v677
      %v682 = vmul.f32 %v642, %v677
      %v683 = vmul.f32 %v643, %v677
      %v684 = vmul.f32 %v644, %v677
      %v685 = vmul.f32 %v645, %v677
      %686 = vset.pattern.permute.xlu0 3
      %687 = vperm.xlu0 %686, %v396
      %v688 = vpop.permute.xlu0 %687
      %690 = vset.pattern.permute.xlu0 3
      %691 = vperm.xlu0 %690, %v397
      %v692 = vpop.permute.xlu0 %691
      %694 = vset.pattern.permute.xlu0 3
      %695 = vperm.xlu0 %694, %v398
      %v696 = vpop.permute.xlu0 %695
      %698 = vset.pattern.permute.xlu0 3
      %699 = vperm.xlu0 %698, %v399
      %v700 = vpop.permute.xlu0 %699
      %v702 = vmul.f32 %v678, %v688
      %v703 = vmul.f32 %v679, %v688
      %v704 = vmul.f32 %v680, %v692
      %v705 = vmul.f32 %v681, %v692
      %v706 = vmul.f32 %v682, %v696
      %v707 = vmul.f32 %v683, %v696
      %v708 = vmul.f32 %v684, %v700
      %v709 = vmul.f32 %v685, %v700
      %710 = vset.pattern.permute.xlu0 4
      %711 = vperm.xlu0 %710, %v396
      %v712 = vpop.permute.xlu0 %711
      %714 = vset.pattern.permute.xlu0 4
      %715 = vperm.xlu0 %714, %v397
      %v716 = vpop.permute.xlu0 %715
      %718 = vset.pattern.permute.xlu0 4
      %719 = vperm.xlu0 %718, %v398
      %v720 = vpop.permute.xlu0 %719
      %722 = vset.pattern.permute.xlu0 4
      %723 = vperm.xlu0 %722, %v399
      %v724 = vpop.permute.xlu0 %723
      %v726 = vadd.f32 %v702, %v712
      %v727 = vadd.f32 %v703, %v712
      %v728 = vadd.f32 %v704, %v716
      %v729 = vadd.f32 %v705, %v716
      %v730 = vadd.f32 %v706, %v720
      %v731 = vadd.f32 %v707, %v720
      %v732 = vadd.f32 %v708, %v724
      %v733 = vadd.f32 %v709, %v724
      %v734 = vmul.f32 %v726, 0.5
      %v735 = vmul.f32 %v727, 0.5
      %v736 = vmul.f32 %v728, 0.5
      %v737 = vmul.f32 %v729, 0.5
      %v738 = vmul.f32 %v730, 0.5
      %v739 = vmul.f32 %v731, 0.5
      %v740 = vmul.f32 %v732, 0.5
      %v741 = vmul.f32 %v733, 0.5
      %v742 = vmul.f32 %v726, %v726
      %v743 = vmul.f32 %v727, %v727
      %v744 = vmul.f32 %v728, %v728
      %v745 = vmul.f32 %v729, %v729
      %v746 = vmul.f32 %v730, %v730
      %v747 = vmul.f32 %v731, %v731
      %v748 = vmul.f32 %v732, %v732
      %v749 = vmul.f32 %v733, %v733
      %v750 = vmul.f32 %v742, %v726
      %v751 = vmul.f32 %v743, %v727
      %v752 = vmul.f32 %v744, %v728
      %v753 = vmul.f32 %v745, %v729
      %v754 = vmul.f32 %v746, %v730
      %v755 = vmul.f32 %v747, %v731
      %v756 = vmul.f32 %v748, %v732
      %v757 = vmul.f32 %v749, %v733
      %v758 = vmul.f32 %v750, 0.044715
      %v759 = vmul.f32 %v751, 0.044715
      %v760 = vmul.f32 %v752, 0.044715
      %v761 = vmul.f32 %v753, 0.044715
      %v762 = vmul.f32 %v754, 0.044715
      %v763 = vmul.f32 %v755, 0.044715
      %v764 = vmul.f32 %v756, 0.044715
      %v765 = vmul.f32 %v757, 0.044715
      %v766 = vadd.f32 %v726, %v758
      %v767 = vadd.f32 %v727, %v759
      %v768 = vadd.f32 %v728, %v760
      %v769 = vadd.f32 %v729, %v761
      %v770 = vadd.f32 %v730, %v762
      %v771 = vadd.f32 %v731, %v763
      %v772 = vadd.f32 %v732, %v764
      %v773 = vadd.f32 %v733, %v765
      %v774 = vmul.f32 %v766, 0.7978846
      %v775 = vmul.f32 %v767, 0.7978846
      %v776 = vmul.f32 %v768, 0.7978846
      %v777 = vmul.f32 %v769, 0.7978846
      %v778 = vmul.f32 %v770, 0.7978846
      %v779 = vmul.f32 %v771, 0.7978846
      %v780 = vmul.f32 %v772, 0.7978846
      %v781 = vmul.f32 %v773, 0.7978846
      %v782 = vtanh.pop %v774
      %v783 = vtanh.pop %v775
      %v784 = vtanh.pop %v776
      %v785 = vtanh.pop %v777
      %v786 = vtanh.pop %v778
      %v787 = vtanh.pop %v779
      %v788 = vtanh.pop %v780
      %v789 = vtanh.pop %v781
      %v790 = vadd.f32 %v782, 1.0
      %v791 = vadd.f32 %v783, 1.0
      %v792 = vadd.f32 %v784, 1.0
      %v793 = vadd.f32 %v785, 1.0
      %v794 = vadd.f32 %v786, 1.0
      %v795 = vadd.f32 %v787, 1.0
      %v796 = vadd.f32 %v788, 1.0
      %v797 = vadd.f32 %v789, 1.0
      %v798 = vmul.f32 %v734, %v790
      %v799 = vmul.f32 %v735, %v791
      %v800 = vmul.f32 %v736, %v792
      %v801 = vmul.f32 %v737, %v793
      %v802 = vmul.f32 %v738, %v794
      %v803 = vmul.f32 %v739, %v795
      %v804 = vmul.f32 %v740, %v796
      %v805 = vmul.f32 %v741, %v797
      %806 = vrot.lane.b32.xlu0 %v798, 125
      %v807 = vpop.permute.xlu0 %806
      %808 = vrot.lane.b32.xlu0 %v800, 125
      %v809 = vpop.permute.xlu0 %808
      %810 = vrot.lane.b32.xlu0 %v802, 125
      %v811 = vpop.permute.xlu0 %810
      %812 = vrot.lane.b32.xlu0 %v804, 125
      %v813 = vpop.permute.xlu0 %812
      %814 = vrot.lane.b32.xlu0 %v799, 125
      %v815 = vpop.permute.xlu0 %814
      %816 = vrot.lane.b32.xlu0 %v801, 125
      %v817 = vpop.permute.xlu0 %816
      %818 = vrot.lane.b32.xlu0 %v803, 125
      %v819 = vpop.permute.xlu0 %818
      %820 = vrot.lane.b32.xlu0 %v805, 125
      %v821 = vpop.permute.xlu0 %820
      %v822 = vlaneseq
      %v823 = vand.u32 %v822, 127
      %vm824 = vcmp.lt.s32.totalorder %v823, 125
      %v825 = vsel %vm824, %v807, %v815
      %v826 = vsel %vm824, %v809, %v817
      %v827 = vsel %vm824, %v811, %v819
      %v828 = vsel %vm824, %v813, %v821
      %v829 = vsel %vm824, %v815, %v807
      %v830 = vsel %vm824, %v817, %v809
      %v831 = vsel %vm824, %v819, %v811
      %v832 = vsel %vm824, %v821, %v813
      %v833 = vld [vmem:[%s9] sm:$0xff]
      %v834 = vld [vmem:[%s9 + $0x8] sm:$0xff]
      %v835 = vld [vmem:[%s9 + $0x10] sm:$0xff]
      %v836 = vld [vmem:[%s9 + $0x18] sm:$0xff]
      %v837 = vld [vmem:[%s9 + $0x20] sm:$0xff]
      %v838 = vld [vmem:[%s9 + $0x28] sm:$0xff]
      %v839 = vld [vmem:[%s9 + $0x30] sm:$0xff]
      %v840 = vld [vmem:[%s9 + $0x38] sm:$0xff]
      %v841 = vmul.f32 %v825, %v833
      %v842 = vmul.f32 %v829, %v834
      %v843 = vmul.f32 %v826, %v835
      %v844 = vmul.f32 %v830, %v836
      %v845 = vmul.f32 %v827, %v837
      %v846 = vmul.f32 %v831, %v838
      %v847 = vmul.f32 %v828, %v839
      %v848 = vmul.f32 %v832, %v840
      %849 = vrot.lane.b32.xlu0 %v798, 80
      %v850 = vpop.permute.xlu0 %849
      %851 = vrot.lane.b32.xlu0 %v800, 80
      %v852 = vpop.permute.xlu0 %851
      %853 = vrot.lane.b32.xlu0 %v802, 80
      %v854 = vpop.permute.xlu0 %853
      %855 = vrot.lane.b32.xlu0 %v804, 80
      %v856 = vpop.permute.xlu0 %855
      %857 = vrot.lane.b32.xlu0 %v799, 80
      %v858 = vpop.permute.xlu0 %857
      %859 = vrot.lane.b32.xlu0 %v801, 80
      %v860 = vpop.permute.xlu0 %859
      %861 = vrot.lane.b32.xlu0 %v803, 80
      %v862 = vpop.permute.xlu0 %861
      %863 = vrot.lane.b32.xlu0 %v805, 80
      %v864 = vpop.permute.xlu0 %863
      %vm865 = vcmp.lt.s32.totalorder %v823, 80
      %v866 = vsel %vm865, %v850, %v858
      %v867 = vsel %vm865, %v852, %v860
      %v868 = vsel %vm865, %v854, %v862
      %v869 = vsel %vm865, %v856, %v864
      %v870 = vsel %vm865, %v858, %v850
      %v871 = vsel %vm865, %v860, %v852
      %v872 = vsel %vm865, %v862, %v854
      %v873 = vsel %vm865, %v864, %v856
      %v874 = vld [vmem:[%s10] sm:$0xff]
      %v875 = vld [vmem:[%s10 + $0x8] sm:$0xff]
      %v876 = vld [vmem:[%s10 + $0x10] sm:$0xff]
      %v877 = vld [vmem:[%s10 + $0x18] sm:$0xff]
      %v878 = vld [vmem:[%s10 + $0x20] sm:$0xff]
      %v879 = vld [vmem:[%s10 + $0x28] sm:$0xff]
      %v880 = vld [vmem:[%s10 + $0x30] sm:$0xff]
      %v881 = vld [vmem:[%s10 + $0x38] sm:$0xff]
      %v882 = vmul.f32 %v866, %v874
      %v883 = vmul.f32 %v870, %v875
      %v884 = vmul.f32 %v867, %v876
      %v885 = vmul.f32 %v871, %v877
      %v886 = vmul.f32 %v868, %v878
      %v887 = vmul.f32 %v872, %v879
      %v888 = vmul.f32 %v869, %v880
      %v889 = vmul.f32 %v873, %v881
      %890 = vrot.lane.b32.xlu0 %v798, 126
      %v891 = vpop.permute.xlu0 %890
      %892 = vrot.lane.b32.xlu0 %v800, 126
      %v893 = vpop.permute.xlu0 %892
      %894 = vrot.lane.b32.xlu0 %v802, 126
      %v895 = vpop.permute.xlu0 %894
      %896 = vrot.lane.b32.xlu0 %v804, 126
      %v897 = vpop.permute.xlu0 %896
      %898 = vrot.lane.b32.xlu0 %v799, 126
      %v899 = vpop.permute.xlu0 %898
      %900 = vrot.lane.b32.xlu0 %v801, 126
      %v901 = vpop.permute.xlu0 %900
      %902 = vrot.lane.b32.xlu0 %v803, 126
      %v903 = vpop.permute.xlu0 %902
      %904 = vrot.lane.b32.xlu0 %v805, 126
      %v905 = vpop.permute.xlu0 %904
      %vm906 = vcmp.lt.s32.totalorder %v823, 126
      %v907 = vsel %vm906, %v891, %v899
      %v908 = vsel %vm906, %v893, %v901
      %v909 = vsel %vm906, %v895, %v903
      %v910 = vsel %vm906, %v897, %v905
      %v911 = vsel %vm906, %v899, %v891
      %v912 = vsel %vm906, %v901, %v893
      %v913 = vsel %vm906, %v903, %v895
      %v914 = vsel %vm906, %v905, %v897
      %s915 = scalar_lea.vmem %s9, 64
      %v916 = vld [vmem:[%s915] sm:$0xff]
      %v917 = vld [vmem:[%s915 + $0x8] sm:$0xff]
      %v918 = vld [vmem:[%s915 + $0x10] sm:$0xff]
      %v919 = vld [vmem:[%s915 + $0x18] sm:$0xff]
      %v920 = vld [vmem:[%s915 + $0x20] sm:$0xff]
      %v921 = vld [vmem:[%s915 + $0x28] sm:$0xff]
      %v922 = vld [vmem:[%s915 + $0x30] sm:$0xff]
      %v923 = vld [vmem:[%s915 + $0x38] sm:$0xff]
      %v924 = vmul.f32 %v907, %v916
      %v925 = vmul.f32 %v911, %v917
      %v926 = vmul.f32 %v908, %v918
      %v927 = vmul.f32 %v912, %v919
      %v928 = vmul.f32 %v909, %v920
      %v929 = vmul.f32 %v913, %v921
      %v930 = vmul.f32 %v910, %v922
      %v931 = vmul.f32 %v914, %v923
      %932 = vrot.lane.b32.xlu0 %v798, 96
      %v933 = vpop.permute.xlu0 %932
      %934 = vrot.lane.b32.xlu0 %v800, 96
      %v935 = vpop.permute.xlu0 %934
      %936 = vrot.lane.b32.xlu0 %v802, 96
      %v937 = vpop.permute.xlu0 %936
      %938 = vrot.lane.b32.xlu0 %v804, 96
      %v939 = vpop.permute.xlu0 %938
      %940 = vrot.lane.b32.xlu0 %v799, 96
      %v941 = vpop.permute.xlu0 %940
      %942 = vrot.lane.b32.xlu0 %v801, 96
      %v943 = vpop.permute.xlu0 %942
      %944 = vrot.lane.b32.xlu0 %v803, 96
      %v945 = vpop.permute.xlu0 %944
      %946 = vrot.lane.b32.xlu0 %v805, 96
      %v947 = vpop.permute.xlu0 %946
      %vm948 = vcmp.lt.s32.totalorder %v823, 96
      %v949 = vsel %vm948, %v933, %v941
      %v950 = vsel %vm948, %v935, %v943
      %v951 = vsel %vm948, %v937, %v945
      %v952 = vsel %vm948, %v939, %v947
      %v953 = vsel %vm948, %v941, %v933
      %v954 = vsel %vm948, %v943, %v935
      %v955 = vsel %vm948, %v945, %v937
      %v956 = vsel %vm948, %v947, %v939
      %s957 = scalar_lea.vmem %s10, 64
      %v958 = vld [vmem:[%s957] sm:$0xff]
      %v959 = vld [vmem:[%s957 + $0x8] sm:$0xff]
      %v960 = vld [vmem:[%s957 + $0x10] sm:$0xff]
      %v961 = vld [vmem:[%s957 + $0x18] sm:$0xff]
      %v962 = vld [vmem:[%s957 + $0x20] sm:$0xff]
      %v963 = vld [vmem:[%s957 + $0x28] sm:$0xff]
      %v964 = vld [vmem:[%s957 + $0x30] sm:$0xff]
      %v965 = vld [vmem:[%s957 + $0x38] sm:$0xff]
      %v966 = vmul.f32 %v949, %v958
      %v967 = vmul.f32 %v953, %v959
      %v968 = vmul.f32 %v950, %v960
      %v969 = vmul.f32 %v954, %v961
      %v970 = vmul.f32 %v951, %v962
      %v971 = vmul.f32 %v955, %v963
      %v972 = vmul.f32 %v952, %v964
      %v973 = vmul.f32 %v956, %v965
      %v974 = vadd.f32 %v841, %v924
      %v975 = vadd.f32 %v842, %v925
      %v976 = vadd.f32 %v843, %v926
      %v977 = vadd.f32 %v844, %v927
      %v978 = vadd.f32 %v845, %v928
      %v979 = vadd.f32 %v846, %v929
      %v980 = vadd.f32 %v847, %v930
      %v981 = vadd.f32 %v848, %v931
      %v982 = vadd.f32 %v882, %v966
      %v983 = vadd.f32 %v883, %v967
      %v984 = vadd.f32 %v884, %v968
      %v985 = vadd.f32 %v885, %v969
      %v986 = vadd.f32 %v886, %v970
      %v987 = vadd.f32 %v887, %v971
      %v988 = vadd.f32 %v888, %v972
      %v989 = vadd.f32 %v889, %v973
      %990 = vrot.lane.b32.xlu0 %v798, 127
      %v991 = vpop.permute.xlu0 %990
      %992 = vrot.lane.b32.xlu0 %v800, 127
      %v993 = vpop.permute.xlu0 %992
      %994 = vrot.lane.b32.xlu0 %v802, 127
      %v995 = vpop.permute.xlu0 %994
      %996 = vrot.lane.b32.xlu0 %v804, 127
      %v997 = vpop.permute.xlu0 %996
      %998 = vrot.lane.b32.xlu0 %v799, 127
      %v999 = vpop.permute.xlu0 %998
      %1000 = vrot.lane.b32.xlu0 %v801, 127
      %v1001 = vpop.permute.xlu0 %1000
      %1002 = vrot.lane.b32.xlu0 %v803, 127
      %v1003 = vpop.permute.xlu0 %1002
      %1004 = vrot.lane.b32.xlu0 %v805, 127
      %v1005 = vpop.permute.xlu0 %1004
      %vm1006 = vcmp.lt.s32.totalorder %v823, 127
      %v1007 = vsel %vm1006, %v991, %v999
      %v1008 = vsel %vm1006, %v993, %v1001
      %v1009 = vsel %vm1006, %v995, %v1003
      %v1010 = vsel %vm1006, %v997, %v1005
      %v1011 = vsel %vm1006, %v999, %v991
      %v1012 = vsel %vm1006, %v1001, %v993
      %v1013 = vsel %vm1006, %v1003, %v995
      %v1014 = vsel %vm1006, %v1005, %v997
      %s1015 = scalar_lea.vmem %s9, 128
      %v1016 = vld [vmem:[%s1015] sm:$0xff]
      %v1017 = vld [vmem:[%s1015 + $0x8] sm:$0xff]
      %v1018 = vld [vmem:[%s1015 + $0x10] sm:$0xff]
      %v1019 = vld [vmem:[%s1015 + $0x18] sm:$0xff]
      %v1020 = vld [vmem:[%s1015 + $0x20] sm:$0xff]
      %v1021 = vld [vmem:[%s1015 + $0x28] sm:$0xff]
      %v1022 = vld [vmem:[%s1015 + $0x30] sm:$0xff]
      %v1023 = vld [vmem:[%s1015 + $0x38] sm:$0xff]
      %v1024 = vmul.f32 %v1007, %v1016
      %v1025 = vmul.f32 %v1011, %v1017
      %v1026 = vmul.f32 %v1008, %v1018
      %v1027 = vmul.f32 %v1012, %v1019
      %v1028 = vmul.f32 %v1009, %v1020
      %v1029 = vmul.f32 %v1013, %v1021
      %v1030 = vmul.f32 %v1010, %v1022
      %v1031 = vmul.f32 %v1014, %v1023
      %1032 = vrot.lane.b32.xlu0 %v798, 112
      %v1033 = vpop.permute.xlu0 %1032
      %1034 = vrot.lane.b32.xlu0 %v800, 112
      %v1035 = vpop.permute.xlu0 %1034
      %1036 = vrot.lane.b32.xlu0 %v802, 112
      %v1037 = vpop.permute.xlu0 %1036
      %1038 = vrot.lane.b32.xlu0 %v804, 112
      %v1039 = vpop.permute.xlu0 %1038
      %1040 = vrot.lane.b32.xlu0 %v799, 112
      %v1041 = vpop.permute.xlu0 %1040
      %1042 = vrot.lane.b32.xlu0 %v801, 112
      %v1043 = vpop.permute.xlu0 %1042
      %1044 = vrot.lane.b32.xlu0 %v803, 112
      %v1045 = vpop.permute.xlu0 %1044
      %1046 = vrot.lane.b32.xlu0 %v805, 112
      %v1047 = vpop.permute.xlu0 %1046
      %vm1048 = vcmp.lt.s32.totalorder %v823, 112
      %v1049 = vsel %vm1048, %v1033, %v1041
      %v1050 = vsel %vm1048, %v1035, %v1043
      %v1051 = vsel %vm1048, %v1037, %v1045
      %v1052 = vsel %vm1048, %v1039, %v1047
      %v1053 = vsel %vm1048, %v1041, %v1033
      %v1054 = vsel %vm1048, %v1043, %v1035
      %v1055 = vsel %vm1048, %v1045, %v1037
      %v1056 = vsel %vm1048, %v1047, %v1039
      %s1057 = scalar_lea.vmem %s10, 128
      %v1058 = vld [vmem:[%s1057] sm:$0xff]
      %v1059 = vld [vmem:[%s1057 + $0x8] sm:$0xff]
      %v1060 = vld [vmem:[%s1057 + $0x10] sm:$0xff]
      %v1061 = vld [vmem:[%s1057 + $0x18] sm:$0xff]
      %v1062 = vld [vmem:[%s1057 + $0x20] sm:$0xff]
      %v1063 = vld [vmem:[%s1057 + $0x28] sm:$0xff]
      %v1064 = vld [vmem:[%s1057 + $0x30] sm:$0xff]
      %v1065 = vld [vmem:[%s1057 + $0x38] sm:$0xff]
      %v1066 = vmul.f32 %v1049, %v1058
      %v1067 = vmul.f32 %v1053, %v1059
      %v1068 = vmul.f32 %v1050, %v1060
      %v1069 = vmul.f32 %v1054, %v1061
      %v1070 = vmul.f32 %v1051, %v1062
      %v1071 = vmul.f32 %v1055, %v1063
      %v1072 = vmul.f32 %v1052, %v1064
      %v1073 = vmul.f32 %v1056, %v1065
      %v1074 = vadd.f32 %v974, %v1024
      %v1075 = vadd.f32 %v975, %v1025
      %v1076 = vadd.f32 %v976, %v1026
      %v1077 = vadd.f32 %v977, %v1027
      %v1078 = vadd.f32 %v978, %v1028
      %v1079 = vadd.f32 %v979, %v1029
      %v1080 = vadd.f32 %v980, %v1030
      %v1081 = vadd.f32 %v981, %v1031
      %v1082 = vadd.f32 %v982, %v1066
      %v1083 = vadd.f32 %v983, %v1067
      %v1084 = vadd.f32 %v984, %v1068
      %v1085 = vadd.f32 %v985, %v1069
      %v1086 = vadd.f32 %v986, %v1070
      %v1087 = vadd.f32 %v987, %v1071
      %v1088 = vadd.f32 %v988, %v1072
      %v1089 = vadd.f32 %v989, %v1073
      %s1090 = scalar_lea.vmem %s9, 192
      %v1091 = vld [vmem:[%s1090] sm:$0xff]
      %v1092 = vld [vmem:[%s1090 + $0x8] sm:$0xff]
      %v1093 = vld [vmem:[%s1090 + $0x10] sm:$0xff]
      %v1094 = vld [vmem:[%s1090 + $0x18] sm:$0xff]
      %v1095 = vld [vmem:[%s1090 + $0x20] sm:$0xff]
      %v1096 = vld [vmem:[%s1090 + $0x28] sm:$0xff]
      %v1097 = vld [vmem:[%s1090 + $0x30] sm:$0xff]
      %v1098 = vld [vmem:[%s1090 + $0x38] sm:$0xff]
      %v1099 = vmul.f32 %v798, %v1091
      %v1100 = vmul.f32 %v799, %v1092
      %v1101 = vmul.f32 %v800, %v1093
      %v1102 = vmul.f32 %v801, %v1094
      %v1103 = vmul.f32 %v802, %v1095
      %v1104 = vmul.f32 %v803, %v1096
      %v1105 = vmul.f32 %v804, %v1097
      %v1106 = vmul.f32 %v805, %v1098
      %s1107 = scalar_lea.vmem %s10, 192
      %v1108 = vld [vmem:[%s1107] sm:$0xff]
      %v1109 = vld [vmem:[%s1107 + $0x8] sm:$0xff]
      %v1110 = vld [vmem:[%s1107 + $0x10] sm:$0xff]
      %v1111 = vld [vmem:[%s1107 + $0x18] sm:$0xff]
      %v1112 = vld [vmem:[%s1107 + $0x20] sm:$0xff]
      %v1113 = vld [vmem:[%s1107 + $0x28] sm:$0xff]
      %v1114 = vld [vmem:[%s1107 + $0x30] sm:$0xff]
      %v1115 = vld [vmem:[%s1107 + $0x38] sm:$0xff]
      %v1116 = vmul.f32 %v798, %v1108
      %v1117 = vmul.f32 %v799, %v1109
      %v1118 = vmul.f32 %v800, %v1110
      %v1119 = vmul.f32 %v801, %v1111
      %v1120 = vmul.f32 %v802, %v1112
      %v1121 = vmul.f32 %v803, %v1113
      %v1122 = vmul.f32 %v804, %v1114
      %v1123 = vmul.f32 %v805, %v1115
      %v1124 = vadd.f32 %v1074, %v1099
      %v1125 = vadd.f32 %v1075, %v1100
      %v1126 = vadd.f32 %v1076, %v1101
      %v1127 = vadd.f32 %v1077, %v1102
      %v1128 = vadd.f32 %v1078, %v1103
      %v1129 = vadd.f32 %v1079, %v1104
      %v1130 = vadd.f32 %v1080, %v1105
      %v1131 = vadd.f32 %v1081, %v1106
      %v1132 = vadd.f32 %v1082, %v1116
      %v1133 = vadd.f32 %v1083, %v1117
      %v1134 = vadd.f32 %v1084, %v1118
      %v1135 = vadd.f32 %v1085, %v1119
      %v1136 = vadd.f32 %v1086, %v1120
      %v1137 = vadd.f32 %v1087, %v1121
      %v1138 = vadd.f32 %v1088, %v1122
      %v1139 = vadd.f32 %v1089, %v1123
      %1140 = vrot.lane.b32.xlu0 %v798, 1
      %v1141 = vpop.permute.xlu0 %1140
      %1142 = vrot.lane.b32.xlu0 %v800, 1
      %v1143 = vpop.permute.xlu0 %1142
      %1144 = vrot.lane.b32.xlu0 %v802, 1
      %v1145 = vpop.permute.xlu0 %1144
      %1146 = vrot.lane.b32.xlu0 %v804, 1
      %v1147 = vpop.permute.xlu0 %1146
      %1148 = vrot.lane.b32.xlu0 %v799, 1
      %v1149 = vpop.permute.xlu0 %1148
      %1150 = vrot.lane.b32.xlu0 %v801, 1
      %v1151 = vpop.permute.xlu0 %1150
      %1152 = vrot.lane.b32.xlu0 %v803, 1
      %v1153 = vpop.permute.xlu0 %1152
      %1154 = vrot.lane.b32.xlu0 %v805, 1
      %v1155 = vpop.permute.xlu0 %1154
      %vm1156 = vcmp.lt.s32.totalorder %v823, 1
      %v1157 = vsel %vm1156, %v1141, %v1149
      %v1158 = vsel %vm1156, %v1143, %v1151
      %v1159 = vsel %vm1156, %v1145, %v1153
      %v1160 = vsel %vm1156, %v1147, %v1155
      %v1161 = vsel %vm1156, %v1149, %v1141
      %v1162 = vsel %vm1156, %v1151, %v1143
      %v1163 = vsel %vm1156, %v1153, %v1145
      %v1164 = vsel %vm1156, %v1155, %v1147
      %s1165 = scalar_lea.vmem %s9, 256
      %v1166 = vld [vmem:[%s1165] sm:$0xff]
      %v1167 = vld [vmem:[%s1165 + $0x8] sm:$0xff]
      %v1168 = vld [vmem:[%s1165 + $0x10] sm:$0xff]
      %v1169 = vld [vmem:[%s1165 + $0x18] sm:$0xff]
      %v1170 = vld [vmem:[%s1165 + $0x20] sm:$0xff]
      %v1171 = vld [vmem:[%s1165 + $0x28] sm:$0xff]
      %v1172 = vld [vmem:[%s1165 + $0x30] sm:$0xff]
      %v1173 = vld [vmem:[%s1165 + $0x38] sm:$0xff]
      %v1174 = vmul.f32 %v1161, %v1166
      %v1175 = vmul.f32 %v1157, %v1167
      %v1176 = vmul.f32 %v1162, %v1168
      %v1177 = vmul.f32 %v1158, %v1169
      %v1178 = vmul.f32 %v1163, %v1170
      %v1179 = vmul.f32 %v1159, %v1171
      %v1180 = vmul.f32 %v1164, %v1172
      %v1181 = vmul.f32 %v1160, %v1173
      %1182 = vrot.lane.b32.xlu0 %v798, 16
      %v1183 = vpop.permute.xlu0 %1182
      %1184 = vrot.lane.b32.xlu0 %v800, 16
      %v1185 = vpop.permute.xlu0 %1184
      %1186 = vrot.lane.b32.xlu0 %v802, 16
      %v1187 = vpop.permute.xlu0 %1186
      %1188 = vrot.lane.b32.xlu0 %v804, 16
      %v1189 = vpop.permute.xlu0 %1188
      %1190 = vrot.lane.b32.xlu0 %v799, 16
      %v1191 = vpop.permute.xlu0 %1190
      %1192 = vrot.lane.b32.xlu0 %v801, 16
      %v1193 = vpop.permute.xlu0 %1192
      %1194 = vrot.lane.b32.xlu0 %v803, 16
      %v1195 = vpop.permute.xlu0 %1194
      %1196 = vrot.lane.b32.xlu0 %v805, 16
      %v1197 = vpop.permute.xlu0 %1196
      %vm1198 = vcmp.lt.s32.totalorder %v823, 16
      %v1199 = vsel %vm1198, %v1183, %v1191
      %v1200 = vsel %vm1198, %v1185, %v1193
      %v1201 = vsel %vm1198, %v1187, %v1195
      %v1202 = vsel %vm1198, %v1189, %v1197
      %v1203 = vsel %vm1198, %v1191, %v1183
      %v1204 = vsel %vm1198, %v1193, %v1185
      %v1205 = vsel %vm1198, %v1195, %v1187
      %v1206 = vsel %vm1198, %v1197, %v1189
      %s1207 = scalar_lea.vmem %s10, 256
      %v1208 = vld [vmem:[%s1207] sm:$0xff]
      %v1209 = vld [vmem:[%s1207 + $0x8] sm:$0xff]
      %v1210 = vld [vmem:[%s1207 + $0x10] sm:$0xff]
      %v1211 = vld [vmem:[%s1207 + $0x18] sm:$0xff]
      %v1212 = vld [vmem:[%s1207 + $0x20] sm:$0xff]
      %v1213 = vld [vmem:[%s1207 + $0x28] sm:$0xff]
      %v1214 = vld [vmem:[%s1207 + $0x30] sm:$0xff]
      %v1215 = vld [vmem:[%s1207 + $0x38] sm:$0xff]
      %v1216 = vmul.f32 %v1203, %v1208
      %v1217 = vmul.f32 %v1199, %v1209
      %v1218 = vmul.f32 %v1204, %v1210
      %v1219 = vmul.f32 %v1200, %v1211
      %v1220 = vmul.f32 %v1205, %v1212
      %v1221 = vmul.f32 %v1201, %v1213
      %v1222 = vmul.f32 %v1206, %v1214
      %v1223 = vmul.f32 %v1202, %v1215
      %v1224 = vadd.f32 %v1124, %v1174
      %v1225 = vadd.f32 %v1125, %v1175
      %v1226 = vadd.f32 %v1126, %v1176
      %v1227 = vadd.f32 %v1127, %v1177
      %v1228 = vadd.f32 %v1128, %v1178
      %v1229 = vadd.f32 %v1129, %v1179
      %v1230 = vadd.f32 %v1130, %v1180
      %v1231 = vadd.f32 %v1131, %v1181
      %v1232 = vadd.f32 %v1132, %v1216
      %v1233 = vadd.f32 %v1133, %v1217
      %v1234 = vadd.f32 %v1134, %v1218
      %v1235 = vadd.f32 %v1135, %v1219
      %v1236 = vadd.f32 %v1136, %v1220
      %v1237 = vadd.f32 %v1137, %v1221
      %v1238 = vadd.f32 %v1138, %v1222
      %v1239 = vadd.f32 %v1139, %v1223
      %1240 = vrot.lane.b32.xlu0 %v798, 2
      %v1241 = vpop.permute.xlu0 %1240
      %1242 = vrot.lane.b32.xlu0 %v800, 2
      %v1243 = vpop.permute.xlu0 %1242
      %1244 = vrot.lane.b32.xlu0 %v802, 2
      %v1245 = vpop.permute.xlu0 %1244
      %1246 = vrot.lane.b32.xlu0 %v804, 2
      %v1247 = vpop.permute.xlu0 %1246
      %1248 = vrot.lane.b32.xlu0 %v799, 2
      %v1249 = vpop.permute.xlu0 %1248
      %1250 = vrot.lane.b32.xlu0 %v801, 2
      %v1251 = vpop.permute.xlu0 %1250
      %1252 = vrot.lane.b32.xlu0 %v803, 2
      %v1253 = vpop.permute.xlu0 %1252
      %1254 = vrot.lane.b32.xlu0 %v805, 2
      %v1255 = vpop.permute.xlu0 %1254
      %vm1256 = vcmp.lt.s32.totalorder %v823, 2
      %v1257 = vsel %vm1256, %v1241, %v1249
      %v1258 = vsel %vm1256, %v1243, %v1251
      %v1259 = vsel %vm1256, %v1245, %v1253
      %v1260 = vsel %vm1256, %v1247, %v1255
      %v1261 = vsel %vm1256, %v1249, %v1241
      %v1262 = vsel %vm1256, %v1251, %v1243
      %v1263 = vsel %vm1256, %v1253, %v1245
      %v1264 = vsel %vm1256, %v1255, %v1247
      %s1265 = scalar_lea.vmem %s9, 320
      %v1266 = vld [vmem:[%s1265] sm:$0xff]
      %v1267 = vld [vmem:[%s1265 + $0x8] sm:$0xff]
      %v1268 = vld [vmem:[%s1265 + $0x10] sm:$0xff]
      %v1269 = vld [vmem:[%s1265 + $0x18] sm:$0xff]
      %v1270 = vld [vmem:[%s1265 + $0x20] sm:$0xff]
      %v1271 = vld [vmem:[%s1265 + $0x28] sm:$0xff]
      %v1272 = vld [vmem:[%s1265 + $0x30] sm:$0xff]
      %v1273 = vld [vmem:[%s1265 + $0x38] sm:$0xff]
      %v1274 = vmul.f32 %v1261, %v1266
      %v1275 = vmul.f32 %v1257, %v1267
      %v1276 = vmul.f32 %v1262, %v1268
      %v1277 = vmul.f32 %v1258, %v1269
      %v1278 = vmul.f32 %v1263, %v1270
      %v1279 = vmul.f32 %v1259, %v1271
      %v1280 = vmul.f32 %v1264, %v1272
      %v1281 = vmul.f32 %v1260, %v1273
      %1282 = vrot.lane.b32.xlu0 %v798, 32
      %v1283 = vpop.permute.xlu0 %1282
      %1284 = vrot.lane.b32.xlu0 %v800, 32
      %v1285 = vpop.permute.xlu0 %1284
      %1286 = vrot.lane.b32.xlu0 %v802, 32
      %v1287 = vpop.permute.xlu0 %1286
      %1288 = vrot.lane.b32.xlu0 %v804, 32
      %v1289 = vpop.permute.xlu0 %1288
      %1290 = vrot.lane.b32.xlu0 %v799, 32
      %v1291 = vpop.permute.xlu0 %1290
      %1292 = vrot.lane.b32.xlu0 %v801, 32
      %v1293 = vpop.permute.xlu0 %1292
      %1294 = vrot.lane.b32.xlu0 %v803, 32
      %v1295 = vpop.permute.xlu0 %1294
      %1296 = vrot.lane.b32.xlu0 %v805, 32
      %v1297 = vpop.permute.xlu0 %1296
      %vm1298 = vcmp.lt.s32.totalorder %v823, 32
      %v1299 = vsel %vm1298, %v1283, %v1291
      %v1300 = vsel %vm1298, %v1285, %v1293
      %v1301 = vsel %vm1298, %v1287, %v1295
      %v1302 = vsel %vm1298, %v1289, %v1297
      %v1303 = vsel %vm1298, %v1291, %v1283
      %v1304 = vsel %vm1298, %v1293, %v1285
      %v1305 = vsel %vm1298, %v1295, %v1287
      %v1306 = vsel %vm1298, %v1297, %v1289
      %s1307 = scalar_lea.vmem %s10, 320
      %v1308 = vld [vmem:[%s1307] sm:$0xff]
      %v1309 = vld [vmem:[%s1307 + $0x8] sm:$0xff]
      %v1310 = vld [vmem:[%s1307 + $0x10] sm:$0xff]
      %v1311 = vld [vmem:[%s1307 + $0x18] sm:$0xff]
      %v1312 = vld [vmem:[%s1307 + $0x20] sm:$0xff]
      %v1313 = vld [vmem:[%s1307 + $0x28] sm:$0xff]
      %v1314 = vld [vmem:[%s1307 + $0x30] sm:$0xff]
      %v1315 = vld [vmem:[%s1307 + $0x38] sm:$0xff]
      %v1316 = vmul.f32 %v1303, %v1308
      %v1317 = vmul.f32 %v1299, %v1309
      %v1318 = vmul.f32 %v1304, %v1310
      %v1319 = vmul.f32 %v1300, %v1311
      %v1320 = vmul.f32 %v1305, %v1312
      %v1321 = vmul.f32 %v1301, %v1313
      %v1322 = vmul.f32 %v1306, %v1314
      %v1323 = vmul.f32 %v1302, %v1315
      %v1324 = vadd.f32 %v1224, %v1274
      %v1325 = vadd.f32 %v1225, %v1275
      %v1326 = vadd.f32 %v1226, %v1276
      %v1327 = vadd.f32 %v1227, %v1277
      %v1328 = vadd.f32 %v1228, %v1278
      %v1329 = vadd.f32 %v1229, %v1279
      %v1330 = vadd.f32 %v1230, %v1280
      %v1331 = vadd.f32 %v1231, %v1281
      %v1332 = vadd.f32 %v1232, %v1316
      %v1333 = vadd.f32 %v1233, %v1317
      %v1334 = vadd.f32 %v1234, %v1318
      %v1335 = vadd.f32 %v1235, %v1319
      %v1336 = vadd.f32 %v1236, %v1320
      %v1337 = vadd.f32 %v1237, %v1321
      %v1338 = vadd.f32 %v1238, %v1322
      %v1339 = vadd.f32 %v1239, %v1323
      %1340 = vrot.lane.b32.xlu0 %v798, 3
      %v1341 = vpop.permute.xlu0 %1340
      %1342 = vrot.lane.b32.xlu0 %v800, 3
      %v1343 = vpop.permute.xlu0 %1342
      %1344 = vrot.lane.b32.xlu0 %v802, 3
      %v1345 = vpop.permute.xlu0 %1344
      %1346 = vrot.lane.b32.xlu0 %v804, 3
      %v1347 = vpop.permute.xlu0 %1346
      %1348 = vrot.lane.b32.xlu0 %v799, 3
      %v1349 = vpop.permute.xlu0 %1348
      %1350 = vrot.lane.b32.xlu0 %v801, 3
      %v1351 = vpop.permute.xlu0 %1350
      %1352 = vrot.lane.b32.xlu0 %v803, 3
      %v1353 = vpop.permute.xlu0 %1352
      %1354 = vrot.lane.b32.xlu0 %v805, 3
      %v1355 = vpop.permute.xlu0 %1354
      %vm1356 = vcmp.lt.s32.totalorder %v823, 3
      %v1357 = vsel %vm1356, %v1341, %v1349
      %v1358 = vsel %vm1356, %v1343, %v1351
      %v1359 = vsel %vm1356, %v1345, %v1353
      %v1360 = vsel %vm1356, %v1347, %v1355
      %v1361 = vsel %vm1356, %v1349, %v1341
      %v1362 = vsel %vm1356, %v1351, %v1343
      %v1363 = vsel %vm1356, %v1353, %v1345
      %v1364 = vsel %vm1356, %v1355, %v1347
      %s1365 = scalar_lea.vmem %s9, 384
      %v1366 = vld [vmem:[%s1365] sm:$0xff]
      %v1367 = vld [vmem:[%s1365 + $0x8] sm:$0xff]
      %v1368 = vld [vmem:[%s1365 + $0x10] sm:$0xff]
      %v1369 = vld [vmem:[%s1365 + $0x18] sm:$0xff]
      %v1370 = vld [vmem:[%s1365 + $0x20] sm:$0xff]
      %v1371 = vld [vmem:[%s1365 + $0x28] sm:$0xff]
      %v1372 = vld [vmem:[%s1365 + $0x30] sm:$0xff]
      %v1373 = vld [vmem:[%s1365 + $0x38] sm:$0xff]
      %v1374 = vmul.f32 %v1361, %v1366
      %v1375 = vmul.f32 %v1357, %v1367
      %v1376 = vmul.f32 %v1362, %v1368
      %v1377 = vmul.f32 %v1358, %v1369
      %v1378 = vmul.f32 %v1363, %v1370
      %v1379 = vmul.f32 %v1359, %v1371
      %v1380 = vmul.f32 %v1364, %v1372
      %v1381 = vmul.f32 %v1360, %v1373
      %1382 = vrot.lane.b32.xlu0 %v798, 48
      %v1383 = vpop.permute.xlu0 %1382
      %1384 = vrot.lane.b32.xlu0 %v800, 48
      %v1385 = vpop.permute.xlu0 %1384
      %1386 = vrot.lane.b32.xlu0 %v802, 48
      %v1387 = vpop.permute.xlu0 %1386
      %1388 = vrot.lane.b32.xlu0 %v804, 48
      %v1389 = vpop.permute.xlu0 %1388
      %1390 = vrot.lane.b32.xlu0 %v799, 48
      %v1391 = vpop.permute.xlu0 %1390
      %1392 = vrot.lane.b32.xlu0 %v801, 48
      %v1393 = vpop.permute.xlu0 %1392
      %1394 = vrot.lane.b32.xlu0 %v803, 48
      %v1395 = vpop.permute.xlu0 %1394
      %1396 = vrot.lane.b32.xlu0 %v805, 48
      %v1397 = vpop.permute.xlu0 %1396
      %vm1398 = vcmp.lt.s32.totalorder %v823, 48
      %v1399 = vsel %vm1398, %v1383, %v1391
      %v1400 = vsel %vm1398, %v1385, %v1393
      %v1401 = vsel %vm1398, %v1387, %v1395
      %v1402 = vsel %vm1398, %v1389, %v1397
      %v1403 = vsel %vm1398, %v1391, %v1383
      %v1404 = vsel %vm1398, %v1393, %v1385
      %v1405 = vsel %vm1398, %v1395, %v1387
      %v1406 = vsel %vm1398, %v1397, %v1389
      %s1407 = scalar_lea.vmem %s10, 384
      %v1408 = vld [vmem:[%s1407] sm:$0xff]
      %v1409 = vld [vmem:[%s1407 + $0x8] sm:$0xff]
      %v1410 = vld [vmem:[%s1407 + $0x10] sm:$0xff]
      %v1411 = vld [vmem:[%s1407 + $0x18] sm:$0xff]
      %v1412 = vld [vmem:[%s1407 + $0x20] sm:$0xff]
      %v1413 = vld [vmem:[%s1407 + $0x28] sm:$0xff]
      %v1414 = vld [vmem:[%s1407 + $0x30] sm:$0xff]
      %v1415 = vld [vmem:[%s1407 + $0x38] sm:$0xff]
      %v1416 = vmul.f32 %v1403, %v1408
      %v1417 = vmul.f32 %v1399, %v1409
      %v1418 = vmul.f32 %v1404, %v1410
      %v1419 = vmul.f32 %v1400, %v1411
      %v1420 = vmul.f32 %v1405, %v1412
      %v1421 = vmul.f32 %v1401, %v1413
      %v1422 = vmul.f32 %v1406, %v1414
      %v1423 = vmul.f32 %v1402, %v1415
      %v1424 = vadd.f32 %v1324, %v1374
      %v1425 = vadd.f32 %v1325, %v1375
      %v1426 = vadd.f32 %v1326, %v1376
      %v1427 = vadd.f32 %v1327, %v1377
      %v1428 = vadd.f32 %v1328, %v1378
      %v1429 = vadd.f32 %v1329, %v1379
      %v1430 = vadd.f32 %v1330, %v1380
      %v1431 = vadd.f32 %v1331, %v1381
      %v1432 = vadd.f32 %v1332, %v1416
      %v1433 = vadd.f32 %v1333, %v1417
      %v1434 = vadd.f32 %v1334, %v1418
      %v1435 = vadd.f32 %v1335, %v1419
      %v1436 = vadd.f32 %v1336, %v1420
      %v1437 = vadd.f32 %v1337, %v1421
      %v1438 = vadd.f32 %v1338, %v1422
      %v1439 = vadd.f32 %v1339, %v1423
      %v1440 = vld [vmem:[%s4] sm:$0xf]
      %v1441 = vld [vmem:[%s4 + $0x4] sm:$0xf]
      %v1442 = vld [vmem:[%s4 + $0x8] sm:$0xf]
      %v1443 = vld [vmem:[%s4 + $0xc] sm:$0xf]
      %v1444 = vpack.c.bf16 %v1426, %v1424
      %v1445 = vpack.c.bf16 %v1427, %v1425
      %v1446 = vpack.c.bf16 %v1430, %v1428
      %v1447 = vpack.c.bf16 %v1431, %v1429
      %1448 = vset.pattern.permute.xlu0 5
      %1449 = vperm.xlu0 %1448, %v396
      %v1450 = vpop.permute.xlu0 %1449
      %1452 = vset.pattern.permute.xlu0 5
      %1453 = vperm.xlu0 %1452, %v397
      %v1454 = vpop.permute.xlu0 %1453
      %1456 = vset.pattern.permute.xlu0 5
      %1457 = vperm.xlu0 %1456, %v398
      %v1458 = vpop.permute.xlu0 %1457
      %1460 = vset.pattern.permute.xlu0 5
      %1461 = vperm.xlu0 %1460, %v399
      %v1462 = vpop.permute.xlu0 %1461
      %v1468 = vunpack.c.l.b16 %v1440
      %v1469 = vunpack.c.l.b16 %v1441
      %v1470 = vunpack.c.l.b16 %v1442
      %v1471 = vunpack.c.l.b16 %v1443
      %v1472 = vpack.c.b16 %v1469, %v1468
      %v1473 = vpack.c.b16 %v1471, %v1470
      %v1475 = vsel %vm556, %v1472, 0
      %v1478 = vsel %vm556, %v1473, 0
      %1480 = vmatprep.subr.bf16.mxu0 %v1445
      %1481 = vmatpush1.bf16.msra.mxu0 %v1444
      %1482 = vmatprep.subr.bf16.mxu0 %v1447
      %1483 = vmatpush1.bf16.msra.mxu0 %v1446
      %1484 = vmatprep.subr.bf16.mxu0 0
      %1485 = vmatpush1.bf16.msra.mxu0 0
      %1486 = vmatprep.subr.bf16.mxu0 0
      %1487 = vmatpush1.bf16.msra.mxu0 0
      %1488 = vmatprep.subr.bf16.mxu0 0
      %1489 = vmatpush1.bf16.msra.mxu0 0
      %1490 = vmatprep.subr.bf16.mxu0 0
      %1491 = vmatpush1.bf16.msra.mxu0 0
      %1492 = vmatprep.subr.bf16.mxu0 0
      %1493 = vmatpush1.bf16.msra.mxu0 0
      %1494 = vmatprep.subr.bf16.mxu0 0
      %1495 = vmatpush1.bf16.msra.mxu0 0
      %1496 = vmatprep.subr.bf16.mxu0 0
      %1497 = vmatpush1.bf16.msra.mxu0 0
      %1498 = vmatprep.subr.bf16.mxu0 0
      %1499 = vmatpush1.bf16.msra.mxu0 0
      %1500 = vmatprep.subr.bf16.mxu0 0
      %1501 = vmatpush1.bf16.msra.mxu0 0
      %1502 = vmatprep.subr.bf16.mxu0 0
      %1503 = vmatpush1.bf16.msra.mxu0 0
      %1504 = vmatprep.subr.bf16.mxu0 0
      %1505 = vmatpush1.bf16.msra.mxu0 0
      %1506 = vmatprep.subr.bf16.mxu0 0
      %1507 = vmatpush1.bf16.msra.mxu0 0
      %1508 = vmatprep.subr.bf16.mxu0 0
      %1509 = vmatpush1.bf16.msra.mxu0 0
      %1510 = vmatprep.subr.bf16.mxu0 0
      %1511 = vmatpush1.bf16.msra.mxu0 0
      %1512 = vmatprep.mubr.bf16.mxu0 0
      %1513 = vmatmul.mubr.bf16.gmra.mrb[0].mxu0 %v1475
      %v1514 = vpop.f32.mrb[0].mxu0
      %v1515 = vadd.f32 %v1450, %v1514
      %v1516 = vpop.f32.mrb[0].mxu0
      %v1517 = vadd.f32 %v1450, %v1516
      %v1518 = vpop.f32.mrb[0].mxu0
      %v1519 = vadd.f32 %v1454, %v1518
      %v1520 = vpop.f32.mrb[0].mxu0
      %v1521 = vadd.f32 %v1454, %v1520
      %1522 = vmatprep.mubr.bf16.mxu0 0
      %1523 = vmatmul.mubr.bf16.gmra.mrb[0].mxu0 %v1478
      %v1524 = vpop.f32.mrb[0].mxu0
      %v1525 = vadd.f32 %v1458, %v1524
      %v1526 = vpop.f32.mrb[0].mxu0
      %v1527 = vadd.f32 %v1458, %v1526
      %v1528 = vpop.f32.mrb[0].mxu0
      %v1529 = vadd.f32 %v1462, %v1528
      %v1530 = vpop.f32.mrb[0].mxu0
      %v1531 = vadd.f32 %v1462, %v1530
      %1532 = vdwg.mxu0
      %v1533 = vmul.f32 %v1515, 0.5
      %v1534 = vmul.f32 %v1517, 0.5
      %v1535 = vmul.f32 %v1519, 0.5
      %v1536 = vmul.f32 %v1521, 0.5
      %v1537 = vmul.f32 %v1525, 0.5
      %v1538 = vmul.f32 %v1527, 0.5
      %v1539 = vmul.f32 %v1529, 0.5
      %v1540 = vmul.f32 %v1531, 0.5
      %v1541 = vmul.f32 %v1515, %v1515
      %v1542 = vmul.f32 %v1517, %v1517
      %v1543 = vmul.f32 %v1519, %v1519
      %v1544 = vmul.f32 %v1521, %v1521
      %v1545 = vmul.f32 %v1525, %v1525
      %v1546 = vmul.f32 %v1527, %v1527
      %v1547 = vmul.f32 %v1529, %v1529
      %v1548 = vmul.f32 %v1531, %v1531
      %v1549 = vmul.f32 %v1541, %v1515
      %v1550 = vmul.f32 %v1542, %v1517
      %v1551 = vmul.f32 %v1543, %v1519
      %v1552 = vmul.f32 %v1544, %v1521
      %v1553 = vmul.f32 %v1545, %v1525
      %v1554 = vmul.f32 %v1546, %v1527
      %v1555 = vmul.f32 %v1547, %v1529
      %v1556 = vmul.f32 %v1548, %v1531
      %v1557 = vmul.f32 %v1549, 0.044715
      %v1558 = vmul.f32 %v1550, 0.044715
      %v1559 = vmul.f32 %v1551, 0.044715
      %v1560 = vmul.f32 %v1552, 0.044715
      %v1561 = vmul.f32 %v1553, 0.044715
      %v1562 = vmul.f32 %v1554, 0.044715
      %v1563 = vmul.f32 %v1555, 0.044715
      %v1564 = vmul.f32 %v1556, 0.044715
      %v1565 = vadd.f32 %v1515, %v1557
      %v1566 = vadd.f32 %v1517, %v1558
      %v1567 = vadd.f32 %v1519, %v1559
      %v1568 = vadd.f32 %v1521, %v1560
      %v1569 = vadd.f32 %v1525, %v1561
      %v1570 = vadd.f32 %v1527, %v1562
      %v1571 = vadd.f32 %v1529, %v1563
      %v1572 = vadd.f32 %v1531, %v1564
      %v1573 = vmul.f32 %v1565, 0.7978846
      %v1574 = vmul.f32 %v1566, 0.7978846
      %v1575 = vmul.f32 %v1567, 0.7978846
      %v1576 = vmul.f32 %v1568, 0.7978846
      %v1577 = vmul.f32 %v1569, 0.7978846
      %v1578 = vmul.f32 %v1570, 0.7978846
      %v1579 = vmul.f32 %v1571, 0.7978846
      %v1580 = vmul.f32 %v1572, 0.7978846
      %v1581 = vtanh.pop %v1573
      %v1582 = vtanh.pop %v1574
      %v1583 = vtanh.pop %v1575
      %v1584 = vtanh.pop %v1576
      %v1585 = vtanh.pop %v1577
      %v1586 = vtanh.pop %v1578
      %v1587 = vtanh.pop %v1579
      %v1588 = vtanh.pop %v1580
      %v1589 = vadd.f32 %v1581, 1.0
      %v1590 = vadd.f32 %v1582, 1.0
      %v1591 = vadd.f32 %v1583, 1.0
      %v1592 = vadd.f32 %v1584, 1.0
      %v1593 = vadd.f32 %v1585, 1.0
      %v1594 = vadd.f32 %v1586, 1.0
      %v1595 = vadd.f32 %v1587, 1.0
      %v1596 = vadd.f32 %v1588, 1.0
      %v1597 = vmul.f32 %v1533, %v1589
      %v1598 = vmul.f32 %v1534, %v1590
      %v1599 = vmul.f32 %v1535, %v1591
      %v1600 = vmul.f32 %v1536, %v1592
      %v1601 = vmul.f32 %v1537, %v1593
      %v1602 = vmul.f32 %v1538, %v1594
      %v1603 = vmul.f32 %v1539, %v1595
      %v1604 = vmul.f32 %v1540, %v1596
      %v1605 = vld [vmem:[%s5] sm:$0xf]
      %v1606 = vld [vmem:[%s5 + $0x4] sm:$0xf]
      %v1607 = vld [vmem:[%s5 + $0x8] sm:$0xf]
      %v1608 = vld [vmem:[%s5 + $0xc] sm:$0xf]
      %v1609 = vpack.c.bf16 %v1434, %v1432
      %v1610 = vpack.c.bf16 %v1435, %v1433
      %v1611 = vpack.c.bf16 %v1438, %v1436
      %v1612 = vpack.c.bf16 %v1439, %v1437
      %1613 = vset.pattern.permute.xlu0 6
      %1614 = vperm.xlu0 %1613, %v396
      %v1615 = vpop.permute.xlu0 %1614
      %1617 = vset.pattern.permute.xlu0 6
      %1618 = vperm.xlu0 %1617, %v397
      %v1619 = vpop.permute.xlu0 %1618
      %1621 = vset.pattern.permute.xlu0 6
      %1622 = vperm.xlu0 %1621, %v398
      %v1623 = vpop.permute.xlu0 %1622
      %1625 = vset.pattern.permute.xlu0 6
      %1626 = vperm.xlu0 %1625, %v399
      %v1627 = vpop.permute.xlu0 %1626
      %v1633 = vunpack.c.l.b16 %v1605
      %v1634 = vunpack.c.l.b16 %v1606
      %v1635 = vunpack.c.l.b16 %v1607
      %v1636 = vunpack.c.l.b16 %v1608
      %v1637 = vpack.c.b16 %v1634, %v1633
      %v1638 = vpack.c.b16 %v1636, %v1635
      %v1640 = vsel %vm556, %v1637, 0
      %v1643 = vsel %vm556, %v1638, 0
      %1645 = vmatprep.subr.bf16.mxu0 %v1610
      %1646 = vmatpush1.bf16.msra.mxu0 %v1609
      %1647 = vmatprep.subr.bf16.mxu0 %v1612
      %1648 = vmatpush1.bf16.msra.mxu0 %v1611
      %1649 = vmatprep.subr.bf16.mxu0 0
      %1650 = vmatpush1.bf16.msra.mxu0 0
      %1651 = vmatprep.subr.bf16.mxu0 0
      %1652 = vmatpush1.bf16.msra.mxu0 0
      %1653 = vmatprep.subr.bf16.mxu0 0
      %1654 = vmatpush1.bf16.msra.mxu0 0
      %1655 = vmatprep.subr.bf16.mxu0 0
      %1656 = vmatpush1.bf16.msra.mxu0 0
      %1657 = vmatprep.subr.bf16.mxu0 0
      %1658 = vmatpush1.bf16.msra.mxu0 0
      %1659 = vmatprep.subr.bf16.mxu0 0
      %1660 = vmatpush1.bf16.msra.mxu0 0
      %1661 = vmatprep.subr.bf16.mxu0 0
      %1662 = vmatpush1.bf16.msra.mxu0 0
      %1663 = vmatprep.subr.bf16.mxu0 0
      %1664 = vmatpush1.bf16.msra.mxu0 0
      %1665 = vmatprep.subr.bf16.mxu0 0
      %1666 = vmatpush1.bf16.msra.mxu0 0
      %1667 = vmatprep.subr.bf16.mxu0 0
      %1668 = vmatpush1.bf16.msra.mxu0 0
      %1669 = vmatprep.subr.bf16.mxu0 0
      %1670 = vmatpush1.bf16.msra.mxu0 0
      %1671 = vmatprep.subr.bf16.mxu0 0
      %1672 = vmatpush1.bf16.msra.mxu0 0
      %1673 = vmatprep.subr.bf16.mxu0 0
      %1674 = vmatpush1.bf16.msra.mxu0 0
      %1675 = vmatprep.subr.bf16.mxu0 0
      %1676 = vmatpush1.bf16.msra.mxu0 0
      %1677 = vmatprep.mubr.bf16.mxu0 0
      %1678 = vmatmul.mubr.bf16.gmra.mrb[0].mxu0 %v1640
      %v1679 = vpop.f32.mrb[0].mxu0
      %v1680 = vadd.f32 %v1615, %v1679
      %v1681 = vpop.f32.mrb[0].mxu0
      %v1682 = vadd.f32 %v1615, %v1681
      %v1683 = vpop.f32.mrb[0].mxu0
      %v1684 = vadd.f32 %v1619, %v1683
      %v1685 = vpop.f32.mrb[0].mxu0
      %v1686 = vadd.f32 %v1619, %v1685
      %1687 = vmatprep.mubr.bf16.mxu0 0
      %1688 = vmatmul.mubr.bf16.gmra.mrb[0].mxu0 %v1643
      %v1689 = vpop.f32.mrb[0].mxu0
      %v1690 = vadd.f32 %v1623, %v1689
      %v1691 = vpop.f32.mrb[0].mxu0
      %v1692 = vadd.f32 %v1623, %v1691
      %v1693 = vpop.f32.mrb[0].mxu0
      %v1694 = vadd.f32 %v1627, %v1693
      %v1695 = vpop.f32.mrb[0].mxu0
      %v1696 = vadd.f32 %v1627, %v1695
      %1697 = vdwg.mxu0
      %v1698 = vmul.f32 %v1680, 0.5
      %v1699 = vmul.f32 %v1682, 0.5
      %v1700 = vmul.f32 %v1684, 0.5
      %v1701 = vmul.f32 %v1686, 0.5
      %v1702 = vmul.f32 %v1690, 0.5
      %v1703 = vmul.f32 %v1692, 0.5
      %v1704 = vmul.f32 %v1694, 0.5
      %v1705 = vmul.f32 %v1696, 0.5
      %v1706 = vmul.f32 %v1680, %v1680
      %v1707 = vmul.f32 %v1682, %v1682
      %v1708 = vmul.f32 %v1684, %v1684
      %v1709 = vmul.f32 %v1686, %v1686
      %v1710 = vmul.f32 %v1690, %v1690
      %v1711 = vmul.f32 %v1692, %v1692
      %v1712 = vmul.f32 %v1694, %v1694
      %v1713 = vmul.f32 %v1696, %v1696
      %v1714 = vmul.f32 %v1706, %v1680
      %v1715 = vmul.f32 %v1707, %v1682
      %v1716 = vmul.f32 %v1708, %v1684
      %v1717 = vmul.f32 %v1709, %v1686
      %v1718 = vmul.f32 %v1710, %v1690
      %v1719 = vmul.f32 %v1711, %v1692
      %v1720 = vmul.f32 %v1712, %v1694
      %v1721 = vmul.f32 %v1713, %v1696
      %v1722 = vmul.f32 %v1714, 0.044715
      %v1723 = vmul.f32 %v1715, 0.044715
      %v1724 = vmul.f32 %v1716, 0.044715
      %v1725 = vmul.f32 %v1717, 0.044715
      %v1726 = vmul.f32 %v1718, 0.044715
      %v1727 = vmul.f32 %v1719, 0.044715
      %v1728 = vmul.f32 %v1720, 0.044715
      %v1729 = vmul.f32 %v1721, 0.044715
      %v1730 = vadd.f32 %v1680, %v1722
      %v1731 = vadd.f32 %v1682, %v1723
      %v1732 = vadd.f32 %v1684, %v1724
      %v1733 = vadd.f32 %v1686, %v1725
      %v1734 = vadd.f32 %v1690, %v1726
      %v1735 = vadd.f32 %v1692, %v1727
      %v1736 = vadd.f32 %v1694, %v1728
      %v1737 = vadd.f32 %v1696, %v1729
      %v1738 = vmul.f32 %v1730, 0.7978846
      %v1739 = vmul.f32 %v1731, 0.7978846
      %v1740 = vmul.f32 %v1732, 0.7978846
      %v1741 = vmul.f32 %v1733, 0.7978846
      %v1742 = vmul.f32 %v1734, 0.7978846
      %v1743 = vmul.f32 %v1735, 0.7978846
      %v1744 = vmul.f32 %v1736, 0.7978846
      %v1745 = vmul.f32 %v1737, 0.7978846
      %v1746 = vtanh.pop %v1738
      %v1747 = vtanh.pop %v1739
      %v1748 = vtanh.pop %v1740
      %v1749 = vtanh.pop %v1741
      %v1750 = vtanh.pop %v1742
      %v1751 = vtanh.pop %v1743
      %v1752 = vtanh.pop %v1744
      %v1753 = vtanh.pop %v1745
      %v1754 = vadd.f32 %v1746, 1.0
      %v1755 = vadd.f32 %v1747, 1.0
      %v1756 = vadd.f32 %v1748, 1.0
      %v1757 = vadd.f32 %v1749, 1.0
      %v1758 = vadd.f32 %v1750, 1.0
      %v1759 = vadd.f32 %v1751, 1.0
      %v1760 = vadd.f32 %v1752, 1.0
      %v1761 = vadd.f32 %v1753, 1.0
      %v1762 = vmul.f32 %v1698, %v1754
      %v1763 = vmul.f32 %v1699, %v1755
      %v1764 = vmul.f32 %v1700, %v1756
      %v1765 = vmul.f32 %v1701, %v1757
      %v1766 = vmul.f32 %v1702, %v1758
      %v1767 = vmul.f32 %v1703, %v1759
      %v1768 = vmul.f32 %v1704, %v1760
      %v1769 = vmul.f32 %v1705, %v1761
      %v1770 = vadd.f32 %v1597, %v1762
      %v1771 = vadd.f32 %v1598, %v1763
      %v1772 = vadd.f32 %v1599, %v1764
      %v1773 = vadd.f32 %v1600, %v1765
      %v1774 = vadd.f32 %v1601, %v1766
      %v1775 = vadd.f32 %v1602, %v1767
      %v1776 = vadd.f32 %v1603, %v1768
      %v1777 = vadd.f32 %v1604, %v1769
      %v1778 = vadd.f32 %v1770, %v1771
      %1779 = vadd.xlane.f32.xlu0 %v1778
      %v1780 = vpop.xlane.xlu0 %1779
      %v1781 = vadd.f32 %v1772, %v1773
      %1782 = vadd.xlane.f32.xlu0 %v1781
      %v1783 = vpop.xlane.xlu0 %1782
      %v1784 = vadd.f32 %v1774, %v1775
      %1785 = vadd.xlane.f32.xlu0 %v1784
      %v1786 = vpop.xlane.xlu0 %1785
      %v1787 = vadd.f32 %v1776, %v1777
      %1788 = vadd.xlane.f32.xlu0 %v1787
      %v1789 = vpop.xlane.xlu0 %1788
      %v1790 = vadd.f32 %v1780, %v1783
      %v1791 = vadd.f32 %v1790, %v1786
      %v1792 = vadd.f32 %v1791, %v1789
      %v1793 = vrot.slane %v1792, 4
      %v1794 = vadd.f32 %v1792, %v1793
      %v1795 = vrot.slane %v1794, 2
      %v1796 = vadd.f32 %v1794, %v1795
      %v1797 = vrot.slane %v1796, 1
      %v1798 = vadd.f32 %v1796, %v1797
      %v1799 = vmul.f32 %v1798, 0.00012207031
      %v1800 = vsub.f32 %v1770, %v1799
      %v1801 = vsub.f32 %v1771, %v1799
      %v1802 = vsub.f32 %v1772, %v1799
      %v1803 = vsub.f32 %v1773, %v1799
      %v1804 = vsub.f32 %v1774, %v1799
      %v1805 = vsub.f32 %v1775, %v1799
      %v1806 = vsub.f32 %v1776, %v1799
      %v1807 = vsub.f32 %v1777, %v1799
      %v1808 = vmul.f32 %v1800, %v1800
      %v1809 = vmul.f32 %v1801, %v1801
      %v1810 = vmul.f32 %v1802, %v1802
      %v1811 = vmul.f32 %v1803, %v1803
      %v1812 = vmul.f32 %v1804, %v1804
      %v1813 = vmul.f32 %v1805, %v1805
      %v1814 = vmul.f32 %v1806, %v1806
      %v1815 = vmul.f32 %v1807, %v1807
      %v1816 = vadd.f32 %v1808, %v1809
      %1817 = vadd.xlane.f32.xlu0 %v1816
      %v1818 = vpop.xlane.xlu0 %1817
      %v1819 = vadd.f32 %v1810, %v1811
      %1820 = vadd.xlane.f32.xlu0 %v1819
      %v1821 = vpop.xlane.xlu0 %1820
      %v1822 = vadd.f32 %v1812, %v1813
      %1823 = vadd.xlane.f32.xlu0 %v1822
      %v1824 = vpop.xlane.xlu0 %1823
      %v1825 = vadd.f32 %v1814, %v1815
      %1826 = vadd.xlane.f32.xlu0 %v1825
      %v1827 = vpop.xlane.xlu0 %1826
      %v1828 = vadd.f32 %v1818, %v1821
      %v1829 = vadd.f32 %v1828, %v1824
      %v1830 = vadd.f32 %v1829, %v1827
      %v1831 = vrot.slane %v1830, 4
      %v1832 = vadd.f32 %v1830, %v1831
      %v1833 = vrot.slane %v1832, 2
      %v1834 = vadd.f32 %v1832, %v1833
      %v1835 = vrot.slane %v1834, 1
      %v1836 = vadd.f32 %v1834, %v1835
      %v1837 = vmul.f32 %v1836, 0.00012207031
      %v1838 = vadd.f32 %v1837, 1e-05
      %v1839 = vrsqrt.pop %v1838
      %v1840 = vmul.f32 %v1800, %v1839
      %v1841 = vmul.f32 %v1801, %v1839
      %v1842 = vmul.f32 %v1802, %v1839
      %v1843 = vmul.f32 %v1803, %v1839
      %v1844 = vmul.f32 %v1804, %v1839
      %v1845 = vmul.f32 %v1805, %v1839
      %v1846 = vmul.f32 %v1806, %v1839
      %v1847 = vmul.f32 %v1807, %v1839
      %1848 = vset.pattern.permute.xlu0 7
      %1849 = vperm.xlu0 %1848, %v396
      %v1850 = vpop.permute.xlu0 %1849
      %1852 = vset.pattern.permute.xlu0 7
      %1853 = vperm.xlu0 %1852, %v397
      %v1854 = vpop.permute.xlu0 %1853
      %1856 = vset.pattern.permute.xlu0 7
      %1857 = vperm.xlu0 %1856, %v398
      %v1858 = vpop.permute.xlu0 %1857
      %1860 = vset.pattern.permute.xlu0 7
      %1861 = vperm.xlu0 %1860, %v399
      %v1862 = vpop.permute.xlu0 %1861
      %v1864 = vmul.f32 %v1840, %v1850
      %v1865 = vmul.f32 %v1841, %v1850
      %v1866 = vmul.f32 %v1842, %v1854
      %v1867 = vmul.f32 %v1843, %v1854
      %v1868 = vmul.f32 %v1844, %v1858
      %v1869 = vmul.f32 %v1845, %v1858
      %v1870 = vmul.f32 %v1846, %v1862
      %v1871 = vmul.f32 %v1847, %v1862
      %1872 = vset.pattern.permute.xlu0 8
      %1873 = vperm.xlu0 %1872, %v396
      %v1874 = vpop.permute.xlu0 %1873
      %1876 = vset.pattern.permute.xlu0 8
      %1877 = vperm.xlu0 %1876, %v397
      %v1878 = vpop.permute.xlu0 %1877
      %1880 = vset.pattern.permute.xlu0 8
      %1881 = vperm.xlu0 %1880, %v398
      %v1882 = vpop.permute.xlu0 %1881
      %1884 = vset.pattern.permute.xlu0 8
      %1885 = vperm.xlu0 %1884, %v399
      %v1886 = vpop.permute.xlu0 %1885
      %v1888 = vadd.f32 %v1864, %v1874
      %v1889 = vadd.f32 %v1865, %v1874
      %v1890 = vadd.f32 %v1866, %v1878
      %v1891 = vadd.f32 %v1867, %v1878
      %v1892 = vadd.f32 %v1868, %v1882
      %v1893 = vadd.f32 %v1869, %v1882
      %v1894 = vadd.f32 %v1870, %v1886
      %v1895 = vadd.f32 %v1871, %v1886
      %v1896 = vld [vmem:[%s6] sm:$0xf]
      %v1897 = vld [vmem:[%s6 + $0x4] sm:$0xf]
      %v1898 = vld [vmem:[%s6 + $0x8] sm:$0xf]
      %v1899 = vld [vmem:[%s6 + $0xc] sm:$0xf]
      %v1900 = vpack.c.bf16 %v1890, %v1888
      %v1901 = vpack.c.bf16 %v1891, %v1889
      %v1902 = vpack.c.bf16 %v1894, %v1892
      %v1903 = vpack.c.bf16 %v1895, %v1893
      %1904 = vset.pattern.permute.xlu0 9
      %1905 = vperm.xlu0 %1904, %v396
      %v1906 = vpop.permute.xlu0 %1905
      %1908 = vset.pattern.permute.xlu0 9
      %1909 = vperm.xlu0 %1908, %v397
      %v1910 = vpop.permute.xlu0 %1909
      %1912 = vset.pattern.permute.xlu0 9
      %1913 = vperm.xlu0 %1912, %v398
      %v1914 = vpop.permute.xlu0 %1913
      %1916 = vset.pattern.permute.xlu0 9
      %1917 = vperm.xlu0 %1916, %v399
      %v1918 = vpop.permute.xlu0 %1917
      %v1924 = vunpack.c.l.b16 %v1896
      %v1925 = vunpack.c.l.b16 %v1897
      %v1926 = vunpack.c.l.b16 %v1898
      %v1927 = vunpack.c.l.b16 %v1899
      %v1928 = vpack.c.b16 %v1925, %v1924
      %v1929 = vpack.c.b16 %v1927, %v1926
      %v1931 = vsel %vm556, %v1928, 0
      %v1934 = vsel %vm556, %v1929, 0
      %1936 = vmatprep.subr.bf16.mxu0 %v1901
      %1937 = vmatpush1.bf16.msra.mxu0 %v1900
      %1938 = vmatprep.subr.bf16.mxu0 %v1903
      %1939 = vmatpush1.bf16.msra.mxu0 %v1902
      %1940 = vmatprep.subr.bf16.mxu0 0
      %1941 = vmatpush1.bf16.msra.mxu0 0
      %1942 = vmatprep.subr.bf16.mxu0 0
      %1943 = vmatpush1.bf16.msra.mxu0 0
      %1944 = vmatprep.subr.bf16.mxu0 0
      %1945 = vmatpush1.bf16.msra.mxu0 0
      %1946 = vmatprep.subr.bf16.mxu0 0
      %1947 = vmatpush1.bf16.msra.mxu0 0
      %1948 = vmatprep.subr.bf16.mxu0 0
      %1949 = vmatpush1.bf16.msra.mxu0 0
      %1950 = vmatprep.subr.bf16.mxu0 0
      %1951 = vmatpush1.bf16.msra.mxu0 0
      %1952 = vmatprep.subr.bf16.mxu0 0
      %1953 = vmatpush1.bf16.msra.mxu0 0
      %1954 = vmatprep.subr.bf16.mxu0 0
      %1955 = vmatpush1.bf16.msra.mxu0 0
      %1956 = vmatprep.subr.bf16.mxu0 0
      %1957 = vmatpush1.bf16.msra.mxu0 0
      %1958 = vmatprep.subr.bf16.mxu0 0
      %1959 = vmatpush1.bf16.msra.mxu0 0
      %1960 = vmatprep.subr.bf16.mxu0 0
      %1961 = vmatpush1.bf16.msra.mxu0 0
      %1962 = vmatprep.subr.bf16.mxu0 0
      %1963 = vmatpush1.bf16.msra.mxu0 0
      %1964 = vmatprep.subr.bf16.mxu0 0
      %1965 = vmatpush1.bf16.msra.mxu0 0
      %1966 = vmatprep.subr.bf16.mxu0 0
      %1967 = vmatpush1.bf16.msra.mxu0 0
      %1968 = vmatprep.mubr.bf16.mxu0 0
      %1969 = vmatmul.mubr.bf16.gmra.mrb[0].mxu0 %v1931
      %v1970 = vpop.f32.mrb[0].mxu0
      %v1971 = vadd.f32 %v1906, %v1970
      %v1972 = vpop.f32.mrb[0].mxu0
      %v1973 = vadd.f32 %v1906, %v1972
      %v1974 = vpop.f32.mrb[0].mxu0
      %v1975 = vadd.f32 %v1910, %v1974
      %v1976 = vpop.f32.mrb[0].mxu0
      %v1977 = vadd.f32 %v1910, %v1976
      %1978 = vmatprep.mubr.bf16.mxu0 0
      %1979 = vmatmul.mubr.bf16.gmra.mrb[0].mxu0 %v1934
      %v1980 = vpop.f32.mrb[0].mxu0
      %v1981 = vadd.f32 %v1914, %v1980
      %v1982 = vpop.f32.mrb[0].mxu0
      %v1983 = vadd.f32 %v1914, %v1982
      %v1984 = vpop.f32.mrb[0].mxu0
      %v1985 = vadd.f32 %v1918, %v1984
      %v1986 = vpop.f32.mrb[0].mxu0
      %v1987 = vadd.f32 %v1918, %v1986
      %1988 = vdwg.mxu0
      %v1989 = vadd.f32 %v388, %v1971
      %v1990 = vadd.f32 %v389, %v1973
      %v1991 = vadd.f32 %v390, %v1975
      %v1992 = vadd.f32 %v391, %v1977
      %v1993 = vadd.f32 %v392, %v1981
      %v1994 = vadd.f32 %v393, %v1983
      %v1995 = vadd.f32 %v394, %v1985
      %v1996 = vadd.f32 %v395, %v1987
      %v1997 = vadd.f32 %v1989, %v1990
      %1998 = vadd.xlane.f32.xlu0 %v1997
      %v1999 = vpop.xlane.xlu0 %1998
      %v2000 = vadd.f32 %v1991, %v1992
      %2001 = vadd.xlane.f32.xlu0 %v2000
      %v2002 = vpop.xlane.xlu0 %2001
      %v2003 = vadd.f32 %v1993, %v1994
      %2004 = vadd.xlane.f32.xlu0 %v2003
      %v2005 = vpop.xlane.xlu0 %2004
      %v2006 = vadd.f32 %v1995, %v1996
      %2007 = vadd.xlane.f32.xlu0 %v2006
      %v2008 = vpop.xlane.xlu0 %2007
      %v2009 = vadd.f32 %v1999, %v2002
      %v2010 = vadd.f32 %v2009, %v2005
      %v2011 = vadd.f32 %v2010, %v2008
      %v2012 = vrot.slane %v2011, 4
      %v2013 = vadd.f32 %v2011, %v2012
      %v2014 = vrot.slane %v2013, 2
      %v2015 = vadd.f32 %v2013, %v2014
      %v2016 = vrot.slane %v2015, 1
      %v2017 = vadd.f32 %v2015, %v2016
      %v2018 = vmul.f32 %v2017, 0.00012207031
      %v2019 = vsub.f32 %v1989, %v2018
      %v2020 = vsub.f32 %v1990, %v2018
      %v2021 = vsub.f32 %v1991, %v2018
      %v2022 = vsub.f32 %v1992, %v2018
      %v2023 = vsub.f32 %v1993, %v2018
      %v2024 = vsub.f32 %v1994, %v2018
      %v2025 = vsub.f32 %v1995, %v2018
      %v2026 = vsub.f32 %v1996, %v2018
      %v2027 = vmul.f32 %v2019, %v2019
      %v2028 = vmul.f32 %v2020, %v2020
      %v2029 = vmul.f32 %v2021, %v2021
      %v2030 = vmul.f32 %v2022, %v2022
      %v2031 = vmul.f32 %v2023, %v2023
      %v2032 = vmul.f32 %v2024, %v2024
      %v2033 = vmul.f32 %v2025, %v2025
      %v2034 = vmul.f32 %v2026, %v2026
      %v2035 = vadd.f32 %v2027, %v2028
      %2036 = vadd.xlane.f32.xlu0 %v2035
      %v2037 = vpop.xlane.xlu0 %2036
      %v2038 = vadd.f32 %v2029, %v2030
      %2039 = vadd.xlane.f32.xlu0 %v2038
      %v2040 = vpop.xlane.xlu0 %2039
      %v2041 = vadd.f32 %v2031, %v2032
      %2042 = vadd.xlane.f32.xlu0 %v2041
      %v2043 = vpop.xlane.xlu0 %2042
      %v2044 = vadd.f32 %v2033, %v2034
      %2045 = vadd.xlane.f32.xlu0 %v2044
      %v2046 = vpop.xlane.xlu0 %2045
      %v2047 = vadd.f32 %v2037, %v2040
      %v2048 = vadd.f32 %v2047, %v2043
      %v2049 = vadd.f32 %v2048, %v2046
      %v2050 = vrot.slane %v2049, 4
      %v2051 = vadd.f32 %v2049, %v2050
      %v2052 = vrot.slane %v2051, 2
      %v2053 = vadd.f32 %v2051, %v2052
      %v2054 = vrot.slane %v2053, 1
      %v2055 = vadd.f32 %v2053, %v2054
      %v2056 = vmul.f32 %v2055, 0.00012207031
      %v2057 = vadd.f32 %v2056, 1e-05
      %v2058 = vrsqrt.pop %v2057
      %v2059 = vmul.f32 %v2019, %v2058
      %v2060 = vmul.f32 %v2020, %v2058
      %v2061 = vmul.f32 %v2021, %v2058
      %v2062 = vmul.f32 %v2022, %v2058
      %v2063 = vmul.f32 %v2023, %v2058
      %v2064 = vmul.f32 %v2024, %v2058
      %v2065 = vmul.f32 %v2025, %v2058
      %v2066 = vmul.f32 %v2026, %v2058
      %2067 = vset.pattern.permute.xlu0 10
      %2068 = vperm.xlu0 %2067, %v396
      %v2069 = vpop.permute.xlu0 %2068
      %2071 = vset.pattern.permute.xlu0 10
      %2072 = vperm.xlu0 %2071, %v397
      %v2073 = vpop.permute.xlu0 %2072
      %2075 = vset.pattern.permute.xlu0 10
      %2076 = vperm.xlu0 %2075, %v398
      %v2077 = vpop.permute.xlu0 %2076
      %2079 = vset.pattern.permute.xlu0 10
      %2080 = vperm.xlu0 %2079, %v399
      %v2081 = vpop.permute.xlu0 %2080
      %v2083 = vmul.f32 %v2059, %v2069
      %v2084 = vmul.f32 %v2060, %v2069
      %v2085 = vmul.f32 %v2061, %v2073
      %v2086 = vmul.f32 %v2062, %v2073
      %v2087 = vmul.f32 %v2063, %v2077
      %v2088 = vmul.f32 %v2064, %v2077
      %v2089 = vmul.f32 %v2065, %v2081
      %v2090 = vmul.f32 %v2066, %v2081
      %2091 = vset.pattern.permute.xlu0 11
      %2092 = vperm.xlu0 %2091, %v396
      %v2093 = vpop.permute.xlu0 %2092
      %2095 = vset.pattern.permute.xlu0 11
      %2096 = vperm.xlu0 %2095, %v397
      %v2097 = vpop.permute.xlu0 %2096
      %2099 = vset.pattern.permute.xlu0 11
      %2100 = vperm.xlu0 %2099, %v398
      %v2101 = vpop.permute.xlu0 %2100
      %2103 = vset.pattern.permute.xlu0 11
      %2104 = vperm.xlu0 %2103, %v399
      %v2105 = vpop.permute.xlu0 %2104
      %v2107 = vadd.f32 %v2083, %v2093
      %v2108 = vadd.f32 %v2084, %v2093
      %v2109 = vadd.f32 %v2085, %v2097
      %v2110 = vadd.f32 %v2086, %v2097
      %v2111 = vadd.f32 %v2087, %v2101
      %v2112 = vadd.f32 %v2088, %v2101
      %v2113 = vadd.f32 %v2089, %v2105
      %v2114 = vadd.f32 %v2090, %v2105
      %v2115 = vld [vmem:[%s2] sm:$0xff]
      %v2116 = vld [vmem:[%s2 + $0x8] sm:$0xff]
      %v2117 = vld [vmem:[%s2 + $0x10] sm:$0xff]
      %v2118 = vld [vmem:[%s2 + $0x18] sm:$0xff]
      %v2119 = vld [vmem:[%s2 + $0x20] sm:$0xff]
      %v2120 = vld [vmem:[%s2 + $0x28] sm:$0xff]
      %v2121 = vld [vmem:[%s2 + $0x30] sm:$0xff]
      %v2122 = vld [vmem:[%s2 + $0x38] sm:$0xff]
      %v2123 = vld [vmem:[%s2 + $0x40] sm:$0xff]
      %v2124 = vld [vmem:[%s2 + $0x48] sm:$0xff]
      %v2125 = vld [vmem:[%s2 + $0x50] sm:$0xff]
      %v2126 = vld [vmem:[%s2 + $0x58] sm:$0xff]
      %v2127 = vld [vmem:[%s2 + $0x60] sm:$0xff]
      %v2128 = vld [vmem:[%s2 + $0x68] sm:$0xff]
      %v2129 = vld [vmem:[%s2 + $0x70] sm:$0xff]
      %v2130 = vld [vmem:[%s2 + $0x78] sm:$0xff]
      %v2131 = vld [vmem:[%s7] sm:$0xf]
      %v2132 = vld [vmem:[%s7 + $0x4] sm:$0xf]
      %v2133 = vld [vmem:[%s7 + $0x8] sm:$0xf]
      %v2134 = vld [vmem:[%s7 + $0xc] sm:$0xf]
      %v2135 = vld [vmem:[%s7 + $0x10] sm:$0xf]
      %v2136 = vld [vmem:[%s7 + $0x14] sm:$0xf]
      %v2137 = vld [vmem:[%s7 + $0x18] sm:$0xf]
      %v2138 = vld [vmem:[%s7 + $0x1c] sm:$0xf]
      %v2139 = vld [vmem:[%s7 + $0x20] sm:$0xf]
      %v2140 = vld [vmem:[%s7 + $0x24] sm:$0xf]
      %v2141 = vld [vmem:[%s7 + $0x28] sm:$0xf]
      %v2142 = vld [vmem:[%s7 + $0x2c] sm:$0xf]
      %v2143 = vld [vmem:[%s7 + $0x30] sm:$0xf]
      %v2144 = vld [vmem:[%s7 + $0x34] sm:$0xf]
      %v2145 = vld [vmem:[%s7 + $0x38] sm:$0xf]
      %v2146 = vld [vmem:[%s7 + $0x3c] sm:$0xf]
      %v2147 = vpack.c.bf16 %v2109, %v2107
      %v2148 = vpack.c.bf16 %v2110, %v2108
      %v2149 = vpack.c.bf16 %v2113, %v2111
      %v2150 = vpack.c.bf16 %v2114, %v2112
      %2152 = vset.pattern.permute.xlu0 0
      %2153 = vperm.xlu0 %2152, %v2115
      %v2154 = vpop.permute.xlu0 %2153
      %2157 = vset.pattern.permute.xlu0 0
      %2158 = vperm.xlu0 %2157, %v2116
      %v2159 = vpop.permute.xlu0 %2158
      %2162 = vset.pattern.permute.xlu0 0
      %2163 = vperm.xlu0 %2162, %v2117
      %v2164 = vpop.permute.xlu0 %2163
      %2167 = vset.pattern.permute.xlu0 0
      %2168 = vperm.xlu0 %2167, %v2118
      %v2169 = vpop.permute.xlu0 %2168
      %2172 = vset.pattern.permute.xlu0 0
      %2173 = vperm.xlu0 %2172, %v2119
      %v2174 = vpop.permute.xlu0 %2173
      %2177 = vset.pattern.permute.xlu0 0
      %2178 = vperm.xlu0 %2177, %v2120
      %v2179 = vpop.permute.xlu0 %2178
      %2182 = vset.pattern.permute.xlu0 0
      %2183 = vperm.xlu0 %2182, %v2121
      %v2184 = vpop.permute.xlu0 %2183
      %2187 = vset.pattern.permute.xlu0 0
      %2188 = vperm.xlu0 %2187, %v2122
      %v2189 = vpop.permute.xlu0 %2188
      %2192 = vset.pattern.permute.xlu0 0
      %2193 = vperm.xlu0 %2192, %v2123
      %v2194 = vpop.permute.xlu0 %2193
      %2197 = vset.pattern.permute.xlu0 0
      %2198 = vperm.xlu0 %2197, %v2124
      %v2199 = vpop.permute.xlu0 %2198
      %2202 = vset.pattern.permute.xlu0 0
      %2203 = vperm.xlu0 %2202, %v2125
      %v2204 = vpop.permute.xlu0 %2203
      %2207 = vset.pattern.permute.xlu0 0
      %2208 = vperm.xlu0 %2207, %v2126
      %v2209 = vpop.permute.xlu0 %2208
      %2212 = vset.pattern.permute.xlu0 0
      %2213 = vperm.xlu0 %2212, %v2127
      %v2214 = vpop.permute.xlu0 %2213
      %2217 = vset.pattern.permute.xlu0 0
      %2218 = vperm.xlu0 %2217, %v2128
      %v2219 = vpop.permute.xlu0 %2218
      %2222 = vset.pattern.permute.xlu0 0
      %2223 = vperm.xlu0 %2222, %v2129
      %v2224 = vpop.permute.xlu0 %2223
      %2227 = vset.pattern.permute.xlu0 0
      %2228 = vperm.xlu0 %2227, %v2130
      %v2229 = vpop.permute.xlu0 %2228
      %v2247 = vunpack.c.l.b16 %v2131
      %v2248 = vunpack.c.l.b16 %v2132
      %v2249 = vunpack.c.l.b16 %v2133
      %v2250 = vunpack.c.l.b16 %v2134
      %v2251 = vunpack.c.l.b16 %v2135
      %v2252 = vunpack.c.l.b16 %v2136
      %v2253 = vunpack.c.l.b16 %v2137
      %v2254 = vunpack.c.l.b16 %v2138
      %v2255 = vunpack.c.l.b16 %v2139
      %v2256 = vunpack.c.l.b16 %v2140
      %v2257 = vunpack.c.l.b16 %v2141
      %v2258 = vunpack.c.l.b16 %v2142
      %v2259 = vunpack.c.l.b16 %v2143
      %v2260 = vunpack.c.l.b16 %v2144
      %v2261 = vunpack.c.l.b16 %v2145
      %v2262 = vunpack.c.l.b16 %v2146
      %v2263 = vpack.c.b16 %v2248, %v2247
      %v2264 = vpack.c.b16 %v2250, %v2249
      %v2265 = vpack.c.b16 %v2252, %v2251
      %v2266 = vpack.c.b16 %v2254, %v2253
      %v2267 = vpack.c.b16 %v2256, %v2255
      %v2268 = vpack.c.b16 %v2258, %v2257
      %v2269 = vpack.c.b16 %v2260, %v2259
      %v2270 = vpack.c.b16 %v2262, %v2261
      %v2272 = vsel %vm556, %v2263, 0
      %v2275 = vsel %vm556, %v2264, 0
      %v2278 = vsel %vm556, %v2265, 0
      %v2281 = vsel %vm556, %v2266, 0
      %v2284 = vsel %vm556, %v2267, 0
      %v2287 = vsel %vm556, %v2268, 0
      %v2290 = vsel %vm556, %v2269, 0
      %v2293 = vsel %vm556, %v2270, 0
      %2295 = vmatprep.subr.bf16.mxu0 %v2148
      %2296 = vmatpush1.bf16.msra.mxu0 %v2147
      %2297 = vmatprep.subr.bf16.mxu0 %v2150
      %2298 = vmatpush1.bf16.msra.mxu0 %v2149
      %2299 = vmatprep.subr.bf16.mxu0 0
      %2300 = vmatpush1.bf16.msra.mxu0 0
      %2301 = vmatprep.subr.bf16.mxu0 0
      %2302 = vmatpush1.bf16.msra.mxu0 0
      %2303 = vmatprep.subr.bf16.mxu0 0
      %2304 = vmatpush1.bf16.msra.mxu0 0
      %2305 = vmatprep.subr.bf16.mxu0 0
      %2306 = vmatpush1.bf16.msra.mxu0 0
      %2307 = vmatprep.subr.bf16.mxu0 0
      %2308 = vmatpush1.bf16.msra.mxu0 0
      %2309 = vmatprep.subr.bf16.mxu0 0
      %2310 = vmatpush1.bf16.msra.mxu0 0
      %2311 = vmatprep.subr.bf16.mxu0 0
      %2312 = vmatpush1.bf16.msra.mxu0 0
      %2313 = vmatprep.subr.bf16.mxu0 0
      %2314 = vmatpush1.bf16.msra.mxu0 0
      %2315 = vmatprep.subr.bf16.mxu0 0
      %2316 = vmatpush1.bf16.msra.mxu0 0
      %2317 = vmatprep.subr.bf16.mxu0 0
      %2318 = vmatpush1.bf16.msra.mxu0 0
      %2319 = vmatprep.subr.bf16.mxu0 0
      %2320 = vmatpush1.bf16.msra.mxu0 0
      %2321 = vmatprep.subr.bf16.mxu0 0
      %2322 = vmatpush1.bf16.msra.mxu0 0
      %2323 = vmatprep.subr.bf16.mxu0 0
      %2324 = vmatpush1.bf16.msra.mxu0 0
      %2325 = vmatprep.subr.bf16.mxu0 0
      %2326 = vmatpush1.bf16.msra.mxu0 0
      %2327 = vmatprep.mubr.bf16.mxu0 0
      %2328 = vmatmul.mubr.bf16.gmra.mrb[0].mxu0 %v2272
      %v2329 = vpop.f32.mrb[0].mxu0
      %v2330 = vadd.f32 %v2154, %v2329
      %v2331 = vpop.f32.mrb[0].mxu0
      %v2332 = vadd.f32 %v2154, %v2331
      %v2333 = vpop.f32.mrb[0].mxu0
      %v2334 = vadd.f32 %v2159, %v2333
      %v2335 = vpop.f32.mrb[0].mxu0
      %v2336 = vadd.f32 %v2159, %v2335
      %2337 = vmatprep.mubr.bf16.mxu0 0
      %2338 = vmatmul.mubr.bf16.gmra.mrb[0].mxu0 %v2275
      %v2339 = vpop.f32.mrb[0].mxu0
      %v2340 = vadd.f32 %v2164, %v2339
      %v2341 = vpop.f32.mrb[0].mxu0
      %v2342 = vadd.f32 %v2164, %v2341
      %v2343 = vpop.f32.mrb[0].mxu0
      %v2344 = vadd.f32 %v2169, %v2343
      %v2345 = vpop.f32.mrb[0].mxu0
      %v2346 = vadd.f32 %v2169, %v2345
      %2347 = vmatprep.mubr.bf16.mxu0 0
      %2348 = vmatmul.mubr.bf16.gmra.mrb[0].mxu0 %v2278
      %v2349 = vpop.f32.mrb[0].mxu0
      %v2350 = vadd.f32 %v2174, %v2349
      %v2351 = vpop.f32.mrb[0].mxu0
      %v2352 = vadd.f32 %v2174, %v2351
      %v2353 = vpop.f32.mrb[0].mxu0
      %v2354 = vadd.f32 %v2179, %v2353
      %v2355 = vpop.f32.mrb[0].mxu0
      %v2356 = vadd.f32 %v2179, %v2355
      %2357 = vmatprep.mubr.bf16.mxu0 0
      %2358 = vmatmul.mubr.bf16.gmra.mrb[0].mxu0 %v2281
      %v2359 = vpop.f32.mrb[0].mxu0
      %v2360 = vadd.f32 %v2184, %v2359
      %v2361 = vpop.f32.mrb[0].mxu0
      %v2362 = vadd.f32 %v2184, %v2361
      %v2363 = vpop.f32.mrb[0].mxu0
      %v2364 = vadd.f32 %v2189, %v2363
      %v2365 = vpop.f32.mrb[0].mxu0
      %v2366 = vadd.f32 %v2189, %v2365
      %2367 = vmatprep.mubr.bf16.mxu0 0
      %2368 = vmatmul.mubr.bf16.gmra.mrb[0].mxu0 %v2284
      %v2369 = vpop.f32.mrb[0].mxu0
      %v2370 = vadd.f32 %v2194, %v2369
      %v2371 = vpop.f32.mrb[0].mxu0
      %v2372 = vadd.f32 %v2194, %v2371
      %v2373 = vpop.f32.mrb[0].mxu0
      %v2374 = vadd.f32 %v2199, %v2373
      %v2375 = vpop.f32.mrb[0].mxu0
      %v2376 = vadd.f32 %v2199, %v2375
      %2377 = vmatprep.mubr.bf16.mxu0 0
      %2378 = vmatmul.mubr.bf16.gmra.mrb[0].mxu0 %v2287
      %v2379 = vpop.f32.mrb[0].mxu0
      %v2380 = vadd.f32 %v2204, %v2379
      %v2381 = vpop.f32.mrb[0].mxu0
      %v2382 = vadd.f32 %v2204, %v2381
      %v2383 = vpop.f32.mrb[0].mxu0
      %v2384 = vadd.f32 %v2209, %v2383
      %v2385 = vpop.f32.mrb[0].mxu0
      %v2386 = vadd.f32 %v2209, %v2385
      %2387 = vmatprep.mubr.bf16.mxu0 0
      %2388 = vmatmul.mubr.bf16.gmra.mrb[0].mxu0 %v2290
      %v2389 = vpop.f32.mrb[0].mxu0
      %v2390 = vadd.f32 %v2214, %v2389
      %v2391 = vpop.f32.mrb[0].mxu0
      %v2392 = vadd.f32 %v2214, %v2391
      %v2393 = vpop.f32.mrb[0].mxu0
      %v2394 = vadd.f32 %v2219, %v2393
      %v2395 = vpop.f32.mrb[0].mxu0
      %v2396 = vadd.f32 %v2219, %v2395
      %2397 = vmatprep.mubr.bf16.mxu0 0
      %2398 = vmatmul.mubr.bf16.gmra.mrb[0].mxu0 %v2293
      %v2399 = vpop.f32.mrb[0].mxu0
      %v2400 = vadd.f32 %v2224, %v2399
      %v2401 = vpop.f32.mrb[0].mxu0
      %v2402 = vadd.f32 %v2224, %v2401
      %v2403 = vpop.f32.mrb[0].mxu0
      %v2404 = vadd.f32 %v2229, %v2403
      %v2405 = vpop.f32.mrb[0].mxu0
      %v2406 = vadd.f32 %v2229, %v2405
      %2407 = vdwg.mxu0
      %v2408 = vmul.f32 %v2330, 0.5
      %v2409 = vmul.f32 %v2332, 0.5
      %v2410 = vmul.f32 %v2334, 0.5
      %v2411 = vmul.f32 %v2336, 0.5
      %v2412 = vmul.f32 %v2340, 0.5
      %v2413 = vmul.f32 %v2342, 0.5
      %v2414 = vmul.f32 %v2344, 0.5
      %v2415 = vmul.f32 %v2346, 0.5
      %v2416 = vmul.f32 %v2350, 0.5
      %v2417 = vmul.f32 %v2352, 0.5
      %v2418 = vmul.f32 %v2354, 0.5
      %v2419 = vmul.f32 %v2356, 0.5
      %v2420 = vmul.f32 %v2360, 0.5
      %v2421 = vmul.f32 %v2362, 0.5
      %v2422 = vmul.f32 %v2364, 0.5
      %v2423 = vmul.f32 %v2366, 0.5
      %v2424 = vmul.f32 %v2370, 0.5
      %v2425 = vmul.f32 %v2372, 0.5
      %v2426 = vmul.f32 %v2374, 0.5
      %v2427 = vmul.f32 %v2376, 0.5
      %v2428 = vmul.f32 %v2380, 0.5
      %v2429 = vmul.f32 %v2382, 0.5
      %v2430 = vmul.f32 %v2384, 0.5
      %v2431 = vmul.f32 %v2386, 0.5
      %v2432 = vmul.f32 %v2390, 0.5
      %v2433 = vmul.f32 %v2392, 0.5
      %v2434 = vmul.f32 %v2394, 0.5
      %v2435 = vmul.f32 %v2396, 0.5
      %v2436 = vmul.f32 %v2400, 0.5
      %v2437 = vmul.f32 %v2402, 0.5
      %v2438 = vmul.f32 %v2404, 0.5
      %v2439 = vmul.f32 %v2406, 0.5
      %v2440 = vmul.f32 %v2330, %v2330
      %v2441 = vmul.f32 %v2332, %v2332
      %v2442 = vmul.f32 %v2334, %v2334
      %v2443 = vmul.f32 %v2336, %v2336
      %v2444 = vmul.f32 %v2340, %v2340
      %v2445 = vmul.f32 %v2342, %v2342
      %v2446 = vmul.f32 %v2344, %v2344
      %v2447 = vmul.f32 %v2346, %v2346
      %v2448 = vmul.f32 %v2350, %v2350
      %v2449 = vmul.f32 %v2352, %v2352
      %v2450 = vmul.f32 %v2354, %v2354
      %v2451 = vmul.f32 %v2356, %v2356
      %v2452 = vmul.f32 %v2360, %v2360
      %v2453 = vmul.f32 %v2362, %v2362
      %v2454 = vmul.f32 %v2364, %v2364
      %v2455 = vmul.f32 %v2366, %v2366
      %v2456 = vmul.f32 %v2370, %v2370
      %v2457 = vmul.f32 %v2372, %v2372
      %v2458 = vmul.f32 %v2374, %v2374
      %v2459 = vmul.f32 %v2376, %v2376
      %v2460 = vmul.f32 %v2380, %v2380
      %v2461 = vmul.f32 %v2382, %v2382
      %v2462 = vmul.f32 %v2384, %v2384
      %v2463 = vmul.f32 %v2386, %v2386
      %v2464 = vmul.f32 %v2390, %v2390
      %v2465 = vmul.f32 %v2392, %v2392
      %v2466 = vmul.f32 %v2394, %v2394
      %v2467 = vmul.f32 %v2396, %v2396
      %v2468 = vmul.f32 %v2400, %v2400
      %v2469 = vmul.f32 %v2402, %v2402
      %v2470 = vmul.f32 %v2404, %v2404
      %v2471 = vmul.f32 %v2406, %v2406
      %v2472 = vmul.f32 %v2440, %v2330
      %v2473 = vmul.f32 %v2441, %v2332
      %v2474 = vmul.f32 %v2442, %v2334
      %v2475 = vmul.f32 %v2443, %v2336
      %v2476 = vmul.f32 %v2444, %v2340
      %v2477 = vmul.f32 %v2445, %v2342
      %v2478 = vmul.f32 %v2446, %v2344
      %v2479 = vmul.f32 %v2447, %v2346
      %v2480 = vmul.f32 %v2448, %v2350
      %v2481 = vmul.f32 %v2449, %v2352
      %v2482 = vmul.f32 %v2450, %v2354
      %v2483 = vmul.f32 %v2451, %v2356
      %v2484 = vmul.f32 %v2452, %v2360
      %v2485 = vmul.f32 %v2453, %v2362
      %v2486 = vmul.f32 %v2454, %v2364
      %v2487 = vmul.f32 %v2455, %v2366
      %v2488 = vmul.f32 %v2456, %v2370
      %v2489 = vmul.f32 %v2457, %v2372
      %v2490 = vmul.f32 %v2458, %v2374
      %v2491 = vmul.f32 %v2459, %v2376
      %v2492 = vmul.f32 %v2460, %v2380
      %v2493 = vmul.f32 %v2461, %v2382
      %v2494 = vmul.f32 %v2462, %v2384
      %v2495 = vmul.f32 %v2463, %v2386
      %v2496 = vmul.f32 %v2464, %v2390
      %v2497 = vmul.f32 %v2465, %v2392
      %v2498 = vmul.f32 %v2466, %v2394
      %v2499 = vmul.f32 %v2467, %v2396
      %v2500 = vmul.f32 %v2468, %v2400
      %v2501 = vmul.f32 %v2469, %v2402
      %v2502 = vmul.f32 %v2470, %v2404
      %v2503 = vmul.f32 %v2471, %v2406
      %v2504 = vmul.f32 %v2472, 0.044715
      %v2505 = vmul.f32 %v2473, 0.044715
      %v2506 = vmul.f32 %v2474, 0.044715
      %v2507 = vmul.f32 %v2475, 0.044715
      %v2508 = vmul.f32 %v2476, 0.044715
      %v2509 = vmul.f32 %v2477, 0.044715
      %v2510 = vmul.f32 %v2478, 0.044715
      %v2511 = vmul.f32 %v2479, 0.044715
      %v2512 = vmul.f32 %v2480, 0.044715
      %v2513 = vmul.f32 %v2481, 0.044715
      %v2514 = vmul.f32 %v2482, 0.044715
      %v2515 = vmul.f32 %v2483, 0.044715
      %v2516 = vmul.f32 %v2484, 0.044715
      %v2517 = vmul.f32 %v2485, 0.044715
      %v2518 = vmul.f32 %v2486, 0.044715
      %v2519 = vmul.f32 %v2487, 0.044715
      %v2520 = vmul.f32 %v2488, 0.044715
      %v2521 = vmul.f32 %v2489, 0.044715
      %v2522 = vmul.f32 %v2490, 0.044715
      %v2523 = vmul.f32 %v2491, 0.044715
      %v2524 = vmul.f32 %v2492, 0.044715
      %v2525 = vmul.f32 %v2493, 0.044715
      %v2526 = vmul.f32 %v2494, 0.044715
      %v2527 = vmul.f32 %v2495, 0.044715
      %v2528 = vmul.f32 %v2496, 0.044715
      %v2529 = vmul.f32 %v2497, 0.044715
      %v2530 = vmul.f32 %v2498, 0.044715
      %v2531 = vmul.f32 %v2499, 0.044715
      %v2532 = vmul.f32 %v2500, 0.044715
      %v2533 = vmul.f32 %v2501, 0.044715
      %v2534 = vmul.f32 %v2502, 0.044715
      %v2535 = vmul.f32 %v2503, 0.044715
      %v2536 = vadd.f32 %v2330, %v2504
      %v2537 = vadd.f32 %v2332, %v2505
      %v2538 = vadd.f32 %v2334, %v2506
      %v2539 = vadd.f32 %v2336, %v2507
      %v2540 = vadd.f32 %v2340, %v2508
      %v2541 = vadd.f32 %v2342, %v2509
      %v2542 = vadd.f32 %v2344, %v2510
      %v2543 = vadd.f32 %v2346, %v2511
      %v2544 = vadd.f32 %v2350, %v2512
      %v2545 = vadd.f32 %v2352, %v2513
      %v2546 = vadd.f32 %v2354, %v2514
      %v2547 = vadd.f32 %v2356, %v2515
      %v2548 = vadd.f32 %v2360, %v2516
      %v2549 = vadd.f32 %v2362, %v2517
      %v2550 = vadd.f32 %v2364, %v2518
      %v2551 = vadd.f32 %v2366, %v2519
      %v2552 = vadd.f32 %v2370, %v2520
      %v2553 = vadd.f32 %v2372, %v2521
      %v2554 = vadd.f32 %v2374, %v2522
      %v2555 = vadd.f32 %v2376, %v2523
      %v2556 = vadd.f32 %v2380, %v2524
      %v2557 = vadd.f32 %v2382, %v2525
      %v2558 = vadd.f32 %v2384, %v2526
      %v2559 = vadd.f32 %v2386, %v2527
      %v2560 = vadd.f32 %v2390, %v2528
      %v2561 = vadd.f32 %v2392, %v2529
      %v2562 = vadd.f32 %v2394, %v2530
      %v2563 = vadd.f32 %v2396, %v2531
      %v2564 = vadd.f32 %v2400, %v2532
      %v2565 = vadd.f32 %v2402, %v2533
      %v2566 = vadd.f32 %v2404, %v2534
      %v2567 = vadd.f32 %v2406, %v2535
      %v2568 = vmul.f32 %v2536, 0.7978846
      %v2569 = vmul.f32 %v2537, 0.7978846
      %v2570 = vmul.f32 %v2538, 0.7978846
      %v2571 = vmul.f32 %v2539, 0.7978846
      %v2572 = vmul.f32 %v2540, 0.7978846
      %v2573 = vmul.f32 %v2541, 0.7978846
      %v2574 = vmul.f32 %v2542, 0.7978846
      %v2575 = vmul.f32 %v2543, 0.7978846
      %v2576 = vmul.f32 %v2544, 0.7978846
      %v2577 = vmul.f32 %v2545, 0.7978846
      %v2578 = vmul.f32 %v2546, 0.7978846
      %v2579 = vmul.f32 %v2547, 0.7978846
      %v2580 = vmul.f32 %v2548, 0.7978846
      %v2581 = vmul.f32 %v2549, 0.7978846
      %v2582 = vmul.f32 %v2550, 0.7978846
      %v2583 = vmul.f32 %v2551, 0.7978846
      %v2584 = vmul.f32 %v2552, 0.7978846
      %v2585 = vmul.f32 %v2553, 0.7978846
      %v2586 = vmul.f32 %v2554, 0.7978846
      %v2587 = vmul.f32 %v2555, 0.7978846
      %v2588 = vmul.f32 %v2556, 0.7978846
      %v2589 = vmul.f32 %v2557, 0.7978846
      %v2590 = vmul.f32 %v2558, 0.7978846
      %v2591 = vmul.f32 %v2559, 0.7978846
      %v2592 = vmul.f32 %v2560, 0.7978846
      %v2593 = vmul.f32 %v2561, 0.7978846
      %v2594 = vmul.f32 %v2562, 0.7978846
      %v2595 = vmul.f32 %v2563, 0.7978846
      %v2596 = vmul.f32 %v2564, 0.7978846
      %v2597 = vmul.f32 %v2565, 0.7978846
      %v2598 = vmul.f32 %v2566, 0.7978846
      %v2599 = vmul.f32 %v2567, 0.7978846
      %v2600 = vtanh.pop %v2568
      %v2601 = vtanh.pop %v2569
      %v2602 = vtanh.pop %v2570
      %v2603 = vtanh.pop %v2571
      %v2604 = vtanh.pop %v2572
      %v2605 = vtanh.pop %v2573
      %v2606 = vtanh.pop %v2574
      %v2607 = vtanh.pop %v2575
      %v2608 = vtanh.pop %v2576
      %v2609 = vtanh.pop %v2577
      %v2610 = vtanh.pop %v2578
      %v2611 = vtanh.pop %v2579
      %v2612 = vtanh.pop %v2580
      %v2613 = vtanh.pop %v2581
      %v2614 = vtanh.pop %v2582
      %v2615 = vtanh.pop %v2583
      %v2616 = vtanh.pop %v2584
      %v2617 = vtanh.pop %v2585
      %v2618 = vtanh.pop %v2586
      %v2619 = vtanh.pop %v2587
      %v2620 = vtanh.pop %v2588
      %v2621 = vtanh.pop %v2589
      %v2622 = vtanh.pop %v2590
      %v2623 = vtanh.pop %v2591
      %v2624 = vtanh.pop %v2592
      %v2625 = vtanh.pop %v2593
      %v2626 = vtanh.pop %v2594
      %v2627 = vtanh.pop %v2595
      %v2628 = vtanh.pop %v2596
      %v2629 = vtanh.pop %v2597
      %v2630 = vtanh.pop %v2598
      %v2631 = vtanh.pop %v2599
      %v2632 = vadd.f32 %v2600, 1.0
      %v2633 = vadd.f32 %v2601, 1.0
      %v2634 = vadd.f32 %v2602, 1.0
      %v2635 = vadd.f32 %v2603, 1.0
      %v2636 = vadd.f32 %v2604, 1.0
      %v2637 = vadd.f32 %v2605, 1.0
      %v2638 = vadd.f32 %v2606, 1.0
      %v2639 = vadd.f32 %v2607, 1.0
      %v2640 = vadd.f32 %v2608, 1.0
      %v2641 = vadd.f32 %v2609, 1.0
      %v2642 = vadd.f32 %v2610, 1.0
      %v2643 = vadd.f32 %v2611, 1.0
      %v2644 = vadd.f32 %v2612, 1.0
      %v2645 = vadd.f32 %v2613, 1.0
      %v2646 = vadd.f32 %v2614, 1.0
      %v2647 = vadd.f32 %v2615, 1.0
      %v2648 = vadd.f32 %v2616, 1.0
      %v2649 = vadd.f32 %v2617, 1.0
      %v2650 = vadd.f32 %v2618, 1.0
      %v2651 = vadd.f32 %v2619, 1.0
      %v2652 = vadd.f32 %v2620, 1.0
      %v2653 = vadd.f32 %v2621, 1.0
      %v2654 = vadd.f32 %v2622, 1.0
      %v2655 = vadd.f32 %v2623, 1.0
      %v2656 = vadd.f32 %v2624, 1.0
      %v2657 = vadd.f32 %v2625, 1.0
      %v2658 = vadd.f32 %v2626, 1.0
      %v2659 = vadd.f32 %v2627, 1.0
      %v2660 = vadd.f32 %v2628, 1.0
      %v2661 = vadd.f32 %v2629, 1.0
      %v2662 = vadd.f32 %v2630, 1.0
      %v2663 = vadd.f32 %v2631, 1.0
      %v2664 = vmul.f32 %v2408, %v2632
      %v2665 = vmul.f32 %v2409, %v2633
      %v2666 = vmul.f32 %v2410, %v2634
      %v2667 = vmul.f32 %v2411, %v2635
      %v2668 = vmul.f32 %v2412, %v2636
      %v2669 = vmul.f32 %v2413, %v2637
      %v2670 = vmul.f32 %v2414, %v2638
      %v2671 = vmul.f32 %v2415, %v2639
      %v2672 = vmul.f32 %v2416, %v2640
      %v2673 = vmul.f32 %v2417, %v2641
      %v2674 = vmul.f32 %v2418, %v2642
      %v2675 = vmul.f32 %v2419, %v2643
      %v2676 = vmul.f32 %v2420, %v2644
      %v2677 = vmul.f32 %v2421, %v2645
      %v2678 = vmul.f32 %v2422, %v2646
      %v2679 = vmul.f32 %v2423, %v2647
      %v2680 = vmul.f32 %v2424, %v2648
      %v2681 = vmul.f32 %v2425, %v2649
      %v2682 = vmul.f32 %v2426, %v2650
      %v2683 = vmul.f32 %v2427, %v2651
      %v2684 = vmul.f32 %v2428, %v2652
      %v2685 = vmul.f32 %v2429, %v2653
      %v2686 = vmul.f32 %v2430, %v2654
      %v2687 = vmul.f32 %v2431, %v2655
      %v2688 = vmul.f32 %v2432, %v2656
      %v2689 = vmul.f32 %v2433, %v2657
      %v2690 = vmul.f32 %v2434, %v2658
      %v2691 = vmul.f32 %v2435, %v2659
      %v2692 = vmul.f32 %v2436, %v2660
      %v2693 = vmul.f32 %v2437, %v2661
      %v2694 = vmul.f32 %v2438, %v2662
      %v2695 = vmul.f32 %v2439, %v2663
      %v2696 = vld [vmem:[%s8] sm:$0xf]
      %v2697 = vld [vmem:[%s8 + $0x4] sm:$0xf]
      %v2698 = vld [vmem:[%s8 + $0x8] sm:$0xf]
      %v2699 = vld [vmem:[%s8 + $0xc] sm:$0xf]
      %v2700 = vpack.c.bf16 %v2666, %v2664
      %v2701 = vpack.c.bf16 %v2667, %v2665
      %v2702 = vpack.c.bf16 %v2670, %v2668
      %v2703 = vpack.c.bf16 %v2671, %v2669
      %v2704 = vpack.c.bf16 %v2674, %v2672
      %v2705 = vpack.c.bf16 %v2675, %v2673
      %v2706 = vpack.c.bf16 %v2678, %v2676
      %v2707 = vpack.c.bf16 %v2679, %v2677
      %v2708 = vpack.c.bf16 %v2682, %v2680
      %v2709 = vpack.c.bf16 %v2683, %v2681
      %v2710 = vpack.c.bf16 %v2686, %v2684
      %v2711 = vpack.c.bf16 %v2687, %v2685
      %v2712 = vpack.c.bf16 %v2690, %v2688
      %v2713 = vpack.c.bf16 %v2691, %v2689
      %v2714 = vpack.c.bf16 %v2694, %v2692
      %v2715 = vpack.c.bf16 %v2695, %v2693
      %2716 = vset.pattern.permute.xlu0 12
      %2717 = vperm.xlu0 %2716, %v396
      %v2718 = vpop.permute.xlu0 %2717
      %2720 = vset.pattern.permute.xlu0 12
      %2721 = vperm.xlu0 %2720, %v397
      %v2722 = vpop.permute.xlu0 %2721
      %2724 = vset.pattern.permute.xlu0 12
      %2725 = vperm.xlu0 %2724, %v398
      %v2726 = vpop.permute.xlu0 %2725
      %2728 = vset.pattern.permute.xlu0 12
      %2729 = vperm.xlu0 %2728, %v399
      %v2730 = vpop.permute.xlu0 %2729
      %v2736 = vunpack.c.l.b16 %v2696
      %v2737 = vunpack.c.l.b16 %v2697
      %v2738 = vunpack.c.l.b16 %v2698
      %v2739 = vunpack.c.l.b16 %v2699
      %v2740 = vpack.c.b16 %v2737, %v2736
      %v2741 = vpack.c.b16 %v2739, %v2738
      %2744 = vmatprep.subr.bf16.mxu0 %v2701
      %2745 = vmatpush1.bf16.msra.mxu0 %v2700
      %2746 = vmatprep.subr.bf16.mxu0 %v2703
      %2747 = vmatpush1.bf16.msra.mxu0 %v2702
      %2748 = vmatprep.subr.bf16.mxu0 %v2705
      %2749 = vmatpush1.bf16.msra.mxu0 %v2704
      %2750 = vmatprep.subr.bf16.mxu0 %v2707
      %2751 = vmatpush1.bf16.msra.mxu0 %v2706
      %2752 = vmatprep.subr.bf16.mxu0 %v2709
      %2753 = vmatpush1.bf16.msra.mxu0 %v2708
      %2754 = vmatprep.subr.bf16.mxu0 %v2711
      %2755 = vmatpush1.bf16.msra.mxu0 %v2710
      %2756 = vmatprep.subr.bf16.mxu0 %v2713
      %2757 = vmatpush1.bf16.msra.mxu0 %v2712
      %2758 = vmatprep.subr.bf16.mxu0 %v2715
      %2759 = vmatpush1.bf16.msra.mxu0 %v2714
      %2760 = vmatprep.subr.bf16.mxu0 0
      %2761 = vmatpush1.bf16.msra.mxu0 0
      %2762 = vmatprep.subr.bf16.mxu0 0
      %2763 = vmatpush1.bf16.msra.mxu0 0
      %2764 = vmatprep.subr.bf16.mxu0 0
      %2765 = vmatpush1.bf16.msra.mxu0 0
      %2766 = vmatprep.subr.bf16.mxu0 0
      %2767 = vmatpush1.bf16.msra.mxu0 0
      %2768 = vmatprep.subr.bf16.mxu0 0
      %2769 = vmatpush1.bf16.msra.mxu0 0
      %2770 = vmatprep.subr.bf16.mxu0 0
      %2771 = vmatpush1.bf16.msra.mxu0 0
      %2772 = vmatprep.subr.bf16.mxu0 0
      %2773 = vmatpush1.bf16.msra.mxu0 0
      %2774 = vmatprep.subr.bf16.mxu0 0
      %2775 = vmatpush1.bf16.msra.mxu0 0
      %2776 = vmatprep.mubr.bf16.mxu0 0
      %2777 = vmatmul.mubr.bf16.gmra.mrb[0].mxu0 %v2740
      %v2778 = vpop.f32.mrb[0].mxu0
      %v2779 = vadd.f32 %v2718, %v2778
      %v2780 = vpop.f32.mrb[0].mxu0
      %v2781 = vadd.f32 %v2718, %v2780
      %v2782 = vpop.f32.mrb[0].mxu0
      %v2783 = vadd.f32 %v2722, %v2782
      %v2784 = vpop.f32.mrb[0].mxu0
      %v2785 = vadd.f32 %v2722, %v2784
      %2786 = vmatprep.mubr.bf16.mxu0 0
      %2787 = vmatmul.mubr.bf16.gmra.mrb[0].mxu0 %v2741
      %v2788 = vpop.f32.mrb[0].mxu0
      %v2789 = vadd.f32 %v2726, %v2788
      %v2790 = vpop.f32.mrb[0].mxu0
      %v2791 = vadd.f32 %v2726, %v2790
      %v2792 = vpop.f32.mrb[0].mxu0
      %v2793 = vadd.f32 %v2730, %v2792
      %v2794 = vpop.f32.mrb[0].mxu0
      %v2795 = vadd.f32 %v2730, %v2794
      %2796 = vdwg.mxu0
      %v2797 = vadd.f32 %v1989, %v2779
      %v2798 = vadd.f32 %v1990, %v2781
      %v2799 = vadd.f32 %v1991, %v2783
      %v2800 = vadd.f32 %v1992, %v2785
      %v2801 = vadd.f32 %v1993, %v2789
      %v2802 = vadd.f32 %v1994, %v2791
      %v2803 = vadd.f32 %v1995, %v2793
      %v2804 = vadd.f32 %v1996, %v2795
      %2805 = vst [vmem:[%s386] sm:$0xff] %v2797
      %2806 = vst [vmem:[%s386 + $0x8] sm:$0xff] %v2798
      %2807 = vst [vmem:[%s386 + $0x10] sm:$0xff] %v2799
      %2808 = vst [vmem:[%s386 + $0x18] sm:$0xff] %v2800
      %2809 = vst [vmem:[%s386 + $0x20] sm:$0xff] %v2801
      %2810 = vst [vmem:[%s386 + $0x28] sm:$0xff] %v2802
      %2811 = vst [vmem:[%s386 + $0x30] sm:$0xff] %v2803
      %2812 = vst [vmem:[%s386 + $0x38] sm:$0xff] %v2804
      %p2813 = scmp.lt.s32.totalorder %s22, 1
      %s2814 = scalar_select %p2813, %s22, 1
      %s2815 = smul.addr %s2814, 8
      %s2816 = smul.addr %s2815, 8
      %s2817 = scalar_lea.vmem %s11, %s2816
      // Predicated region
      $region65: #{axial_shifted_block_pallas.1} parent=63 // pred_check
        %p2818 = pneg %p276
      $region66: #{axial_shifted_block_pallas.1} parent=63 // pred_check_branch
        %2820 = sbr.rel (%p2818) target = $region68
      $region67: #{axial_shifted_block_pallas.1} parent=63 // pred_region
        _
      $region68: #{axial_shifted_block_pallas.1} parent=63 // pred_fallthru
        _
    $region64: #{axial_shifted_block_pallas.1} parent=5 // pred_fallthru
      _
    %p2821 = scmp.le.s32.totalorder 2, %s17
    // Predicated region
    $region69: #{axial_shifted_block_pallas.1} parent=5 // pred_check
      %p2822 = pneg %p2821
    $region70: #{axial_shifted_block_pallas.1} parent=5 // pred_check_branch
      %2824 = sbr.rel (%p2822) target = $region72
    $region71: #{axial_shifted_block_pallas.1} parent=5 // pred_region
      %s2825 = ssub.s32 %s17, 2
      // Predicated region
      $region73: #{axial_shifted_block_pallas.1} parent=71 // pred_check
        %p2826 = pneg %p282
      $region74: #{axial_shifted_block_pallas.1} parent=71 // pred_check_branch
        %2828 = sbr.rel (%p2826) target = $region76
      $region75: #{axial_shifted_block_pallas.1} parent=71 // pred_region
        %p2829 = scmp.lt.s32.totalorder %s23, 1
        %s2830 = scalar_select %p2829, %s23, 1
        %s2831 = smul.addr %s2830, 8
        %s2832 = smul.addr %s2831, 8
        %s2833 = scalar_lea.vmem %s11, %s2832
      $region76: #{axial_shifted_block_pallas.1} parent=71 // pred_fallthru
        _
    $region72: #{axial_shifted_block_pallas.1} parent=5 // pred_fallthru
      _
  $region6: #{axial_shifted_block_pallas.1} parent=0 // loop_footer
    %s21 = sadd.s32 1, %s17
  $region7: #{axial_shifted_block_pallas.1} parent=0 // loop_footer_branch
    %16 = sbr.rel target = $region3
  $region8: #{axial_shifted_block_pallas.1} parent=0 // loop_exit
    _

// kernel: axial_shifted_block_pallas.1
$region0: #{axial_shifted_block_pallas.1}
  #allocation0 [shape = 'u32[]', space=smem, size = 0x4, offset = 0x4, fixed_abs, tag = 'smem constant byte address 0x4 - core index']
  #allocation1 [shape = 'u32[144,128]{1,0:T(1,128)}', space=vmem, size = 0x12000, scoped, tag = 'internal scratch']
  %s0 = inlined_call_operand.vmem [shape: f32[2,32,256], index: 0, kind: input, shape index: {}]
  %s1 = inlined_call_operand.vmem [shape: f32[32,16], index: 1, kind: input, shape index: {}]
  %s2 = inlined_call_operand.vmem [shape: f32[128,1], index: 2, kind: input, shape index: {}]
  %s3 = inlined_call_operand.vmem [shape: bf16[32,32], index: 3, kind: input, shape index: {}]
  %s4 = inlined_call_operand.vmem [shape: bf16[32,32], index: 4, kind: input, shape index: {}]
  %s5 = inlined_call_operand.vmem [shape: bf16[32,32], index: 5, kind: input, shape index: {}]
  %s6 = inlined_call_operand.vmem [shape: bf16[32,32], index: 6, kind: input, shape index: {}]
  %s7 = inlined_call_operand.vmem [shape: bf16[128,32], index: 7, kind: input, shape index: {}]
  %s8 = inlined_call_operand.vmem [shape: bf16[32,128], index: 8, kind: input, shape index: {}]
  %s9 = inlined_call_operand.vmem [shape: f32[7,32,256], index: 9, kind: input, shape index: {}]
  %s10 = inlined_call_operand.vmem [shape: f32[7,32,256], index: 10, kind: input, shape index: {}]
  %s11 = inlined_call_operand.vmem [shape: f32[2,32,256], index: 11, kind: output, shape index: {}]
  %s12 = sld [smem:[#allocation0]]
  $region77: #{axial_shifted_block_pallas.1} parent=0
    _
  %s14 = ssub.s32 1, %s12
  %s15 = scalar_select 0, %s14, %s12
  loop: start=0, step=1, limit=4
  $region2: #{axial_shifted_block_pallas.1} parent=0 // loop_pre_header
    _
  $region3: #{axial_shifted_block_pallas.1} parent=0 // loop_header
    %s17 = sphi 0, %s21
    %p18 = scmp.ge.s32.totalorder %s17, 4
    %s27 = sphi 0, %s29
    %s30 = sphi 0, %s27
    %s31 = sphi 0, %s30
    %s47 = sphi 0, %s31
    %s51 = sphi 0, %s51
    %s53 = sphi 0, %s51
    %s54 = sphi 0, %s53
    %s68 = sphi 0, %s54
    %s72 = sphi 0, %s72
    %s74 = sphi 0, %s72
    %s75 = sphi 0, %s74
    %s89 = sphi 0, %s75
    %s93 = sphi 0, %s93
    %s95 = sphi 0, %s93
    %s96 = sphi 0, %s95
    %s110 = sphi 0, %s96
    %s114 = sphi 0, %s114
    %s116 = sphi 0, %s114
    %s117 = sphi 0, %s116
    %s131 = sphi 0, %s117
    %s135 = sphi 0, %s135
    %s137 = sphi 0, %s135
    %s138 = sphi 0, %s137
    %s152 = sphi 0, %s138
    %s156 = sphi 0, %s156
    %s158 = sphi 0, %s156
    %s159 = sphi 0, %s158
    %s173 = sphi 0, %s159
    %s177 = sphi 0, %s177
    %s179 = sphi 0, %s177
    %s180 = sphi 0, %s179
    %s194 = sphi 0, %s180
    %s198 = sphi 0, %s198
    %s200 = sphi 0, %s198
    %s201 = sphi 0, %s200
    %s215 = sphi 0, %s201
    %s219 = sphi 0, %s219
    %s221 = sphi 0, %s219
    %s222 = sphi 0, %s221
    %s236 = sphi 0, %s222
    %s240 = sphi 0, %s240
    %s242 = sphi 0, %s240
    %s243 = sphi 0, %s242
    %s257 = sphi 0, %s243
    %s263 = sphi 0, %s265
    %s266 = sphi 0, %s263
    %s267 = sphi 0, %s266
    %s283 = sphi 0, %s267
  $region4: #{axial_shifted_block_pallas.1} parent=0 // loop_header_branch
    %20 = sbr.rel (%p18) target = $region8
  $region5: #{axial_shifted_block_pallas.1} parent=0 // loop_body
    %s22 = ssub.s32 %s17, 1
    %s23 = ssub.s32 %s17, 2
    %s24 = sadd.s32 %s17, 1
    %s25 = ssub.s32 %s17, %s24
    %p26 = scmp.eq.s32.totalorder %s25, 0
    %s28 = sadd.s32 %s27, 1
    %s29 = scalar_select %p26, %s27, %s28
    %p32 = pneg %p26
    %p33 = scmp.eq.s32.totalorder %s17, 1
    %p34 = por %p32, %p33
    %p35 = scmp.ne.s32.totalorder %s27, %s30
    %p36 = scmp.eq.s32.totalorder %s17, 0
    %p37 = por %p35, %p36
    %p38 = scmp.ne.s32.totalorder %s27, %s30
    %p39 = scmp.eq.s32.totalorder %s22, 1
    %p40 = por %p38, %p39
    %p41 = scmp.ne.s32.totalorder %s30, %s31
    %p42 = scmp.eq.s32.totalorder %s22, 0
    %p43 = por %p41, %p42
    %p44 = scmp.ne.s32.totalorder %s30, %s31
    %p45 = scmp.eq.s32.totalorder %s23, 1
    %p46 = por %p44, %p45
    %p48 = scmp.ne.s32.totalorder %s31, %s47
    %p49 = scmp.eq.s32.totalorder %s23, 0
    %p50 = por %p48, %p49
    %s52 = sadd.s32 %s51, 1
    %p55 = scmp.eq.s32.totalorder %s17, 1
    %p56 = scmp.ne.s32.totalorder %s51, %s53
    %p57 = scmp.eq.s32.totalorder %s17, 0
    %p58 = por %p56, %p57
    %p59 = scmp.ne.s32.totalorder %s51, %s53
    %p60 = scmp.eq.s32.totalorder %s22, 1
    %p61 = por %p59, %p60
    %p62 = scmp.ne.s32.totalorder %s53, %s54
    %p63 = scmp.eq.s32.totalorder %s22, 0
    %p64 = por %p62, %p63
    %p65 = scmp.ne.s32.totalorder %s53, %s54
    %p66 = scmp.eq.s32.totalorder %s23, 1
    %p67 = por %p65, %p66
    %p69 = scmp.ne.s32.totalorder %s54, %s68
    %p70 = scmp.eq.s32.totalorder %s23, 0
    %p71 = por %p69, %p70
    %s73 = sadd.s32 %s72, 1
    %p76 = scmp.eq.s32.totalorder %s17, 1
    %p77 = scmp.ne.s32.totalorder %s72, %s74
    %p78 = scmp.eq.s32.totalorder %s17, 0
    %p79 = por %p77, %p78
    %p80 = scmp.ne.s32.totalorder %s72, %s74
    %p81 = scmp.eq.s32.totalorder %s22, 1
    %p82 = por %p80, %p81
    %p83 = scmp.ne.s32.totalorder %s74, %s75
    %p84 = scmp.eq.s32.totalorder %s22, 0
    %p85 = por %p83, %p84
    %p86 = scmp.ne.s32.totalorder %s74, %s75
    %p87 = scmp.eq.s32.totalorder %s23, 1
    %p88 = por %p86, %p87
    %p90 = scmp.ne.s32.totalorder %s75, %s89
    %p91 = scmp.eq.s32.totalorder %s23, 0
    %p92 = por %p90, %p91
    %s94 = sadd.s32 %s93, 1
    %p97 = scmp.eq.s32.totalorder %s17, 1
    %p98 = scmp.ne.s32.totalorder %s93, %s95
    %p99 = scmp.eq.s32.totalorder %s17, 0
    %p100 = por %p98, %p99
    %p101 = scmp.ne.s32.totalorder %s93, %s95
    %p102 = scmp.eq.s32.totalorder %s22, 1
    %p103 = por %p101, %p102
    %p104 = scmp.ne.s32.totalorder %s95, %s96
    %p105 = scmp.eq.s32.totalorder %s22, 0
    %p106 = por %p104, %p105
    %p107 = scmp.ne.s32.totalorder %s95, %s96
    %p108 = scmp.eq.s32.totalorder %s23, 1
    %p109 = por %p107, %p108
    %p111 = scmp.ne.s32.totalorder %s96, %s110
    %p112 = scmp.eq.s32.totalorder %s23, 0
    %p113 = por %p111, %p112
    %s115 = sadd.s32 %s114, 1
    %p118 = scmp.eq.s32.totalorder %s17, 1
    %p119 = scmp.ne.s32.totalorder %s114, %s116
    %p120 = scmp.eq.s32.totalorder %s17, 0
    %p121 = por %p119, %p120
    %p122 = scmp.ne.s32.totalorder %s114, %s116
    %p123 = scmp.eq.s32.totalorder %s22, 1
    %p124 = por %p122, %p123
    %p125 = scmp.ne.s32.totalorder %s116, %s117
    %p126 = scmp.eq.s32.totalorder %s22, 0
    %p127 = por %p125, %p126
    %p128 = scmp.ne.s32.totalorder %s116, %s117
    %p129 = scmp.eq.s32.totalorder %s23, 1
    %p130 = por %p128, %p129
    %p132 = scmp.ne.s32.totalorder %s117, %s131
    %p133 = scmp.eq.s32.totalorder %s23, 0
    %p134 = por %p132, %p133
    %s136 = sadd.s32 %s135, 1
    %p139 = scmp.eq.s32.totalorder %s17, 1
    %p140 = scmp.ne.s32.totalorder %s135, %s137
    %p141 = scmp.eq.s32.totalorder %s17, 0
    %p142 = por %p140, %p141
    %p143 = scmp.ne.s32.totalorder %s135, %s137
    %p144 = scmp.eq.s32.totalorder %s22, 1
    %p145 = por %p143, %p144
    %p146 = scmp.ne.s32.totalorder %s137, %s138
    %p147 = scmp.eq.s32.totalorder %s22, 0
    %p148 = por %p146, %p147
    %p149 = scmp.ne.s32.totalorder %s137, %s138
    %p150 = scmp.eq.s32.totalorder %s23, 1
    %p151 = por %p149, %p150
    %p153 = scmp.ne.s32.totalorder %s138, %s152
    %p154 = scmp.eq.s32.totalorder %s23, 0
    %p155 = por %p153, %p154
    %s157 = sadd.s32 %s156, 1
    %p160 = scmp.eq.s32.totalorder %s17, 1
    %p161 = scmp.ne.s32.totalorder %s156, %s158
    %p162 = scmp.eq.s32.totalorder %s17, 0
    %p163 = por %p161, %p162
    %p164 = scmp.ne.s32.totalorder %s156, %s158
    %p165 = scmp.eq.s32.totalorder %s22, 1
    %p166 = por %p164, %p165
    %p167 = scmp.ne.s32.totalorder %s158, %s159
    %p168 = scmp.eq.s32.totalorder %s22, 0
    %p169 = por %p167, %p168
    %p170 = scmp.ne.s32.totalorder %s158, %s159
    %p171 = scmp.eq.s32.totalorder %s23, 1
    %p172 = por %p170, %p171
    %p174 = scmp.ne.s32.totalorder %s159, %s173
    %p175 = scmp.eq.s32.totalorder %s23, 0
    %p176 = por %p174, %p175
    %s178 = sadd.s32 %s177, 1
    %p181 = scmp.eq.s32.totalorder %s17, 1
    %p182 = scmp.ne.s32.totalorder %s177, %s179
    %p183 = scmp.eq.s32.totalorder %s17, 0
    %p184 = por %p182, %p183
    %p185 = scmp.ne.s32.totalorder %s177, %s179
    %p186 = scmp.eq.s32.totalorder %s22, 1
    %p187 = por %p185, %p186
    %p188 = scmp.ne.s32.totalorder %s179, %s180
    %p189 = scmp.eq.s32.totalorder %s22, 0
    %p190 = por %p188, %p189
    %p191 = scmp.ne.s32.totalorder %s179, %s180
    %p192 = scmp.eq.s32.totalorder %s23, 1
    %p193 = por %p191, %p192
    %p195 = scmp.ne.s32.totalorder %s180, %s194
    %p196 = scmp.eq.s32.totalorder %s23, 0
    %p197 = por %p195, %p196
    %s199 = sadd.s32 %s198, 1
    %p202 = scmp.eq.s32.totalorder %s17, 1
    %p203 = scmp.ne.s32.totalorder %s198, %s200
    %p204 = scmp.eq.s32.totalorder %s17, 0
    %p205 = por %p203, %p204
    %p206 = scmp.ne.s32.totalorder %s198, %s200
    %p207 = scmp.eq.s32.totalorder %s22, 1
    %p208 = por %p206, %p207
    %p209 = scmp.ne.s32.totalorder %s200, %s201
    %p210 = scmp.eq.s32.totalorder %s22, 0
    %p211 = por %p209, %p210
    %p212 = scmp.ne.s32.totalorder %s200, %s201
    %p213 = scmp.eq.s32.totalorder %s23, 1
    %p214 = por %p212, %p213
    %p216 = scmp.ne.s32.totalorder %s201, %s215
    %p217 = scmp.eq.s32.totalorder %s23, 0
    %p218 = por %p216, %p217
    %s220 = sadd.s32 %s219, 1
    %p223 = scmp.eq.s32.totalorder %s17, 1
    %p224 = scmp.ne.s32.totalorder %s219, %s221
    %p225 = scmp.eq.s32.totalorder %s17, 0
    %p226 = por %p224, %p225
    %p227 = scmp.ne.s32.totalorder %s219, %s221
    %p228 = scmp.eq.s32.totalorder %s22, 1
    %p229 = por %p227, %p228
    %p230 = scmp.ne.s32.totalorder %s221, %s222
    %p231 = scmp.eq.s32.totalorder %s22, 0
    %p232 = por %p230, %p231
    %p233 = scmp.ne.s32.totalorder %s221, %s222
    %p234 = scmp.eq.s32.totalorder %s23, 1
    %p235 = por %p233, %p234
    %p237 = scmp.ne.s32.totalorder %s222, %s236
    %p238 = scmp.eq.s32.totalorder %s23, 0
    %p239 = por %p237, %p238
    %s241 = sadd.s32 %s240, 1
    %p244 = scmp.eq.s32.totalorder %s17, 1
    %p245 = scmp.ne.s32.totalorder %s240, %s242
    %p246 = scmp.eq.s32.totalorder %s17, 0
    %p247 = por %p245, %p246
    %p248 = scmp.ne.s32.totalorder %s240, %s242
    %p249 = scmp.eq.s32.totalorder %s22, 1
    %p250 = por %p248, %p249
    %p251 = scmp.ne.s32.totalorder %s242, %s243
    %p252 = scmp.eq.s32.totalorder %s22, 0
    %p253 = por %p251, %p252
    %p254 = scmp.ne.s32.totalorder %s242, %s243
    %p255 = scmp.eq.s32.totalorder %s23, 1
    %p256 = por %p254, %p255
    %p258 = scmp.ne.s32.totalorder %s243, %s257
    %p259 = scmp.eq.s32.totalorder %s23, 0
    %p260 = por %p258, %p259
    %s261 = ssub.s32 %s17, %s24
    %p262 = scmp.eq.s32.totalorder %s261, 0
    %s264 = sadd.s32 %s263, 1
    %s265 = scalar_select %p262, %s263, %s264
    %p268 = pneg %p262
    %p269 = scmp.eq.s32.totalorder %s17, 1
    %p270 = por %p268, %p269
    %p271 = scmp.ne.s32.totalorder %s263, %s266
    %p272 = scmp.eq.s32.totalorder %s17, 0
    %p273 = por %p271, %p272
    %p274 = scmp.ne.s32.totalorder %s263, %s266
    %p275 = scmp.eq.s32.totalorder %s22, 1
    %p276 = por %p274, %p275
    %p277 = scmp.ne.s32.totalorder %s266, %s267
    %p278 = scmp.eq.s32.totalorder %s22, 0
    %p279 = por %p277, %p278
    %p280 = scmp.ne.s32.totalorder %s266, %s267
    %p281 = scmp.eq.s32.totalorder %s23, 1
    %p282 = por %p280, %p281
    %p284 = scmp.ne.s32.totalorder %s267, %s283
    %p285 = scmp.eq.s32.totalorder %s23, 0
    %p286 = por %p284, %p285
    %p287 = scmp.le.s32.totalorder 1, %s17
    %p288 = scmp.lt.s32.totalorder %s17, 3
    %p289 = pnand %p287, %p288
    %p290 = pneg %p289
    // Predicated region
    $region9: #{axial_shifted_block_pallas.1} parent=5 // pred_check
      _
    $region10: #{axial_shifted_block_pallas.1} parent=5 // pred_check_branch
      %292 = sbr.rel (%p289) target = $region12
    $region11: #{axial_shifted_block_pallas.1} parent=5 // pred_region
      %s293 = ssub.s32 %s17, 1
      // Predicated region
      $region13: #{axial_shifted_block_pallas.1} parent=11 // pred_check
        %p294 = pneg %p64
      $region14: #{axial_shifted_block_pallas.1} parent=11 // pred_check_branch
        %296 = sbr.rel (%p294) target = $region16
      $region15: #{axial_shifted_block_pallas.1} parent=11 // pred_region
        _
      $region16: #{axial_shifted_block_pallas.1} parent=11 // pred_fallthru
        _
      // Predicated region
      $region17: #{axial_shifted_block_pallas.1} parent=11 // pred_check
        %p297 = pneg %p85
      $region18: #{axial_shifted_block_pallas.1} parent=11 // pred_check_branch
        %299 = sbr.rel (%p297) target = $region20
      $region19: #{axial_shifted_block_pallas.1} parent=11 // pred_region
        _
      $region20: #{axial_shifted_block_pallas.1} parent=11 // pred_fallthru
        _
      // Predicated region
      $region21: #{axial_shifted_block_pallas.1} parent=11 // pred_check
        %p300 = pneg %p106
      $region22: #{axial_shifted_block_pallas.1} parent=11 // pred_check_branch
        %302 = sbr.rel (%p300) target = $region24
      $region23: #{axial_shifted_block_pallas.1} parent=11 // pred_region
        _
      $region24: #{axial_shifted_block_pallas.1} parent=11 // pred_fallthru
        _
      // Predicated region
      $region25: #{axial_shifted_block_pallas.1} parent=11 // pred_check
        %p303 = pneg %p127
      $region26: #{axial_shifted_block_pallas.1} parent=11 // pred_check_branch
        %305 = sbr.rel (%p303) target = $region28
      $region27: #{axial_shifted_block_pallas.1} parent=11 // pred_region
        _
      $region28: #{axial_shifted_block_pallas.1} parent=11 // pred_fallthru
        _
      // Predicated region
      $region29: #{axial_shifted_block_pallas.1} parent=11 // pred_check
        %p306 = pneg %p148
      $region30: #{axial_shifted_block_pallas.1} parent=11 // pred_check_branch
        %308 = sbr.rel (%p306) target = $region32
      $region31: #{axial_shifted_block_pallas.1} parent=11 // pred_region
        _
      $region32: #{axial_shifted_block_pallas.1} parent=11 // pred_fallthru
        _
      // Predicated region
      $region33: #{axial_shifted_block_pallas.1} parent=11 // pred_check
        %p309 = pneg %p169
      $region34: #{axial_shifted_block_pallas.1} parent=11 // pred_check_branch
        %311 = sbr.rel (%p309) target = $region36
      $region35: #{axial_shifted_block_pallas.1} parent=11 // pred_region
        _
      $region36: #{axial_shifted_block_pallas.1} parent=11 // pred_fallthru
        _
      // Predicated region
      $region37: #{axial_shifted_block_pallas.1} parent=11 // pred_check
        %p312 = pneg %p190
      $region38: #{axial_shifted_block_pallas.1} parent=11 // pred_check_branch
        %314 = sbr.rel (%p312) target = $region40
      $region39: #{axial_shifted_block_pallas.1} parent=11 // pred_region
        _
      $region40: #{axial_shifted_block_pallas.1} parent=11 // pred_fallthru
        _
      // Predicated region
      $region41: #{axial_shifted_block_pallas.1} parent=11 // pred_check
        %p315 = pneg %p211
      $region42: #{axial_shifted_block_pallas.1} parent=11 // pred_check_branch
        %317 = sbr.rel (%p315) target = $region44
      $region43: #{axial_shifted_block_pallas.1} parent=11 // pred_region
        _
      $region44: #{axial_shifted_block_pallas.1} parent=11 // pred_fallthru
        _
      // Predicated region
      $region45: #{axial_shifted_block_pallas.1} parent=11 // pred_check
        %p318 = pneg %p232
      $region46: #{axial_shifted_block_pallas.1} parent=11 // pred_check_branch
        %320 = sbr.rel (%p318) target = $region48
      $region47: #{axial_shifted_block_pallas.1} parent=11 // pred_region
        _
      $region48: #{axial_shifted_block_pallas.1} parent=11 // pred_fallthru
        _
      // Predicated region
      $region49: #{axial_shifted_block_pallas.1} parent=11 // pred_check
        %p321 = pneg %p253
      $region50: #{axial_shifted_block_pallas.1} parent=11 // pred_check_branch
        %323 = sbr.rel (%p321) target = $region52
      $region51: #{axial_shifted_block_pallas.1} parent=11 // pred_region
        _
      $region52: #{axial_shifted_block_pallas.1} parent=11 // pred_fallthru
        _
    $region12: #{axial_shifted_block_pallas.1} parent=5 // pred_fallthru
      _
    %p324 = scmp.lt.s32.totalorder %s17, 2
    // Predicated region
    $region53: #{axial_shifted_block_pallas.1} parent=5 // pred_check
      %p325 = pneg %p324
    $region54: #{axial_shifted_block_pallas.1} parent=5 // pred_check_branch
      %327 = sbr.rel (%p325) target = $region56
    $region55: #{axial_shifted_block_pallas.1} parent=5 // pred_region
      // Predicated region
      $region57: #{axial_shifted_block_pallas.1} parent=55 // pred_check
        %p328 = pneg %p37
      $region58: #{axial_shifted_block_pallas.1} parent=55 // pred_check_branch
        %330 = sbr.rel (%p328) target = $region60
      $region59: #{axial_shifted_block_pallas.1} parent=55 // pred_region
        %p331 = scmp.lt.s32.totalorder %s17, 1
        %s332 = scalar_select %p331, %s17, 1
        %s333 = smul.addr %s332, 8
        %s334 = smul.addr %s333, 8
        %s335 = scalar_lea.vmem %s0, %s334
      $region60: #{axial_shifted_block_pallas.1} parent=55 // pred_fallthru
        _
    $region56: #{axial_shifted_block_pallas.1} parent=5 // pred_fallthru
      _
    %p336 = scmp.le.s32.totalorder 1, %s17
    %p337 = scmp.lt.s32.totalorder %s17, 3
    %p338 = pnand %p336, %p337
    %p339 = pneg %p338
    // Predicated region
    $region61: #{axial_shifted_block_pallas.1} parent=5 // pred_check
      _
    $region62: #{axial_shifted_block_pallas.1} parent=5 // pred_check_branch
      %341 = sbr.rel (%p338) target = $region64
    $region63: #{axial_shifted_block_pallas.1} parent=5 // pred_region
      %s342 = ssub.s32 %s17, 1
      %p343 = scmp.lt.s32.totalorder %s22, 1
      %s344 = scalar_select %p343, %s22, 1
      %s345 = smul.addr %s344, 8
      %s346 = smul.addr %s345, 8
      %s347 = scalar_lea.vmem %s0, %s346
      %p348 = pneg %p43
      %p349 = pneg %p40
      %p350 = pneg %p64
      %p351 = pneg %p61
      %p352 = pneg %p85
      %p353 = pneg %p82
      %p354 = pneg %p106
      %p355 = pneg %p103
      %p356 = pneg %p127
      %p357 = pneg %p124
      %p358 = pneg %p148
      %p359 = pneg %p145
      %p360 = pneg %p169
      %p361 = pneg %p166
      %p362 = pneg %p190
      %p363 = pneg %p187
      %p364 = pneg %p211
      %p365 = pneg %p208
      %p366 = pneg %p232
      %p367 = pneg %p229
      %p368 = pneg %p253
      %p369 = pneg %p250
      %p370 = pneg %p279
      %p371 = pneg %p276
      %p372 = scmp.lt.s32.totalorder %s22, 1
      %s373 = scalar_select %p372, %s22, 1
      %s374 = smul.addr %s373, 8
      %s375 = smul.addr %s374, 8
      %s376 = scalar_lea.vmem %s11, %s375
      %p377 = scmp.lt.s32.totalorder %s22, 1
      %s378 = scalar_select %p377, %s22, 1
      %s379 = smul.addr %s378, 8
      %s380 = smul.addr %s379, 8
      %s381 = scalar_lea.vmem %s0, %s380
      %p382 = scmp.lt.s32.totalorder %s22, 1
      %s383 = scalar_select %p382, %s22, 1
      %s384 = smul.addr %s383, 8
      %s385 = smul.addr %s384, 8
      %s386 = scalar_lea.vmem %s11, %s385
      %v388 = vld [vmem:[%s381] sm:$0xff]
      %v389 = vld [vmem:[%s381 + $0x8] sm:$0xff]
      %v390 = vld [vmem:[%s381 + $0x10] sm:$0xff]
      %v391 = vld [vmem:[%s381 + $0x18] sm:$0xff]
      %v392 = vld [vmem:[%s381 + $0x20] sm:$0xff]
      %v393 = vld [vmem:[%s381 + $0x28] sm:$0xff]
      %v394 = vld [vmem:[%s381 + $0x30] sm:$0xff]
      %v395 = vld [vmem:[%s381 + $0x38] sm:$0xff]
      %v396 = vld [vmem:[%s1] sm:$0xff]
      %v397 = vld [vmem:[%s1 + $0x8] sm:$0xff]
      %v398 = vld [vmem:[%s1 + $0x10] sm:$0xff]
      %v399 = vld [vmem:[%s1 + $0x18] sm:$0xff]
      %v400 = vadd.f32 %v388, %v389
      %401 = vadd.xlane.f32.xlu0 %v400
      %v402 = vpop.xlane.xlu0 %401
      %v403 = vadd.f32 %v390, %v391
      %404 = vadd.xlane.f32.xlu0 %v403
      %v405 = vpop.xlane.xlu0 %404
      %v406 = vadd.f32 %v392, %v393
      %407 = vadd.xlane.f32.xlu0 %v406
      %v408 = vpop.xlane.xlu0 %407
      %v409 = vadd.f32 %v394, %v395
      %410 = vadd.xlane.f32.xlu0 %v409
      %v411 = vpop.xlane.xlu0 %410
      %v412 = vadd.f32 %v402, %v405
      %v413 = vadd.f32 %v412, %v408
      %v414 = vadd.f32 %v413, %v411
      %v415 = vrot.slane %v414, 4
      %v416 = vadd.f32 %v414, %v415
      %v417 = vrot.slane %v416, 2
      %v418 = vadd.f32 %v416, %v417
      %v419 = vrot.slane %v418, 1
      %v420 = vadd.f32 %v418, %v419
      %v421 = vmul.f32 %v420, 0.00012207031
      %v422 = vsub.f32 %v388, %v421
      %v423 = vsub.f32 %v389, %v421
      %v424 = vsub.f32 %v390, %v421
      %v425 = vsub.f32 %v391, %v421
      %v426 = vsub.f32 %v392, %v421
      %v427 = vsub.f32 %v393, %v421
      %v428 = vsub.f32 %v394, %v421
      %v429 = vsub.f32 %v395, %v421
      %v430 = vmul.f32 %v422, %v422
      %v431 = vmul.f32 %v423, %v423
      %v432 = vmul.f32 %v424, %v424
      %v433 = vmul.f32 %v425, %v425
      %v434 = vmul.f32 %v426, %v426
      %v435 = vmul.f32 %v427, %v427
      %v436 = vmul.f32 %v428, %v428
      %v437 = vmul.f32 %v429, %v429
      %v438 = vadd.f32 %v430, %v431
      %439 = vadd.xlane.f32.xlu0 %v438
      %v440 = vpop.xlane.xlu0 %439
      %v441 = vadd.f32 %v432, %v433
      %442 = vadd.xlane.f32.xlu0 %v441
      %v443 = vpop.xlane.xlu0 %442
      %v444 = vadd.f32 %v434, %v435
      %445 = vadd.xlane.f32.xlu0 %v444
      %v446 = vpop.xlane.xlu0 %445
      %v447 = vadd.f32 %v436, %v437
      %448 = vadd.xlane.f32.xlu0 %v447
      %v449 = vpop.xlane.xlu0 %448
      %v450 = vadd.f32 %v440, %v443
      %v451 = vadd.f32 %v450, %v446
      %v452 = vadd.f32 %v451, %v449
      %v453 = vrot.slane %v452, 4
      %v454 = vadd.f32 %v452, %v453
      %v455 = vrot.slane %v454, 2
      %v456 = vadd.f32 %v454, %v455
      %v457 = vrot.slane %v456, 1
      %v458 = vadd.f32 %v456, %v457
      %v459 = vmul.f32 %v458, 0.00012207031
      %v460 = vadd.f32 %v459, 1e-05
      %v461 = vrsqrt.pop %v460
      %v462 = vmul.f32 %v422, %v461
      %v463 = vmul.f32 %v423, %v461
      %v464 = vmul.f32 %v424, %v461
      %v465 = vmul.f32 %v425, %v461
      %v466 = vmul.f32 %v426, %v461
      %v467 = vmul.f32 %v427, %v461
      %v468 = vmul.f32 %v428, %v461
      %v469 = vmul.f32 %v429, %v461
      %471 = vset.pattern.permute.xlu0 0
      %472 = vperm.xlu0 %471, %v396
      %v473 = vpop.permute.xlu0 %472
      %476 = vset.pattern.permute.xlu0 0
      %477 = vperm.xlu0 %476, %v397
      %v478 = vpop.permute.xlu0 %477
      %481 = vset.pattern.permute.xlu0 0
      %482 = vperm.xlu0 %481, %v398
      %v483 = vpop.permute.xlu0 %482
      %486 = vset.pattern.permute.xlu0 0
      %487 = vperm.xlu0 %486, %v399
      %v488 = vpop.permute.xlu0 %487
      %v490 = vmul.f32 %v462, %v473
      %v491 = vmul.f32 %v463, %v473
      %v492 = vmul.f32 %v464, %v478
      %v493 = vmul.f32 %v465, %v478
      %v494 = vmul.f32 %v466, %v483
      %v495 = vmul.f32 %v467, %v483
      %v496 = vmul.f32 %v468, %v488
      %v497 = vmul.f32 %v469, %v488
      %498 = vset.pattern.permute.xlu0 1
      %499 = vperm.xlu0 %498, %v396
      %v500 = vpop.permute.xlu0 %499
      %502 = vset.pattern.permute.xlu0 1
      %503 = vperm.xlu0 %502, %v397
      %v504 = vpop.permute.xlu0 %503
      %506 = vset.pattern.permute.xlu0 1
      %507 = vperm.xlu0 %506, %v398
      %v508 = vpop.permute.xlu0 %507
      %510 = vset.pattern.permute.xlu0 1
      %511 = vperm.xlu0 %510, %v399
      %v512 = vpop.permute.xlu0 %511
      %v514 = vadd.f32 %v490, %v500
      %v515 = vadd.f32 %v491, %v500
      %v516 = vadd.f32 %v492, %v504
      %v517 = vadd.f32 %v493, %v504
      %v518 = vadd.f32 %v494, %v508
      %v519 = vadd.f32 %v495, %v508
      %v520 = vadd.f32 %v496, %v512
      %v521 = vadd.f32 %v497, %v512
      %v522 = vld [vmem:[%s3] sm:$0xf]
      %v523 = vld [vmem:[%s3 + $0x4] sm:$0xf]
      %v524 = vld [vmem:[%s3 + $0x8] sm:$0xf]
      %v525 = vld [vmem:[%s3 + $0xc] sm:$0xf]
      %v526 = vpack.c.bf16 %v516, %v514
      %v527 = vpack.c.bf16 %v517, %v515
      %v528 = vpack.c.bf16 %v520, %v518
      %v529 = vpack.c.bf16 %v521, %v519
      %530 = vset.pattern.permute.xlu0 2
      %531 = vperm.xlu0 %530, %v396
      %v532 = vpop.permute.xlu0 %531
      %534 = vset.pattern.permute.xlu0 2
      %535 = vperm.xlu0 %534, %v397
      %v536 = vpop.permute.xlu0 %535
      %538 = vset.pattern.permute.xlu0 2
      %539 = vperm.xlu0 %538, %v398
      %v540 = vpop.permute.xlu0 %539
      %542 = vset.pattern.permute.xlu0 2
      %543 = vperm.xlu0 %542, %v399
      %v544 = vpop.permute.xlu0 %543
      %v550 = vunpack.c.l.b16 %v522
      %v551 = vunpack.c.l.b16 %v523
      %v552 = vunpack.c.l.b16 %v524
      %v553 = vunpack.c.l.b16 %v525
      %v554 = vpack.c.b16 %v551, %v550
      %v555 = vpack.c.b16 %v553, %v552
      %vm556 = vcmask 261120
      %v558 = vsel %vm556, %v554, 0
      %v561 = vsel %vm556, %v555, 0
      %563 = vmatprep.subr.bf16.mxu0 %v527
      %564 = vmatpush1.bf16.msra.mxu0 %v526
      %565 = vmatprep.subr.bf16.mxu0 %v529
      %566 = vmatpush1.bf16.msra.mxu0 %v528
      %567 = vmatprep.subr.bf16.mxu0 0
      %568 = vmatpush1.bf16.msra.mxu0 0
      %569 = vmatprep.subr.bf16.mxu0 0
      %570 = vmatpush1.bf16.msra.mxu0 0
      %571 = vmatprep.subr.bf16.mxu0 0
      %572 = vmatpush1.bf16.msra.mxu0 0
      %573 = vmatprep.subr.bf16.mxu0 0
      %574 = vmatpush1.bf16.msra.mxu0 0
      %575 = vmatprep.subr.bf16.mxu0 0
      %576 = vmatpush1.bf16.msra.mxu0 0
      %577 = vmatprep.subr.bf16.mxu0 0
      %578 = vmatpush1.bf16.msra.mxu0 0
      %579 = vmatprep.subr.bf16.mxu0 0
      %580 = vmatpush1.bf16.msra.mxu0 0
      %581 = vmatprep.subr.bf16.mxu0 0
      %582 = vmatpush1.bf16.msra.mxu0 0
      %583 = vmatprep.subr.bf16.mxu0 0
      %584 = vmatpush1.bf16.msra.mxu0 0
      %585 = vmatprep.subr.bf16.mxu0 0
      %586 = vmatpush1.bf16.msra.mxu0 0
      %587 = vmatprep.subr.bf16.mxu0 0
      %588 = vmatpush1.bf16.msra.mxu0 0
      %589 = vmatprep.subr.bf16.mxu0 0
      %590 = vmatpush1.bf16.msra.mxu0 0
      %591 = vmatprep.subr.bf16.mxu0 0
      %592 = vmatpush1.bf16.msra.mxu0 0
      %593 = vmatprep.subr.bf16.mxu0 0
      %594 = vmatpush1.bf16.msra.mxu0 0
      %595 = vmatprep.mubr.bf16.mxu0 0
      %596 = vmatmul.mubr.bf16.gmra.mrb[0].mxu0 %v558
      %v597 = vpop.f32.mrb[0].mxu0
      %v598 = vadd.f32 %v532, %v597
      %v599 = vpop.f32.mrb[0].mxu0
      %v600 = vadd.f32 %v532, %v599
      %v601 = vpop.f32.mrb[0].mxu0
      %v602 = vadd.f32 %v536, %v601
      %v603 = vpop.f32.mrb[0].mxu0
      %v604 = vadd.f32 %v536, %v603
      %605 = vmatprep.mubr.bf16.mxu0 0
      %606 = vmatmul.mubr.bf16.gmra.mrb[0].mxu0 %v561
      %v607 = vpop.f32.mrb[0].mxu0
      %v608 = vadd.f32 %v540, %v607
      %v609 = vpop.f32.mrb[0].mxu0
      %v610 = vadd.f32 %v540, %v609
      %v611 = vpop.f32.mrb[0].mxu0
      %v612 = vadd.f32 %v544, %v611
      %v613 = vpop.f32.mrb[0].mxu0
      %v614 = vadd.f32 %v544, %v613
      %615 = vdwg.mxu0
      %v616 = vadd.f32 %v598, %v600
      %617 = vadd.xlane.f32.xlu0 %v616
      %v618 = vpop.xlane.xlu0 %617
      %v619 = vadd.f32 %v602, %v604
      %620 = vadd.xlane.f32.xlu0 %v619
      %v621 = vpop.xlane.xlu0 %620
      %v622 = vadd.f32 %v608, %v610
      %623 = vadd.xlane.f32.xlu0 %v622
      %v624 = vpop.xlane.xlu0 %623
      %v625 = vadd.f32 %v612, %v614
      %626 = vadd.xlane.f32.xlu0 %v625
      %v627 = vpop.xlane.xlu0 %626
      %v628 = vadd.f32 %v618, %v621
      %v629 = vadd.f32 %v628, %v624
      %v630 = vadd.f32 %v629, %v627
      %v631 = vrot.slane %v630, 4
      %v632 = vadd.f32 %v630, %v631
      %v633 = vrot.slane %v632, 2
      %v634 = vadd.f32 %v632, %v633
      %v635 = vrot.slane %v634, 1
      %v636 = vadd.f32 %v634, %v635
      %v637 = vmul.f32 %v636, 0.00012207031
      %v638 = vsub.f32 %v598, %v637
      %v639 = vsub.f32 %v600, %v637
      %v640 = vsub.f32 %v602, %v637
      %v641 = vsub.f32 %v604, %v637
      %v642 = vsub.f32 %v608, %v637
      %v643 = vsub.f32 %v610, %v637
      %v644 = vsub.f32 %v612, %v637
      %v645 = vsub.f32 %v614, %v637
      %v646 = vmul.f32 %v638, %v638
      %v647 = vmul.f32 %v639, %v639
      %v648 = vmul.f32 %v640, %v640
      %v649 = vmul.f32 %v641, %v641
      %v650 = vmul.f32 %v642, %v642
      %v651 = vmul.f32 %v643, %v643
      %v652 = vmul.f32 %v644, %v644
      %v653 = vmul.f32 %v645, %v645
      %v654 = vadd.f32 %v646, %v647
      %655 = vadd.xlane.f32.xlu0 %v654
      %v656 = vpop.xlane.xlu0 %655
      %v657 = vadd.f32 %v648, %v649
      %658 = vadd.xlane.f32.xlu0 %v657
      %v659 = vpop.xlane.xlu0 %658
      %v660 = vadd.f32 %v650, %v651
      %661 = vadd.xlane.f32.xlu0 %v660
      %v662 = vpop.xlane.xlu0 %661
      %v663 = vadd.f32 %v652, %v653
      %664 = vadd.xlane.f32.xlu0 %v663
      %v665 = vpop.xlane.xlu0 %664
      %v666 = vadd.f32 %v656, %v659
      %v667 = vadd.f32 %v666, %v662
      %v668 = vadd.f32 %v667, %v665
      %v669 = vrot.slane %v668, 4
      %v670 = vadd.f32 %v668, %v669
      %v671 = vrot.slane %v670, 2
      %v672 = vadd.f32 %v670, %v671
      %v673 = vrot.slane %v672, 1
      %v674 = vadd.f32 %v672, %v673
      %v675 = vmul.f32 %v674, 0.00012207031
      %v676 = vadd.f32 %v675, 1e-05
      %v677 = vrsqrt.pop %v676
      %v678 = vmul.f32 %v638, %v677
      %v679 = vmul.f32 %v639, %v677
      %v680 = vmul.f32 %v640, %v677
      %v681 = vmul.f32 %v641, %v677
      %v682 = vmul.f32 %v642, %v677
      %v683 = vmul.f32 %v643, %v677
      %v684 = vmul.f32 %v644, %v677
      %v685 = vmul.f32 %v645, %v677
      %686 = vset.pattern.permute.xlu0 3
      %687 = vperm.xlu0 %686, %v396
      %v688 = vpop.permute.xlu0 %687
      %690 = vset.pattern.permute.xlu0 3
      %691 = vperm.xlu0 %690, %v397
      %v692 = vpop.permute.xlu0 %691
      %694 = vset.pattern.permute.xlu0 3
      %695 = vperm.xlu0 %694, %v398
      %v696 = vpop.permute.xlu0 %695
      %698 = vset.pattern.permute.xlu0 3
      %699 = vperm.xlu0 %698, %v399
      %v700 = vpop.permute.xlu0 %699
      %v702 = vmul.f32 %v678, %v688
      %v703 = vmul.f32 %v679, %v688
      %v704 = vmul.f32 %v680, %v692
      %v705 = vmul.f32 %v681, %v692
      %v706 = vmul.f32 %v682, %v696
      %v707 = vmul.f32 %v683, %v696
      %v708 = vmul.f32 %v684, %v700
      %v709 = vmul.f32 %v685, %v700
      %710 = vset.pattern.permute.xlu0 4
      %711 = vperm.xlu0 %710, %v396
      %v712 = vpop.permute.xlu0 %711
      %714 = vset.pattern.permute.xlu0 4
      %715 = vperm.xlu0 %714, %v397
      %v716 = vpop.permute.xlu0 %715
      %718 = vset.pattern.permute.xlu0 4
      %719 = vperm.xlu0 %718, %v398
      %v720 = vpop.permute.xlu0 %719
      %722 = vset.pattern.permute.xlu0 4
      %723 = vperm.xlu0 %722, %v399
      %v724 = vpop.permute.xlu0 %723
      %v726 = vadd.f32 %v702, %v712
      %v727 = vadd.f32 %v703, %v712
      %v728 = vadd.f32 %v704, %v716
      %v729 = vadd.f32 %v705, %v716
      %v730 = vadd.f32 %v706, %v720
      %v731 = vadd.f32 %v707, %v720
      %v732 = vadd.f32 %v708, %v724
      %v733 = vadd.f32 %v709, %v724
      %v734 = vmul.f32 %v726, 0.5
      %v735 = vmul.f32 %v727, 0.5
      %v736 = vmul.f32 %v728, 0.5
      %v737 = vmul.f32 %v729, 0.5
      %v738 = vmul.f32 %v730, 0.5
      %v739 = vmul.f32 %v731, 0.5
      %v740 = vmul.f32 %v732, 0.5
      %v741 = vmul.f32 %v733, 0.5
      %v742 = vmul.f32 %v726, %v726
      %v743 = vmul.f32 %v727, %v727
      %v744 = vmul.f32 %v728, %v728
      %v745 = vmul.f32 %v729, %v729
      %v746 = vmul.f32 %v730, %v730
      %v747 = vmul.f32 %v731, %v731
      %v748 = vmul.f32 %v732, %v732
      %v749 = vmul.f32 %v733, %v733
      %v750 = vmul.f32 %v742, %v726
      %v751 = vmul.f32 %v743, %v727
      %v752 = vmul.f32 %v744, %v728
      %v753 = vmul.f32 %v745, %v729
      %v754 = vmul.f32 %v746, %v730
      %v755 = vmul.f32 %v747, %v731
      %v756 = vmul.f32 %v748, %v732
      %v757 = vmul.f32 %v749, %v733
      %v758 = vmul.f32 %v750, 0.044715
      %v759 = vmul.f32 %v751, 0.044715
      %v760 = vmul.f32 %v752, 0.044715
      %v761 = vmul.f32 %v753, 0.044715
      %v762 = vmul.f32 %v754, 0.044715
      %v763 = vmul.f32 %v755, 0.044715
      %v764 = vmul.f32 %v756, 0.044715
      %v765 = vmul.f32 %v757, 0.044715
      %v766 = vadd.f32 %v726, %v758
      %v767 = vadd.f32 %v727, %v759
      %v768 = vadd.f32 %v728, %v760
      %v769 = vadd.f32 %v729, %v761
      %v770 = vadd.f32 %v730, %v762
      %v771 = vadd.f32 %v731, %v763
      %v772 = vadd.f32 %v732, %v764
      %v773 = vadd.f32 %v733, %v765
      %v774 = vmul.f32 %v766, 0.7978846
      %v775 = vmul.f32 %v767, 0.7978846
      %v776 = vmul.f32 %v768, 0.7978846
      %v777 = vmul.f32 %v769, 0.7978846
      %v778 = vmul.f32 %v770, 0.7978846
      %v779 = vmul.f32 %v771, 0.7978846
      %v780 = vmul.f32 %v772, 0.7978846
      %v781 = vmul.f32 %v773, 0.7978846
      %v782 = vtanh.pop %v774
      %v783 = vtanh.pop %v775
      %v784 = vtanh.pop %v776
      %v785 = vtanh.pop %v777
      %v786 = vtanh.pop %v778
      %v787 = vtanh.pop %v779
      %v788 = vtanh.pop %v780
      %v789 = vtanh.pop %v781
      %v790 = vadd.f32 %v782, 1.0
      %v791 = vadd.f32 %v783, 1.0
      %v792 = vadd.f32 %v784, 1.0
      %v793 = vadd.f32 %v785, 1.0
      %v794 = vadd.f32 %v786, 1.0
      %v795 = vadd.f32 %v787, 1.0
      %v796 = vadd.f32 %v788, 1.0
      %v797 = vadd.f32 %v789, 1.0
      %v798 = vmul.f32 %v734, %v790
      %v799 = vmul.f32 %v735, %v791
      %v800 = vmul.f32 %v736, %v792
      %v801 = vmul.f32 %v737, %v793
      %v802 = vmul.f32 %v738, %v794
      %v803 = vmul.f32 %v739, %v795
      %v804 = vmul.f32 %v740, %v796
      %v805 = vmul.f32 %v741, %v797
      %806 = vrot.lane.b32.xlu0 %v798, 125
      %v807 = vpop.permute.xlu0 %806
      %808 = vrot.lane.b32.xlu0 %v800, 125
      %v809 = vpop.permute.xlu0 %808
      %810 = vrot.lane.b32.xlu0 %v802, 125
      %v811 = vpop.permute.xlu0 %810
      %812 = vrot.lane.b32.xlu0 %v804, 125
      %v813 = vpop.permute.xlu0 %812
      %814 = vrot.lane.b32.xlu0 %v799, 125
      %v815 = vpop.permute.xlu0 %814
      %816 = vrot.lane.b32.xlu0 %v801, 125
      %v817 = vpop.permute.xlu0 %816
      %818 = vrot.lane.b32.xlu0 %v803, 125
      %v819 = vpop.permute.xlu0 %818
      %820 = vrot.lane.b32.xlu0 %v805, 125
      %v821 = vpop.permute.xlu0 %820
      %v822 = vlaneseq
      %v823 = vand.u32 %v822, 127
      %vm824 = vcmp.lt.s32.totalorder %v823, 125
      %v825 = vsel %vm824, %v807, %v815
      %v826 = vsel %vm824, %v809, %v817
      %v827 = vsel %vm824, %v811, %v819
      %v828 = vsel %vm824, %v813, %v821
      %v829 = vsel %vm824, %v815, %v807
      %v830 = vsel %vm824, %v817, %v809
      %v831 = vsel %vm824, %v819, %v811
      %v832 = vsel %vm824, %v821, %v813
      %v833 = vld [vmem:[%s9] sm:$0xff]
      %v834 = vld [vmem:[%s9 + $0x8] sm:$0xff]
      %v835 = vld [vmem:[%s9 + $0x10] sm:$0xff]
      %v836 = vld [vmem:[%s9 + $0x18] sm:$0xff]
      %v837 = vld [vmem:[%s9 + $0x20] sm:$0xff]
      %v838 = vld [vmem:[%s9 + $0x28] sm:$0xff]
      %v839 = vld [vmem:[%s9 + $0x30] sm:$0xff]
      %v840 = vld [vmem:[%s9 + $0x38] sm:$0xff]
      %v841 = vmul.f32 %v825, %v833
      %v842 = vmul.f32 %v829, %v834
      %v843 = vmul.f32 %v826, %v835
      %v844 = vmul.f32 %v830, %v836
      %v845 = vmul.f32 %v827, %v837
      %v846 = vmul.f32 %v831, %v838
      %v847 = vmul.f32 %v828, %v839
      %v848 = vmul.f32 %v832, %v840
      %849 = vrot.lane.b32.xlu0 %v798, 80
      %v850 = vpop.permute.xlu0 %849
      %851 = vrot.lane.b32.xlu0 %v800, 80
      %v852 = vpop.permute.xlu0 %851
      %853 = vrot.lane.b32.xlu0 %v802, 80
      %v854 = vpop.permute.xlu0 %853
      %855 = vrot.lane.b32.xlu0 %v804, 80
      %v856 = vpop.permute.xlu0 %855
      %857 = vrot.lane.b32.xlu0 %v799, 80
      %v858 = vpop.permute.xlu0 %857
      %859 = vrot.lane.b32.xlu0 %v801, 80
      %v860 = vpop.permute.xlu0 %859
      %861 = vrot.lane.b32.xlu0 %v803, 80
      %v862 = vpop.permute.xlu0 %861
      %863 = vrot.lane.b32.xlu0 %v805, 80
      %v864 = vpop.permute.xlu0 %863
      %vm865 = vcmp.lt.s32.totalorder %v823, 80
      %v866 = vsel %vm865, %v850, %v858
      %v867 = vsel %vm865, %v852, %v860
      %v868 = vsel %vm865, %v854, %v862
      %v869 = vsel %vm865, %v856, %v864
      %v870 = vsel %vm865, %v858, %v850
      %v871 = vsel %vm865, %v860, %v852
      %v872 = vsel %vm865, %v862, %v854
      %v873 = vsel %vm865, %v864, %v856
      %v874 = vld [vmem:[%s10] sm:$0xff]
      %v875 = vld [vmem:[%s10 + $0x8] sm:$0xff]
      %v876 = vld [vmem:[%s10 + $0x10] sm:$0xff]
      %v877 = vld [vmem:[%s10 + $0x18] sm:$0xff]
      %v878 = vld [vmem:[%s10 + $0x20] sm:$0xff]
      %v879 = vld [vmem:[%s10 + $0x28] sm:$0xff]
      %v880 = vld [vmem:[%s10 + $0x30] sm:$0xff]
      %v881 = vld [vmem:[%s10 + $0x38] sm:$0xff]
      %v882 = vmul.f32 %v866, %v874
      %v883 = vmul.f32 %v870, %v875
      %v884 = vmul.f32 %v867, %v876
      %v885 = vmul.f32 %v871, %v877
      %v886 = vmul.f32 %v868, %v878
      %v887 = vmul.f32 %v872, %v879
      %v888 = vmul.f32 %v869, %v880
      %v889 = vmul.f32 %v873, %v881
      %890 = vrot.lane.b32.xlu0 %v798, 126
      %v891 = vpop.permute.xlu0 %890
      %892 = vrot.lane.b32.xlu0 %v800, 126
      %v893 = vpop.permute.xlu0 %892
      %894 = vrot.lane.b32.xlu0 %v802, 126
      %v895 = vpop.permute.xlu0 %894
      %896 = vrot.lane.b32.xlu0 %v804, 126
      %v897 = vpop.permute.xlu0 %896
      %898 = vrot.lane.b32.xlu0 %v799, 126
      %v899 = vpop.permute.xlu0 %898
      %900 = vrot.lane.b32.xlu0 %v801, 126
      %v901 = vpop.permute.xlu0 %900
      %902 = vrot.lane.b32.xlu0 %v803, 126
      %v903 = vpop.permute.xlu0 %902
      %904 = vrot.lane.b32.xlu0 %v805, 126
      %v905 = vpop.permute.xlu0 %904
      %vm906 = vcmp.lt.s32.totalorder %v823, 126
      %v907 = vsel %vm906, %v891, %v899
      %v908 = vsel %vm906, %v893, %v901
      %v909 = vsel %vm906, %v895, %v903
      %v910 = vsel %vm906, %v897, %v905
      %v911 = vsel %vm906, %v899, %v891
      %v912 = vsel %vm906, %v901, %v893
      %v913 = vsel %vm906, %v903, %v895
      %v914 = vsel %vm906, %v905, %v897
      %s915 = scalar_lea.vmem %s9, 64
      %v916 = vld [vmem:[%s915] sm:$0xff]
      %v917 = vld [vmem:[%s915 + $0x8] sm:$0xff]
      %v918 = vld [vmem:[%s915 + $0x10] sm:$0xff]
      %v919 = vld [vmem:[%s915 + $0x18] sm:$0xff]
      %v920 = vld [vmem:[%s915 + $0x20] sm:$0xff]
      %v921 = vld [vmem:[%s915 + $0x28] sm:$0xff]
      %v922 = vld [vmem:[%s915 + $0x30] sm:$0xff]
      %v923 = vld [vmem:[%s915 + $0x38] sm:$0xff]
      %v924 = vmul.f32 %v907, %v916
      %v925 = vmul.f32 %v911, %v917
      %v926 = vmul.f32 %v908, %v918
      %v927 = vmul.f32 %v912, %v919
      %v928 = vmul.f32 %v909, %v920
      %v929 = vmul.f32 %v913, %v921
      %v930 = vmul.f32 %v910, %v922
      %v931 = vmul.f32 %v914, %v923
      %932 = vrot.lane.b32.xlu0 %v798, 96
      %v933 = vpop.permute.xlu0 %932
      %934 = vrot.lane.b32.xlu0 %v800, 96
      %v935 = vpop.permute.xlu0 %934
      %936 = vrot.lane.b32.xlu0 %v802, 96
      %v937 = vpop.permute.xlu0 %936
      %938 = vrot.lane.b32.xlu0 %v804, 96
      %v939 = vpop.permute.xlu0 %938
      %940 = vrot.lane.b32.xlu0 %v799, 96
      %v941 = vpop.permute.xlu0 %940
      %942 = vrot.lane.b32.xlu0 %v801, 96
      %v943 = vpop.permute.xlu0 %942
      %944 = vrot.lane.b32.xlu0 %v803, 96
      %v945 = vpop.permute.xlu0 %944
      %946 = vrot.lane.b32.xlu0 %v805, 96
      %v947 = vpop.permute.xlu0 %946
      %vm948 = vcmp.lt.s32.totalorder %v823, 96
      %v949 = vsel %vm948, %v933, %v941
      %v950 = vsel %vm948, %v935, %v943
      %v951 = vsel %vm948, %v937, %v945
      %v952 = vsel %vm948, %v939, %v947
      %v953 = vsel %vm948, %v941, %v933
      %v954 = vsel %vm948, %v943, %v935
      %v955 = vsel %vm948, %v945, %v937
      %v956 = vsel %vm948, %v947, %v939
      %s957 = scalar_lea.vmem %s10, 64
      %v958 = vld [vmem:[%s957] sm:$0xff]
      %v959 = vld [vmem:[%s957 + $0x8] sm:$0xff]
      %v960 = vld [vmem:[%s957 + $0x10] sm:$0xff]
      %v961 = vld [vmem:[%s957 + $0x18] sm:$0xff]
      %v962 = vld [vmem:[%s957 + $0x20] sm:$0xff]
      %v963 = vld [vmem:[%s957 + $0x28] sm:$0xff]
      %v964 = vld [vmem:[%s957 + $0x30] sm:$0xff]
      %v965 = vld [vmem:[%s957 + $0x38] sm:$0xff]
      %v966 = vmul.f32 %v949, %v958
      %v967 = vmul.f32 %v953, %v959
      %v968 = vmul.f32 %v950, %v960
      %v969 = vmul.f32 %v954, %v961
      %v970 = vmul.f32 %v951, %v962
      %v971 = vmul.f32 %v955, %v963
      %v972 = vmul.f32 %v952, %v964
      %v973 = vmul.f32 %v956, %v965
      %v974 = vadd.f32 %v841, %v924
      %v975 = vadd.f32 %v842, %v925
      %v976 = vadd.f32 %v843, %v926
      %v977 = vadd.f32 %v844, %v927
      %v978 = vadd.f32 %v845, %v928
      %v979 = vadd.f32 %v846, %v929
      %v980 = vadd.f32 %v847, %v930
      %v981 = vadd.f32 %v848, %v931
      %v982 = vadd.f32 %v882, %v966
      %v983 = vadd.f32 %v883, %v967
      %v984 = vadd.f32 %v884, %v968
      %v985 = vadd.f32 %v885, %v969
      %v986 = vadd.f32 %v886, %v970
      %v987 = vadd.f32 %v887, %v971
      %v988 = vadd.f32 %v888, %v972
      %v989 = vadd.f32 %v889, %v973
      %990 = vrot.lane.b32.xlu0 %v798, 127
      %v991 = vpop.permute.xlu0 %990
      %992 = vrot.lane.b32.xlu0 %v800, 127
      %v993 = vpop.permute.xlu0 %992
      %994 = vrot.lane.b32.xlu0 %v802, 127
      %v995 = vpop.permute.xlu0 %994
      %996 = vrot.lane.b32.xlu0 %v804, 127
      %v997 = vpop.permute.xlu0 %996
      %998 = vrot.lane.b32.xlu0 %v799, 127
      %v999 = vpop.permute.xlu0 %998
      %1000 = vrot.lane.b32.xlu0 %v801, 127
      %v1001 = vpop.permute.xlu0 %1000
      %1002 = vrot.lane.b32.xlu0 %v803, 127
      %v1003 = vpop.permute.xlu0 %1002
      %1004 = vrot.lane.b32.xlu0 %v805, 127
      %v1005 = vpop.permute.xlu0 %1004
      %vm1006 = vcmp.lt.s32.totalorder %v823, 127
      %v1007 = vsel %vm1006, %v991, %v999
      %v1008 = vsel %vm1006, %v993, %v1001
      %v1009 = vsel %vm1006, %v995, %v1003
      %v1010 = vsel %vm1006, %v997, %v1005
      %v1011 = vsel %vm1006, %v999, %v991
      %v1012 = vsel %vm1006, %v1001, %v993
      %v1013 = vsel %vm1006, %v1003, %v995
      %v1014 = vsel %vm1006, %v1005, %v997
      %s1015 = scalar_lea.vmem %s9, 128
      %v1016 = vld [vmem:[%s1015] sm:$0xff]
      %v1017 = vld [vmem:[%s1015 + $0x8] sm:$0xff]
      %v1018 = vld [vmem:[%s1015 + $0x10] sm:$0xff]
      %v1019 = vld [vmem:[%s1015 + $0x18] sm:$0xff]
      %v1020 = vld [vmem:[%s1015 + $0x20] sm:$0xff]
      %v1021 = vld [vmem:[%s1015 + $0x28] sm:$0xff]
      %v1022 = vld [vmem:[%s1015 + $0x30] sm:$0xff]
      %v1023 = vld [vmem:[%s1015 + $0x38] sm:$0xff]
      %v1024 = vmul.f32 %v1007, %v1016
      %v1025 = vmul.f32 %v1011, %v1017
      %v1026 = vmul.f32 %v1008, %v1018
      %v1027 = vmul.f32 %v1012, %v1019
      %v1028 = vmul.f32 %v1009, %v1020
      %v1029 = vmul.f32 %v1013, %v1021
      %v1030 = vmul.f32 %v1010, %v1022
      %v1031 = vmul.f32 %v1014, %v1023
      %1032 = vrot.lane.b32.xlu0 %v798, 112
      %v1033 = vpop.permute.xlu0 %1032
      %1034 = vrot.lane.b32.xlu0 %v800, 112
      %v1035 = vpop.permute.xlu0 %1034
      %1036 = vrot.lane.b32.xlu0 %v802, 112
      %v1037 = vpop.permute.xlu0 %1036
      %1038 = vrot.lane.b32.xlu0 %v804, 112
      %v1039 = vpop.permute.xlu0 %1038
      %1040 = vrot.lane.b32.xlu0 %v799, 112
      %v1041 = vpop.permute.xlu0 %1040
      %1042 = vrot.lane.b32.xlu0 %v801, 112
      %v1043 = vpop.permute.xlu0 %1042
      %1044 = vrot.lane.b32.xlu0 %v803, 112
      %v1045 = vpop.permute.xlu0 %1044
      %1046 = vrot.lane.b32.xlu0 %v805, 112
      %v1047 = vpop.permute.xlu0 %1046
      %vm1048 = vcmp.lt.s32.totalorder %v823, 112
      %v1049 = vsel %vm1048, %v1033, %v1041
      %v1050 = vsel %vm1048, %v1035, %v1043
      %v1051 = vsel %vm1048, %v1037, %v1045
      %v1052 = vsel %vm1048, %v1039, %v1047
      %v1053 = vsel %vm1048, %v1041, %v1033
      %v1054 = vsel %vm1048, %v1043, %v1035
      %v1055 = vsel %vm1048, %v1045, %v1037
      %v1056 = vsel %vm1048, %v1047, %v1039
      %s1057 = scalar_lea.vmem %s10, 128
      %v1058 = vld [vmem:[%s1057] sm:$0xff]
      %v1059 = vld [vmem:[%s1057 + $0x8] sm:$0xff]
      %v1060 = vld [vmem:[%s1057 + $0x10] sm:$0xff]
      %v1061 = vld [vmem:[%s1057 + $0x18] sm:$0xff]
      %v1062 = vld [vmem:[%s1057 + $0x20] sm:$0xff]
      %v1063 = vld [vmem:[%s1057 + $0x28] sm:$0xff]
      %v1064 = vld [vmem:[%s1057 + $0x30] sm:$0xff]
      %v1065 = vld [vmem:[%s1057 + $0x38] sm:$0xff]
      %v1066 = vmul.f32 %v1049, %v1058
      %v1067 = vmul.f32 %v1053, %v1059
      %v1068 = vmul.f32 %v1050, %v1060
      %v1069 = vmul.f32 %v1054, %v1061
      %v1070 = vmul.f32 %v1051, %v1062
      %v1071 = vmul.f32 %v1055, %v1063
      %v1072 = vmul.f32 %v1052, %v1064
      %v1073 = vmul.f32 %v1056, %v1065
      %v1074 = vadd.f32 %v974, %v1024
      %v1075 = vadd.f32 %v975, %v1025
      %v1076 = vadd.f32 %v976, %v1026
      %v1077 = vadd.f32 %v977, %v1027
      %v1078 = vadd.f32 %v978, %v1028
      %v1079 = vadd.f32 %v979, %v1029
      %v1080 = vadd.f32 %v980, %v1030
      %v1081 = vadd.f32 %v981, %v1031
      %v1082 = vadd.f32 %v982, %v1066
      %v1083 = vadd.f32 %v983, %v1067
      %v1084 = vadd.f32 %v984, %v1068
      %v1085 = vadd.f32 %v985, %v1069
      %v1086 = vadd.f32 %v986, %v1070
      %v1087 = vadd.f32 %v987, %v1071
      %v1088 = vadd.f32 %v988, %v1072
      %v1089 = vadd.f32 %v989, %v1073
      %s1090 = scalar_lea.vmem %s9, 192
      %v1091 = vld [vmem:[%s1090] sm:$0xff]
      %v1092 = vld [vmem:[%s1090 + $0x8] sm:$0xff]
      %v1093 = vld [vmem:[%s1090 + $0x10] sm:$0xff]
      %v1094 = vld [vmem:[%s1090 + $0x18] sm:$0xff]
      %v1095 = vld [vmem:[%s1090 + $0x20] sm:$0xff]
      %v1096 = vld [vmem:[%s1090 + $0x28] sm:$0xff]
      %v1097 = vld [vmem:[%s1090 + $0x30] sm:$0xff]
      %v1098 = vld [vmem:[%s1090 + $0x38] sm:$0xff]
      %v1099 = vmul.f32 %v798, %v1091
      %v1100 = vmul.f32 %v799, %v1092
      %v1101 = vmul.f32 %v800, %v1093
      %v1102 = vmul.f32 %v801, %v1094
      %v1103 = vmul.f32 %v802, %v1095
      %v1104 = vmul.f32 %v803, %v1096
      %v1105 = vmul.f32 %v804, %v1097
      %v1106 = vmul.f32 %v805, %v1098
      %s1107 = scalar_lea.vmem %s10, 192
      %v1108 = vld [vmem:[%s1107] sm:$0xff]
      %v1109 = vld [vmem:[%s1107 + $0x8] sm:$0xff]
      %v1110 = vld [vmem:[%s1107 + $0x10] sm:$0xff]
      %v1111 = vld [vmem:[%s1107 + $0x18] sm:$0xff]
      %v1112 = vld [vmem:[%s1107 + $0x20] sm:$0xff]
      %v1113 = vld [vmem:[%s1107 + $0x28] sm:$0xff]
      %v1114 = vld [vmem:[%s1107 + $0x30] sm:$0xff]
      %v1115 = vld [vmem:[%s1107 + $0x38] sm:$0xff]
      %v1116 = vmul.f32 %v798, %v1108
      %v1117 = vmul.f32 %v799, %v1109
      %v1118 = vmul.f32 %v800, %v1110
      %v1119 = vmul.f32 %v801, %v1111
      %v1120 = vmul.f32 %v802, %v1112
      %v1121 = vmul.f32 %v803, %v1113
      %v1122 = vmul.f32 %v804, %v1114
      %v1123 = vmul.f32 %v805, %v1115
      %v1124 = vadd.f32 %v1074, %v1099
      %v1125 = vadd.f32 %v1075, %v1100
      %v1126 = vadd.f32 %v1076, %v1101
      %v1127 = vadd.f32 %v1077, %v1102
      %v1128 = vadd.f32 %v1078, %v1103
      %v1129 = vadd.f32 %v1079, %v1104
      %v1130 = vadd.f32 %v1080, %v1105
      %v1131 = vadd.f32 %v1081, %v1106
      %v1132 = vadd.f32 %v1082, %v1116
      %v1133 = vadd.f32 %v1083, %v1117
      %v1134 = vadd.f32 %v1084, %v1118
      %v1135 = vadd.f32 %v1085, %v1119
      %v1136 = vadd.f32 %v1086, %v1120
      %v1137 = vadd.f32 %v1087, %v1121
      %v1138 = vadd.f32 %v1088, %v1122
      %v1139 = vadd.f32 %v1089, %v1123
      %1140 = vrot.lane.b32.xlu0 %v798, 1
      %v1141 = vpop.permute.xlu0 %1140
      %1142 = vrot.lane.b32.xlu0 %v800, 1
      %v1143 = vpop.permute.xlu0 %1142
      %1144 = vrot.lane.b32.xlu0 %v802, 1
      %v1145 = vpop.permute.xlu0 %1144
      %1146 = vrot.lane.b32.xlu0 %v804, 1
      %v1147 = vpop.permute.xlu0 %1146
      %1148 = vrot.lane.b32.xlu0 %v799, 1
      %v1149 = vpop.permute.xlu0 %1148
      %1150 = vrot.lane.b32.xlu0 %v801, 1
      %v1151 = vpop.permute.xlu0 %1150
      %1152 = vrot.lane.b32.xlu0 %v803, 1
      %v1153 = vpop.permute.xlu0 %1152
      %1154 = vrot.lane.b32.xlu0 %v805, 1
      %v1155 = vpop.permute.xlu0 %1154
      %vm1156 = vcmp.lt.s32.totalorder %v823, 1
      %v1157 = vsel %vm1156, %v1141, %v1149
      %v1158 = vsel %vm1156, %v1143, %v1151
      %v1159 = vsel %vm1156, %v1145, %v1153
      %v1160 = vsel %vm1156, %v1147, %v1155
      %v1161 = vsel %vm1156, %v1149, %v1141
      %v1162 = vsel %vm1156, %v1151, %v1143
      %v1163 = vsel %vm1156, %v1153, %v1145
      %v1164 = vsel %vm1156, %v1155, %v1147
      %s1165 = scalar_lea.vmem %s9, 256
      %v1166 = vld [vmem:[%s1165] sm:$0xff]
      %v1167 = vld [vmem:[%s1165 + $0x8] sm:$0xff]
      %v1168 = vld [vmem:[%s1165 + $0x10] sm:$0xff]
      %v1169 = vld [vmem:[%s1165 + $0x18] sm:$0xff]
      %v1170 = vld [vmem:[%s1165 + $0x20] sm:$0xff]
      %v1171 = vld [vmem:[%s1165 + $0x28] sm:$0xff]
      %v1172 = vld [vmem:[%s1165 + $0x30] sm:$0xff]
      %v1173 = vld [vmem:[%s1165 + $0x38] sm:$0xff]
      %v1174 = vmul.f32 %v1161, %v1166
      %v1175 = vmul.f32 %v1157, %v1167
      %v1176 = vmul.f32 %v1162, %v1168
      %v1177 = vmul.f32 %v1158, %v1169
      %v1178 = vmul.f32 %v1163, %v1170
      %v1179 = vmul.f32 %v1159, %v1171
      %v1180 = vmul.f32 %v1164, %v1172
      %v1181 = vmul.f32 %v1160, %v1173
      %1182 = vrot.lane.b32.xlu0 %v798, 16
      %v1183 = vpop.permute.xlu0 %1182
      %1184 = vrot.lane.b32.xlu0 %v800, 16
      %v1185 = vpop.permute.xlu0 %1184
      %1186 = vrot.lane.b32.xlu0 %v802, 16
      %v1187 = vpop.permute.xlu0 %1186
      %1188 = vrot.lane.b32.xlu0 %v804, 16
      %v1189 = vpop.permute.xlu0 %1188
      %1190 = vrot.lane.b32.xlu0 %v799, 16
      %v1191 = vpop.permute.xlu0 %1190
      %1192 = vrot.lane.b32.xlu0 %v801, 16
      %v1193 = vpop.permute.xlu0 %1192
      %1194 = vrot.lane.b32.xlu0 %v803, 16
      %v1195 = vpop.permute.xlu0 %1194
      %1196 = vrot.lane.b32.xlu0 %v805, 16
      %v1197 = vpop.permute.xlu0 %1196
      %vm1198 = vcmp.lt.s32.totalorder %v823, 16
      %v1199 = vsel %vm1198, %v1183, %v1191
      %v1200 = vsel %vm1198, %v1185, %v1193
      %v1201 = vsel %vm1198, %v1187, %v1195
      %v1202 = vsel %vm1198, %v1189, %v1197
      %v1203 = vsel %vm1198, %v1191, %v1183
      %v1204 = vsel %vm1198, %v1193, %v1185
      %v1205 = vsel %vm1198, %v1195, %v1187
      %v1206 = vsel %vm1198, %v1197, %v1189
      %s1207 = scalar_lea.vmem %s10, 256
      %v1208 = vld [vmem:[%s1207] sm:$0xff]
      %v1209 = vld [vmem:[%s1207 + $0x8] sm:$0xff]
      %v1210 = vld [vmem:[%s1207 + $0x10] sm:$0xff]
      %v1211 = vld [vmem:[%s1207 + $0x18] sm:$0xff]
      %v1212 = vld [vmem:[%s1207 + $0x20] sm:$0xff]
      %v1213 = vld [vmem:[%s1207 + $0x28] sm:$0xff]
      %v1214 = vld [vmem:[%s1207 + $0x30] sm:$0xff]
      %v1215 = vld [vmem:[%s1207 + $0x38] sm:$0xff]
      %v1216 = vmul.f32 %v1203, %v1208
      %v1217 = vmul.f32 %v1199, %v1209
      %v1218 = vmul.f32 %v1204, %v1210
      %v1219 = vmul.f32 %v1200, %v1211
      %v1220 = vmul.f32 %v1205, %v1212
      %v1221 = vmul.f32 %v1201, %v1213
      %v1222 = vmul.f32 %v1206, %v1214
      %v1223 = vmul.f32 %v1202, %v1215
      %v1224 = vadd.f32 %v1124, %v1174
      %v1225 = vadd.f32 %v1125, %v1175
      %v1226 = vadd.f32 %v1126, %v1176
      %v1227 = vadd.f32 %v1127, %v1177
      %v1228 = vadd.f32 %v1128, %v1178
      %v1229 = vadd.f32 %v1129, %v1179
      %v1230 = vadd.f32 %v1130, %v1180
      %v1231 = vadd.f32 %v1131, %v1181
      %v1232 = vadd.f32 %v1132, %v1216
      %v1233 = vadd.f32 %v1133, %v1217
      %v1234 = vadd.f32 %v1134, %v1218
      %v1235 = vadd.f32 %v1135, %v1219
      %v1236 = vadd.f32 %v1136, %v1220
      %v1237 = vadd.f32 %v1137, %v1221
      %v1238 = vadd.f32 %v1138, %v1222
      %v1239 = vadd.f32 %v1139, %v1223
      %1240 = vrot.lane.b32.xlu0 %v798, 2
      %v1241 = vpop.permute.xlu0 %1240
      %1242 = vrot.lane.b32.xlu0 %v800, 2
      %v1243 = vpop.permute.xlu0 %1242
      %1244 = vrot.lane.b32.xlu0 %v802, 2
      %v1245 = vpop.permute.xlu0 %1244
      %1246 = vrot.lane.b32.xlu0 %v804, 2
      %v1247 = vpop.permute.xlu0 %1246
      %1248 = vrot.lane.b32.xlu0 %v799, 2
      %v1249 = vpop.permute.xlu0 %1248
      %1250 = vrot.lane.b32.xlu0 %v801, 2
      %v1251 = vpop.permute.xlu0 %1250
      %1252 = vrot.lane.b32.xlu0 %v803, 2
      %v1253 = vpop.permute.xlu0 %1252
      %1254 = vrot.lane.b32.xlu0 %v805, 2
      %v1255 = vpop.permute.xlu0 %1254
      %vm1256 = vcmp.lt.s32.totalorder %v823, 2
      %v1257 = vsel %vm1256, %v1241, %v1249
      %v1258 = vsel %vm1256, %v1243, %v1251
      %v1259 = vsel %vm1256, %v1245, %v1253
      %v1260 = vsel %vm1256, %v1247, %v1255
      %v1261 = vsel %vm1256, %v1249, %v1241
      %v1262 = vsel %vm1256, %v1251, %v1243
      %v1263 = vsel %vm1256, %v1253, %v1245
      %v1264 = vsel %vm1256, %v1255, %v1247
      %s1265 = scalar_lea.vmem %s9, 320
      %v1266 = vld [vmem:[%s1265] sm:$0xff]
      %v1267 = vld [vmem:[%s1265 + $0x8] sm:$0xff]
      %v1268 = vld [vmem:[%s1265 + $0x10] sm:$0xff]
      %v1269 = vld [vmem:[%s1265 + $0x18] sm:$0xff]
      %v1270 = vld [vmem:[%s1265 + $0x20] sm:$0xff]
      %v1271 = vld [vmem:[%s1265 + $0x28] sm:$0xff]
      %v1272 = vld [vmem:[%s1265 + $0x30] sm:$0xff]
      %v1273 = vld [vmem:[%s1265 + $0x38] sm:$0xff]
      %v1274 = vmul.f32 %v1261, %v1266
      %v1275 = vmul.f32 %v1257, %v1267
      %v1276 = vmul.f32 %v1262, %v1268
      %v1277 = vmul.f32 %v1258, %v1269
      %v1278 = vmul.f32 %v1263, %v1270
      %v1279 = vmul.f32 %v1259, %v1271
      %v1280 = vmul.f32 %v1264, %v1272
      %v1281 = vmul.f32 %v1260, %v1273
      %1282 = vrot.lane.b32.xlu0 %v798, 32
      %v1283 = vpop.permute.xlu0 %1282
      %1284 = vrot.lane.b32.xlu0 %v800, 32
      %v1285 = vpop.permute.xlu0 %1284
      %1286 = vrot.lane.b32.xlu0 %v802, 32
      %v1287 = vpop.permute.xlu0 %1286
      %1288 = vrot.lane.b32.xlu0 %v804, 32
      %v1289 = vpop.permute.xlu0 %1288
      %1290 = vrot.lane.b32.xlu0 %v799, 32
      %v1291 = vpop.permute.xlu0 %1290
      %1292 = vrot.lane.b32.xlu0 %v801, 32
      %v1293 = vpop.permute.xlu0 %1292
      %1294 = vrot.lane.b32.xlu0 %v803, 32
      %v1295 = vpop.permute.xlu0 %1294
      %1296 = vrot.lane.b32.xlu0 %v805, 32
      %v1297 = vpop.permute.xlu0 %1296
      %vm1298 = vcmp.lt.s32.totalorder %v823, 32
      %v1299 = vsel %vm1298, %v1283, %v1291
      %v1300 = vsel %vm1298, %v1285, %v1293
      %v1301 = vsel %vm1298, %v1287, %v1295
      %v1302 = vsel %vm1298, %v1289, %v1297
      %v1303 = vsel %vm1298, %v1291, %v1283
      %v1304 = vsel %vm1298, %v1293, %v1285
      %v1305 = vsel %vm1298, %v1295, %v1287
      %v1306 = vsel %vm1298, %v1297, %v1289
      %s1307 = scalar_lea.vmem %s10, 320
      %v1308 = vld [vmem:[%s1307] sm:$0xff]
      %v1309 = vld [vmem:[%s1307 + $0x8] sm:$0xff]
      %v1310 = vld [vmem:[%s1307 + $0x10] sm:$0xff]
      %v1311 = vld [vmem:[%s1307 + $0x18] sm:$0xff]
      %v1312 = vld [vmem:[%s1307 + $0x20] sm:$0xff]
      %v1313 = vld [vmem:[%s1307 + $0x28] sm:$0xff]
      %v1314 = vld [vmem:[%s1307 + $0x30] sm:$0xff]
      %v1315 = vld [vmem:[%s1307 + $0x38] sm:$0xff]
      %v1316 = vmul.f32 %v1303, %v1308
      %v1317 = vmul.f32 %v1299, %v1309
      %v1318 = vmul.f32 %v1304, %v1310
      %v1319 = vmul.f32 %v1300, %v1311
      %v1320 = vmul.f32 %v1305, %v1312
      %v1321 = vmul.f32 %v1301, %v1313
      %v1322 = vmul.f32 %v1306, %v1314
      %v1323 = vmul.f32 %v1302, %v1315
      %v1324 = vadd.f32 %v1224, %v1274
      %v1325 = vadd.f32 %v1225, %v1275
      %v1326 = vadd.f32 %v1226, %v1276
      %v1327 = vadd.f32 %v1227, %v1277
      %v1328 = vadd.f32 %v1228, %v1278
      %v1329 = vadd.f32 %v1229, %v1279
      %v1330 = vadd.f32 %v1230, %v1280
      %v1331 = vadd.f32 %v1231, %v1281
      %v1332 = vadd.f32 %v1232, %v1316
      %v1333 = vadd.f32 %v1233, %v1317
      %v1334 = vadd.f32 %v1234, %v1318
      %v1335 = vadd.f32 %v1235, %v1319
      %v1336 = vadd.f32 %v1236, %v1320
      %v1337 = vadd.f32 %v1237, %v1321
      %v1338 = vadd.f32 %v1238, %v1322
      %v1339 = vadd.f32 %v1239, %v1323
      %1340 = vrot.lane.b32.xlu0 %v798, 3
      %v1341 = vpop.permute.xlu0 %1340
      %1342 = vrot.lane.b32.xlu0 %v800, 3
      %v1343 = vpop.permute.xlu0 %1342
      %1344 = vrot.lane.b32.xlu0 %v802, 3
      %v1345 = vpop.permute.xlu0 %1344
      %1346 = vrot.lane.b32.xlu0 %v804, 3
      %v1347 = vpop.permute.xlu0 %1346
      %1348 = vrot.lane.b32.xlu0 %v799, 3
      %v1349 = vpop.permute.xlu0 %1348
      %1350 = vrot.lane.b32.xlu0 %v801, 3
      %v1351 = vpop.permute.xlu0 %1350
      %1352 = vrot.lane.b32.xlu0 %v803, 3
      %v1353 = vpop.permute.xlu0 %1352
      %1354 = vrot.lane.b32.xlu0 %v805, 3
      %v1355 = vpop.permute.xlu0 %1354
      %vm1356 = vcmp.lt.s32.totalorder %v823, 3
      %v1357 = vsel %vm1356, %v1341, %v1349
      %v1358 = vsel %vm1356, %v1343, %v1351
      %v1359 = vsel %vm1356, %v1345, %v1353
      %v1360 = vsel %vm1356, %v1347, %v1355
      %v1361 = vsel %vm1356, %v1349, %v1341
      %v1362 = vsel %vm1356, %v1351, %v1343
      %v1363 = vsel %vm1356, %v1353, %v1345
      %v1364 = vsel %vm1356, %v1355, %v1347
      %s1365 = scalar_lea.vmem %s9, 384
      %v1366 = vld [vmem:[%s1365] sm:$0xff]
      %v1367 = vld [vmem:[%s1365 + $0x8] sm:$0xff]
      %v1368 = vld [vmem:[%s1365 + $0x10] sm:$0xff]
      %v1369 = vld [vmem:[%s1365 + $0x18] sm:$0xff]
      %v1370 = vld [vmem:[%s1365 + $0x20] sm:$0xff]
      %v1371 = vld [vmem:[%s1365 + $0x28] sm:$0xff]
      %v1372 = vld [vmem:[%s1365 + $0x30] sm:$0xff]
      %v1373 = vld [vmem:[%s1365 + $0x38] sm:$0xff]
      %v1374 = vmul.f32 %v1361, %v1366
      %v1375 = vmul.f32 %v1357, %v1367
      %v1376 = vmul.f32 %v1362, %v1368
      %v1377 = vmul.f32 %v1358, %v1369
      %v1378 = vmul.f32 %v1363, %v1370
      %v1379 = vmul.f32 %v1359, %v1371
      %v1380 = vmul.f32 %v1364, %v1372
      %v1381 = vmul.f32 %v1360, %v1373
      %1382 = vrot.lane.b32.xlu0 %v798, 48
      %v1383 = vpop.permute.xlu0 %1382
      %1384 = vrot.lane.b32.xlu0 %v800, 48
      %v1385 = vpop.permute.xlu0 %1384
      %1386 = vrot.lane.b32.xlu0 %v802, 48
      %v1387 = vpop.permute.xlu0 %1386
      %1388 = vrot.lane.b32.xlu0 %v804, 48
      %v1389 = vpop.permute.xlu0 %1388
      %1390 = vrot.lane.b32.xlu0 %v799, 48
      %v1391 = vpop.permute.xlu0 %1390
      %1392 = vrot.lane.b32.xlu0 %v801, 48
      %v1393 = vpop.permute.xlu0 %1392
      %1394 = vrot.lane.b32.xlu0 %v803, 48
      %v1395 = vpop.permute.xlu0 %1394
      %1396 = vrot.lane.b32.xlu0 %v805, 48
      %v1397 = vpop.permute.xlu0 %1396
      %vm1398 = vcmp.lt.s32.totalorder %v823, 48
      %v1399 = vsel %vm1398, %v1383, %v1391
      %v1400 = vsel %vm1398, %v1385, %v1393
      %v1401 = vsel %vm1398, %v1387, %v1395
      %v1402 = vsel %vm1398, %v1389, %v1397
      %v1403 = vsel %vm1398, %v1391, %v1383
      %v1404 = vsel %vm1398, %v1393, %v1385
      %v1405 = vsel %vm1398, %v1395, %v1387
      %v1406 = vsel %vm1398, %v1397, %v1389
      %s1407 = scalar_lea.vmem %s10, 384
      %v1408 = vld [vmem:[%s1407] sm:$0xff]
      %v1409 = vld [vmem:[%s1407 + $0x8] sm:$0xff]
      %v1410 = vld [vmem:[%s1407 + $0x10] sm:$0xff]
      %v1411 = vld [vmem:[%s1407 + $0x18] sm:$0xff]
      %v1412 = vld [vmem:[%s1407 + $0x20] sm:$0xff]
      %v1413 = vld [vmem:[%s1407 + $0x28] sm:$0xff]
      %v1414 = vld [vmem:[%s1407 + $0x30] sm:$0xff]
      %v1415 = vld [vmem:[%s1407 + $0x38] sm:$0xff]
      %v1416 = vmul.f32 %v1403, %v1408
      %v1417 = vmul.f32 %v1399, %v1409
      %v1418 = vmul.f32 %v1404, %v1410
      %v1419 = vmul.f32 %v1400, %v1411
      %v1420 = vmul.f32 %v1405, %v1412
      %v1421 = vmul.f32 %v1401, %v1413
      %v1422 = vmul.f32 %v1406, %v1414
      %v1423 = vmul.f32 %v1402, %v1415
      %v1424 = vadd.f32 %v1324, %v1374
      %v1425 = vadd.f32 %v1325, %v1375
      %v1426 = vadd.f32 %v1326, %v1376
      %v1427 = vadd.f32 %v1327, %v1377
      %v1428 = vadd.f32 %v1328, %v1378
      %v1429 = vadd.f32 %v1329, %v1379
      %v1430 = vadd.f32 %v1330, %v1380
      %v1431 = vadd.f32 %v1331, %v1381
      %v1432 = vadd.f32 %v1332, %v1416
      %v1433 = vadd.f32 %v1333, %v1417
      %v1434 = vadd.f32 %v1334, %v1418
      %v1435 = vadd.f32 %v1335, %v1419
      %v1436 = vadd.f32 %v1336, %v1420
      %v1437 = vadd.f32 %v1337, %v1421
      %v1438 = vadd.f32 %v1338, %v1422
      %v1439 = vadd.f32 %v1339, %v1423
      %v1440 = vld [vmem:[%s4] sm:$0xf]
      %v1441 = vld [vmem:[%s4 + $0x4] sm:$0xf]
      %v1442 = vld [vmem:[%s4 + $0x8] sm:$0xf]
      %v1443 = vld [vmem:[%s4 + $0xc] sm:$0xf]
      %v1444 = vpack.c.bf16 %v1426, %v1424
      %v1445 = vpack.c.bf16 %v1427, %v1425
      %v1446 = vpack.c.bf16 %v1430, %v1428
      %v1447 = vpack.c.bf16 %v1431, %v1429
      %1448 = vset.pattern.permute.xlu0 5
      %1449 = vperm.xlu0 %1448, %v396
      %v1450 = vpop.permute.xlu0 %1449
      %1452 = vset.pattern.permute.xlu0 5
      %1453 = vperm.xlu0 %1452, %v397
      %v1454 = vpop.permute.xlu0 %1453
      %1456 = vset.pattern.permute.xlu0 5
      %1457 = vperm.xlu0 %1456, %v398
      %v1458 = vpop.permute.xlu0 %1457
      %1460 = vset.pattern.permute.xlu0 5
      %1461 = vperm.xlu0 %1460, %v399
      %v1462 = vpop.permute.xlu0 %1461
      %v1468 = vunpack.c.l.b16 %v1440
      %v1469 = vunpack.c.l.b16 %v1441
      %v1470 = vunpack.c.l.b16 %v1442
      %v1471 = vunpack.c.l.b16 %v1443
      %v1472 = vpack.c.b16 %v1469, %v1468
      %v1473 = vpack.c.b16 %v1471, %v1470
      %v1475 = vsel %vm556, %v1472, 0
      %v1478 = vsel %vm556, %v1473, 0
      %1480 = vmatprep.subr.bf16.mxu0 %v1445
      %1481 = vmatpush1.bf16.msra.mxu0 %v1444
      %1482 = vmatprep.subr.bf16.mxu0 %v1447
      %1483 = vmatpush1.bf16.msra.mxu0 %v1446
      %1484 = vmatprep.subr.bf16.mxu0 0
      %1485 = vmatpush1.bf16.msra.mxu0 0
      %1486 = vmatprep.subr.bf16.mxu0 0
      %1487 = vmatpush1.bf16.msra.mxu0 0
      %1488 = vmatprep.subr.bf16.mxu0 0
      %1489 = vmatpush1.bf16.msra.mxu0 0
      %1490 = vmatprep.subr.bf16.mxu0 0
      %1491 = vmatpush1.bf16.msra.mxu0 0
      %1492 = vmatprep.subr.bf16.mxu0 0
      %1493 = vmatpush1.bf16.msra.mxu0 0
      %1494 = vmatprep.subr.bf16.mxu0 0
      %1495 = vmatpush1.bf16.msra.mxu0 0
      %1496 = vmatprep.subr.bf16.mxu0 0
      %1497 = vmatpush1.bf16.msra.mxu0 0
      %1498 = vmatprep.subr.bf16.mxu0 0
      %1499 = vmatpush1.bf16.msra.mxu0 0
      %1500 = vmatprep.subr.bf16.mxu0 0
      %1501 = vmatpush1.bf16.msra.mxu0 0
      %1502 = vmatprep.subr.bf16.mxu0 0
      %1503 = vmatpush1.bf16.msra.mxu0 0
      %1504 = vmatprep.subr.bf16.mxu0 0
      %1505 = vmatpush1.bf16.msra.mxu0 0
      %1506 = vmatprep.subr.bf16.mxu0 0
      %1507 = vmatpush1.bf16.msra.mxu0 0
      %1508 = vmatprep.subr.bf16.mxu0 0
      %1509 = vmatpush1.bf16.msra.mxu0 0
      %1510 = vmatprep.subr.bf16.mxu0 0
      %1511 = vmatpush1.bf16.msra.mxu0 0
      %1512 = vmatprep.mubr.bf16.mxu0 0
      %1513 = vmatmul.mubr.bf16.gmra.mrb[0].mxu0 %v1475
      %v1514 = vpop.f32.mrb[0].mxu0
      %v1515 = vadd.f32 %v1450, %v1514
      %v1516 = vpop.f32.mrb[0].mxu0
      %v1517 = vadd.f32 %v1450, %v1516
      %v1518 = vpop.f32.mrb[0].mxu0
      %v1519 = vadd.f32 %v1454, %v1518
      %v1520 = vpop.f32.mrb[0].mxu0
      %v1521 = vadd.f32 %v1454, %v1520
      %1522 = vmatprep.mubr.bf16.mxu0 0
      %1523 = vmatmul.mubr.bf16.gmra.mrb[0].mxu0 %v1478
      %v1524 = vpop.f32.mrb[0].mxu0
      %v1525 = vadd.f32 %v1458, %v1524
      %v1526 = vpop.f32.mrb[0].mxu0
      %v1527 = vadd.f32 %v1458, %v1526
      %v1528 = vpop.f32.mrb[0].mxu0
      %v1529 = vadd.f32 %v1462, %v1528
      %v1530 = vpop.f32.mrb[0].mxu0
      %v1531 = vadd.f32 %v1462, %v1530
      %1532 = vdwg.mxu0
      %v1533 = vmul.f32 %v1515, 0.5
      %v1534 = vmul.f32 %v1517, 0.5
      %v1535 = vmul.f32 %v1519, 0.5
      %v1536 = vmul.f32 %v1521, 0.5
      %v1537 = vmul.f32 %v1525, 0.5
      %v1538 = vmul.f32 %v1527, 0.5
      %v1539 = vmul.f32 %v1529, 0.5
      %v1540 = vmul.f32 %v1531, 0.5
      %v1541 = vmul.f32 %v1515, %v1515
      %v1542 = vmul.f32 %v1517, %v1517
      %v1543 = vmul.f32 %v1519, %v1519
      %v1544 = vmul.f32 %v1521, %v1521
      %v1545 = vmul.f32 %v1525, %v1525
      %v1546 = vmul.f32 %v1527, %v1527
      %v1547 = vmul.f32 %v1529, %v1529
      %v1548 = vmul.f32 %v1531, %v1531
      %v1549 = vmul.f32 %v1541, %v1515
      %v1550 = vmul.f32 %v1542, %v1517
      %v1551 = vmul.f32 %v1543, %v1519
      %v1552 = vmul.f32 %v1544, %v1521
      %v1553 = vmul.f32 %v1545, %v1525
      %v1554 = vmul.f32 %v1546, %v1527
      %v1555 = vmul.f32 %v1547, %v1529
      %v1556 = vmul.f32 %v1548, %v1531
      %v1557 = vmul.f32 %v1549, 0.044715
      %v1558 = vmul.f32 %v1550, 0.044715
      %v1559 = vmul.f32 %v1551, 0.044715
      %v1560 = vmul.f32 %v1552, 0.044715
      %v1561 = vmul.f32 %v1553, 0.044715
      %v1562 = vmul.f32 %v1554, 0.044715
      %v1563 = vmul.f32 %v1555, 0.044715
      %v1564 = vmul.f32 %v1556, 0.044715
      %v1565 = vadd.f32 %v1515, %v1557
      %v1566 = vadd.f32 %v1517, %v1558
      %v1567 = vadd.f32 %v1519, %v1559
      %v1568 = vadd.f32 %v1521, %v1560
      %v1569 = vadd.f32 %v1525, %v1561
      %v1570 = vadd.f32 %v1527, %v1562
      %v1571 = vadd.f32 %v1529, %v1563
      %v1572 = vadd.f32 %v1531, %v1564
      %v1573 = vmul.f32 %v1565, 0.7978846
      %v1574 = vmul.f32 %v1566, 0.7978846
      %v1575 = vmul.f32 %v1567, 0.7978846
      %v1576 = vmul.f32 %v1568, 0.7978846
      %v1577 = vmul.f32 %v1569, 0.7978846
      %v1578 = vmul.f32 %v1570, 0.7978846
      %v1579 = vmul.f32 %v1571, 0.7978846
      %v1580 = vmul.f32 %v1572, 0.7978846
      %v1581 = vtanh.pop %v1573
      %v1582 = vtanh.pop %v1574
      %v1583 = vtanh.pop %v1575
      %v1584 = vtanh.pop %v1576
      %v1585 = vtanh.pop %v1577
      %v1586 = vtanh.pop %v1578
      %v1587 = vtanh.pop %v1579
      %v1588 = vtanh.pop %v1580
      %v1589 = vadd.f32 %v1581, 1.0
      %v1590 = vadd.f32 %v1582, 1.0
      %v1591 = vadd.f32 %v1583, 1.0
      %v1592 = vadd.f32 %v1584, 1.0
      %v1593 = vadd.f32 %v1585, 1.0
      %v1594 = vadd.f32 %v1586, 1.0
      %v1595 = vadd.f32 %v1587, 1.0
      %v1596 = vadd.f32 %v1588, 1.0
      %v1597 = vmul.f32 %v1533, %v1589
      %v1598 = vmul.f32 %v1534, %v1590
      %v1599 = vmul.f32 %v1535, %v1591
      %v1600 = vmul.f32 %v1536, %v1592
      %v1601 = vmul.f32 %v1537, %v1593
      %v1602 = vmul.f32 %v1538, %v1594
      %v1603 = vmul.f32 %v1539, %v1595
      %v1604 = vmul.f32 %v1540, %v1596
      %v1605 = vld [vmem:[%s5] sm:$0xf]
      %v1606 = vld [vmem:[%s5 + $0x4] sm:$0xf]
      %v1607 = vld [vmem:[%s5 + $0x8] sm:$0xf]
      %v1608 = vld [vmem:[%s5 + $0xc] sm:$0xf]
      %v1609 = vpack.c.bf16 %v1434, %v1432
      %v1610 = vpack.c.bf16 %v1435, %v1433
      %v1611 = vpack.c.bf16 %v1438, %v1436
      %v1612 = vpack.c.bf16 %v1439, %v1437
      %1613 = vset.pattern.permute.xlu0 6
      %1614 = vperm.xlu0 %1613, %v396
      %v1615 = vpop.permute.xlu0 %1614
      %1617 = vset.pattern.permute.xlu0 6
      %1618 = vperm.xlu0 %1617, %v397
      %v1619 = vpop.permute.xlu0 %1618
      %1621 = vset.pattern.permute.xlu0 6
      %1622 = vperm.xlu0 %1621, %v398
      %v1623 = vpop.permute.xlu0 %1622
      %1625 = vset.pattern.permute.xlu0 6
      %1626 = vperm.xlu0 %1625, %v399
      %v1627 = vpop.permute.xlu0 %1626
      %v1633 = vunpack.c.l.b16 %v1605
      %v1634 = vunpack.c.l.b16 %v1606
      %v1635 = vunpack.c.l.b16 %v1607
      %v1636 = vunpack.c.l.b16 %v1608
      %v1637 = vpack.c.b16 %v1634, %v1633
      %v1638 = vpack.c.b16 %v1636, %v1635
      %v1640 = vsel %vm556, %v1637, 0
      %v1643 = vsel %vm556, %v1638, 0
      %1645 = vmatprep.subr.bf16.mxu0 %v1610
      %1646 = vmatpush1.bf16.msra.mxu0 %v1609
      %1647 = vmatprep.subr.bf16.mxu0 %v1612
      %1648 = vmatpush1.bf16.msra.mxu0 %v1611
      %1649 = vmatprep.subr.bf16.mxu0 0
      %1650 = vmatpush1.bf16.msra.mxu0 0
      %1651 = vmatprep.subr.bf16.mxu0 0
      %1652 = vmatpush1.bf16.msra.mxu0 0
      %1653 = vmatprep.subr.bf16.mxu0 0
      %1654 = vmatpush1.bf16.msra.mxu0 0
      %1655 = vmatprep.subr.bf16.mxu0 0
      %1656 = vmatpush1.bf16.msra.mxu0 0
      %1657 = vmatprep.subr.bf16.mxu0 0
      %1658 = vmatpush1.bf16.msra.mxu0 0
      %1659 = vmatprep.subr.bf16.mxu0 0
      %1660 = vmatpush1.bf16.msra.mxu0 0
      %1661 = vmatprep.subr.bf16.mxu0 0
      %1662 = vmatpush1.bf16.msra.mxu0 0
      %1663 = vmatprep.subr.bf16.mxu0 0
      %1664 = vmatpush1.bf16.msra.mxu0 0
      %1665 = vmatprep.subr.bf16.mxu0 0
      %1666 = vmatpush1.bf16.msra.mxu0 0
      %1667 = vmatprep.subr.bf16.mxu0 0
      %1668 = vmatpush1.bf16.msra.mxu0 0
      %1669 = vmatprep.subr.bf16.mxu0 0
      %1670 = vmatpush1.bf16.msra.mxu0 0
      %1671 = vmatprep.subr.bf16.mxu0 0
      %1672 = vmatpush1.bf16.msra.mxu0 0
      %1673 = vmatprep.subr.bf16.mxu0 0
      %1674 = vmatpush1.bf16.msra.mxu0 0
      %1675 = vmatprep.subr.bf16.mxu0 0
      %1676 = vmatpush1.bf16.msra.mxu0 0
      %1677 = vmatprep.mubr.bf16.mxu0 0
      %1678 = vmatmul.mubr.bf16.gmra.mrb[0].mxu0 %v1640
      %v1679 = vpop.f32.mrb[0].mxu0
      %v1680 = vadd.f32 %v1615, %v1679
      %v1681 = vpop.f32.mrb[0].mxu0
      %v1682 = vadd.f32 %v1615, %v1681
      %v1683 = vpop.f32.mrb[0].mxu0
      %v1684 = vadd.f32 %v1619, %v1683
      %v1685 = vpop.f32.mrb[0].mxu0
      %v1686 = vadd.f32 %v1619, %v1685
      %1687 = vmatprep.mubr.bf16.mxu0 0
      %1688 = vmatmul.mubr.bf16.gmra.mrb[0].mxu0 %v1643
      %v1689 = vpop.f32.mrb[0].mxu0
      %v1690 = vadd.f32 %v1623, %v1689
      %v1691 = vpop.f32.mrb[0].mxu0
      %v1692 = vadd.f32 %v1623, %v1691
      %v1693 = vpop.f32.mrb[0].mxu0
      %v1694 = vadd.f32 %v1627, %v1693
      %v1695 = vpop.f32.mrb[0].mxu0
      %v1696 = vadd.f32 %v1627, %v1695
      %1697 = vdwg.mxu0
      %v1698 = vmul.f32 %v1680, 0.5
      %v1699 = vmul.f32 %v1682, 0.5
      %v1700 = vmul.f32 %v1684, 0.5
      %v1701 = vmul.f32 %v1686, 0.5
      %v1702 = vmul.f32 %v1690, 0.5
      %v1703 = vmul.f32 %v1692, 0.5
      %v1704 = vmul.f32 %v1694, 0.5
      %v1705 = vmul.f32 %v1696, 0.5
      %v1706 = vmul.f32 %v1680, %v1680
      %v1707 = vmul.f32 %v1682, %v1682
      %v1708 = vmul.f32 %v1684, %v1684
      %v1709 = vmul.f32 %v1686, %v1686
      %v1710 = vmul.f32 %v1690, %v1690
      %v1711 = vmul.f32 %v1692, %v1692
      %v1712 = vmul.f32 %v1694, %v1694
      %v1713 = vmul.f32 %v1696, %v1696
      %v1714 = vmul.f32 %v1706, %v1680
      %v1715 = vmul.f32 %v1707, %v1682
      %v1716 = vmul.f32 %v1708, %v1684
      %v1717 = vmul.f32 %v1709, %v1686
      %v1718 = vmul.f32 %v1710, %v1690
      %v1719 = vmul.f32 %v1711, %v1692
      %v1720 = vmul.f32 %v1712, %v1694
      %v1721 = vmul.f32 %v1713, %v1696
      %v1722 = vmul.f32 %v1714, 0.044715
      %v1723 = vmul.f32 %v1715, 0.044715
      %v1724 = vmul.f32 %v1716, 0.044715
      %v1725 = vmul.f32 %v1717, 0.044715
      %v1726 = vmul.f32 %v1718, 0.044715
      %v1727 = vmul.f32 %v1719, 0.044715
      %v1728 = vmul.f32 %v1720, 0.044715
      %v1729 = vmul.f32 %v1721, 0.044715
      %v1730 = vadd.f32 %v1680, %v1722
      %v1731 = vadd.f32 %v1682, %v1723
      %v1732 = vadd.f32 %v1684, %v1724
      %v1733 = vadd.f32 %v1686, %v1725
      %v1734 = vadd.f32 %v1690, %v1726
      %v1735 = vadd.f32 %v1692, %v1727
      %v1736 = vadd.f32 %v1694, %v1728
      %v1737 = vadd.f32 %v1696, %v1729
      %v1738 = vmul.f32 %v1730, 0.7978846
      %v1739 = vmul.f32 %v1731, 0.7978846
      %v1740 = vmul.f32 %v1732, 0.7978846
      %v1741 = vmul.f32 %v1733, 0.7978846
      %v1742 = vmul.f32 %v1734, 0.7978846
      %v1743 = vmul.f32 %v1735, 0.7978846
      %v1744 = vmul.f32 %v1736, 0.7978846
      %v1745 = vmul.f32 %v1737, 0.7978846
      %v1746 = vtanh.pop %v1738
      %v1747 = vtanh.pop %v1739
      %v1748 = vtanh.pop %v1740
      %v1749 = vtanh.pop %v1741
      %v1750 = vtanh.pop %v1742
      %v1751 = vtanh.pop %v1743
      %v1752 = vtanh.pop %v1744
      %v1753 = vtanh.pop %v1745
      %v1754 = vadd.f32 %v1746, 1.0
      %v1755 = vadd.f32 %v1747, 1.0
      %v1756 = vadd.f32 %v1748, 1.0
      %v1757 = vadd.f32 %v1749, 1.0
      %v1758 = vadd.f32 %v1750, 1.0
      %v1759 = vadd.f32 %v1751, 1.0
      %v1760 = vadd.f32 %v1752, 1.0
      %v1761 = vadd.f32 %v1753, 1.0
      %v1762 = vmul.f32 %v1698, %v1754
      %v1763 = vmul.f32 %v1699, %v1755
      %v1764 = vmul.f32 %v1700, %v1756
      %v1765 = vmul.f32 %v1701, %v1757
      %v1766 = vmul.f32 %v1702, %v1758
      %v1767 = vmul.f32 %v1703, %v1759
      %v1768 = vmul.f32 %v1704, %v1760
      %v1769 = vmul.f32 %v1705, %v1761
      %v1770 = vadd.f32 %v1597, %v1762
      %v1771 = vadd.f32 %v1598, %v1763
      %v1772 = vadd.f32 %v1599, %v1764
      %v1773 = vadd.f32 %v1600, %v1765
      %v1774 = vadd.f32 %v1601, %v1766
      %v1775 = vadd.f32 %v1602, %v1767
      %v1776 = vadd.f32 %v1603, %v1768
      %v1777 = vadd.f32 %v1604, %v1769
      %v1778 = vadd.f32 %v1770, %v1771
      %1779 = vadd.xlane.f32.xlu0 %v1778
      %v1780 = vpop.xlane.xlu0 %1779
      %v1781 = vadd.f32 %v1772, %v1773
      %1782 = vadd.xlane.f32.xlu0 %v1781
      %v1783 = vpop.xlane.xlu0 %1782
      %v1784 = vadd.f32 %v1774, %v1775
      %1785 = vadd.xlane.f32.xlu0 %v1784
      %v1786 = vpop.xlane.xlu0 %1785
      %v1787 = vadd.f32 %v1776, %v1777
      %1788 = vadd.xlane.f32.xlu0 %v1787
      %v1789 = vpop.xlane.xlu0 %1788
      %v1790 = vadd.f32 %v1780, %v1783
      %v1791 = vadd.f32 %v1790, %v1786
      %v1792 = vadd.f32 %v1791, %v1789
      %v1793 = vrot.slane %v1792, 4
      %v1794 = vadd.f32 %v1792, %v1793
      %v1795 = vrot.slane %v1794, 2
      %v1796 = vadd.f32 %v1794, %v1795
      %v1797 = vrot.slane %v1796, 1
      %v1798 = vadd.f32 %v1796, %v1797
      %v1799 = vmul.f32 %v1798, 0.00012207031
      %v1800 = vsub.f32 %v1770, %v1799
      %v1801 = vsub.f32 %v1771, %v1799
      %v1802 = vsub.f32 %v1772, %v1799
      %v1803 = vsub.f32 %v1773, %v1799
      %v1804 = vsub.f32 %v1774, %v1799
      %v1805 = vsub.f32 %v1775, %v1799
      %v1806 = vsub.f32 %v1776, %v1799
      %v1807 = vsub.f32 %v1777, %v1799
      %v1808 = vmul.f32 %v1800, %v1800
      %v1809 = vmul.f32 %v1801, %v1801
      %v1810 = vmul.f32 %v1802, %v1802
      %v1811 = vmul.f32 %v1803, %v1803
      %v1812 = vmul.f32 %v1804, %v1804
      %v1813 = vmul.f32 %v1805, %v1805
      %v1814 = vmul.f32 %v1806, %v1806
      %v1815 = vmul.f32 %v1807, %v1807
      %v1816 = vadd.f32 %v1808, %v1809
      %1817 = vadd.xlane.f32.xlu0 %v1816
      %v1818 = vpop.xlane.xlu0 %1817
      %v1819 = vadd.f32 %v1810, %v1811
      %1820 = vadd.xlane.f32.xlu0 %v1819
      %v1821 = vpop.xlane.xlu0 %1820
      %v1822 = vadd.f32 %v1812, %v1813
      %1823 = vadd.xlane.f32.xlu0 %v1822
      %v1824 = vpop.xlane.xlu0 %1823
      %v1825 = vadd.f32 %v1814, %v1815
      %1826 = vadd.xlane.f32.xlu0 %v1825
      %v1827 = vpop.xlane.xlu0 %1826
      %v1828 = vadd.f32 %v1818, %v1821
      %v1829 = vadd.f32 %v1828, %v1824
      %v1830 = vadd.f32 %v1829, %v1827
      %v1831 = vrot.slane %v1830, 4
      %v1832 = vadd.f32 %v1830, %v1831
      %v1833 = vrot.slane %v1832, 2
      %v1834 = vadd.f32 %v1832, %v1833
      %v1835 = vrot.slane %v1834, 1
      %v1836 = vadd.f32 %v1834, %v1835
      %v1837 = vmul.f32 %v1836, 0.00012207031
      %v1838 = vadd.f32 %v1837, 1e-05
      %v1839 = vrsqrt.pop %v1838
      %v1840 = vmul.f32 %v1800, %v1839
      %v1841 = vmul.f32 %v1801, %v1839
      %v1842 = vmul.f32 %v1802, %v1839
      %v1843 = vmul.f32 %v1803, %v1839
      %v1844 = vmul.f32 %v1804, %v1839
      %v1845 = vmul.f32 %v1805, %v1839
      %v1846 = vmul.f32 %v1806, %v1839
      %v1847 = vmul.f32 %v1807, %v1839
      %1848 = vset.pattern.permute.xlu0 7
      %1849 = vperm.xlu0 %1848, %v396
      %v1850 = vpop.permute.xlu0 %1849
      %1852 = vset.pattern.permute.xlu0 7
      %1853 = vperm.xlu0 %1852, %v397
      %v1854 = vpop.permute.xlu0 %1853
      %1856 = vset.pattern.permute.xlu0 7
      %1857 = vperm.xlu0 %1856, %v398
      %v1858 = vpop.permute.xlu0 %1857
      %1860 = vset.pattern.permute.xlu0 7
      %1861 = vperm.xlu0 %1860, %v399
      %v1862 = vpop.permute.xlu0 %1861
      %v1864 = vmul.f32 %v1840, %v1850
      %v1865 = vmul.f32 %v1841, %v1850
      %v1866 = vmul.f32 %v1842, %v1854
      %v1867 = vmul.f32 %v1843, %v1854
      %v1868 = vmul.f32 %v1844, %v1858
      %v1869 = vmul.f32 %v1845, %v1858
      %v1870 = vmul.f32 %v1846, %v1862
      %v1871 = vmul.f32 %v1847, %v1862
      %1872 = vset.pattern.permute.xlu0 8
      %1873 = vperm.xlu0 %1872, %v396
      %v1874 = vpop.permute.xlu0 %1873
      %1876 = vset.pattern.permute.xlu0 8
      %1877 = vperm.xlu0 %1876, %v397
      %v1878 = vpop.permute.xlu0 %1877
      %1880 = vset.pattern.permute.xlu0 8
      %1881 = vperm.xlu0 %1880, %v398
      %v1882 = vpop.permute.xlu0 %1881
      %1884 = vset.pattern.permute.xlu0 8
      %1885 = vperm.xlu0 %1884, %v399
      %v1886 = vpop.permute.xlu0 %1885
      %v1888 = vadd.f32 %v1864, %v1874
      %v1889 = vadd.f32 %v1865, %v1874
      %v1890 = vadd.f32 %v1866, %v1878
      %v1891 = vadd.f32 %v1867, %v1878
      %v1892 = vadd.f32 %v1868, %v1882
      %v1893 = vadd.f32 %v1869, %v1882
      %v1894 = vadd.f32 %v1870, %v1886
      %v1895 = vadd.f32 %v1871, %v1886
      %v1896 = vld [vmem:[%s6] sm:$0xf]
      %v1897 = vld [vmem:[%s6 + $0x4] sm:$0xf]
      %v1898 = vld [vmem:[%s6 + $0x8] sm:$0xf]
      %v1899 = vld [vmem:[%s6 + $0xc] sm:$0xf]
      %v1900 = vpack.c.bf16 %v1890, %v1888
      %v1901 = vpack.c.bf16 %v1891, %v1889
      %v1902 = vpack.c.bf16 %v1894, %v1892
      %v1903 = vpack.c.bf16 %v1895, %v1893
      %1904 = vset.pattern.permute.xlu0 9
      %1905 = vperm.xlu0 %1904, %v396
      %v1906 = vpop.permute.xlu0 %1905
      %1908 = vset.pattern.permute.xlu0 9
      %1909 = vperm.xlu0 %1908, %v397
      %v1910 = vpop.permute.xlu0 %1909
      %1912 = vset.pattern.permute.xlu0 9
      %1913 = vperm.xlu0 %1912, %v398
      %v1914 = vpop.permute.xlu0 %1913
      %1916 = vset.pattern.permute.xlu0 9
      %1917 = vperm.xlu0 %1916, %v399
      %v1918 = vpop.permute.xlu0 %1917
      %v1924 = vunpack.c.l.b16 %v1896
      %v1925 = vunpack.c.l.b16 %v1897
      %v1926 = vunpack.c.l.b16 %v1898
      %v1927 = vunpack.c.l.b16 %v1899
      %v1928 = vpack.c.b16 %v1925, %v1924
      %v1929 = vpack.c.b16 %v1927, %v1926
      %v1931 = vsel %vm556, %v1928, 0
      %v1934 = vsel %vm556, %v1929, 0
      %1936 = vmatprep.subr.bf16.mxu0 %v1901
      %1937 = vmatpush1.bf16.msra.mxu0 %v1900
      %1938 = vmatprep.subr.bf16.mxu0 %v1903
      %1939 = vmatpush1.bf16.msra.mxu0 %v1902
      %1940 = vmatprep.subr.bf16.mxu0 0
      %1941 = vmatpush1.bf16.msra.mxu0 0
      %1942 = vmatprep.subr.bf16.mxu0 0
      %1943 = vmatpush1.bf16.msra.mxu0 0
      %1944 = vmatprep.subr.bf16.mxu0 0
      %1945 = vmatpush1.bf16.msra.mxu0 0
      %1946 = vmatprep.subr.bf16.mxu0 0
      %1947 = vmatpush1.bf16.msra.mxu0 0
      %1948 = vmatprep.subr.bf16.mxu0 0
      %1949 = vmatpush1.bf16.msra.mxu0 0
      %1950 = vmatprep.subr.bf16.mxu0 0
      %1951 = vmatpush1.bf16.msra.mxu0 0
      %1952 = vmatprep.subr.bf16.mxu0 0
      %1953 = vmatpush1.bf16.msra.mxu0 0
      %1954 = vmatprep.subr.bf16.mxu0 0
      %1955 = vmatpush1.bf16.msra.mxu0 0
      %1956 = vmatprep.subr.bf16.mxu0 0
      %1957 = vmatpush1.bf16.msra.mxu0 0
      %1958 = vmatprep.subr.bf16.mxu0 0
      %1959 = vmatpush1.bf16.msra.mxu0 0
      %1960 = vmatprep.subr.bf16.mxu0 0
      %1961 = vmatpush1.bf16.msra.mxu0 0
      %1962 = vmatprep.subr.bf16.mxu0 0
      %1963 = vmatpush1.bf16.msra.mxu0 0
      %1964 = vmatprep.subr.bf16.mxu0 0
      %1965 = vmatpush1.bf16.msra.mxu0 0
      %1966 = vmatprep.subr.bf16.mxu0 0
      %1967 = vmatpush1.bf16.msra.mxu0 0
      %1968 = vmatprep.mubr.bf16.mxu0 0
      %1969 = vmatmul.mubr.bf16.gmra.mrb[0].mxu0 %v1931
      %v1970 = vpop.f32.mrb[0].mxu0
      %v1971 = vadd.f32 %v1906, %v1970
      %v1972 = vpop.f32.mrb[0].mxu0
      %v1973 = vadd.f32 %v1906, %v1972
      %v1974 = vpop.f32.mrb[0].mxu0
      %v1975 = vadd.f32 %v1910, %v1974
      %v1976 = vpop.f32.mrb[0].mxu0
      %v1977 = vadd.f32 %v1910, %v1976
      %1978 = vmatprep.mubr.bf16.mxu0 0
      %1979 = vmatmul.mubr.bf16.gmra.mrb[0].mxu0 %v1934
      %v1980 = vpop.f32.mrb[0].mxu0
      %v1981 = vadd.f32 %v1914, %v1980
      %v1982 = vpop.f32.mrb[0].mxu0
      %v1983 = vadd.f32 %v1914, %v1982
      %v1984 = vpop.f32.mrb[0].mxu0
      %v1985 = vadd.f32 %v1918, %v1984
      %v1986 = vpop.f32.mrb[0].mxu0
      %v1987 = vadd.f32 %v1918, %v1986
      %1988 = vdwg.mxu0
      %v1989 = vadd.f32 %v388, %v1971
      %v1990 = vadd.f32 %v389, %v1973
      %v1991 = vadd.f32 %v390, %v1975
      %v1992 = vadd.f32 %v391, %v1977
      %v1993 = vadd.f32 %v392, %v1981
      %v1994 = vadd.f32 %v393, %v1983
      %v1995 = vadd.f32 %v394, %v1985
      %v1996 = vadd.f32 %v395, %v1987
      %v1997 = vadd.f32 %v1989, %v1990
      %1998 = vadd.xlane.f32.xlu0 %v1997
      %v1999 = vpop.xlane.xlu0 %1998
      %v2000 = vadd.f32 %v1991, %v1992
      %2001 = vadd.xlane.f32.xlu0 %v2000
      %v2002 = vpop.xlane.xlu0 %2001
      %v2003 = vadd.f32 %v1993, %v1994
      %2004 = vadd.xlane.f32.xlu0 %v2003
      %v2005 = vpop.xlane.xlu0 %2004
      %v2006 = vadd.f32 %v1995, %v1996
      %2007 = vadd.xlane.f32.xlu0 %v2006
      %v2008 = vpop.xlane.xlu0 %2007
      %v2009 = vadd.f32 %v1999, %v2002
      %v2010 = vadd.f32 %v2009, %v2005
      %v2011 = vadd.f32 %v2010, %v2008
      %v2012 = vrot.slane %v2011, 4
      %v2013 = vadd.f32 %v2011, %v2012
      %v2014 = vrot.slane %v2013, 2
      %v2015 = vadd.f32 %v2013, %v2014
      %v2016 = vrot.slane %v2015, 1
      %v2017 = vadd.f32 %v2015, %v2016
      %v2018 = vmul.f32 %v2017, 0.00012207031
      %v2019 = vsub.f32 %v1989, %v2018
      %v2020 = vsub.f32 %v1990, %v2018
      %v2021 = vsub.f32 %v1991, %v2018
      %v2022 = vsub.f32 %v1992, %v2018
      %v2023 = vsub.f32 %v1993, %v2018
      %v2024 = vsub.f32 %v1994, %v2018
      %v2025 = vsub.f32 %v1995, %v2018
      %v2026 = vsub.f32 %v1996, %v2018
      %v2027 = vmul.f32 %v2019, %v2019
      %v2028 = vmul.f32 %v2020, %v2020
      %v2029 = vmul.f32 %v2021, %v2021
      %v2030 = vmul.f32 %v2022, %v2022
      %v2031 = vmul.f32 %v2023, %v2023
      %v2032 = vmul.f32 %v2024, %v2024
      %v2033 = vmul.f32 %v2025, %v2025
      %v2034 = vmul.f32 %v2026, %v2026
      %v2035 = vadd.f32 %v2027, %v2028
      %2036 = vadd.xlane.f32.xlu0 %v2035
      %v2037 = vpop.xlane.xlu0 %2036
      %v2038 = vadd.f32 %v2029, %v2030
      %2039 = vadd.xlane.f32.xlu0 %v2038
      %v2040 = vpop.xlane.xlu0 %2039
      %v2041 = vadd.f32 %v2031, %v2032
      %2042 = vadd.xlane.f32.xlu0 %v2041
      %v2043 = vpop.xlane.xlu0 %2042
      %v2044 = vadd.f32 %v2033, %v2034
      %2045 = vadd.xlane.f32.xlu0 %v2044
      %v2046 = vpop.xlane.xlu0 %2045
      %v2047 = vadd.f32 %v2037, %v2040
      %v2048 = vadd.f32 %v2047, %v2043
      %v2049 = vadd.f32 %v2048, %v2046
      %v2050 = vrot.slane %v2049, 4
      %v2051 = vadd.f32 %v2049, %v2050
      %v2052 = vrot.slane %v2051, 2
      %v2053 = vadd.f32 %v2051, %v2052
      %v2054 = vrot.slane %v2053, 1
      %v2055 = vadd.f32 %v2053, %v2054
      %v2056 = vmul.f32 %v2055, 0.00012207031
      %v2057 = vadd.f32 %v2056, 1e-05
      %v2058 = vrsqrt.pop %v2057
      %v2059 = vmul.f32 %v2019, %v2058
      %v2060 = vmul.f32 %v2020, %v2058
      %v2061 = vmul.f32 %v2021, %v2058
      %v2062 = vmul.f32 %v2022, %v2058
      %v2063 = vmul.f32 %v2023, %v2058
      %v2064 = vmul.f32 %v2024, %v2058
      %v2065 = vmul.f32 %v2025, %v2058
      %v2066 = vmul.f32 %v2026, %v2058
      %2067 = vset.pattern.permute.xlu0 10
      %2068 = vperm.xlu0 %2067, %v396
      %v2069 = vpop.permute.xlu0 %2068
      %2071 = vset.pattern.permute.xlu0 10
      %2072 = vperm.xlu0 %2071, %v397
      %v2073 = vpop.permute.xlu0 %2072
      %2075 = vset.pattern.permute.xlu0 10
      %2076 = vperm.xlu0 %2075, %v398
      %v2077 = vpop.permute.xlu0 %2076
      %2079 = vset.pattern.permute.xlu0 10
      %2080 = vperm.xlu0 %2079, %v399
      %v2081 = vpop.permute.xlu0 %2080
      %v2083 = vmul.f32 %v2059, %v2069
      %v2084 = vmul.f32 %v2060, %v2069
      %v2085 = vmul.f32 %v2061, %v2073
      %v2086 = vmul.f32 %v2062, %v2073
      %v2087 = vmul.f32 %v2063, %v2077
      %v2088 = vmul.f32 %v2064, %v2077
      %v2089 = vmul.f32 %v2065, %v2081
      %v2090 = vmul.f32 %v2066, %v2081
      %2091 = vset.pattern.permute.xlu0 11
      %2092 = vperm.xlu0 %2091, %v396
      %v2093 = vpop.permute.xlu0 %2092
      %2095 = vset.pattern.permute.xlu0 11
      %2096 = vperm.xlu0 %2095, %v397
      %v2097 = vpop.permute.xlu0 %2096
      %2099 = vset.pattern.permute.xlu0 11
      %2100 = vperm.xlu0 %2099, %v398
      %v2101 = vpop.permute.xlu0 %2100
      %2103 = vset.pattern.permute.xlu0 11
      %2104 = vperm.xlu0 %2103, %v399
      %v2105 = vpop.permute.xlu0 %2104
      %v2107 = vadd.f32 %v2083, %v2093
      %v2108 = vadd.f32 %v2084, %v2093
      %v2109 = vadd.f32 %v2085, %v2097
      %v2110 = vadd.f32 %v2086, %v2097
      %v2111 = vadd.f32 %v2087, %v2101
      %v2112 = vadd.f32 %v2088, %v2101
      %v2113 = vadd.f32 %v2089, %v2105
      %v2114 = vadd.f32 %v2090, %v2105
      %v2115 = vld [vmem:[%s2] sm:$0xff]
      %v2116 = vld [vmem:[%s2 + $0x8] sm:$0xff]
      %v2117 = vld [vmem:[%s2 + $0x10] sm:$0xff]
      %v2118 = vld [vmem:[%s2 + $0x18] sm:$0xff]
      %v2119 = vld [vmem:[%s2 + $0x20] sm:$0xff]
      %v2120 = vld [vmem:[%s2 + $0x28] sm:$0xff]
      %v2121 = vld [vmem:[%s2 + $0x30] sm:$0xff]
      %v2122 = vld [vmem:[%s2 + $0x38] sm:$0xff]
      %v2123 = vld [vmem:[%s2 + $0x40] sm:$0xff]
      %v2124 = vld [vmem:[%s2 + $0x48] sm:$0xff]
      %v2125 = vld [vmem:[%s2 + $0x50] sm:$0xff]
      %v2126 = vld [vmem:[%s2 + $0x58] sm:$0xff]
      %v2127 = vld [vmem:[%s2 + $0x60] sm:$0xff]
      %v2128 = vld [vmem:[%s2 + $0x68] sm:$0xff]
      %v2129 = vld [vmem:[%s2 + $0x70] sm:$0xff]
      %v2130 = vld [vmem:[%s2 + $0x78] sm:$0xff]
      %v2131 = vld [vmem:[%s7] sm:$0xf]
      %v2132 = vld [vmem:[%s7 + $0x4] sm:$0xf]
      %v2133 = vld [vmem:[%s7 + $0x8] sm:$0xf]
      %v2134 = vld [vmem:[%s7 + $0xc] sm:$0xf]
      %v2135 = vld [vmem:[%s7 + $0x10] sm:$0xf]
      %v2136 = vld [vmem:[%s7 + $0x14] sm:$0xf]
      %v2137 = vld [vmem:[%s7 + $0x18] sm:$0xf]
      %v2138 = vld [vmem:[%s7 + $0x1c] sm:$0xf]
      %v2139 = vld [vmem:[%s7 + $0x20] sm:$0xf]
      %v2140 = vld [vmem:[%s7 + $0x24] sm:$0xf]
      %v2141 = vld [vmem:[%s7 + $0x28] sm:$0xf]
      %v2142 = vld [vmem:[%s7 + $0x2c] sm:$0xf]
      %v2143 = vld [vmem:[%s7 + $0x30] sm:$0xf]
      %v2144 = vld [vmem:[%s7 + $0x34] sm:$0xf]
      %v2145 = vld [vmem:[%s7 + $0x38] sm:$0xf]
      %v2146 = vld [vmem:[%s7 + $0x3c] sm:$0xf]
      %v2147 = vpack.c.bf16 %v2109, %v2107
      %v2148 = vpack.c.bf16 %v2110, %v2108
      %v2149 = vpack.c.bf16 %v2113, %v2111
      %v2150 = vpack.c.bf16 %v2114, %v2112
      %2152 = vset.pattern.permute.xlu0 0
      %2153 = vperm.xlu0 %2152, %v2115
      %v2154 = vpop.permute.xlu0 %2153
      %2157 = vset.pattern.permute.xlu0 0
      %2158 = vperm.xlu0 %2157, %v2116
      %v2159 = vpop.permute.xlu0 %2158
      %2162 = vset.pattern.permute.xlu0 0
      %2163 = vperm.xlu0 %2162, %v2117
      %v2164 = vpop.permute.xlu0 %2163
      %2167 = vset.pattern.permute.xlu0 0
      %2168 = vperm.xlu0 %2167, %v2118
      %v2169 = vpop.permute.xlu0 %2168
      %2172 = vset.pattern.permute.xlu0 0
      %2173 = vperm.xlu0 %2172, %v2119
      %v2174 = vpop.permute.xlu0 %2173
      %2177 = vset.pattern.permute.xlu0 0
      %2178 = vperm.xlu0 %2177, %v2120
      %v2179 = vpop.permute.xlu0 %2178
      %2182 = vset.pattern.permute.xlu0 0
      %2183 = vperm.xlu0 %2182, %v2121
      %v2184 = vpop.permute.xlu0 %2183
      %2187 = vset.pattern.permute.xlu0 0
      %2188 = vperm.xlu0 %2187, %v2122
      %v2189 = vpop.permute.xlu0 %2188
      %2192 = vset.pattern.permute.xlu0 0
      %2193 = vperm.xlu0 %2192, %v2123
      %v2194 = vpop.permute.xlu0 %2193
      %2197 = vset.pattern.permute.xlu0 0
      %2198 = vperm.xlu0 %2197, %v2124
      %v2199 = vpop.permute.xlu0 %2198
      %2202 = vset.pattern.permute.xlu0 0
      %2203 = vperm.xlu0 %2202, %v2125
      %v2204 = vpop.permute.xlu0 %2203
      %2207 = vset.pattern.permute.xlu0 0
      %2208 = vperm.xlu0 %2207, %v2126
      %v2209 = vpop.permute.xlu0 %2208
      %2212 = vset.pattern.permute.xlu0 0
      %2213 = vperm.xlu0 %2212, %v2127
      %v2214 = vpop.permute.xlu0 %2213
      %2217 = vset.pattern.permute.xlu0 0
      %2218 = vperm.xlu0 %2217, %v2128
      %v2219 = vpop.permute.xlu0 %2218
      %2222 = vset.pattern.permute.xlu0 0
      %2223 = vperm.xlu0 %2222, %v2129
      %v2224 = vpop.permute.xlu0 %2223
      %2227 = vset.pattern.permute.xlu0 0
      %2228 = vperm.xlu0 %2227, %v2130
      %v2229 = vpop.permute.xlu0 %2228
      %v2247 = vunpack.c.l.b16 %v2131
      %v2248 = vunpack.c.l.b16 %v2132
      %v2249 = vunpack.c.l.b16 %v2133
      %v2250 = vunpack.c.l.b16 %v2134
      %v2251 = vunpack.c.l.b16 %v2135
      %v2252 = vunpack.c.l.b16 %v2136
      %v2253 = vunpack.c.l.b16 %v2137
      %v2254 = vunpack.c.l.b16 %v2138
      %v2255 = vunpack.c.l.b16 %v2139
      %v2256 = vunpack.c.l.b16 %v2140
      %v2257 = vunpack.c.l.b16 %v2141
      %v2258 = vunpack.c.l.b16 %v2142
      %v2259 = vunpack.c.l.b16 %v2143
      %v2260 = vunpack.c.l.b16 %v2144
      %v2261 = vunpack.c.l.b16 %v2145
      %v2262 = vunpack.c.l.b16 %v2146
      %v2263 = vpack.c.b16 %v2248, %v2247
      %v2264 = vpack.c.b16 %v2250, %v2249
      %v2265 = vpack.c.b16 %v2252, %v2251
      %v2266 = vpack.c.b16 %v2254, %v2253
      %v2267 = vpack.c.b16 %v2256, %v2255
      %v2268 = vpack.c.b16 %v2258, %v2257
      %v2269 = vpack.c.b16 %v2260, %v2259
      %v2270 = vpack.c.b16 %v2262, %v2261
      %v2272 = vsel %vm556, %v2263, 0
      %v2275 = vsel %vm556, %v2264, 0
      %v2278 = vsel %vm556, %v2265, 0
      %v2281 = vsel %vm556, %v2266, 0
      %v2284 = vsel %vm556, %v2267, 0
      %v2287 = vsel %vm556, %v2268, 0
      %v2290 = vsel %vm556, %v2269, 0
      %v2293 = vsel %vm556, %v2270, 0
      %2295 = vmatprep.subr.bf16.mxu0 %v2148
      %2296 = vmatpush1.bf16.msra.mxu0 %v2147
      %2297 = vmatprep.subr.bf16.mxu0 %v2150
      %2298 = vmatpush1.bf16.msra.mxu0 %v2149
      %2299 = vmatprep.subr.bf16.mxu0 0
      %2300 = vmatpush1.bf16.msra.mxu0 0
      %2301 = vmatprep.subr.bf16.mxu0 0
      %2302 = vmatpush1.bf16.msra.mxu0 0
      %2303 = vmatprep.subr.bf16.mxu0 0
      %2304 = vmatpush1.bf16.msra.mxu0 0
      %2305 = vmatprep.subr.bf16.mxu0 0
      %2306 = vmatpush1.bf16.msra.mxu0 0
      %2307 = vmatprep.subr.bf16.mxu0 0
      %2308 = vmatpush1.bf16.msra.mxu0 0
      %2309 = vmatprep.subr.bf16.mxu0 0
      %2310 = vmatpush1.bf16.msra.mxu0 0
      %2311 = vmatprep.subr.bf16.mxu0 0
      %2312 = vmatpush1.bf16.msra.mxu0 0
      %2313 = vmatprep.subr.bf16.mxu0 0
      %2314 = vmatpush1.bf16.msra.mxu0 0
      %2315 = vmatprep.subr.bf16.mxu0 0
      %2316 = vmatpush1.bf16.msra.mxu0 0
      %2317 = vmatprep.subr.bf16.mxu0 0
      %2318 = vmatpush1.bf16.msra.mxu0 0
      %2319 = vmatprep.subr.bf16.mxu0 0
      %2320 = vmatpush1.bf16.msra.mxu0 0
      %2321 = vmatprep.subr.bf16.mxu0 0
      %2322 = vmatpush1.bf16.msra.mxu0 0
      %2323 = vmatprep.subr.bf16.mxu0 0
      %2324 = vmatpush1.bf16.msra.mxu0 0
      %2325 = vmatprep.subr.bf16.mxu0 0
      %2326 = vmatpush1.bf16.msra.mxu0 0
      %2327 = vmatprep.mubr.bf16.mxu0 0
      %2328 = vmatmul.mubr.bf16.gmra.mrb[0].mxu0 %v2272
      %v2329 = vpop.f32.mrb[0].mxu0
      %v2330 = vadd.f32 %v2154, %v2329
      %v2331 = vpop.f32.mrb[0].mxu0
      %v2332 = vadd.f32 %v2154, %v2331
      %v2333 = vpop.f32.mrb[0].mxu0
      %v2334 = vadd.f32 %v2159, %v2333
      %v2335 = vpop.f32.mrb[0].mxu0
      %v2336 = vadd.f32 %v2159, %v2335
      %2337 = vmatprep.mubr.bf16.mxu0 0
      %2338 = vmatmul.mubr.bf16.gmra.mrb[0].mxu0 %v2275
      %v2339 = vpop.f32.mrb[0].mxu0
      %v2340 = vadd.f32 %v2164, %v2339
      %v2341 = vpop.f32.mrb[0].mxu0
      %v2342 = vadd.f32 %v2164, %v2341
      %v2343 = vpop.f32.mrb[0].mxu0
      %v2344 = vadd.f32 %v2169, %v2343
      %v2345 = vpop.f32.mrb[0].mxu0
      %v2346 = vadd.f32 %v2169, %v2345
      %2347 = vmatprep.mubr.bf16.mxu0 0
      %2348 = vmatmul.mubr.bf16.gmra.mrb[0].mxu0 %v2278
      %v2349 = vpop.f32.mrb[0].mxu0
      %v2350 = vadd.f32 %v2174, %v2349
      %v2351 = vpop.f32.mrb[0].mxu0
      %v2352 = vadd.f32 %v2174, %v2351
      %v2353 = vpop.f32.mrb[0].mxu0
      %v2354 = vadd.f32 %v2179, %v2353
      %v2355 = vpop.f32.mrb[0].mxu0
      %v2356 = vadd.f32 %v2179, %v2355
      %2357 = vmatprep.mubr.bf16.mxu0 0
      %2358 = vmatmul.mubr.bf16.gmra.mrb[0].mxu0 %v2281
      %v2359 = vpop.f32.mrb[0].mxu0
      %v2360 = vadd.f32 %v2184, %v2359
      %v2361 = vpop.f32.mrb[0].mxu0
      %v2362 = vadd.f32 %v2184, %v2361
      %v2363 = vpop.f32.mrb[0].mxu0
      %v2364 = vadd.f32 %v2189, %v2363
      %v2365 = vpop.f32.mrb[0].mxu0
      %v2366 = vadd.f32 %v2189, %v2365
      %2367 = vmatprep.mubr.bf16.mxu0 0
      %2368 = vmatmul.mubr.bf16.gmra.mrb[0].mxu0 %v2284
      %v2369 = vpop.f32.mrb[0].mxu0
      %v2370 = vadd.f32 %v2194, %v2369
      %v2371 = vpop.f32.mrb[0].mxu0
      %v2372 = vadd.f32 %v2194, %v2371
      %v2373 = vpop.f32.mrb[0].mxu0
      %v2374 = vadd.f32 %v2199, %v2373
      %v2375 = vpop.f32.mrb[0].mxu0
      %v2376 = vadd.f32 %v2199, %v2375
      %2377 = vmatprep.mubr.bf16.mxu0 0
      %2378 = vmatmul.mubr.bf16.gmra.mrb[0].mxu0 %v2287
      %v2379 = vpop.f32.mrb[0].mxu0
      %v2380 = vadd.f32 %v2204, %v2379
      %v2381 = vpop.f32.mrb[0].mxu0
      %v2382 = vadd.f32 %v2204, %v2381
      %v2383 = vpop.f32.mrb[0].mxu0
      %v2384 = vadd.f32 %v2209, %v2383
      %v2385 = vpop.f32.mrb[0].mxu0
      %v2386 = vadd.f32 %v2209, %v2385
      %2387 = vmatprep.mubr.bf16.mxu0 0
      %2388 = vmatmul.mubr.bf16.gmra.mrb[0].mxu0 %v2290
      %v2389 = vpop.f32.mrb[0].mxu0
      %v2390 = vadd.f32 %v2214, %v2389
      %v2391 = vpop.f32.mrb[0].mxu0
      %v2392 = vadd.f32 %v2214, %v2391
      %v2393 = vpop.f32.mrb[0].mxu0
      %v2394 = vadd.f32 %v2219, %v2393
      %v2395 = vpop.f32.mrb[0].mxu0
      %v2396 = vadd.f32 %v2219, %v2395
      %2397 = vmatprep.mubr.bf16.mxu0 0
      %2398 = vmatmul.mubr.bf16.gmra.mrb[0].mxu0 %v2293
      %v2399 = vpop.f32.mrb[0].mxu0
      %v2400 = vadd.f32 %v2224, %v2399
      %v2401 = vpop.f32.mrb[0].mxu0
      %v2402 = vadd.f32 %v2224, %v2401
      %v2403 = vpop.f32.mrb[0].mxu0
      %v2404 = vadd.f32 %v2229, %v2403
      %v2405 = vpop.f32.mrb[0].mxu0
      %v2406 = vadd.f32 %v2229, %v2405
      %2407 = vdwg.mxu0
      %v2408 = vmul.f32 %v2330, 0.5
      %v2409 = vmul.f32 %v2332, 0.5
      %v2410 = vmul.f32 %v2334, 0.5
      %v2411 = vmul.f32 %v2336, 0.5
      %v2412 = vmul.f32 %v2340, 0.5
      %v2413 = vmul.f32 %v2342, 0.5
      %v2414 = vmul.f32 %v2344, 0.5
      %v2415 = vmul.f32 %v2346, 0.5
      %v2416 = vmul.f32 %v2350, 0.5
      %v2417 = vmul.f32 %v2352, 0.5
      %v2418 = vmul.f32 %v2354, 0.5
      %v2419 = vmul.f32 %v2356, 0.5
      %v2420 = vmul.f32 %v2360, 0.5
      %v2421 = vmul.f32 %v2362, 0.5
      %v2422 = vmul.f32 %v2364, 0.5
      %v2423 = vmul.f32 %v2366, 0.5
      %v2424 = vmul.f32 %v2370, 0.5
      %v2425 = vmul.f32 %v2372, 0.5
      %v2426 = vmul.f32 %v2374, 0.5
      %v2427 = vmul.f32 %v2376, 0.5
      %v2428 = vmul.f32 %v2380, 0.5
      %v2429 = vmul.f32 %v2382, 0.5
      %v2430 = vmul.f32 %v2384, 0.5
      %v2431 = vmul.f32 %v2386, 0.5
      %v2432 = vmul.f32 %v2390, 0.5
      %v2433 = vmul.f32 %v2392, 0.5
      %v2434 = vmul.f32 %v2394, 0.5
      %v2435 = vmul.f32 %v2396, 0.5
      %v2436 = vmul.f32 %v2400, 0.5
      %v2437 = vmul.f32 %v2402, 0.5
      %v2438 = vmul.f32 %v2404, 0.5
      %v2439 = vmul.f32 %v2406, 0.5
      %v2440 = vmul.f32 %v2330, %v2330
      %v2441 = vmul.f32 %v2332, %v2332
      %v2442 = vmul.f32 %v2334, %v2334
      %v2443 = vmul.f32 %v2336, %v2336
      %v2444 = vmul.f32 %v2340, %v2340
      %v2445 = vmul.f32 %v2342, %v2342
      %v2446 = vmul.f32 %v2344, %v2344
      %v2447 = vmul.f32 %v2346, %v2346
      %v2448 = vmul.f32 %v2350, %v2350
      %v2449 = vmul.f32 %v2352, %v2352
      %v2450 = vmul.f32 %v2354, %v2354
      %v2451 = vmul.f32 %v2356, %v2356
      %v2452 = vmul.f32 %v2360, %v2360
      %v2453 = vmul.f32 %v2362, %v2362
      %v2454 = vmul.f32 %v2364, %v2364
      %v2455 = vmul.f32 %v2366, %v2366
      %v2456 = vmul.f32 %v2370, %v2370
      %v2457 = vmul.f32 %v2372, %v2372
      %v2458 = vmul.f32 %v2374, %v2374
      %v2459 = vmul.f32 %v2376, %v2376
      %v2460 = vmul.f32 %v2380, %v2380
      %v2461 = vmul.f32 %v2382, %v2382
      %v2462 = vmul.f32 %v2384, %v2384
      %v2463 = vmul.f32 %v2386, %v2386
      %v2464 = vmul.f32 %v2390, %v2390
      %v2465 = vmul.f32 %v2392, %v2392
      %v2466 = vmul.f32 %v2394, %v2394
      %v2467 = vmul.f32 %v2396, %v2396
      %v2468 = vmul.f32 %v2400, %v2400
      %v2469 = vmul.f32 %v2402, %v2402
      %v2470 = vmul.f32 %v2404, %v2404
      %v2471 = vmul.f32 %v2406, %v2406
      %v2472 = vmul.f32 %v2440, %v2330
      %v2473 = vmul.f32 %v2441, %v2332
      %v2474 = vmul.f32 %v2442, %v2334
      %v2475 = vmul.f32 %v2443, %v2336
      %v2476 = vmul.f32 %v2444, %v2340
      %v2477 = vmul.f32 %v2445, %v2342
      %v2478 = vmul.f32 %v2446, %v2344
      %v2479 = vmul.f32 %v2447, %v2346
      %v2480 = vmul.f32 %v2448, %v2350
      %v2481 = vmul.f32 %v2449, %v2352
      %v2482 = vmul.f32 %v2450, %v2354
      %v2483 = vmul.f32 %v2451, %v2356
      %v2484 = vmul.f32 %v2452, %v2360
      %v2485 = vmul.f32 %v2453, %v2362
      %v2486 = vmul.f32 %v2454, %v2364
      %v2487 = vmul.f32 %v2455, %v2366
      %v2488 = vmul.f32 %v2456, %v2370
      %v2489 = vmul.f32 %v2457, %v2372
      %v2490 = vmul.f32 %v2458, %v2374
      %v2491 = vmul.f32 %v2459, %v2376
      %v2492 = vmul.f32 %v2460, %v2380
      %v2493 = vmul.f32 %v2461, %v2382
      %v2494 = vmul.f32 %v2462, %v2384
      %v2495 = vmul.f32 %v2463, %v2386
      %v2496 = vmul.f32 %v2464, %v2390
      %v2497 = vmul.f32 %v2465, %v2392
      %v2498 = vmul.f32 %v2466, %v2394
      %v2499 = vmul.f32 %v2467, %v2396
      %v2500 = vmul.f32 %v2468, %v2400
      %v2501 = vmul.f32 %v2469, %v2402
      %v2502 = vmul.f32 %v2470, %v2404
      %v2503 = vmul.f32 %v2471, %v2406
      %v2504 = vmul.f32 %v2472, 0.044715
      %v2505 = vmul.f32 %v2473, 0.044715
      %v2506 = vmul.f32 %v2474, 0.044715
      %v2507 = vmul.f32 %v2475, 0.044715
      %v2508 = vmul.f32 %v2476, 0.044715
      %v2509 = vmul.f32 %v2477, 0.044715
      %v2510 = vmul.f32 %v2478, 0.044715
      %v2511 = vmul.f32 %v2479, 0.044715
      %v2512 = vmul.f32 %v2480, 0.044715
      %v2513 = vmul.f32 %v2481, 0.044715
      %v2514 = vmul.f32 %v2482, 0.044715
      %v2515 = vmul.f32 %v2483, 0.044715
      %v2516 = vmul.f32 %v2484, 0.044715
      %v2517 = vmul.f32 %v2485, 0.044715
      %v2518 = vmul.f32 %v2486, 0.044715
      %v2519 = vmul.f32 %v2487, 0.044715
      %v2520 = vmul.f32 %v2488, 0.044715
      %v2521 = vmul.f32 %v2489, 0.044715
      %v2522 = vmul.f32 %v2490, 0.044715
      %v2523 = vmul.f32 %v2491, 0.044715
      %v2524 = vmul.f32 %v2492, 0.044715
      %v2525 = vmul.f32 %v2493, 0.044715
      %v2526 = vmul.f32 %v2494, 0.044715
      %v2527 = vmul.f32 %v2495, 0.044715
      %v2528 = vmul.f32 %v2496, 0.044715
      %v2529 = vmul.f32 %v2497, 0.044715
      %v2530 = vmul.f32 %v2498, 0.044715
      %v2531 = vmul.f32 %v2499, 0.044715
      %v2532 = vmul.f32 %v2500, 0.044715
      %v2533 = vmul.f32 %v2501, 0.044715
      %v2534 = vmul.f32 %v2502, 0.044715
      %v2535 = vmul.f32 %v2503, 0.044715
      %v2536 = vadd.f32 %v2330, %v2504
      %v2537 = vadd.f32 %v2332, %v2505
      %v2538 = vadd.f32 %v2334, %v2506
      %v2539 = vadd.f32 %v2336, %v2507
      %v2540 = vadd.f32 %v2340, %v2508
      %v2541 = vadd.f32 %v2342, %v2509
      %v2542 = vadd.f32 %v2344, %v2510
      %v2543 = vadd.f32 %v2346, %v2511
      %v2544 = vadd.f32 %v2350, %v2512
      %v2545 = vadd.f32 %v2352, %v2513
      %v2546 = vadd.f32 %v2354, %v2514
      %v2547 = vadd.f32 %v2356, %v2515
      %v2548 = vadd.f32 %v2360, %v2516
      %v2549 = vadd.f32 %v2362, %v2517
      %v2550 = vadd.f32 %v2364, %v2518
      %v2551 = vadd.f32 %v2366, %v2519
      %v2552 = vadd.f32 %v2370, %v2520
      %v2553 = vadd.f32 %v2372, %v2521
      %v2554 = vadd.f32 %v2374, %v2522
      %v2555 = vadd.f32 %v2376, %v2523
      %v2556 = vadd.f32 %v2380, %v2524
      %v2557 = vadd.f32 %v2382, %v2525
      %v2558 = vadd.f32 %v2384, %v2526
      %v2559 = vadd.f32 %v2386, %v2527
      %v2560 = vadd.f32 %v2390, %v2528
      %v2561 = vadd.f32 %v2392, %v2529
      %v2562 = vadd.f32 %v2394, %v2530
      %v2563 = vadd.f32 %v2396, %v2531
      %v2564 = vadd.f32 %v2400, %v2532
      %v2565 = vadd.f32 %v2402, %v2533
      %v2566 = vadd.f32 %v2404, %v2534
      %v2567 = vadd.f32 %v2406, %v2535
      %v2568 = vmul.f32 %v2536, 0.7978846
      %v2569 = vmul.f32 %v2537, 0.7978846
      %v2570 = vmul.f32 %v2538, 0.7978846
      %v2571 = vmul.f32 %v2539, 0.7978846
      %v2572 = vmul.f32 %v2540, 0.7978846
      %v2573 = vmul.f32 %v2541, 0.7978846
      %v2574 = vmul.f32 %v2542, 0.7978846
      %v2575 = vmul.f32 %v2543, 0.7978846
      %v2576 = vmul.f32 %v2544, 0.7978846
      %v2577 = vmul.f32 %v2545, 0.7978846
      %v2578 = vmul.f32 %v2546, 0.7978846
      %v2579 = vmul.f32 %v2547, 0.7978846
      %v2580 = vmul.f32 %v2548, 0.7978846
      %v2581 = vmul.f32 %v2549, 0.7978846
      %v2582 = vmul.f32 %v2550, 0.7978846
      %v2583 = vmul.f32 %v2551, 0.7978846
      %v2584 = vmul.f32 %v2552, 0.7978846
      %v2585 = vmul.f32 %v2553, 0.7978846
      %v2586 = vmul.f32 %v2554, 0.7978846
      %v2587 = vmul.f32 %v2555, 0.7978846
      %v2588 = vmul.f32 %v2556, 0.7978846
      %v2589 = vmul.f32 %v2557, 0.7978846
      %v2590 = vmul.f32 %v2558, 0.7978846
      %v2591 = vmul.f32 %v2559, 0.7978846
      %v2592 = vmul.f32 %v2560, 0.7978846
      %v2593 = vmul.f32 %v2561, 0.7978846
      %v2594 = vmul.f32 %v2562, 0.7978846
      %v2595 = vmul.f32 %v2563, 0.7978846
      %v2596 = vmul.f32 %v2564, 0.7978846
      %v2597 = vmul.f32 %v2565, 0.7978846
      %v2598 = vmul.f32 %v2566, 0.7978846
      %v2599 = vmul.f32 %v2567, 0.7978846
      %v2600 = vtanh.pop %v2568
      %v2601 = vtanh.pop %v2569
      %v2602 = vtanh.pop %v2570
      %v2603 = vtanh.pop %v2571
      %v2604 = vtanh.pop %v2572
      %v2605 = vtanh.pop %v2573
      %v2606 = vtanh.pop %v2574
      %v2607 = vtanh.pop %v2575
      %v2608 = vtanh.pop %v2576
      %v2609 = vtanh.pop %v2577
      %v2610 = vtanh.pop %v2578
      %v2611 = vtanh.pop %v2579
      %v2612 = vtanh.pop %v2580
      %v2613 = vtanh.pop %v2581
      %v2614 = vtanh.pop %v2582
      %v2615 = vtanh.pop %v2583
      %v2616 = vtanh.pop %v2584
      %v2617 = vtanh.pop %v2585
      %v2618 = vtanh.pop %v2586
      %v2619 = vtanh.pop %v2587
      %v2620 = vtanh.pop %v2588
      %v2621 = vtanh.pop %v2589
      %v2622 = vtanh.pop %v2590
      %v2623 = vtanh.pop %v2591
      %v2624 = vtanh.pop %v2592
      %v2625 = vtanh.pop %v2593
      %v2626 = vtanh.pop %v2594
      %v2627 = vtanh.pop %v2595
      %v2628 = vtanh.pop %v2596
      %v2629 = vtanh.pop %v2597
      %v2630 = vtanh.pop %v2598
      %v2631 = vtanh.pop %v2599
      %v2632 = vadd.f32 %v2600, 1.0
      %v2633 = vadd.f32 %v2601, 1.0
      %v2634 = vadd.f32 %v2602, 1.0
      %v2635 = vadd.f32 %v2603, 1.0
      %v2636 = vadd.f32 %v2604, 1.0
      %v2637 = vadd.f32 %v2605, 1.0
      %v2638 = vadd.f32 %v2606, 1.0
      %v2639 = vadd.f32 %v2607, 1.0
      %v2640 = vadd.f32 %v2608, 1.0
      %v2641 = vadd.f32 %v2609, 1.0
      %v2642 = vadd.f32 %v2610, 1.0
      %v2643 = vadd.f32 %v2611, 1.0
      %v2644 = vadd.f32 %v2612, 1.0
      %v2645 = vadd.f32 %v2613, 1.0
      %v2646 = vadd.f32 %v2614, 1.0
      %v2647 = vadd.f32 %v2615, 1.0
      %v2648 = vadd.f32 %v2616, 1.0
      %v2649 = vadd.f32 %v2617, 1.0
      %v2650 = vadd.f32 %v2618, 1.0
      %v2651 = vadd.f32 %v2619, 1.0
      %v2652 = vadd.f32 %v2620, 1.0
      %v2653 = vadd.f32 %v2621, 1.0
      %v2654 = vadd.f32 %v2622, 1.0
      %v2655 = vadd.f32 %v2623, 1.0
      %v2656 = vadd.f32 %v2624, 1.0
      %v2657 = vadd.f32 %v2625, 1.0
      %v2658 = vadd.f32 %v2626, 1.0
      %v2659 = vadd.f32 %v2627, 1.0
      %v2660 = vadd.f32 %v2628, 1.0
      %v2661 = vadd.f32 %v2629, 1.0
      %v2662 = vadd.f32 %v2630, 1.0
      %v2663 = vadd.f32 %v2631, 1.0
      %v2664 = vmul.f32 %v2408, %v2632
      %v2665 = vmul.f32 %v2409, %v2633
      %v2666 = vmul.f32 %v2410, %v2634
      %v2667 = vmul.f32 %v2411, %v2635
      %v2668 = vmul.f32 %v2412, %v2636
      %v2669 = vmul.f32 %v2413, %v2637
      %v2670 = vmul.f32 %v2414, %v2638
      %v2671 = vmul.f32 %v2415, %v2639
      %v2672 = vmul.f32 %v2416, %v2640
      %v2673 = vmul.f32 %v2417, %v2641
      %v2674 = vmul.f32 %v2418, %v2642
      %v2675 = vmul.f32 %v2419, %v2643
      %v2676 = vmul.f32 %v2420, %v2644
      %v2677 = vmul.f32 %v2421, %v2645
      %v2678 = vmul.f32 %v2422, %v2646
      %v2679 = vmul.f32 %v2423, %v2647
      %v2680 = vmul.f32 %v2424, %v2648
      %v2681 = vmul.f32 %v2425, %v2649
      %v2682 = vmul.f32 %v2426, %v2650
      %v2683 = vmul.f32 %v2427, %v2651
      %v2684 = vmul.f32 %v2428, %v2652
      %v2685 = vmul.f32 %v2429, %v2653
      %v2686 = vmul.f32 %v2430, %v2654
      %v2687 = vmul.f32 %v2431, %v2655
      %v2688 = vmul.f32 %v2432, %v2656
      %v2689 = vmul.f32 %v2433, %v2657
      %v2690 = vmul.f32 %v2434, %v2658
      %v2691 = vmul.f32 %v2435, %v2659
      %v2692 = vmul.f32 %v2436, %v2660
      %v2693 = vmul.f32 %v2437, %v2661
      %v2694 = vmul.f32 %v2438, %v2662
      %v2695 = vmul.f32 %v2439, %v2663
      %v2696 = vld [vmem:[%s8] sm:$0xf]
      %v2697 = vld [vmem:[%s8 + $0x4] sm:$0xf]
      %v2698 = vld [vmem:[%s8 + $0x8] sm:$0xf]
      %v2699 = vld [vmem:[%s8 + $0xc] sm:$0xf]
      %v2700 = vpack.c.bf16 %v2666, %v2664
      %v2701 = vpack.c.bf16 %v2667, %v2665
      %v2702 = vpack.c.bf16 %v2670, %v2668
      %v2703 = vpack.c.bf16 %v2671, %v2669
      %v2704 = vpack.c.bf16 %v2674, %v2672
      %v2705 = vpack.c.bf16 %v2675, %v2673
      %v2706 = vpack.c.bf16 %v2678, %v2676
      %v2707 = vpack.c.bf16 %v2679, %v2677
      %v2708 = vpack.c.bf16 %v2682, %v2680
      %v2709 = vpack.c.bf16 %v2683, %v2681
      %v2710 = vpack.c.bf16 %v2686, %v2684
      %v2711 = vpack.c.bf16 %v2687, %v2685
      %v2712 = vpack.c.bf16 %v2690, %v2688
      %v2713 = vpack.c.bf16 %v2691, %v2689
      %v2714 = vpack.c.bf16 %v2694, %v2692
      %v2715 = vpack.c.bf16 %v2695, %v2693
      %2716 = vset.pattern.permute.xlu0 12
      %2717 = vperm.xlu0 %2716, %v396
      %v2718 = vpop.permute.xlu0 %2717
      %2720 = vset.pattern.permute.xlu0 12
      %2721 = vperm.xlu0 %2720, %v397
      %v2722 = vpop.permute.xlu0 %2721
      %2724 = vset.pattern.permute.xlu0 12
      %2725 = vperm.xlu0 %2724, %v398
      %v2726 = vpop.permute.xlu0 %2725
      %2728 = vset.pattern.permute.xlu0 12
      %2729 = vperm.xlu0 %2728, %v399
      %v2730 = vpop.permute.xlu0 %2729
      %v2736 = vunpack.c.l.b16 %v2696
      %v2737 = vunpack.c.l.b16 %v2697
      %v2738 = vunpack.c.l.b16 %v2698
      %v2739 = vunpack.c.l.b16 %v2699
      %v2740 = vpack.c.b16 %v2737, %v2736
      %v2741 = vpack.c.b16 %v2739, %v2738
      %2744 = vmatprep.subr.bf16.mxu0 %v2701
      %2745 = vmatpush1.bf16.msra.mxu0 %v2700
      %2746 = vmatprep.subr.bf16.mxu0 %v2703
      %2747 = vmatpush1.bf16.msra.mxu0 %v2702
      %2748 = vmatprep.subr.bf16.mxu0 %v2705
      %2749 = vmatpush1.bf16.msra.mxu0 %v2704
      %2750 = vmatprep.subr.bf16.mxu0 %v2707
      %2751 = vmatpush1.bf16.msra.mxu0 %v2706
      %2752 = vmatprep.subr.bf16.mxu0 %v2709
      %2753 = vmatpush1.bf16.msra.mxu0 %v2708
      %2754 = vmatprep.subr.bf16.mxu0 %v2711
      %2755 = vmatpush1.bf16.msra.mxu0 %v2710
      %2756 = vmatprep.subr.bf16.mxu0 %v2713
      %2757 = vmatpush1.bf16.msra.mxu0 %v2712
      %2758 = vmatprep.subr.bf16.mxu0 %v2715
      %2759 = vmatpush1.bf16.msra.mxu0 %v2714
      %2760 = vmatprep.subr.bf16.mxu0 0
      %2761 = vmatpush1.bf16.msra.mxu0 0
      %2762 = vmatprep.subr.bf16.mxu0 0
      %2763 = vmatpush1.bf16.msra.mxu0 0
      %2764 = vmatprep.subr.bf16.mxu0 0
      %2765 = vmatpush1.bf16.msra.mxu0 0
      %2766 = vmatprep.subr.bf16.mxu0 0
      %2767 = vmatpush1.bf16.msra.mxu0 0
      %2768 = vmatprep.subr.bf16.mxu0 0
      %2769 = vmatpush1.bf16.msra.mxu0 0
      %2770 = vmatprep.subr.bf16.mxu0 0
      %2771 = vmatpush1.bf16.msra.mxu0 0
      %2772 = vmatprep.subr.bf16.mxu0 0
      %2773 = vmatpush1.bf16.msra.mxu0 0
      %2774 = vmatprep.subr.bf16.mxu0 0
      %2775 = vmatpush1.bf16.msra.mxu0 0
      %2776 = vmatprep.mubr.bf16.mxu0 0
      %2777 = vmatmul.mubr.bf16.gmra.mrb[0].mxu0 %v2740
      %v2778 = vpop.f32.mrb[0].mxu0
      %v2779 = vadd.f32 %v2718, %v2778
      %v2780 = vpop.f32.mrb[0].mxu0
      %v2781 = vadd.f32 %v2718, %v2780
      %v2782 = vpop.f32.mrb[0].mxu0
      %v2783 = vadd.f32 %v2722, %v2782
      %v2784 = vpop.f32.mrb[0].mxu0
      %v2785 = vadd.f32 %v2722, %v2784
      %2786 = vmatprep.mubr.bf16.mxu0 0
      %2787 = vmatmul.mubr.bf16.gmra.mrb[0].mxu0 %v2741
      %v2788 = vpop.f32.mrb[0].mxu0
      %v2789 = vadd.f32 %v2726, %v2788
      %v2790 = vpop.f32.mrb[0].mxu0
      %v2791 = vadd.f32 %v2726, %v2790
      %v2792 = vpop.f32.mrb[0].mxu0
      %v2793 = vadd.f32 %v2730, %v2792
      %v2794 = vpop.f32.mrb[0].mxu0
      %v2795 = vadd.f32 %v2730, %v2794
      %2796 = vdwg.mxu0
      %v2797 = vadd.f32 %v1989, %v2779
      %v2798 = vadd.f32 %v1990, %v2781
      %v2799 = vadd.f32 %v1991, %v2783
      %v2800 = vadd.f32 %v1992, %v2785
      %v2801 = vadd.f32 %v1993, %v2789
      %v2802 = vadd.f32 %v1994, %v2791
      %v2803 = vadd.f32 %v1995, %v2793
      %v2804 = vadd.f32 %v1996, %v2795
      %2805 = vst [vmem:[%s386] sm:$0xff] %v2797
      %2806 = vst [vmem:[%s386 + $0x8] sm:$0xff] %v2798
      %2807 = vst [vmem:[%s386 + $0x10] sm:$0xff] %v2799
      %2808 = vst [vmem:[%s386 + $0x18] sm:$0xff] %v2800
      %2809 = vst [vmem:[%s386 + $0x20] sm:$0xff] %v2801
      %2810 = vst [vmem:[%s386 + $0x28] sm:$0xff] %v2802
      %2811 = vst [vmem:[%s386 + $0x30] sm:$0xff] %v2803
      %2812 = vst [vmem:[%s386 + $0x38] sm:$0xff] %v2804
      %p2813 = scmp.lt.s32.totalorder %s22, 1
      %s2814 = scalar_select %p2813, %s22, 1
      %s2815 = smul.addr %s2814, 8
      %s2816 = smul.addr %s2815, 8
      %s2817 = scalar_lea.vmem %s11, %s2816
      // Predicated region
      $region65: #{axial_shifted_block_pallas.1} parent=63 // pred_check
        %p2818 = pneg %p276
      $region66: #{axial_shifted_block_pallas.1} parent=63 // pred_check_branch
        %2820 = sbr.rel (%p2818) target = $region68
      $region67: #{axial_shifted_block_pallas.1} parent=63 // pred_region
        _
      $region68: #{axial_shifted_block_pallas.1} parent=63 // pred_fallthru
        _
    $region64: #{axial_shifted_block_pallas.1} parent=5 // pred_fallthru
      _
    %p2821 = scmp.le.s32.totalorder 2, %s17
    // Predicated region
    $region69: #{axial_shifted_block_pallas.1} parent=5 // pred_check
      %p2822 = pneg %p2821
    $region70: #{axial_shifted_block_pallas.1} parent=5 // pred_check_branch
      %2824 = sbr.rel (%p2822) target = $region72
    $region71: #{axial_shifted_block_pallas.1} parent=5 // pred_region
      %s2825 = ssub.s32 %s17, 2
      // Predicated region
      $region73: #{axial_shifted_block_pallas.1} parent=71 // pred_check
        %p2826 = pneg %p282
      $region74: #{axial_shifted_block_pallas.1} parent=71 // pred_check_branch
        %2828 = sbr.rel (%p2826) target = $region76
      $region75: #{axial_shifted_block_pallas.1} parent=71 // pred_region
        %p2829 = scmp.lt.s32.totalorder %s23, 1
        %s2830 = scalar_select %p2829, %s23, 1
        %s2831 = smul.addr %s2830, 8
        %s2832 = smul.addr %s2831, 8
        %s2833 = scalar_lea.vmem %s11, %s2832
      $region76: #{axial_shifted_block_pallas.1} parent=71 // pred_fallthru
        _
    $region72: #{axial_shifted_block_pallas.1} parent=5 // pred_fallthru
      _
  $region6: #{axial_shifted_block_pallas.1} parent=0 // loop_footer
    %s21 = sadd.s32 1, %s17
  $region7: #{axial_shifted_block_pallas.1} parent=0 // loop_footer_branch
    %16 = sbr.rel target = $region3
  $region8: #{axial_shifted_block_pallas.1} parent=0 // loop_exit
    _

</llo_original>
